<compile_context>
chip_gen: v6e
topology: v6e:2x2x1
jax: 0.10.0
libtpu: 0.0.40
codegen_flags: <defaults>
</compile_context>

<pallas_src>
import math

import numpy as np
import jax
import jax.numpy as jnp
from jax import lax
from jax.experimental import pallas as pl
from jax.experimental.pallas import tpu as pltpu

# ----------------------------- configuration (MambaConfig) -----------------------------
D_MODEL = 32
D_STATE = 16
EXPAND = 2
D_CONV = 4
SEQ_LEN = 9                        # config.seq_length; input length L must equal this
D_INNER = EXPAND * D_MODEL         # 64
DT_RANK = math.ceil(D_MODEL / 16)  # 2
NDBC = DT_RANK + 2 * D_STATE       # 34
DT_MIN, DT_MAX, DT_INIT_FLOOR = 1e-3, 1e-1, 1e-4
RMS_EPS = 1e-5

# Row indices of the packed "vecs" (NUM_VEC_ROWS, D_INNER) parameter array.
ROW_CONV_B = 0      # +0 forward conv bias, +1 backward conv bias
ROW_DT_B = 2        # +0 dt_proj_f bias,   +1 dt_proj_b bias
ROW_D = 4           # +0 D_f,              +1 D_b
ROW_PRO_TO_B = 6    # pro_to bias
ROW_RMS_W = 7       # RMSNorm weight (padded to 64)
ROW_XPROJ_B = 8     # +0 x_proj_f bias, +1 x_proj_b bias (padded to 64)
ROW_RES_B = 10      # ResidualBlock.pro bias (padded to 64)
NUM_VEC_ROWS = 11


# ----------------------------- static helpers -----------------------------
def _gauss_index_mask_np(length, kind):
    """Batch-independent gaussian index mask (precomputed on host, passed as an input)."""
    idx = np.arange(length, dtype=np.float32)
    ref = (length + 1) // 2 if kind == "center" else length - 1
    sigma = np.abs(idx - ref).mean()
    w = np.exp(-0.5 * (idx - ref) ** 2 / sigma ** 2)
    return (w / w.sum()).astype(np.float32)


# ----------------------------- the Pallas kernel -----------------------------
def make_kernel(B, L):
    assert L == SEQ_LEN, "AdaptiveAvgPool1d is the identity only when L == seq_length"
    assert L % 2 == 1, "forward/backward sub-sequences must have equal length (odd L)"
    S = SEQ_LEN
    mid = L // 2 + 1                      # length of each sub-sequence
    Lc = min(L, mid + D_CONV - 1)         # conv output length after the [:, :, :L] slice
    PADL = D_CONV - 1
    PAD_LEN = mid + 2 * (D_CONV - 1)      # padded conv input length
    f32 = jnp.float32

    def kernel(x_ref, idxm_ref, vecs_ref, w_in_ref, conv_w_ref, xproj_w_ref,
               dt_w_ref, A_ref, pro_to_w_ref, wva_ref, wor_ref, o_ref,
               pad_scr, h_scr):
        vecs = vecs_ref[...]                         # (NUM_VEC_ROWS, Di) packed small params
        idxm = idxm_ref[...]                         # (Lc, 2): [:,0]=last mask, [:,1]=center mask
        idx_last = idxm[:, 0:1][None, :, :]          # (1, Lc, 1)
        idx_center = idxm[:, 1:2][None, :, :]        # (1, Lc, 1)

        xe = x_ref[...]                              # (B, L, Dm)
        xe2 = xe.reshape(B * L, D_MODEL)             # batch fused into the matmul M dimension

        # ---- RMSNorm over the whole tile ----
        rms_w = vecs[ROW_RMS_W:ROW_RMS_W + 1, :D_MODEL]
        nx2 = xe2 * lax.rsqrt(jnp.mean(xe2 * xe2, axis=-1, keepdims=True) + RMS_EPS) * rms_w

        # ---- fused in-projections: one (B*L, Dm) @ (Dm, 2*Di) matmul (bias=False) ----
        xz = jnp.dot(nx2, w_in_ref[...], preferred_element_type=f32)      # (B*L, 2*Di)
        xi3 = xz[:, :D_INNER].reshape(B, L, D_INNER)                      # in_proj_x
        zz2 = xz[:, D_INNER:]                                             # in_proj_z, (B*L, Di)

        # ---- split_sequence_auto: forward half + reversed backward half (static-slice flip) ----
        x_f_in = xi3[:, :mid, :]                                          # (B, mid, Di)
        x_b_in = jnp.concatenate(
            [xi3[:, L - 1 - t:L - t, :] for t in range(mid)], axis=1)     # flipped tail

        # ---- depthwise causal conv (padding = d_conv-1, sliced to Lc) + SiLU ----
        # Zero only the border rows of the padded scratch (interior is overwritten per call).
        pad_scr[:, 0:PADL, :] = jnp.zeros((B, PADL, D_INNER), f32)
        pad_scr[:, PADL + mid:, :] = jnp.zeros((B, PAD_LEN - PADL - mid, D_INNER), f32)

        def dconv_silu(xin, which):
            pad_scr[:, PADL:PADL + mid, :] = xin                          # interior only
            w = conv_w_ref[which]                                         # (K, Di)
            b = vecs[ROW_CONV_B + which:ROW_CONV_B + which + 1, :]        # (1, Di)
            acc = pad_scr[:, 0:Lc, :] * w[0:1, :]
            for k in range(1, D_CONV):
                acc = acc + pad_scr[:, k:k + Lc, :] * w[k:k + 1, :]
            return jax.nn.silu(acc + b)                                   # (B, Lc, Di)

        xf = dconv_silu(x_f_in, 0)
        xb = dconv_silu(x_b_in, 1)

        # ---- selective SSM: batched over the tile, only the Lc-step recurrence is serial ----
        def ssm(xc, which):
            xc2 = xc.reshape(B * Lc, D_INNER)
            b_xp = vecs[ROW_XPROJ_B + which:ROW_XPROJ_B + which + 1, :NDBC]
            dBC = jnp.dot(xc2, xproj_w_ref[which], preferred_element_type=f32) + b_xp
            b_dt = vecs[ROW_DT_B + which:ROW_DT_B + which + 1, :]
            delta2 = jax.nn.softplus(
                jnp.dot(dBC[:, :DT_RANK], dt_w_ref[which], preferred_element_type=f32) + b_dt)
            delta3 = delta2.reshape(B, Lc, D_INNER)                        # (B, Lc, Di)
            Bm = dBC[:, DT_RANK:DT_RANK + D_STATE].reshape(B, Lc, D_STATE)
            Cm = dBC[:, DT_RANK + D_STATE:NDBC].reshape(B, Lc, D_STATE)
            Ab = A_ref[which]                                              # (ds, Di): -exp(A_log).T

            # Batched precompute (exp + broadcasts done in 2 big ops, outside the serial loop).
            dA4 = jnp.exp(delta3[:, :, None, :] * Ab[None, None, :, :])    # (B, Lc, ds, Di)
            BX4 = Bm[:, :, :, None] * (delta3 * xc)[:, :, None, :]         # (B, Lc, ds, Di)

            h = jnp.zeros((B, 1, D_STATE, D_INNER), f32)
            for t in range(Lc):                                            # 8 unrolled serial steps
                h = dA4[:, t:t + 1] * h + BX4[:, t:t + 1]                  # 2 VALU ops per step
                h_scr[:, t:t + 1, :, :] = h                                # row write, no concat

            # Single fused C-contraction over the whole sequence.
            y = jnp.sum(h_scr[...] * Cm[:, :, :, None], axis=2)            # (B, Lc, Di)
            dd = vecs[ROW_D + which:ROW_D + which + 1, :][None, :, :]      # (1, 1, Di)
            return y + dd * xc

        y_f = ssm(xf, 0)                                                   # (B, Lc, Di)
        y_b = ssm(xb, 1)

        # ---- gaussian masks ----
        def vec_mask(seq, ref_idx):                                        # (B, Lc, Di) -> (B, Lc, 1)
            ref = seq[:, ref_idx:ref_idx + 1, :]
            d = seq - ref
            dist = jnp.sqrt(jnp.sum(d * d, axis=2, keepdims=True))
            sig = jnp.mean(dist, axis=1, keepdims=True)
            r = dist * pl.reciprocal(sig, approx=True)
            w = jnp.exp(-0.5 * r * r)
            return w * pl.reciprocal(jnp.sum(w, axis=1, keepdims=True), approx=True)

        def l2norm(v):                                                     # F.normalize(p=2, dim=1)
            n = jnp.sqrt(jnp.sum(v * v, axis=1, keepdims=True))
            return v * pl.reciprocal(jnp.maximum(n, 1e-12), approx=True)

        mf = l2norm(idx_last * vec_mask(y_f, Lc - 1))                      # (B, Lc, 1)
        mb = l2norm(idx_last * vec_mask(y_b, Lc - 1))
        mb_flip = jnp.concatenate(                                         # static-slice flip
            [mb[:, Lc - 1 - t:Lc - t, :] for t in range(Lc)], axis=1)

        y_cat = jnp.concatenate([y_f * mf, y_b * mb_flip], axis=2)         # (B, Lc, 2*Di)
        pro_b = vecs[ROW_PRO_TO_B:ROW_PRO_TO_B + 1, :]
        y2 = jnp.dot(y_cat.reshape(B * Lc, 2 * D_INNER), pro_to_w_ref[...],
                     preferred_element_type=f32) + pro_b
        y3 = y2.reshape(B, Lc, D_INNER)
        mc = l2norm(idx_center * vec_mask(y3, (Lc + 1) // 2))
        y2m = (y3 * mc).reshape(B * Lc, D_INNER)

        # ---- tokenizer (direction 'f'), wV and wA fused into one matmul ----
        # TODO(synk): tokenizer_dropout is treated as eval-mode identity (no stochastic dropout).
        AV = jnp.dot(y2m, wva_ref[...], preferred_element_type=f32)        # (B*Lc, Di+S)
        VV = AV[:, :D_INNER].reshape(B, Lc, D_INNER)
        Amat = AV[:, D_INNER:].reshape(B, Lc, S)
        A_sm = jax.nn.softmax(jnp.swapaxes(Amat, 1, 2), axis=-1)           # (B, S, Lc)
        T = jnp.einsum('bsl,bld->bsd', A_sm, VV, preferred_element_type=f32)  # (B, S, Di)

        # ---- z gate: adaptive avg-pool is identity since L == seq_length ----
        zp = jax.nn.silu(zz2).reshape(B, S, D_INNER)

        # ---- fused out_proj (bias=False) + residual pro(adapool(x)) = [T*z | x] @ [[Wo],[Wr]] ----
        cat = jnp.concatenate([(T * zp).reshape(B * S, D_INNER), xe2], axis=1)  # (B*S, Di+Dm)
        res_b = vecs[ROW_RES_B:ROW_RES_B + 1, :D_MODEL]
        o = jnp.dot(cat, wor_ref[...], preferred_element_type=f32) + res_b      # (B*S, Dm)
        o_ref[...] = o.reshape(B, L, D_MODEL)

    return kernel, Lc, PAD_LEN


# ----------------------------- wrapper -----------------------------
def residual_block_forward(x, params, *, block_b=32):
    N, L, Dm = x.shape
    assert Dm == D_MODEL and L == SEQ_LEN
    B = int(min(block_b, N))                 # batch tile size (amortizes per-step grid overhead)
    G = -(-N // B)
    Npad = G * B
    if Npad != N:
        x = jnp.concatenate([x, jnp.zeros((Npad - N, L, Dm), x.dtype)], axis=0)

    kernel, Lc, PAD_LEN = make_kernel(B, L)

    # ---- pack parameters (one-time, outside the kernel) ----
    def row64(v):
        v = jnp.reshape(v, (-1,)).astype(jnp.float32)
        return jnp.pad(v, (0, D_INNER - v.shape[0]))

    vecs = jnp.stack([
        row64(params["conv_f_b"]), row64(params["conv_b_b"]),
        row64(params["dtproj_f_b"]), row64(params["dtproj_b_b"]),
        row64(params["D_f"]), row64(params["D_b"]),
        row64(params["pro_to_b"]), row64(params["rms_w"]),
        row64(params["xproj_f_b"]), row64(params["xproj_b_b"]),
        row64(params["res_pro_b"]),
    ], axis=0)                                                             # (NUM_VEC_ROWS, Di)

    idxm = jnp.stack([jnp.asarray(_gauss_index_mask_np(Lc, "last")),
                      jnp.asarray(_gauss_index_mask_np(Lc, "center"))], axis=1)  # (Lc, 2)

    w_in = jnp.concatenate([params["wx"], params["wz"]], axis=1)           # (Dm, 2*Di)
    conv_w = jnp.stack([params["conv_f_w"], params["conv_b_w"]])           # (2, K, Di)
    xproj_w = jnp.stack([params["xproj_f_w"], params["xproj_b_w"]])        # (2, Di, NDBC)
    dt_w = jnp.stack([params["dtproj_f_w"], params["dtproj_b_w"]])         # (2, DT_RANK, Di)
    A_t = jnp.stack([-jnp.exp(params["A_log_f"]).T,
                     -jnp.exp(params["A_log_b"]).T])                       # (2, ds, Di), precomputed
    wva = jnp.concatenate([params["wV_f"], params["wA_f"]], axis=1)        # (Di, Di+S)
    wor = jnp.concatenate([params["out_w"], params["res_pro_w"]], axis=0)  # (Di+Dm, Dm)

    plist = [idxm, vecs, w_in, conv_w, xproj_w, dt_w, A_t,
             params["pro_to_w"], wva, wor]

    def full_spec(a):
        nd = a.ndim
        return pl.BlockSpec(a.shape, lambda g, nd=nd: (0,) * nd)

    in_specs = [pl.BlockSpec((B, L, Dm), lambda g: (g, 0, 0))] + [full_spec(a) for a in plist]
    out_spec = pl.BlockSpec((B, L, Dm), lambda g: (g, 0, 0))

    out = pl.pallas_call(
        kernel,
        out_shape=jax.ShapeDtypeStruct((Npad, L, Dm), jnp.float32),
        grid_spec=pltpu.PrefetchScalarGridSpec(
            num_scalar_prefetch=0,
            grid=(G,),
            in_specs=in_specs,
            out_specs=out_spec,
            scratch_shapes=[
                pltpu.VMEM((B, PAD_LEN, D_INNER), jnp.float32),            # padded conv input
                pltpu.VMEM((B, Lc, D_STATE, D_INNER), jnp.float32),        # SSM hidden states
            ]),
        compiler_params=pltpu.CompilerParams(
            dimension_semantics=("parallel",)),   # batch tiles are independent (v7x megacore)
    )(x, *plist)
    return out[:N]


# ----------------------------- deterministic parameter init -----------------------------
def init_params(key):
    ks = jax.random.split(key, 24)

    def uni(k, shape, scale):
        return (jax.random.uniform(k, shape, jnp.float32, -1.0, 1.0) * scale).astype(jnp.float32)

    p = {}
    p["rms_w"] = jnp.ones((1, D_MODEL), jnp.float32)
    p["wx"] = uni(ks[0], (D_MODEL, D_INNER), 1.0 / math.sqrt(D_MODEL))
    p["wz"] = uni(ks[1], (D_MODEL, D_INNER), 1.0 / math.sqrt(D_MODEL))
    p["conv_f_w"] = uni(ks[2], (D_CONV, D_INNER), 1.0 / math.sqrt(D_CONV))   # depthwise, (K, C)
    p["conv_f_b"] = uni(ks[3], (1, D_INNER), 1.0 / math.sqrt(D_CONV))
    p["conv_b_w"] = uni(ks[4], (D_CONV, D_INNER), 1.0 / math.sqrt(D_CONV))
    p["conv_b_b"] = uni(ks[5], (1, D_INNER), 1.0 / math.sqrt(D_CONV))
    p["xproj_f_w"] = uni(ks[6], (D_INNER, NDBC), 1.0 / math.sqrt(D_INNER))
    p["xproj_f_b"] = uni(ks[7], (1, NDBC), 1.0 / math.sqrt(D_INNER))
    p["xproj_b_w"] = uni(ks[8], (D_INNER, NDBC), 1.0 / math.sqrt(D_INNER))
    p["xproj_b_b"] = uni(ks[9], (1, NDBC), 1.0 / math.sqrt(D_INNER))
    dt_std = DT_RANK ** (-0.5)
    p["dtproj_f_w"] = uni(ks[10], (DT_RANK, D_INNER), dt_std)
    p["dtproj_b_w"] = uni(ks[11], (DT_RANK, D_INNER), dt_std)

    def inv_dt(k):
        dt = jnp.exp(jax.random.uniform(k, (D_INNER,)) * (math.log(DT_MAX) - math.log(DT_MIN))
                     + math.log(DT_MIN))
        dt = jnp.maximum(dt, DT_INIT_FLOOR)
        return (dt + jnp.log(-jnp.expm1(-dt))).reshape(1, D_INNER).astype(jnp.float32)

    p["dtproj_f_b"] = inv_dt(ks[12])
    p["dtproj_b_b"] = inv_dt(ks[13])
    a_log = jnp.log(jnp.arange(1, D_STATE + 1, dtype=jnp.float32))
    p["A_log_f"] = jnp.tile(a_log[None, :], (D_INNER, 1))
    p["A_log_b"] = jnp.tile(a_log[None, :], (D_INNER, 1))
    p["D_f"] = jnp.ones((1, D_INNER), jnp.float32)
    p["D_b"] = jnp.ones((1, D_INNER), jnp.float32)
    p["pro_to_w"] = uni(ks[14], (2 * D_INNER, D_INNER), 1.0 / math.sqrt(2 * D_INNER))
    p["pro_to_b"] = uni(ks[15], (1, D_INNER), 1.0 / math.sqrt(2 * D_INNER))
    p["wA_f"] = (jax.random.normal(ks[16], (D_INNER, SEQ_LEN)) * math.sqrt(2.0 / D_INNER)).astype(jnp.float32)
    p["wV_f"] = (jax.random.normal(ks[17], (D_INNER, D_INNER)) * math.sqrt(2.0 / D_INNER)).astype(jnp.float32)
    p["out_w"] = uni(ks[18], (D_INNER, D_MODEL), 1.0 / math.sqrt(D_INNER))
    p["res_pro_w"] = uni(ks[19], (D_MODEL, D_MODEL), 1.0 / math.sqrt(D_MODEL))
    p["res_pro_b"] = uni(ks[20], (1, D_MODEL), 1.0 / math.sqrt(D_MODEL))
    return p


# ----------------------------- pure-JAX reference (for verification) -----------------------------
def reference_forward(x, p):
    def one(xe):
        L = xe.shape[0]
        mid = L // 2 + 1
        Lc = min(L, mid + D_CONV - 1)
        nx = xe * lax.rsqrt(jnp.mean(xe * xe, axis=-1, keepdims=True) + RMS_EPS) * p["rms_w"][0]
        xi = nx @ p["wx"]
        zz = nx @ p["wz"]
        x_f_in = xi[:mid]
        x_b_in = xi[mid - 1:][::-1]

        def conv(xin, w, b):
            pad = jnp.zeros((D_CONV - 1, D_INNER))
            xp = jnp.concatenate([pad, xin, pad], axis=0)
            out = sum(xp[k:k + Lc] * w[k][None, :] for k in range(D_CONV))
            return jax.nn.silu(out + b[0][None, :])

        xf = conv(x_f_in, p["conv_f_w"], p["conv_f_b"])
        xbk = conv(x_b_in, p["conv_b_w"], p["conv_b_b"])

        def ssm(xc, wxp, bxp, wdt, bdt, alog, dd):
            dBC = xc @ wxp + bxp[0]
            dlt = dBC[:, :DT_RANK]
            Bm = dBC[:, DT_RANK:DT_RANK + D_STATE]
            Cm = dBC[:, DT_RANK + D_STATE:]
            delta = jax.nn.softplus(dlt @ wdt + bdt[0])
            A = -jnp.exp(alog)
            dA = jnp.exp(delta[:, :, None] * A[None])
            BX = delta[:, :, None] * Bm[:, None, :] * xc[:, :, None]

            def step(h, t):
                h = dA[t] * h + BX[t]
                return h, jnp.sum(h * Cm[t][None, :], axis=1)

            _, ys = lax.scan(step, jnp.zeros((D_INNER, D_STATE)), jnp.arange(Lc))
            return ys + dd[0][None, :] * xc

        y_f = ssm(xf, p["xproj_f_w"], p["xproj_f_b"], p["dtproj_f_w"], p["dtproj_f_b"], p["A_log_f"], p["D_f"])
        y_b = ssm(xbk, p["xproj_b_w"], p["xproj_b_b"], p["dtproj_b_w"], p["dtproj_b_b"], p["A_log_b"], p["D_b"])

        def idx_mask(length, kind):
            i = jnp.arange(length, dtype=jnp.float32)
            ref = (length + 1) // 2 if kind == "center" else length - 1
            sig = jnp.mean(jnp.abs(i - ref))
            w = jnp.exp(-0.5 * (i - ref) ** 2 / sig ** 2)
            return w / jnp.sum(w)

        def vec_mask(seq, kind):
            length = seq.shape[0]
            ri = (length + 1) // 2 if kind == "center" else length - 1
            d = jnp.linalg.norm(seq - seq[ri][None, :], axis=1)
            sig = jnp.mean(d)
            w = jnp.exp(-0.5 * (d / sig) ** 2)
            return w / jnp.sum(w)

        def l2n(v):
            return v / jnp.maximum(jnp.linalg.norm(v), 1e-12)

        mf = l2n(idx_mask(Lc, "last") * vec_mask(y_f, "last"))
        mb = l2n(idx_mask(Lc, "last") * vec_mask(y_b, "last"))
        y_cat = jnp.concatenate([y_f * mf[:, None], y_b * mb[::-1][:, None]], axis=-1)
        y = y_cat @ p["pro_to_w"] + p["pro_to_b"][0]
        mc = l2n(idx_mask(Lc, "center") * vec_mask(y, "center"))
        y = y * mc[:, None]

        Amat = y @ p["wA_f"]
        A_sm = jax.nn.softmax(Amat, axis=0)
        VV = y @ p["wV_f"]
        T = A_sm.T @ VV
        zp = jax.nn.silu(zz)
        ymix = (T * zp) @ p["out_w"]
        res = xe @ p["res_pro_w"] + p["res_pro_b"][0]
        return ymix + res

    return jax.vmap(one)(x)


# ----------------------------- main -----------------------------
if __name__ == "__main__":
    key = jax.random.PRNGKey(0)
    kx, kp = jax.random.split(key)
    N, L = 2, SEQ_LEN
    x = jax.random.normal(kx, (N, L, D_MODEL), dtype=jnp.float32)
    params = init_params(kp)

    out = residual_block_forward(x, params)
    out = jax.block_until_ready(out)
    assert out.shape == (N, SEQ_LEN, D_MODEL)

    ref = reference_forward(x, params)
    np.testing.assert_allclose(np.asarray(out), np.asarray(ref), rtol=2e-2, atol=2e-2)

    print("KERNEL_OK")
</pallas_src>

<mosaic_0001>
module attributes {stable_mosaic.version = 11 : i64} {
  func.func @kernel(%arg0: i32, %arg1: memref<2x9x32xf32, #tpu.memory_space<vmem>>, %arg2: memref<8x2xf32, #tpu.memory_space<vmem>>, %arg3: memref<11x64xf32, #tpu.memory_space<vmem>>, %arg4: memref<32x128xf32, #tpu.memory_space<vmem>>, %arg5: memref<2x4x64xf32, #tpu.memory_space<vmem>>, %arg6: memref<2x64x34xf32, #tpu.memory_space<vmem>>, %arg7: memref<2x2x64xf32, #tpu.memory_space<vmem>>, %arg8: memref<2x16x64xf32, #tpu.memory_space<vmem>>, %arg9: memref<128x64xf32, #tpu.memory_space<vmem>>, %arg10: memref<64x73xf32, #tpu.memory_space<vmem>>, %arg11: memref<96x32xf32, #tpu.memory_space<vmem>>, %arg12: memref<2x9x32xf32, #tpu.memory_space<vmem>>, %arg13: memref<2x11x64xf32, #tpu.memory_space<vmem>>, %arg14: memref<2x8x16x64xf32, #tpu.memory_space<vmem>>) attributes {dimension_semantics = [#tpu.dimension_semantics<parallel>], iteration_bounds = array<i64: 1>, scalar_prefetch = 0 : i64, scratch_operands = 2 : i64, tpu.core_type = #tpu.core_type<tc>, window_params = [{transform_indices = @transform_0, window_bounds = array<i64: 2, 9, 32>}, {pipeline_mode = #tpu.pipeline_mode<synchronous>, transform_indices = @transform_1, window_bounds = array<i64: 8, 2>}, {pipeline_mode = #tpu.pipeline_mode<synchronous>, transform_indices = @transform_2, window_bounds = array<i64: 11, 64>}, {pipeline_mode = #tpu.pipeline_mode<synchronous>, transform_indices = @transform_3, window_bounds = array<i64: 32, 128>}, {pipeline_mode = #tpu.pipeline_mode<synchronous>, transform_indices = @transform_4, window_bounds = array<i64: 2, 4, 64>}, {pipeline_mode = #tpu.pipeline_mode<synchronous>, transform_indices = @transform_5, window_bounds = array<i64: 2, 64, 34>}, {pipeline_mode = #tpu.pipeline_mode<synchronous>, transform_indices = @transform_6, window_bounds = array<i64: 2, 2, 64>}, {pipeline_mode = #tpu.pipeline_mode<synchronous>, transform_indices = @transform_7, window_bounds = array<i64: 2, 16, 64>}, {pipeline_mode = #tpu.pipeline_mode<synchronous>, transform_indices = @transform_8, window_bounds = array<i64: 128, 64>}, {pipeline_mode = #tpu.pipeline_mode<synchronous>, transform_indices = @transform_9, window_bounds = array<i64: 64, 73>}, {pipeline_mode = #tpu.pipeline_mode<synchronous>, transform_indices = @transform_10, window_bounds = array<i64: 96, 32>}, {transform_indices = @transform_11, window_bounds = array<i64: 2, 9, 32>}]} {
    %c0 = arith.constant 0 : index
    %c0_0 = arith.constant 0 : index
    %0 = vector.load %arg3[%c0, %c0_0] : memref<11x64xf32, #tpu.memory_space<vmem>>, vector<11x64xf32>
    %c0_1 = arith.constant 0 : index
    %c0_2 = arith.constant 0 : index
    %1 = vector.load %arg2[%c0_1, %c0_2] : memref<8x2xf32, #tpu.memory_space<vmem>>, vector<8x2xf32>
    %2 = vector.extract_strided_slice %1 {offsets = [0, 0], sizes = [8, 1], strides = [1, 1]} : vector<8x2xf32> to vector<8x1xf32>
    %3 = vector.shape_cast %2 : vector<8x1xf32> to vector<1x8x1xf32>
    %4 = vector.extract_strided_slice %1 {offsets = [0, 1], sizes = [8, 1], strides = [1, 1]} : vector<8x2xf32> to vector<8x1xf32>
    %5 = vector.shape_cast %4 : vector<8x1xf32> to vector<1x8x1xf32>
    %c0_3 = arith.constant 0 : index
    %c0_4 = arith.constant 0 : index
    %c0_5 = arith.constant 0 : index
    %6 = vector.load %arg1[%c0_3, %c0_4, %c0_5] : memref<2x9x32xf32, #tpu.memory_space<vmem>>, vector<2x9x32xf32>
    %7 = vector.shape_cast %6 : vector<2x9x32xf32> to vector<18x32xf32>
    %8 = vector.extract_strided_slice %0 {offsets = [7, 0], sizes = [1, 32], strides = [1, 1]} : vector<11x64xf32> to vector<1x32xf32>
    %9 = arith.mulf %7, %7 : vector<18x32xf32>
    %cst = arith.constant dense<0.000000e+00> : vector<18xf32>
    %10 = vector.multi_reduction <add>, %9, %cst [1] : vector<18x32xf32> to vector<18xf32>
    %11 = vector.shape_cast %10 : vector<18xf32> to vector<18x1xf32>
    %cst_6 = arith.constant 3.200000e+01 : f32
    %12 = vector.broadcast %cst_6 : f32 to vector<18x1xf32>
    %13 = arith.divf %11, %12 : vector<18x1xf32>
    %cst_7 = arith.constant 9.99999974E-6 : f32
    %14 = vector.broadcast %cst_7 : f32 to vector<18x1xf32>
    %15 = arith.addf %13, %14 : vector<18x1xf32>
    %16 = math.rsqrt %15 : vector<18x1xf32>
    %17 = vector.broadcast %16 : vector<18x1xf32> to vector<18x32xf32>
    %18 = arith.mulf %7, %17 : vector<18x32xf32>
    %19 = vector.broadcast %8 : vector<1x32xf32> to vector<18x32xf32>
    %20 = arith.mulf %18, %19 : vector<18x32xf32>
    %c0_8 = arith.constant 0 : index
    %c0_9 = arith.constant 0 : index
    %21 = vector.load %arg4[%c0_8, %c0_9] : memref<32x128xf32, #tpu.memory_space<vmem>>, vector<32x128xf32>
    %cst_10 = arith.constant dense<0.000000e+00> : vector<18x128xf32>
    %22 = tpu.matmul %20, %21, %cst_10 {dimension_numbers = #tpu.dot_dimension_numbers<[1], [0], [0], [1], [0, 0, 1, 1], [], []>} : vector<18x32xf32>, vector<32x128xf32>, vector<18x128xf32> -> vector<18x128xf32>
    %23 = vector.extract_strided_slice %22 {offsets = [0, 0], sizes = [18, 64], strides = [1, 1]} : vector<18x128xf32> to vector<18x64xf32>
    %24 = vector.shape_cast %23 : vector<18x64xf32> to vector<2x9x64xf32>
    %25 = vector.extract_strided_slice %22 {offsets = [0, 64], sizes = [18, 64], strides = [1, 1]} : vector<18x128xf32> to vector<18x64xf32>
    %26 = vector.extract_strided_slice %24 {offsets = [0, 0, 0], sizes = [2, 5, 64], strides = [1, 1, 1]} : vector<2x9x64xf32> to vector<2x5x64xf32>
    %27 = vector.extract_strided_slice %24 {offsets = [0, 8, 0], sizes = [2, 1, 64], strides = [1, 1, 1]} : vector<2x9x64xf32> to vector<2x1x64xf32>
    %28 = vector.extract_strided_slice %24 {offsets = [0, 7, 0], sizes = [2, 1, 64], strides = [1, 1, 1]} : vector<2x9x64xf32> to vector<2x1x64xf32>
    %29 = vector.extract_strided_slice %24 {offsets = [0, 6, 0], sizes = [2, 1, 64], strides = [1, 1, 1]} : vector<2x9x64xf32> to vector<2x1x64xf32>
    %30 = vector.extract_strided_slice %24 {offsets = [0, 5, 0], sizes = [2, 1, 64], strides = [1, 1, 1]} : vector<2x9x64xf32> to vector<2x1x64xf32>
    %31 = vector.extract_strided_slice %24 {offsets = [0, 4, 0], sizes = [2, 1, 64], strides = [1, 1, 1]} : vector<2x9x64xf32> to vector<2x1x64xf32>
    %32 = tpu.concatenate %27, %28, %29, %30, %31 in 1 : vector<2x1x64xf32>, vector<2x1x64xf32>, vector<2x1x64xf32>, vector<2x1x64xf32>, vector<2x1x64xf32> -> vector<2x5x64xf32>
    %cst_11 = arith.constant 0.000000e+00 : f32
    %33 = vector.broadcast %cst_11 : f32 to vector<2x3x64xf32>
    %c0_12 = arith.constant 0 : index
    %c0_13 = arith.constant 0 : index
    %c0_14 = arith.constant 0 : index
    %34 = vector.load %arg13[%c0_12, %c0_13, %c0_14] : memref<2x11x64xf32, #tpu.memory_space<vmem>>, vector<2x3x64xf32>
    tpu.vector_store %arg13[%c0_12, %c0_13, %c0_14], %33 {strides = array<i32>} : memref<2x11x64xf32, #tpu.memory_space<vmem>>, vector<2x3x64xf32>,
    %cst_15 = arith.constant 0.000000e+00 : f32
    %35 = vector.broadcast %cst_15 : f32 to vector<2x3x64xf32>
    %c0_16 = arith.constant 0 : index
    %c8 = arith.constant 8 : index
    %c0_17 = arith.constant 0 : index
    %36 = vector.load %arg13[%c0_16, %c8, %c0_17] : memref<2x11x64xf32, #tpu.memory_space<vmem>>, vector<2x3x64xf32>
    tpu.vector_store %arg13[%c0_16, %c8, %c0_17], %35 {strides = array<i32>} : memref<2x11x64xf32, #tpu.memory_space<vmem>>, vector<2x3x64xf32>,
    %c0_18 = arith.constant 0 : index
    %c3 = arith.constant 3 : index
    %c0_19 = arith.constant 0 : index
    %37 = vector.load %arg13[%c0_18, %c3, %c0_19] : memref<2x11x64xf32, #tpu.memory_space<vmem>>, vector<2x5x64xf32>
    tpu.vector_store %arg13[%c0_18, %c3, %c0_19], %26 {strides = array<i32>} : memref<2x11x64xf32, #tpu.memory_space<vmem>>, vector<2x5x64xf32>,
    %c0_20 = arith.constant 0 : index
    %c0_21 = arith.constant 0 : index
    %c0_22 = arith.constant 0 : index
    %38 = vector.load %arg5[%c0_20, %c0_21, %c0_22] : memref<2x4x64xf32, #tpu.memory_space<vmem>>, vector<1x4x64xf32>
    %39 = vector.shape_cast %38 : vector<1x4x64xf32> to vector<4x64xf32>
    %40 = vector.extract_strided_slice %0 {offsets = [0, 0], sizes = [1, 64], strides = [1, 1]} : vector<11x64xf32> to vector<1x64xf32>
    %c0_23 = arith.constant 0 : index
    %c0_24 = arith.constant 0 : index
    %c0_25 = arith.constant 0 : index
    %41 = vector.load %arg13[%c0_23, %c0_24, %c0_25] : memref<2x11x64xf32, #tpu.memory_space<vmem>>, vector<2x8x64xf32>
    %42 = vector.extract_strided_slice %39 {offsets = [0, 0], sizes = [1, 64], strides = [1, 1]} : vector<4x64xf32> to vector<1x64xf32>
    %43 = vector.shape_cast %42 : vector<1x64xf32> to vector<1x1x64xf32>
    %44 = vector.broadcast %43 : vector<1x1x64xf32> to vector<2x8x64xf32>
    %45 = arith.mulf %41, %44 : vector<2x8x64xf32>
    %c0_26 = arith.constant 0 : index
    %c1 = arith.constant 1 : index
    %c0_27 = arith.constant 0 : index
    %46 = vector.load %arg13[%c0_26, %c1, %c0_27] : memref<2x11x64xf32, #tpu.memory_space<vmem>>, vector<2x8x64xf32>
    %47 = vector.extract_strided_slice %39 {offsets = [1, 0], sizes = [1, 64], strides = [1, 1]} : vector<4x64xf32> to vector<1x64xf32>
    %48 = vector.shape_cast %47 : vector<1x64xf32> to vector<1x1x64xf32>
    %49 = vector.broadcast %48 : vector<1x1x64xf32> to vector<2x8x64xf32>
    %50 = arith.mulf %46, %49 : vector<2x8x64xf32>
    %51 = arith.addf %45, %50 : vector<2x8x64xf32>
    %c0_28 = arith.constant 0 : index
    %c2 = arith.constant 2 : index
    %c0_29 = arith.constant 0 : index
    %52 = vector.load %arg13[%c0_28, %c2, %c0_29] : memref<2x11x64xf32, #tpu.memory_space<vmem>>, vector<2x8x64xf32>
    %53 = vector.extract_strided_slice %39 {offsets = [2, 0], sizes = [1, 64], strides = [1, 1]} : vector<4x64xf32> to vector<1x64xf32>
    %54 = vector.shape_cast %53 : vector<1x64xf32> to vector<1x1x64xf32>
    %55 = vector.broadcast %54 : vector<1x1x64xf32> to vector<2x8x64xf32>
    %56 = arith.mulf %52, %55 : vector<2x8x64xf32>
    %57 = arith.addf %51, %56 : vector<2x8x64xf32>
    %c0_30 = arith.constant 0 : index
    %c3_31 = arith.constant 3 : index
    %c0_32 = arith.constant 0 : index
    %58 = vector.load %arg13[%c0_30, %c3_31, %c0_32] : memref<2x11x64xf32, #tpu.memory_space<vmem>>, vector<2x8x64xf32>
    %59 = vector.extract_strided_slice %39 {offsets = [3, 0], sizes = [1, 64], strides = [1, 1]} : vector<4x64xf32> to vector<1x64xf32>
    %60 = vector.shape_cast %59 : vector<1x64xf32> to vector<1x1x64xf32>
    %61 = vector.broadcast %60 : vector<1x1x64xf32> to vector<2x8x64xf32>
    %62 = arith.mulf %58, %61 : vector<2x8x64xf32>
    %63 = arith.addf %57, %62 : vector<2x8x64xf32>
    %64 = vector.shape_cast %40 : vector<1x64xf32> to vector<1x1x64xf32>
    %65 = vector.broadcast %64 : vector<1x1x64xf32> to vector<2x8x64xf32>
    %66 = arith.addf %63, %65 : vector<2x8x64xf32>
    %67 = arith.negf %66 : vector<2x8x64xf32>
    %68 = math.exp %67 : vector<2x8x64xf32>
    %cst_33 = arith.constant 1.000000e+00 : f32
    %69 = vector.broadcast %cst_33 : f32 to vector<2x8x64xf32>
    %70 = arith.addf %69, %68 : vector<2x8x64xf32>
    %71 = arith.divf %69, %70 : vector<2x8x64xf32>
    %72 = arith.mulf %66, %71 : vector<2x8x64xf32>
    %c0_34 = arith.constant 0 : index
    %c3_35 = arith.constant 3 : index
    %c0_36 = arith.constant 0 : index
    %73 = vector.load %arg13[%c0_34, %c3_35, %c0_36] : memref<2x11x64xf32, #tpu.memory_space<vmem>>, vector<2x5x64xf32>
    tpu.vector_store %arg13[%c0_34, %c3_35, %c0_36], %32 {strides = array<i32>} : memref<2x11x64xf32, #tpu.memory_space<vmem>>, vector<2x5x64xf32>,
    %c1_37 = arith.constant 1 : index
    %c0_38 = arith.constant 0 : index
    %c0_39 = arith.constant 0 : index
    %74 = vector.load %arg5[%c1_37, %c0_38, %c0_39] : memref<2x4x64xf32, #tpu.memory_space<vmem>>, vector<1x4x64xf32>
    %75 = vector.shape_cast %74 : vector<1x4x64xf32> to vector<4x64xf32>
    %76 = vector.extract_strided_slice %0 {offsets = [1, 0], sizes = [1, 64], strides = [1, 1]} : vector<11x64xf32> to vector<1x64xf32>
    %c0_40 = arith.constant 0 : index
    %c0_41 = arith.constant 0 : index
    %c0_42 = arith.constant 0 : index
    %77 = vector.load %arg13[%c0_40, %c0_41, %c0_42] : memref<2x11x64xf32, #tpu.memory_space<vmem>>, vector<2x8x64xf32>
    %78 = vector.extract_strided_slice %75 {offsets = [0, 0], sizes = [1, 64], strides = [1, 1]} : vector<4x64xf32> to vector<1x64xf32>
    %79 = vector.shape_cast %78 : vector<1x64xf32> to vector<1x1x64xf32>
    %80 = vector.broadcast %79 : vector<1x1x64xf32> to vector<2x8x64xf32>
    %81 = arith.mulf %77, %80 : vector<2x8x64xf32>
    %c0_43 = arith.constant 0 : index
    %c1_44 = arith.constant 1 : index
    %c0_45 = arith.constant 0 : index
    %82 = vector.load %arg13[%c0_43, %c1_44, %c0_45] : memref<2x11x64xf32, #tpu.memory_space<vmem>>, vector<2x8x64xf32>
    %83 = vector.extract_strided_slice %75 {offsets = [1, 0], sizes = [1, 64], strides = [1, 1]} : vector<4x64xf32> to vector<1x64xf32>
    %84 = vector.shape_cast %83 : vector<1x64xf32> to vector<1x1x64xf32>
    %85 = vector.broadcast %84 : vector<1x1x64xf32> to vector<2x8x64xf32>
    %86 = arith.mulf %82, %85 : vector<2x8x64xf32>
    %87 = arith.addf %81, %86 : vector<2x8x64xf32>
    %c0_46 = arith.constant 0 : index
    %c2_47 = arith.constant 2 : index
    %c0_48 = arith.constant 0 : index
    %88 = vector.load %arg13[%c0_46, %c2_47, %c0_48] : memref<2x11x64xf32, #tpu.memory_space<vmem>>, vector<2x8x64xf32>
    %89 = vector.extract_strided_slice %75 {offsets = [2, 0], sizes = [1, 64], strides = [1, 1]} : vector<4x64xf32> to vector<1x64xf32>
    %90 = vector.shape_cast %89 : vector<1x64xf32> to vector<1x1x64xf32>
    %91 = vector.broadcast %90 : vector<1x1x64xf32> to vector<2x8x64xf32>
    %92 = arith.mulf %88, %91 : vector<2x8x64xf32>
    %93 = arith.addf %87, %92 : vector<2x8x64xf32>
    %c0_49 = arith.constant 0 : index
    %c3_50 = arith.constant 3 : index
    %c0_51 = arith.constant 0 : index
    %94 = vector.load %arg13[%c0_49, %c3_50, %c0_51] : memref<2x11x64xf32, #tpu.memory_space<vmem>>, vector<2x8x64xf32>
    %95 = vector.extract_strided_slice %75 {offsets = [3, 0], sizes = [1, 64], strides = [1, 1]} : vector<4x64xf32> to vector<1x64xf32>
    %96 = vector.shape_cast %95 : vector<1x64xf32> to vector<1x1x64xf32>
    %97 = vector.broadcast %96 : vector<1x1x64xf32> to vector<2x8x64xf32>
    %98 = arith.mulf %94, %97 : vector<2x8x64xf32>
    %99 = arith.addf %93, %98 : vector<2x8x64xf32>
    %100 = vector.shape_cast %76 : vector<1x64xf32> to vector<1x1x64xf32>
    %101 = vector.broadcast %100 : vector<1x1x64xf32> to vector<2x8x64xf32>
    %102 = arith.addf %99, %101 : vector<2x8x64xf32>
    %103 = arith.negf %102 : vector<2x8x64xf32>
    %104 = math.exp %103 : vector<2x8x64xf32>
    %cst_52 = arith.constant 1.000000e+00 : f32
    %105 = vector.broadcast %cst_52 : f32 to vector<2x8x64xf32>
    %106 = arith.addf %105, %104 : vector<2x8x64xf32>
    %107 = arith.divf %105, %106 : vector<2x8x64xf32>
    %108 = arith.mulf %102, %107 : vector<2x8x64xf32>
    %109 = vector.shape_cast %72 : vector<2x8x64xf32> to vector<16x64xf32>
    %110 = vector.extract_strided_slice %0 {offsets = [8, 0], sizes = [1, 34], strides = [1, 1]} : vector<11x64xf32> to vector<1x34xf32>
    %c0_53 = arith.constant 0 : index
    %c0_54 = arith.constant 0 : index
    %c0_55 = arith.constant 0 : index
    %111 = vector.load %arg6[%c0_53, %c0_54, %c0_55] : memref<2x64x34xf32, #tpu.memory_space<vmem>>, vector<1x64x34xf32>
    %112 = vector.shape_cast %111 : vector<1x64x34xf32> to vector<64x34xf32>
    %cst_56 = arith.constant dense<0.000000e+00> : vector<16x34xf32>
    %113 = tpu.matmul %109, %112, %cst_56 {dimension_numbers = #tpu.dot_dimension_numbers<[1], [0], [0], [1], [0, 0, 1, 1], [], []>} : vector<16x64xf32>, vector<64x34xf32>, vector<16x34xf32> -> vector<16x34xf32>
    %114 = vector.broadcast %110 : vector<1x34xf32> to vector<16x34xf32>
    %115 = arith.addf %113, %114 : vector<16x34xf32>
    %116 = vector.extract_strided_slice %0 {offsets = [2, 0], sizes = [1, 64], strides = [1, 1]} : vector<11x64xf32> to vector<1x64xf32>
    %117 = vector.extract_strided_slice %115 {offsets = [0, 0], sizes = [16, 2], strides = [1, 1]} : vector<16x34xf32> to vector<16x2xf32>
    %c0_57 = arith.constant 0 : index
    %c0_58 = arith.constant 0 : index
    %c0_59 = arith.constant 0 : index
    %118 = vector.load %arg7[%c0_57, %c0_58, %c0_59] : memref<2x2x64xf32, #tpu.memory_space<vmem>>, vector<1x2x64xf32>
    %119 = vector.shape_cast %118 : vector<1x2x64xf32> to vector<2x64xf32>
    %cst_60 = arith.constant dense<0.000000e+00> : vector<16x64xf32>
    %120 = tpu.matmul %117, %119, %cst_60 {dimension_numbers = #tpu.dot_dimension_numbers<[1], [0], [0], [1], [0, 0, 1, 1], [], []>} : vector<16x2xf32>, vector<2x64xf32>, vector<16x64xf32> -> vector<16x64xf32>
    %121 = vector.broadcast %116 : vector<1x64xf32> to vector<16x64xf32>
    %122 = arith.addf %120, %121 : vector<16x64xf32>
    %cst_61 = arith.constant 0.000000e+00 : f32
    %123 = vector.broadcast %cst_61 : f32 to vector<16x64xf32>
    %124 = arith.maximumf %122, %123 : vector<16x64xf32>
    %125 = vector.broadcast %cst_61 : f32 to vector<16x64xf32>
    %126 = arith.subf %122, %125 : vector<16x64xf32>
    %127 = arith.cmpf one, %126, %126 : vector<16x64xf32>
    %128 = vector.broadcast %cst_61 : f32 to vector<16x64xf32>
    %129 = arith.addf %122, %128 : vector<16x64xf32>
    %130 = math.absf %126 : vector<16x64xf32>
    %cst_62 = arith.constant 0.000000e+00 : f32
    %131 = vector.broadcast %cst_62 : f32 to vector<16x64xf32>
    %132 = arith.subf %131, %130 : vector<16x64xf32>
    %133 = math.exp %132 : vector<16x64xf32>
    %134 = math.log1p %133 : vector<16x64xf32>
    %135 = arith.addf %124, %134 : vector<16x64xf32>
    %136 = arith.select %127, %129, %135 : vector<16x64xi1>, vector<16x64xf32>
    %137 = vector.shape_cast %136 : vector<16x64xf32> to vector<2x8x64xf32>
    %138 = vector.extract_strided_slice %115 {offsets = [0, 2], sizes = [16, 16], strides = [1, 1]} : vector<16x34xf32> to vector<16x16xf32>
    %139 = vector.shape_cast %138 : vector<16x16xf32> to vector<2x8x16xf32>
    %140 = vector.extract_strided_slice %115 {offsets = [0, 18], sizes = [16, 16], strides = [1, 1]} : vector<16x34xf32> to vector<16x16xf32>
    %141 = vector.shape_cast %140 : vector<16x16xf32> to vector<2x8x16xf32>
    %c0_63 = arith.constant 0 : index
    %c0_64 = arith.constant 0 : index
    %c0_65 = arith.constant 0 : index
    %142 = vector.load %arg8[%c0_63, %c0_64, %c0_65] : memref<2x16x64xf32, #tpu.memory_space<vmem>>, vector<1x16x64xf32>
    %143 = vector.shape_cast %142 : vector<1x16x64xf32> to vector<16x64xf32>
    %144 = vector.shape_cast %137 : vector<2x8x64xf32> to vector<2x8x1x64xf32>
    %145 = vector.shape_cast %143 : vector<16x64xf32> to vector<1x1x16x64xf32>
    %146 = vector.broadcast %144 : vector<2x8x1x64xf32> to vector<2x8x16x64xf32>
    %147 = vector.broadcast %145 : vector<1x1x16x64xf32> to vector<2x8x16x64xf32>
    %148 = arith.mulf %146, %147 : vector<2x8x16x64xf32>
    %149 = math.exp %148 : vector<2x8x16x64xf32>
    %150 = vector.shape_cast %139 : vector<2x8x16xf32> to vector<2x8x16x1xf32>
    %151 = arith.mulf %137, %72 : vector<2x8x64xf32>
    %152 = vector.shape_cast %151 : vector<2x8x64xf32> to vector<2x8x1x64xf32>
    %153 = vector.broadcast %150 : vector<2x8x16x1xf32> to vector<2x8x16x64xf32>
    %154 = vector.broadcast %152 : vector<2x8x1x64xf32> to vector<2x8x16x64xf32>
    %155 = arith.mulf %153, %154 : vector<2x8x16x64xf32>
    %cst_66 = arith.constant 0.000000e+00 : f32
    %156 = vector.broadcast %cst_66 : f32 to vector<2x1x16x64xf32>
    %157 = vector.extract_strided_slice %149 {offsets = [0, 0, 0, 0], sizes = [2, 1, 16, 64], strides = [1, 1, 1, 1]} : vector<2x8x16x64xf32> to vector<2x1x16x64xf32>
    %158 = arith.mulf %157, %156 : vector<2x1x16x64xf32>
    %159 = vector.extract_strided_slice %155 {offsets = [0, 0, 0, 0], sizes = [2, 1, 16, 64], strides = [1, 1, 1, 1]} : vector<2x8x16x64xf32> to vector<2x1x16x64xf32>
    %160 = arith.addf %158, %159 : vector<2x1x16x64xf32>
    %c0_67 = arith.constant 0 : index
    %c0_68 = arith.constant 0 : index
    %c0_69 = arith.constant 0 : index
    %c0_70 = arith.constant 0 : index
    %161 = vector.load %arg14[%c0_67, %c0_68, %c0_69, %c0_70] : memref<2x8x16x64xf32, #tpu.memory_space<vmem>>, vector<2x1x16x64xf32>
    tpu.vector_store %arg14[%c0_67, %c0_68, %c0_69, %c0_70], %160 {strides = array<i32>} : memref<2x8x16x64xf32, #tpu.memory_space<vmem>>, vector<2x1x16x64xf32>,
    %162 = vector.extract_strided_slice %149 {offsets = [0, 1, 0, 0], sizes = [2, 1, 16, 64], strides = [1, 1, 1, 1]} : vector<2x8x16x64xf32> to vector<2x1x16x64xf32>
    %163 = arith.mulf %162, %160 : vector<2x1x16x64xf32>
    %164 = vector.extract_strided_slice %155 {offsets = [0, 1, 0, 0], sizes = [2, 1, 16, 64], strides = [1, 1, 1, 1]} : vector<2x8x16x64xf32> to vector<2x1x16x64xf32>
    %165 = arith.addf %163, %164 : vector<2x1x16x64xf32>
    %c0_71 = arith.constant 0 : index
    %c1_72 = arith.constant 1 : index
    %c0_73 = arith.constant 0 : index
    %c0_74 = arith.constant 0 : index
    %166 = vector.load %arg14[%c0_71, %c1_72, %c0_73, %c0_74] : memref<2x8x16x64xf32, #tpu.memory_space<vmem>>, vector<2x1x16x64xf32>
    tpu.vector_store %arg14[%c0_71, %c1_72, %c0_73, %c0_74], %165 {strides = array<i32>} : memref<2x8x16x64xf32, #tpu.memory_space<vmem>>, vector<2x1x16x64xf32>,
    %167 = vector.extract_strided_slice %149 {offsets = [0, 2, 0, 0], sizes = [2, 1, 16, 64], strides = [1, 1, 1, 1]} : vector<2x8x16x64xf32> to vector<2x1x16x64xf32>
    %168 = arith.mulf %167, %165 : vector<2x1x16x64xf32>
    %169 = vector.extract_strided_slice %155 {offsets = [0, 2, 0, 0], sizes = [2, 1, 16, 64], strides = [1, 1, 1, 1]} : vector<2x8x16x64xf32> to vector<2x1x16x64xf32>
    %170 = arith.addf %168, %169 : vector<2x1x16x64xf32>
    %c0_75 = arith.constant 0 : index
    %c2_76 = arith.constant 2 : index
    %c0_77 = arith.constant 0 : index
    %c0_78 = arith.constant 0 : index
    %171 = vector.load %arg14[%c0_75, %c2_76, %c0_77, %c0_78] : memref<2x8x16x64xf32, #tpu.memory_space<vmem>>, vector<2x1x16x64xf32>
    tpu.vector_store %arg14[%c0_75, %c2_76, %c0_77, %c0_78], %170 {strides = array<i32>} : memref<2x8x16x64xf32, #tpu.memory_space<vmem>>, vector<2x1x16x64xf32>,
    %172 = vector.extract_strided_slice %149 {offsets = [0, 3, 0, 0], sizes = [2, 1, 16, 64], strides = [1, 1, 1, 1]} : vector<2x8x16x64xf32> to vector<2x1x16x64xf32>
    %173 = arith.mulf %172, %170 : vector<2x1x16x64xf32>
    %174 = vector.extract_strided_slice %155 {offsets = [0, 3, 0, 0], sizes = [2, 1, 16, 64], strides = [1, 1, 1, 1]} : vector<2x8x16x64xf32> to vector<2x1x16x64xf32>
    %175 = arith.addf %173, %174 : vector<2x1x16x64xf32>
    %c0_79 = arith.constant 0 : index
    %c3_80 = arith.constant 3 : index
    %c0_81 = arith.constant 0 : index
    %c0_82 = arith.constant 0 : index
    %176 = vector.load %arg14[%c0_79, %c3_80, %c0_81, %c0_82] : memref<2x8x16x64xf32, #tpu.memory_space<vmem>>, vector<2x1x16x64xf32>
    tpu.vector_store %arg14[%c0_79, %c3_80, %c0_81, %c0_82], %175 {strides = array<i32>} : memref<2x8x16x64xf32, #tpu.memory_space<vmem>>, vector<2x1x16x64xf32>,
    %177 = vector.extract_strided_slice %149 {offsets = [0, 4, 0, 0], sizes = [2, 1, 16, 64], strides = [1, 1, 1, 1]} : vector<2x8x16x64xf32> to vector<2x1x16x64xf32>
    %178 = arith.mulf %177, %175 : vector<2x1x16x64xf32>
    %179 = vector.extract_strided_slice %155 {offsets = [0, 4, 0, 0], sizes = [2, 1, 16, 64], strides = [1, 1, 1, 1]} : vector<2x8x16x64xf32> to vector<2x1x16x64xf32>
    %180 = arith.addf %178, %179 : vector<2x1x16x64xf32>
    %c0_83 = arith.constant 0 : index
    %c4 = arith.constant 4 : index
    %c0_84 = arith.constant 0 : index
    %c0_85 = arith.constant 0 : index
    %181 = vector.load %arg14[%c0_83, %c4, %c0_84, %c0_85] : memref<2x8x16x64xf32, #tpu.memory_space<vmem>>, vector<2x1x16x64xf32>
    tpu.vector_store %arg14[%c0_83, %c4, %c0_84, %c0_85], %180 {strides = array<i32>} : memref<2x8x16x64xf32, #tpu.memory_space<vmem>>, vector<2x1x16x64xf32>,
    %182 = vector.extract_strided_slice %149 {offsets = [0, 5, 0, 0], sizes = [2, 1, 16, 64], strides = [1, 1, 1, 1]} : vector<2x8x16x64xf32> to vector<2x1x16x64xf32>
    %183 = arith.mulf %182, %180 : vector<2x1x16x64xf32>
    %184 = vector.extract_strided_slice %155 {offsets = [0, 5, 0, 0], sizes = [2, 1, 16, 64], strides = [1, 1, 1, 1]} : vector<2x8x16x64xf32> to vector<2x1x16x64xf32>
    %185 = arith.addf %183, %184 : vector<2x1x16x64xf32>
    %c0_86 = arith.constant 0 : index
    %c5 = arith.constant 5 : index
    %c0_87 = arith.constant 0 : index
    %c0_88 = arith.constant 0 : index
    %186 = vector.load %arg14[%c0_86, %c5, %c0_87, %c0_88] : memref<2x8x16x64xf32, #tpu.memory_space<vmem>>, vector<2x1x16x64xf32>
    tpu.vector_store %arg14[%c0_86, %c5, %c0_87, %c0_88], %185 {strides = array<i32>} : memref<2x8x16x64xf32, #tpu.memory_space<vmem>>, vector<2x1x16x64xf32>,
    %187 = vector.extract_strided_slice %149 {offsets = [0, 6, 0, 0], sizes = [2, 1, 16, 64], strides = [1, 1, 1, 1]} : vector<2x8x16x64xf32> to vector<2x1x16x64xf32>
    %188 = arith.mulf %187, %185 : vector<2x1x16x64xf32>
    %189 = vector.extract_strided_slice %155 {offsets = [0, 6, 0, 0], sizes = [2, 1, 16, 64], strides = [1, 1, 1, 1]} : vector<2x8x16x64xf32> to vector<2x1x16x64xf32>
    %190 = arith.addf %188, %189 : vector<2x1x16x64xf32>
    %c0_89 = arith.constant 0 : index
    %c6 = arith.constant 6 : index
    %c0_90 = arith.constant 0 : index
    %c0_91 = arith.constant 0 : index
    %191 = vector.load %arg14[%c0_89, %c6, %c0_90, %c0_91] : memref<2x8x16x64xf32, #tpu.memory_space<vmem>>, vector<2x1x16x64xf32>
    tpu.vector_store %arg14[%c0_89, %c6, %c0_90, %c0_91], %190 {strides = array<i32>} : memref<2x8x16x64xf32, #tpu.memory_space<vmem>>, vector<2x1x16x64xf32>,
    %192 = vector.extract_strided_slice %149 {offsets = [0, 7, 0, 0], sizes = [2, 1, 16, 64], strides = [1, 1, 1, 1]} : vector<2x8x16x64xf32> to vector<2x1x16x64xf32>
    %193 = arith.mulf %192, %190 : vector<2x1x16x64xf32>
    %194 = vector.extract_strided_slice %155 {offsets = [0, 7, 0, 0], sizes = [2, 1, 16, 64], strides = [1, 1, 1, 1]} : vector<2x8x16x64xf32> to vector<2x1x16x64xf32>
    %195 = arith.addf %193, %194 : vector<2x1x16x64xf32>
    %c0_92 = arith.constant 0 : index
    %c7 = arith.constant 7 : index
    %c0_93 = arith.constant 0 : index
    %c0_94 = arith.constant 0 : index
    %196 = vector.load %arg14[%c0_92, %c7, %c0_93, %c0_94] : memref<2x8x16x64xf32, #tpu.memory_space<vmem>>, vector<2x1x16x64xf32>
    tpu.vector_store %arg14[%c0_92, %c7, %c0_93, %c0_94], %195 {strides = array<i32>} : memref<2x8x16x64xf32, #tpu.memory_space<vmem>>, vector<2x1x16x64xf32>,
    %c0_95 = arith.constant 0 : index
    %c0_96 = arith.constant 0 : index
    %c0_97 = arith.constant 0 : index
    %c0_98 = arith.constant 0 : index
    %197 = vector.load %arg14[%c0_95, %c0_96, %c0_97, %c0_98] : memref<2x8x16x64xf32, #tpu.memory_space<vmem>>, vector<2x8x16x64xf32>
    %198 = vector.shape_cast %141 : vector<2x8x16xf32> to vector<2x8x16x1xf32>
    %199 = vector.broadcast %198 : vector<2x8x16x1xf32> to vector<2x8x16x64xf32>
    %200 = arith.mulf %197, %199 : vector<2x8x16x64xf32>
    %cst_99 = arith.constant dense<0.000000e+00> : vector<2x8x64xf32>
    %201 = vector.multi_reduction <add>, %200, %cst_99 [2] : vector<2x8x16x64xf32> to vector<2x8x64xf32>
    %202 = vector.extract_strided_slice %0 {offsets = [4, 0], sizes = [1, 64], strides = [1, 1]} : vector<11x64xf32> to vector<1x64xf32>
    %203 = vector.shape_cast %202 : vector<1x64xf32> to vector<1x1x64xf32>
    %204 = vector.broadcast %203 : vector<1x1x64xf32> to vector<2x8x64xf32>
    %205 = arith.mulf %204, %72 : vector<2x8x64xf32>
    %206 = arith.addf %201, %205 : vector<2x8x64xf32>
    %207 = vector.shape_cast %108 : vector<2x8x64xf32> to vector<16x64xf32>
    %208 = vector.extract_strided_slice %0 {offsets = [9, 0], sizes = [1, 34], strides = [1, 1]} : vector<11x64xf32> to vector<1x34xf32>
    %c1_100 = arith.constant 1 : index
    %c0_101 = arith.constant 0 : index
    %c0_102 = arith.constant 0 : index
    %209 = vector.load %arg6[%c1_100, %c0_101, %c0_102] : memref<2x64x34xf32, #tpu.memory_space<vmem>>, vector<1x64x34xf32>
    %210 = vector.shape_cast %209 : vector<1x64x34xf32> to vector<64x34xf32>
    %cst_103 = arith.constant dense<0.000000e+00> : vector<16x34xf32>
    %211 = tpu.matmul %207, %210, %cst_103 {dimension_numbers = #tpu.dot_dimension_numbers<[1], [0], [0], [1], [0, 0, 1, 1], [], []>} : vector<16x64xf32>, vector<64x34xf32>, vector<16x34xf32> -> vector<16x34xf32>
    %212 = vector.broadcast %208 : vector<1x34xf32> to vector<16x34xf32>
    %213 = arith.addf %211, %212 : vector<16x34xf32>
    %214 = vector.extract_strided_slice %0 {offsets = [3, 0], sizes = [1, 64], strides = [1, 1]} : vector<11x64xf32> to vector<1x64xf32>
    %215 = vector.extract_strided_slice %213 {offsets = [0, 0], sizes = [16, 2], strides = [1, 1]} : vector<16x34xf32> to vector<16x2xf32>
    %c1_104 = arith.constant 1 : index
    %c0_105 = arith.constant 0 : index
    %c0_106 = arith.constant 0 : index
    %216 = vector.load %arg7[%c1_104, %c0_105, %c0_106] : memref<2x2x64xf32, #tpu.memory_space<vmem>>, vector<1x2x64xf32>
    %217 = vector.shape_cast %216 : vector<1x2x64xf32> to vector<2x64xf32>
    %cst_107 = arith.constant dense<0.000000e+00> : vector<16x64xf32>
    %218 = tpu.matmul %215, %217, %cst_107 {dimension_numbers = #tpu.dot_dimension_numbers<[1], [0], [0], [1], [0, 0, 1, 1], [], []>} : vector<16x2xf32>, vector<2x64xf32>, vector<16x64xf32> -> vector<16x64xf32>
    %219 = vector.broadcast %214 : vector<1x64xf32> to vector<16x64xf32>
    %220 = arith.addf %218, %219 : vector<16x64xf32>
    %cst_108 = arith.constant 0.000000e+00 : f32
    %221 = vector.broadcast %cst_108 : f32 to vector<16x64xf32>
    %222 = arith.maximumf %220, %221 : vector<16x64xf32>
    %223 = vector.broadcast %cst_108 : f32 to vector<16x64xf32>
    %224 = arith.subf %220, %223 : vector<16x64xf32>
    %225 = arith.cmpf one, %224, %224 : vector<16x64xf32>
    %226 = vector.broadcast %cst_108 : f32 to vector<16x64xf32>
    %227 = arith.addf %220, %226 : vector<16x64xf32>
    %228 = math.absf %224 : vector<16x64xf32>
    %cst_109 = arith.constant 0.000000e+00 : f32
    %229 = vector.broadcast %cst_109 : f32 to vector<16x64xf32>
    %230 = arith.subf %229, %228 : vector<16x64xf32>
    %231 = math.exp %230 : vector<16x64xf32>
    %232 = math.log1p %231 : vector<16x64xf32>
    %233 = arith.addf %222, %232 : vector<16x64xf32>
    %234 = arith.select %225, %227, %233 : vector<16x64xi1>, vector<16x64xf32>
    %235 = vector.shape_cast %234 : vector<16x64xf32> to vector<2x8x64xf32>
    %236 = vector.extract_strided_slice %213 {offsets = [0, 2], sizes = [16, 16], strides = [1, 1]} : vector<16x34xf32> to vector<16x16xf32>
    %237 = vector.shape_cast %236 : vector<16x16xf32> to vector<2x8x16xf32>
    %238 = vector.extract_strided_slice %213 {offsets = [0, 18], sizes = [16, 16], strides = [1, 1]} : vector<16x34xf32> to vector<16x16xf32>
    %239 = vector.shape_cast %238 : vector<16x16xf32> to vector<2x8x16xf32>
    %c1_110 = arith.constant 1 : index
    %c0_111 = arith.constant 0 : index
    %c0_112 = arith.constant 0 : index
    %240 = vector.load %arg8[%c1_110, %c0_111, %c0_112] : memref<2x16x64xf32, #tpu.memory_space<vmem>>, vector<1x16x64xf32>
    %241 = vector.shape_cast %240 : vector<1x16x64xf32> to vector<16x64xf32>
    %242 = vector.shape_cast %235 : vector<2x8x64xf32> to vector<2x8x1x64xf32>
    %243 = vector.shape_cast %241 : vector<16x64xf32> to vector<1x1x16x64xf32>
    %244 = vector.broadcast %242 : vector<2x8x1x64xf32> to vector<2x8x16x64xf32>
    %245 = vector.broadcast %243 : vector<1x1x16x64xf32> to vector<2x8x16x64xf32>
    %246 = arith.mulf %244, %245 : vector<2x8x16x64xf32>
    %247 = math.exp %246 : vector<2x8x16x64xf32>
    %248 = vector.shape_cast %237 : vector<2x8x16xf32> to vector<2x8x16x1xf32>
    %249 = arith.mulf %235, %108 : vector<2x8x64xf32>
    %250 = vector.shape_cast %249 : vector<2x8x64xf32> to vector<2x8x1x64xf32>
    %251 = vector.broadcast %248 : vector<2x8x16x1xf32> to vector<2x8x16x64xf32>
    %252 = vector.broadcast %250 : vector<2x8x1x64xf32> to vector<2x8x16x64xf32>
    %253 = arith.mulf %251, %252 : vector<2x8x16x64xf32>
    %cst_113 = arith.constant 0.000000e+00 : f32
    %254 = vector.broadcast %cst_113 : f32 to vector<2x1x16x64xf32>
    %255 = vector.extract_strided_slice %247 {offsets = [0, 0, 0, 0], sizes = [2, 1, 16, 64], strides = [1, 1, 1, 1]} : vector<2x8x16x64xf32> to vector<2x1x16x64xf32>
    %256 = arith.mulf %255, %254 : vector<2x1x16x64xf32>
    %257 = vector.extract_strided_slice %253 {offsets = [0, 0, 0, 0], sizes = [2, 1, 16, 64], strides = [1, 1, 1, 1]} : vector<2x8x16x64xf32> to vector<2x1x16x64xf32>
    %258 = arith.addf %256, %257 : vector<2x1x16x64xf32>
    %c0_114 = arith.constant 0 : index
    %c0_115 = arith.constant 0 : index
    %c0_116 = arith.constant 0 : index
    %c0_117 = arith.constant 0 : index
    %259 = vector.load %arg14[%c0_114, %c0_115, %c0_116, %c0_117] : memref<2x8x16x64xf32, #tpu.memory_space<vmem>>, vector<2x1x16x64xf32>
    tpu.vector_store %arg14[%c0_114, %c0_115, %c0_116, %c0_117], %258 {strides = array<i32>} : memref<2x8x16x64xf32, #tpu.memory_space<vmem>>, vector<2x1x16x64xf32>,
    %260 = vector.extract_strided_slice %247 {offsets = [0, 1, 0, 0], sizes = [2, 1, 16, 64], strides = [1, 1, 1, 1]} : vector<2x8x16x64xf32> to vector<2x1x16x64xf32>
    %261 = arith.mulf %260, %258 : vector<2x1x16x64xf32>
    %262 = vector.extract_strided_slice %253 {offsets = [0, 1, 0, 0], sizes = [2, 1, 16, 64], strides = [1, 1, 1, 1]} : vector<2x8x16x64xf32> to vector<2x1x16x64xf32>
    %263 = arith.addf %261, %262 : vector<2x1x16x64xf32>
    %c0_118 = arith.constant 0 : index
    %c1_119 = arith.constant 1 : index
    %c0_120 = arith.constant 0 : index
    %c0_121 = arith.constant 0 : index
    %264 = vector.load %arg14[%c0_118, %c1_119, %c0_120, %c0_121] : memref<2x8x16x64xf32, #tpu.memory_space<vmem>>, vector<2x1x16x64xf32>
    tpu.vector_store %arg14[%c0_118, %c1_119, %c0_120, %c0_121], %263 {strides = array<i32>} : memref<2x8x16x64xf32, #tpu.memory_space<vmem>>, vector<2x1x16x64xf32>,
    %265 = vector.extract_strided_slice %247 {offsets = [0, 2, 0, 0], sizes = [2, 1, 16, 64], strides = [1, 1, 1, 1]} : vector<2x8x16x64xf32> to vector<2x1x16x64xf32>
    %266 = arith.mulf %265, %263 : vector<2x1x16x64xf32>
    %267 = vector.extract_strided_slice %253 {offsets = [0, 2, 0, 0], sizes = [2, 1, 16, 64], strides = [1, 1, 1, 1]} : vector<2x8x16x64xf32> to vector<2x1x16x64xf32>
    %268 = arith.addf %266, %267 : vector<2x1x16x64xf32>
    %c0_122 = arith.constant 0 : index
    %c2_123 = arith.constant 2 : index
    %c0_124 = arith.constant 0 : index
    %c0_125 = arith.constant 0 : index
    %269 = vector.load %arg14[%c0_122, %c2_123, %c0_124, %c0_125] : memref<2x8x16x64xf32, #tpu.memory_space<vmem>>, vector<2x1x16x64xf32>
    tpu.vector_store %arg14[%c0_122, %c2_123, %c0_124, %c0_125], %268 {strides = array<i32>} : memref<2x8x16x64xf32, #tpu.memory_space<vmem>>, vector<2x1x16x64xf32>,
    %270 = vector.extract_strided_slice %247 {offsets = [0, 3, 0, 0], sizes = [2, 1, 16, 64], strides = [1, 1, 1, 1]} : vector<2x8x16x64xf32> to vector<2x1x16x64xf32>
    %271 = arith.mulf %270, %268 : vector<2x1x16x64xf32>
    %272 = vector.extract_strided_slice %253 {offsets = [0, 3, 0, 0], sizes = [2, 1, 16, 64], strides = [1, 1, 1, 1]} : vector<2x8x16x64xf32> to vector<2x1x16x64xf32>
    %273 = arith.addf %271, %272 : vector<2x1x16x64xf32>
    %c0_126 = arith.constant 0 : index
    %c3_127 = arith.constant 3 : index
    %c0_128 = arith.constant 0 : index
    %c0_129 = arith.constant 0 : index
    %274 = vector.load %arg14[%c0_126, %c3_127, %c0_128, %c0_129] : memref<2x8x16x64xf32, #tpu.memory_space<vmem>>, vector<2x1x16x64xf32>
    tpu.vector_store %arg14[%c0_126, %c3_127, %c0_128, %c0_129], %273 {strides = array<i32>} : memref<2x8x16x64xf32, #tpu.memory_space<vmem>>, vector<2x1x16x64xf32>,
    %275 = vector.extract_strided_slice %247 {offsets = [0, 4, 0, 0], sizes = [2, 1, 16, 64], strides = [1, 1, 1, 1]} : vector<2x8x16x64xf32> to vector<2x1x16x64xf32>
    %276 = arith.mulf %275, %273 : vector<2x1x16x64xf32>
    %277 = vector.extract_strided_slice %253 {offsets = [0, 4, 0, 0], sizes = [2, 1, 16, 64], strides = [1, 1, 1, 1]} : vector<2x8x16x64xf32> to vector<2x1x16x64xf32>
    %278 = arith.addf %276, %277 : vector<2x1x16x64xf32>
    %c0_130 = arith.constant 0 : index
    %c4_131 = arith.constant 4 : index
    %c0_132 = arith.constant 0 : index
    %c0_133 = arith.constant 0 : index
    %279 = vector.load %arg14[%c0_130, %c4_131, %c0_132, %c0_133] : memref<2x8x16x64xf32, #tpu.memory_space<vmem>>, vector<2x1x16x64xf32>
    tpu.vector_store %arg14[%c0_130, %c4_131, %c0_132, %c0_133], %278 {strides = array<i32>} : memref<2x8x16x64xf32, #tpu.memory_space<vmem>>, vector<2x1x16x64xf32>,
    %280 = vector.extract_strided_slice %247 {offsets = [0, 5, 0, 0], sizes = [2, 1, 16, 64], strides = [1, 1, 1, 1]} : vector<2x8x16x64xf32> to vector<2x1x16x64xf32>
    %281 = arith.mulf %280, %278 : vector<2x1x16x64xf32>
    %282 = vector.extract_strided_slice %253 {offsets = [0, 5, 0, 0], sizes = [2, 1, 16, 64], strides = [1, 1, 1, 1]} : vector<2x8x16x64xf32> to vector<2x1x16x64xf32>
    %283 = arith.addf %281, %282 : vector<2x1x16x64xf32>
    %c0_134 = arith.constant 0 : index
    %c5_135 = arith.constant 5 : index
    %c0_136 = arith.constant 0 : index
    %c0_137 = arith.constant 0 : index
    %284 = vector.load %arg14[%c0_134, %c5_135, %c0_136, %c0_137] : memref<2x8x16x64xf32, #tpu.memory_space<vmem>>, vector<2x1x16x64xf32>
    tpu.vector_store %arg14[%c0_134, %c5_135, %c0_136, %c0_137], %283 {strides = array<i32>} : memref<2x8x16x64xf32, #tpu.memory_space<vmem>>, vector<2x1x16x64xf32>,
    %285 = vector.extract_strided_slice %247 {offsets = [0, 6, 0, 0], sizes = [2, 1, 16, 64], strides = [1, 1, 1, 1]} : vector<2x8x16x64xf32> to vector<2x1x16x64xf32>
    %286 = arith.mulf %285, %283 : vector<2x1x16x64xf32>
    %287 = vector.extract_strided_slice %253 {offsets = [0, 6, 0, 0], sizes = [2, 1, 16, 64], strides = [1, 1, 1, 1]} : vector<2x8x16x64xf32> to vector<2x1x16x64xf32>
    %288 = arith.addf %286, %287 : vector<2x1x16x64xf32>
    %c0_138 = arith.constant 0 : index
    %c6_139 = arith.constant 6 : index
    %c0_140 = arith.constant 0 : index
    %c0_141 = arith.constant 0 : index
    %289 = vector.load %arg14[%c0_138, %c6_139, %c0_140, %c0_141] : memref<2x8x16x64xf32, #tpu.memory_space<vmem>>, vector<2x1x16x64xf32>
    tpu.vector_store %arg14[%c0_138, %c6_139, %c0_140, %c0_141], %288 {strides = array<i32>} : memref<2x8x16x64xf32, #tpu.memory_space<vmem>>, vector<2x1x16x64xf32>,
    %290 = vector.extract_strided_slice %247 {offsets = [0, 7, 0, 0], sizes = [2, 1, 16, 64], strides = [1, 1, 1, 1]} : vector<2x8x16x64xf32> to vector<2x1x16x64xf32>
    %291 = arith.mulf %290, %288 : vector<2x1x16x64xf32>
    %292 = vector.extract_strided_slice %253 {offsets = [0, 7, 0, 0], sizes = [2, 1, 16, 64], strides = [1, 1, 1, 1]} : vector<2x8x16x64xf32> to vector<2x1x16x64xf32>
    %293 = arith.addf %291, %292 : vector<2x1x16x64xf32>
    %c0_142 = arith.constant 0 : index
    %c7_143 = arith.constant 7 : index
    %c0_144 = arith.constant 0 : index
    %c0_145 = arith.constant 0 : index
    %294 = vector.load %arg14[%c0_142, %c7_143, %c0_144, %c0_145] : memref<2x8x16x64xf32, #tpu.memory_space<vmem>>, vector<2x1x16x64xf32>
    tpu.vector_store %arg14[%c0_142, %c7_143, %c0_144, %c0_145], %293 {strides = array<i32>} : memref<2x8x16x64xf32, #tpu.memory_space<vmem>>, vector<2x1x16x64xf32>,
    %c0_146 = arith.constant 0 : index
    %c0_147 = arith.constant 0 : index
    %c0_148 = arith.constant 0 : index
    %c0_149 = arith.constant 0 : index
    %295 = vector.load %arg14[%c0_146, %c0_147, %c0_148, %c0_149] : memref<2x8x16x64xf32, #tpu.memory_space<vmem>>, vector<2x8x16x64xf32>
    %296 = vector.shape_cast %239 : vector<2x8x16xf32> to vector<2x8x16x1xf32>
    %297 = vector.broadcast %296 : vector<2x8x16x1xf32> to vector<2x8x16x64xf32>
    %298 = arith.mulf %295, %297 : vector<2x8x16x64xf32>
    %cst_150 = arith.constant dense<0.000000e+00> : vector<2x8x64xf32>
    %299 = vector.multi_reduction <add>, %298, %cst_150 [2] : vector<2x8x16x64xf32> to vector<2x8x64xf32>
    %300 = vector.extract_strided_slice %0 {offsets = [5, 0], sizes = [1, 64], strides = [1, 1]} : vector<11x64xf32> to vector<1x64xf32>
    %301 = vector.shape_cast %300 : vector<1x64xf32> to vector<1x1x64xf32>
    %302 = vector.broadcast %301 : vector<1x1x64xf32> to vector<2x8x64xf32>
    %303 = arith.mulf %302, %108 : vector<2x8x64xf32>
    %304 = arith.addf %299, %303 : vector<2x8x64xf32>
    %305 = vector.extract_strided_slice %206 {offsets = [0, 7, 0], sizes = [2, 1, 64], strides = [1, 1, 1]} : vector<2x8x64xf32> to vector<2x1x64xf32>
    %306 = vector.broadcast %305 : vector<2x1x64xf32> to vector<2x8x64xf32>
    %307 = arith.subf %206, %306 : vector<2x8x64xf32>
    %308 = arith.mulf %307, %307 : vector<2x8x64xf32>
    %cst_151 = arith.constant dense<0.000000e+00> : vector<2x8xf32>
    %309 = vector.multi_reduction <add>, %308, %cst_151 [2] : vector<2x8x64xf32> to vector<2x8xf32>
    %310 = vector.shape_cast %309 : vector<2x8xf32> to vector<2x8x1xf32>
    %311 = math.sqrt %310 : vector<2x8x1xf32>
    %cst_152 = arith.constant dense<0.000000e+00> : vector<2x1xf32>
    %312 = vector.multi_reduction <add>, %311, %cst_152 [1] : vector<2x8x1xf32> to vector<2x1xf32>
    %313 = vector.shape_cast %312 : vector<2x1xf32> to vector<2x1x1xf32>
    %cst_153 = arith.constant 8.000000e+00 : f32
    %314 = vector.broadcast %cst_153 : f32 to vector<2x1x1xf32>
    %315 = arith.divf %313, %314 : vector<2x1x1xf32>
    %316 = tpu.reciprocal %315 {approx = true} : vector<2x1x1xf32> -> vector<2x1x1xf32>
    %317 = vector.broadcast %316 : vector<2x1x1xf32> to vector<2x8x1xf32>
    %318 = arith.mulf %311, %317 : vector<2x8x1xf32>
    %cst_154 = arith.constant -5.000000e-01 : f32
    %319 = vector.broadcast %cst_154 : f32 to vector<2x8x1xf32>
    %320 = arith.mulf %319, %318 : vector<2x8x1xf32>
    %321 = arith.mulf %320, %318 : vector<2x8x1xf32>
    %322 = math.exp %321 : vector<2x8x1xf32>
    %cst_155 = arith.constant dense<0.000000e+00> : vector<2x1xf32>
    %323 = vector.multi_reduction <add>, %322, %cst_155 [1] : vector<2x8x1xf32> to vector<2x1xf32>
    %324 = vector.shape_cast %323 : vector<2x1xf32> to vector<2x1x1xf32>
    %325 = tpu.reciprocal %324 {approx = true} : vector<2x1x1xf32> -> vector<2x1x1xf32>
    %326 = vector.broadcast %325 : vector<2x1x1xf32> to vector<2x8x1xf32>
    %327 = arith.mulf %322, %326 : vector<2x8x1xf32>
    %328 = vector.broadcast %3 : vector<1x8x1xf32> to vector<2x8x1xf32>
    %329 = arith.mulf %328, %327 : vector<2x8x1xf32>
    %330 = arith.mulf %329, %329 : vector<2x8x1xf32>
    %cst_156 = arith.constant dense<0.000000e+00> : vector<2x1xf32>
    %331 = vector.multi_reduction <add>, %330, %cst_156 [1] : vector<2x8x1xf32> to vector<2x1xf32>
    %332 = vector.shape_cast %331 : vector<2x1xf32> to vector<2x1x1xf32>
    %333 = math.sqrt %332 : vector<2x1x1xf32>
    %cst_157 = arith.constant 9.99999996E-13 : f32
    %334 = vector.broadcast %cst_157 : f32 to vector<2x1x1xf32>
    %335 = arith.maximumf %333, %334 : vector<2x1x1xf32>
    %336 = tpu.reciprocal %335 {approx = true} : vector<2x1x1xf32> -> vector<2x1x1xf32>
    %337 = vector.broadcast %336 : vector<2x1x1xf32> to vector<2x8x1xf32>
    %338 = arith.mulf %329, %337 : vector<2x8x1xf32>
    %339 = vector.extract_strided_slice %304 {offsets = [0, 7, 0], sizes = [2, 1, 64], strides = [1, 1, 1]} : vector<2x8x64xf32> to vector<2x1x64xf32>
    %340 = vector.broadcast %339 : vector<2x1x64xf32> to vector<2x8x64xf32>
    %341 = arith.subf %304, %340 : vector<2x8x64xf32>
    %342 = arith.mulf %341, %341 : vector<2x8x64xf32>
    %cst_158 = arith.constant dense<0.000000e+00> : vector<2x8xf32>
    %343 = vector.multi_reduction <add>, %342, %cst_158 [2] : vector<2x8x64xf32> to vector<2x8xf32>
    %344 = vector.shape_cast %343 : vector<2x8xf32> to vector<2x8x1xf32>
    %345 = math.sqrt %344 : vector<2x8x1xf32>
    %cst_159 = arith.constant dense<0.000000e+00> : vector<2x1xf32>
    %346 = vector.multi_reduction <add>, %345, %cst_159 [1] : vector<2x8x1xf32> to vector<2x1xf32>
    %347 = vector.shape_cast %346 : vector<2x1xf32> to vector<2x1x1xf32>
    %cst_160 = arith.constant 8.000000e+00 : f32
    %348 = vector.broadcast %cst_160 : f32 to vector<2x1x1xf32>
    %349 = arith.divf %347, %348 : vector<2x1x1xf32>
    %350 = tpu.reciprocal %349 {approx = true} : vector<2x1x1xf32> -> vector<2x1x1xf32>
    %351 = vector.broadcast %350 : vector<2x1x1xf32> to vector<2x8x1xf32>
    %352 = arith.mulf %345, %351 : vector<2x8x1xf32>
    %cst_161 = arith.constant -5.000000e-01 : f32
    %353 = vector.broadcast %cst_161 : f32 to vector<2x8x1xf32>
    %354 = arith.mulf %353, %352 : vector<2x8x1xf32>
    %355 = arith.mulf %354, %352 : vector<2x8x1xf32>
    %356 = math.exp %355 : vector<2x8x1xf32>
    %cst_162 = arith.constant dense<0.000000e+00> : vector<2x1xf32>
    %357 = vector.multi_reduction <add>, %356, %cst_162 [1] : vector<2x8x1xf32> to vector<2x1xf32>
    %358 = vector.shape_cast %357 : vector<2x1xf32> to vector<2x1x1xf32>
    %359 = tpu.reciprocal %358 {approx = true} : vector<2x1x1xf32> -> vector<2x1x1xf32>
    %360 = vector.broadcast %359 : vector<2x1x1xf32> to vector<2x8x1xf32>
    %361 = arith.mulf %356, %360 : vector<2x8x1xf32>
    %362 = vector.broadcast %3 : vector<1x8x1xf32> to vector<2x8x1xf32>
    %363 = arith.mulf %362, %361 : vector<2x8x1xf32>
    %364 = arith.mulf %363, %363 : vector<2x8x1xf32>
    %cst_163 = arith.constant dense<0.000000e+00> : vector<2x1xf32>
    %365 = vector.multi_reduction <add>, %364, %cst_163 [1] : vector<2x8x1xf32> to vector<2x1xf32>
    %366 = vector.shape_cast %365 : vector<2x1xf32> to vector<2x1x1xf32>
    %367 = math.sqrt %366 : vector<2x1x1xf32>
    %cst_164 = arith.constant 9.99999996E-13 : f32
    %368 = vector.broadcast %cst_164 : f32 to vector<2x1x1xf32>
    %369 = arith.maximumf %367, %368 : vector<2x1x1xf32>
    %370 = tpu.reciprocal %369 {approx = true} : vector<2x1x1xf32> -> vector<2x1x1xf32>
    %371 = vector.broadcast %370 : vector<2x1x1xf32> to vector<2x8x1xf32>
    %372 = arith.mulf %363, %371 : vector<2x8x1xf32>
    %373 = vector.extract_strided_slice %372 {offsets = [0, 7, 0], sizes = [2, 1, 1], strides = [1, 1, 1]} : vector<2x8x1xf32> to vector<2x1x1xf32>
    %374 = vector.extract_strided_slice %372 {offsets = [0, 6, 0], sizes = [2, 1, 1], strides = [1, 1, 1]} : vector<2x8x1xf32> to vector<2x1x1xf32>
    %375 = vector.extract_strided_slice %372 {offsets = [0, 5, 0], sizes = [2, 1, 1], strides = [1, 1, 1]} : vector<2x8x1xf32> to vector<2x1x1xf32>
    %376 = vector.extract_strided_slice %372 {offsets = [0, 4, 0], sizes = [2, 1, 1], strides = [1, 1, 1]} : vector<2x8x1xf32> to vector<2x1x1xf32>
    %377 = vector.extract_strided_slice %372 {offsets = [0, 3, 0], sizes = [2, 1, 1], strides = [1, 1, 1]} : vector<2x8x1xf32> to vector<2x1x1xf32>
    %378 = vector.extract_strided_slice %372 {offsets = [0, 2, 0], sizes = [2, 1, 1], strides = [1, 1, 1]} : vector<2x8x1xf32> to vector<2x1x1xf32>
    %379 = vector.extract_strided_slice %372 {offsets = [0, 1, 0], sizes = [2, 1, 1], strides = [1, 1, 1]} : vector<2x8x1xf32> to vector<2x1x1xf32>
    %380 = vector.extract_strided_slice %372 {offsets = [0, 0, 0], sizes = [2, 1, 1], strides = [1, 1, 1]} : vector<2x8x1xf32> to vector<2x1x1xf32>
    %381 = tpu.concatenate %373, %374, %375, %376, %377, %378, %379, %380 in 1 : vector<2x1x1xf32>, vector<2x1x1xf32>, vector<2x1x1xf32>, vector<2x1x1xf32>, vector<2x1x1xf32>, vector<2x1x1xf32>, vector<2x1x1xf32>, vector<2x1x1xf32> -> vector<2x8x1xf32>
    %382 = vector.broadcast %338 : vector<2x8x1xf32> to vector<2x8x64xf32>
    %383 = arith.mulf %206, %382 : vector<2x8x64xf32>
    %384 = vector.broadcast %381 : vector<2x8x1xf32> to vector<2x8x64xf32>
    %385 = arith.mulf %304, %384 : vector<2x8x64xf32>
    %386 = tpu.concatenate %383, %385 in 2 : vector<2x8x64xf32>, vector<2x8x64xf32> -> vector<2x8x128xf32>
    %387 = vector.extract_strided_slice %0 {offsets = [6, 0], sizes = [1, 64], strides = [1, 1]} : vector<11x64xf32> to vector<1x64xf32>
    %388 = vector.shape_cast %386 : vector<2x8x128xf32> to vector<16x128xf32>
    %c0_165 = arith.constant 0 : index
    %c0_166 = arith.constant 0 : index
    %389 = vector.load %arg9[%c0_165, %c0_166] : memref<128x64xf32, #tpu.memory_space<vmem>>, vector<128x64xf32>
    %cst_167 = arith.constant dense<0.000000e+00> : vector<16x64xf32>
    %390 = tpu.matmul %388, %389, %cst_167 {dimension_numbers = #tpu.dot_dimension_numbers<[1], [0], [0], [1], [0, 0, 1, 1], [], []>} : vector<16x128xf32>, vector<128x64xf32>, vector<16x64xf32> -> vector<16x64xf32>
    %391 = vector.broadcast %387 : vector<1x64xf32> to vector<16x64xf32>
    %392 = arith.addf %390, %391 : vector<16x64xf32>
    %393 = vector.shape_cast %392 : vector<16x64xf32> to vector<2x8x64xf32>
    %394 = vector.extract_strided_slice %393 {offsets = [0, 4, 0], sizes = [2, 1, 64], strides = [1, 1, 1]} : vector<2x8x64xf32> to vector<2x1x64xf32>
    %395 = vector.broadcast %394 : vector<2x1x64xf32> to vector<2x8x64xf32>
    %396 = arith.subf %393, %395 : vector<2x8x64xf32>
    %397 = arith.mulf %396, %396 : vector<2x8x64xf32>
    %cst_168 = arith.constant dense<0.000000e+00> : vector<2x8xf32>
    %398 = vector.multi_reduction <add>, %397, %cst_168 [2] : vector<2x8x64xf32> to vector<2x8xf32>
    %399 = vector.shape_cast %398 : vector<2x8xf32> to vector<2x8x1xf32>
    %400 = math.sqrt %399 : vector<2x8x1xf32>
    %cst_169 = arith.constant dense<0.000000e+00> : vector<2x1xf32>
    %401 = vector.multi_reduction <add>, %400, %cst_169 [1] : vector<2x8x1xf32> to vector<2x1xf32>
    %402 = vector.shape_cast %401 : vector<2x1xf32> to vector<2x1x1xf32>
    %cst_170 = arith.constant 8.000000e+00 : f32
    %403 = vector.broadcast %cst_170 : f32 to vector<2x1x1xf32>
    %404 = arith.divf %402, %403 : vector<2x1x1xf32>
    %405 = tpu.reciprocal %404 {approx = true} : vector<2x1x1xf32> -> vector<2x1x1xf32>
    %406 = vector.broadcast %405 : vector<2x1x1xf32> to vector<2x8x1xf32>
    %407 = arith.mulf %400, %406 : vector<2x8x1xf32>
    %cst_171 = arith.constant -5.000000e-01 : f32
    %408 = vector.broadcast %cst_171 : f32 to vector<2x8x1xf32>
    %409 = arith.mulf %408, %407 : vector<2x8x1xf32>
    %410 = arith.mulf %409, %407 : vector<2x8x1xf32>
    %411 = math.exp %410 : vector<2x8x1xf32>
    %cst_172 = arith.constant dense<0.000000e+00> : vector<2x1xf32>
    %412 = vector.multi_reduction <add>, %411, %cst_172 [1] : vector<2x8x1xf32> to vector<2x1xf32>
    %413 = vector.shape_cast %412 : vector<2x1xf32> to vector<2x1x1xf32>
    %414 = tpu.reciprocal %413 {approx = true} : vector<2x1x1xf32> -> vector<2x1x1xf32>
    %415 = vector.broadcast %414 : vector<2x1x1xf32> to vector<2x8x1xf32>
    %416 = arith.mulf %411, %415 : vector<2x8x1xf32>
    %417 = vector.broadcast %5 : vector<1x8x1xf32> to vector<2x8x1xf32>
    %418 = arith.mulf %417, %416 : vector<2x8x1xf32>
    %419 = arith.mulf %418, %418 : vector<2x8x1xf32>
    %cst_173 = arith.constant dense<0.000000e+00> : vector<2x1xf32>
    %420 = vector.multi_reduction <add>, %419, %cst_173 [1] : vector<2x8x1xf32> to vector<2x1xf32>
    %421 = vector.shape_cast %420 : vector<2x1xf32> to vector<2x1x1xf32>
    %422 = math.sqrt %421 : vector<2x1x1xf32>
    %cst_174 = arith.constant 9.99999996E-13 : f32
    %423 = vector.broadcast %cst_174 : f32 to vector<2x1x1xf32>
    %424 = arith.maximumf %422, %423 : vector<2x1x1xf32>
    %425 = tpu.reciprocal %424 {approx = true} : vector<2x1x1xf32> -> vector<2x1x1xf32>
    %426 = vector.broadcast %425 : vector<2x1x1xf32> to vector<2x8x1xf32>
    %427 = arith.mulf %418, %426 : vector<2x8x1xf32>
    %428 = vector.broadcast %427 : vector<2x8x1xf32> to vector<2x8x64xf32>
    %429 = arith.mulf %393, %428 : vector<2x8x64xf32>
    %430 = vector.shape_cast %429 : vector<2x8x64xf32> to vector<16x64xf32>
    %c0_175 = arith.constant 0 : index
    %c0_176 = arith.constant 0 : index
    %431 = vector.load %arg10[%c0_175, %c0_176] : memref<64x73xf32, #tpu.memory_space<vmem>>, vector<64x73xf32>
    %cst_177 = arith.constant dense<0.000000e+00> : vector<16x73xf32>
    %432 = tpu.matmul %430, %431, %cst_177 {dimension_numbers = #tpu.dot_dimension_numbers<[1], [0], [0], [1], [0, 0, 1, 1], [], []>} : vector<16x64xf32>, vector<64x73xf32>, vector<16x73xf32> -> vector<16x73xf32>
    %433 = vector.extract_strided_slice %432 {offsets = [0, 0], sizes = [16, 64], strides = [1, 1]} : vector<16x73xf32> to vector<16x64xf32>
    %434 = vector.shape_cast %433 : vector<16x64xf32> to vector<2x8x64xf32>
    %435 = vector.extract_strided_slice %432 {offsets = [0, 64], sizes = [16, 9], strides = [1, 1]} : vector<16x73xf32> to vector<16x9xf32>
    %436 = vector.shape_cast %435 : vector<16x9xf32> to vector<2x8x9xf32>
    %437 = tpu.transpose %436, [0, 2, 1] : vector<2x8x9xf32> -> vector<2x9x8xf32>
    %cst_178 = arith.constant dense<0xFF800000> : vector<2x9xf32>
    %438 = vector.multi_reduction <maximumf>, %437, %cst_178 [2] : vector<2x9x8xf32> to vector<2x9xf32>
    %cst_179 = arith.constant 0xFF800000 : f32
    %439 = vector.broadcast %cst_179 : f32 to vector<2x9xf32>
    %440 = arith.maximumf %439, %438 : vector<2x9xf32>
    %441 = vector.shape_cast %440 : vector<2x9xf32> to vector<2x9x1xf32>
    %442 = vector.broadcast %441 : vector<2x9x1xf32> to vector<2x9x8xf32>
    %443 = arith.subf %437, %442 : vector<2x9x8xf32>
    %444 = math.exp %443 : vector<2x9x8xf32>
    %cst_180 = arith.constant dense<0.000000e+00> : vector<2x9xf32>
    %445 = vector.multi_reduction <add>, %444, %cst_180 [2] : vector<2x9x8xf32> to vector<2x9xf32>
    %446 = vector.shape_cast %445 : vector<2x9xf32> to vector<2x9x1xf32>
    %447 = vector.broadcast %446 : vector<2x9x1xf32> to vector<2x9x8xf32>
    %448 = arith.divf %444, %447 : vector<2x9x8xf32>
    "tpu.trace_start"() <{level = 10 : i32, message = "bsl,bld->bsd"}> : () -> ()
    %cst_181 = arith.constant dense<0.000000e+00> : vector<2x9x64xf32>
    %449 = tpu.matmul %448, %434, %cst_181 {dimension_numbers = #tpu.dot_dimension_numbers<[2], [1], [1], [2], [0, 0, 0, 1, 1, 2], [0], [0]>} : vector<2x9x8xf32>, vector<2x8x64xf32>, vector<2x9x64xf32> -> vector<2x9x64xf32>
    "tpu.trace_stop"() : () -> ()
    %450 = arith.negf %25 : vector<18x64xf32>
    %451 = math.exp %450 : vector<18x64xf32>
    %cst_182 = arith.constant 1.000000e+00 : f32
    %452 = vector.broadcast %cst_182 : f32 to vector<18x64xf32>
    %453 = arith.addf %452, %451 : vector<18x64xf32>
    %454 = arith.divf %452, %453 : vector<18x64xf32>
    %455 = arith.mulf %25, %454 : vector<18x64xf32>
    %456 = vector.shape_cast %455 : vector<18x64xf32> to vector<2x9x64xf32>
    %457 = arith.mulf %449, %456 : vector<2x9x64xf32>
    %458 = vector.shape_cast %457 : vector<2x9x64xf32> to vector<18x64xf32>
    %459 = tpu.concatenate %458, %7 in 1 : vector<18x64xf32>, vector<18x32xf32> -> vector<18x96xf32>
    %460 = vector.extract_strided_slice %0 {offsets = [10, 0], sizes = [1, 32], strides = [1, 1]} : vector<11x64xf32> to vector<1x32xf32>
    %c0_183 = arith.constant 0 : index
    %c0_184 = arith.constant 0 : index
    %461 = vector.load %arg11[%c0_183, %c0_184] : memref<96x32xf32, #tpu.memory_space<vmem>>, vector<96x32xf32>
    %cst_185 = arith.constant dense<0.000000e+00> : vector<18x32xf32>
    %462 = tpu.matmul %459, %461, %cst_185 {dimension_numbers = #tpu.dot_dimension_numbers<[1], [0], [0], [1], [0, 0, 1, 1], [], []>} : vector<18x96xf32>, vector<96x32xf32>, vector<18x32xf32> -> vector<18x32xf32>
    %463 = vector.broadcast %460 : vector<1x32xf32> to vector<18x32xf32>
    %464 = arith.addf %462, %463 : vector<18x32xf32>
    %465 = vector.shape_cast %464 : vector<18x32xf32> to vector<2x9x32xf32>
    %c0_186 = arith.constant 0 : index
    %c0_187 = arith.constant 0 : index
    %c0_188 = arith.constant 0 : index
    %466 = vector.load %arg12[%c0_186, %c0_187, %c0_188] : memref<2x9x32xf32, #tpu.memory_space<vmem>>, vector<2x9x32xf32>
    tpu.vector_store %arg12[%c0_186, %c0_187, %c0_188], %465 {strides = array<i32>} : memref<2x9x32xf32, #tpu.memory_space<vmem>>, vector<2x9x32xf32>,
    return
  }
  func.func @transform_0(%arg0: i32) -> (i32, i32, i32) {
    %c0_i32 = arith.constant 0 : i32
    %c0_i32_0 = arith.constant 0 : i32
    %c0_i32_1 = arith.constant 0 : i32
    return %arg0, %c0_i32, %c0_i32_0 : i32, i32, i32
  }
  func.func @transform_1(%arg0: i32) -> (i32, i32) {
    %c0_i32 = arith.constant 0 : i32
    %c0_i32_0 = arith.constant 0 : i32
    %c0_i32_1 = arith.constant 0 : i32
    return %c0_i32, %c0_i32_0 : i32, i32
  }
  func.func @transform_2(%arg0: i32) -> (i32, i32) {
    %c0_i32 = arith.constant 0 : i32
    %c0_i32_0 = arith.constant 0 : i32
    %c0_i32_1 = arith.constant 0 : i32
    return %c0_i32, %c0_i32_0 : i32, i32
  }
  func.func @transform_3(%arg0: i32) -> (i32, i32) {
    %c0_i32 = arith.constant 0 : i32
    %c0_i32_0 = arith.constant 0 : i32
    %c0_i32_1 = arith.constant 0 : i32
    return %c0_i32, %c0_i32_0 : i32, i32
  }
  func.func @transform_4(%arg0: i32) -> (i32, i32, i32) {
    %c0_i32 = arith.constant 0 : i32
    %c0_i32_0 = arith.constant 0 : i32
    %c0_i32_1 = arith.constant 0 : i32
    %c0_i32_2 = arith.constant 0 : i32
    return %c0_i32, %c0_i32_0, %c0_i32_1 : i32, i32, i32
  }
  func.func @transform_5(%arg0: i32) -> (i32, i32, i32) {
    %c0_i32 = arith.constant 0 : i32
    %c0_i32_0 = arith.constant 0 : i32
    %c0_i32_1 = arith.constant 0 : i32
    %c0_i32_2 = arith.constant 0 : i32
    return %c0_i32, %c0_i32_0, %c0_i32_1 : i32, i32, i32
  }
  func.func @transform_6(%arg0: i32) -> (i32, i32, i32) {
    %c0_i32 = arith.constant 0 : i32
    %c0_i32_0 = arith.constant 0 : i32
    %c0_i32_1 = arith.constant 0 : i32
    %c0_i32_2 = arith.constant 0 : i32
    return %c0_i32, %c0_i32_0, %c0_i32_1 : i32, i32, i32
  }
  func.func @transform_7(%arg0: i32) -> (i32, i32, i32) {
    %c0_i32 = arith.constant 0 : i32
    %c0_i32_0 = arith.constant 0 : i32
    %c0_i32_1 = arith.constant 0 : i32
    %c0_i32_2 = arith.constant 0 : i32
    return %c0_i32, %c0_i32_0, %c0_i32_1 : i32, i32, i32
  }
  func.func @transform_8(%arg0: i32) -> (i32, i32) {
    %c0_i32 = arith.constant 0 : i32
    %c0_i32_0 = arith.constant 0 : i32
    %c0_i32_1 = arith.constant 0 : i32
    return %c0_i32, %c0_i32_0 : i32, i32
  }
  func.func @transform_9(%arg0: i32) -> (i32, i32) {
    %c0_i32 = arith.constant 0 : i32
    %c0_i32_0 = arith.constant 0 : i32
    %c0_i32_1 = arith.constant 0 : i32
    return %c0_i32, %c0_i32_0 : i32, i32
  }
  func.func @transform_10(%arg0: i32) -> (i32, i32) {
    %c0_i32 = arith.constant 0 : i32
    %c0_i32_0 = arith.constant 0 : i32
    %c0_i32_1 = arith.constant 0 : i32
    return %c0_i32, %c0_i32_0 : i32, i32
  }
  func.func @transform_11(%arg0: i32) -> (i32, i32, i32) {
    %c0_i32 = arith.constant 0 : i32
    %c0_i32_0 = arith.constant 0 : i32
    %c0_i32_1 = arith.constant 0 : i32
    return %arg0, %c0_i32, %c0_i32_0 : i32, i32, i32
  }
}

</mosaic_0001>

<llo_original>
// kernel: tpu_custom_call.1
$region0: #{tpu_custom_call.1}
  #allocation0 [shape = 'u32[]', space=smem, size = 0x4, offset = 0x4, fixed_abs, tag = 'smem constant byte address 0x4 - core index']
  #allocation1 [shape = 'u32[144,128]{1,0:T(1,128)}', space=vmem, size = 0x12000, scoped, tag = 'internal scratch']
  #allocation2 [shape = 'f32[2,11,64]{2,1,0:T(8,128)}', space=vmem, size = 0x4000, scoped, tag = 'scratch operand']
  #allocation3 [shape = 'f32[2,8,16,64]{3,2,1,0:T(8,128)}', space=vmem, size = 0x20000, scoped, tag = 'scratch operand']
  %s0 = inlined_call_operand.vmem [shape: f32[2,9,32], index: 0, kind: input, shape index: {}]
  %s1 = inlined_call_operand.vmem [shape: f32[8,2], index: 1, kind: input, shape index: {}]
  %s2 = inlined_call_operand.vmem [shape: f32[11,64], index: 2, kind: input, shape index: {}]
  %s3 = inlined_call_operand.vmem [shape: f32[32,128], index: 3, kind: input, shape index: {}]
  %s4 = inlined_call_operand.vmem [shape: f32[2,4,64], index: 4, kind: input, shape index: {}]
  %s5 = inlined_call_operand.vmem [shape: f32[2,64,34], index: 5, kind: input, shape index: {}]
  %s6 = inlined_call_operand.vmem [shape: f32[2,2,64], index: 6, kind: input, shape index: {}]
  %s7 = inlined_call_operand.vmem [shape: f32[2,16,64], index: 7, kind: input, shape index: {}]
  %s8 = inlined_call_operand.vmem [shape: f32[128,64], index: 8, kind: input, shape index: {}]
  %s9 = inlined_call_operand.vmem [shape: f32[64,73], index: 9, kind: input, shape index: {}]
  %s10 = inlined_call_operand.vmem [shape: f32[96,32], index: 10, kind: input, shape index: {}]
  %s11 = inlined_call_operand.vmem [shape: f32[2,9,32], index: 11, kind: output, shape index: {}]
  %s12 = sld [smem:[#allocation0]]
  $region54: #{tpu_custom_call.1} parent=0
    _
  %s14 = ssub.s32 1, %s12
  %s15 = scalar_select 0, %s14, %s12
  // Predicated region
  $region2: #{tpu_custom_call.1} parent=0 // pred_check
    _
  $region3: #{tpu_custom_call.1} parent=0 // pred_check_branch
    %17 = sbr.rel (0) target = $region5
  $region4: #{tpu_custom_call.1} parent=0 // pred_region
    _
  $region5: #{tpu_custom_call.1} parent=0 // pred_fallthru
    _
  // Predicated region
  $region6: #{tpu_custom_call.1} parent=0 // pred_check
    _
  $region7: #{tpu_custom_call.1} parent=0 // pred_check_branch
    %19 = sbr.rel (0) target = $region9
  $region8: #{tpu_custom_call.1} parent=0 // pred_region
    _
  $region9: #{tpu_custom_call.1} parent=0 // pred_fallthru
    _
  // Predicated region
  $region10: #{tpu_custom_call.1} parent=0 // pred_check
    _
  $region11: #{tpu_custom_call.1} parent=0 // pred_check_branch
    %21 = sbr.rel (0) target = $region13
  $region12: #{tpu_custom_call.1} parent=0 // pred_region
    _
  $region13: #{tpu_custom_call.1} parent=0 // pred_fallthru
    _
  // Predicated region
  $region14: #{tpu_custom_call.1} parent=0 // pred_check
    _
  $region15: #{tpu_custom_call.1} parent=0 // pred_check_branch
    %23 = sbr.rel (0) target = $region17
  $region16: #{tpu_custom_call.1} parent=0 // pred_region
    _
  $region17: #{tpu_custom_call.1} parent=0 // pred_fallthru
    _
  // Predicated region
  $region18: #{tpu_custom_call.1} parent=0 // pred_check
    _
  $region19: #{tpu_custom_call.1} parent=0 // pred_check_branch
    %25 = sbr.rel (0) target = $region21
  $region20: #{tpu_custom_call.1} parent=0 // pred_region
    _
  $region21: #{tpu_custom_call.1} parent=0 // pred_fallthru
    _
  // Predicated region
  $region22: #{tpu_custom_call.1} parent=0 // pred_check
    _
  $region23: #{tpu_custom_call.1} parent=0 // pred_check_branch
    %27 = sbr.rel (0) target = $region25
  $region24: #{tpu_custom_call.1} parent=0 // pred_region
    _
  $region25: #{tpu_custom_call.1} parent=0 // pred_fallthru
    _
  // Predicated region
  $region26: #{tpu_custom_call.1} parent=0 // pred_check
    _
  $region27: #{tpu_custom_call.1} parent=0 // pred_check_branch
    %29 = sbr.rel (0) target = $region29
  $region28: #{tpu_custom_call.1} parent=0 // pred_region
    _
  $region29: #{tpu_custom_call.1} parent=0 // pred_fallthru
    _
  // Predicated region
  $region30: #{tpu_custom_call.1} parent=0 // pred_check
    _
  $region31: #{tpu_custom_call.1} parent=0 // pred_check_branch
    %31 = sbr.rel (0) target = $region33
  $region32: #{tpu_custom_call.1} parent=0 // pred_region
    _
  $region33: #{tpu_custom_call.1} parent=0 // pred_fallthru
    _
  // Predicated region
  $region34: #{tpu_custom_call.1} parent=0 // pred_check
    _
  $region35: #{tpu_custom_call.1} parent=0 // pred_check_branch
    %33 = sbr.rel (0) target = $region37
  $region36: #{tpu_custom_call.1} parent=0 // pred_region
    _
  $region37: #{tpu_custom_call.1} parent=0 // pred_fallthru
    _
  // Predicated region
  $region38: #{tpu_custom_call.1} parent=0 // pred_check
    _
  $region39: #{tpu_custom_call.1} parent=0 // pred_check_branch
    %35 = sbr.rel (0) target = $region41
  $region40: #{tpu_custom_call.1} parent=0 // pred_region
    _
  $region41: #{tpu_custom_call.1} parent=0 // pred_fallthru
    _
  // Predicated region
  $region42: #{tpu_custom_call.1} parent=0 // pred_check
    _
  $region43: #{tpu_custom_call.1} parent=0 // pred_check_branch
    %37 = sbr.rel (0) target = $region45
  $region44: #{tpu_custom_call.1} parent=0 // pred_region
    _
  $region45: #{tpu_custom_call.1} parent=0 // pred_fallthru
    _
  %v38 = vld [vmem:[%s2] sm:$0xff]
  %v39 = vld [vmem:[%s2 + $0x8] sm:$0x7]
  %v40 = vld [vmem:[%s1] sm:$0xff]
  %v41 = vld [vmem:[%s0] sm:$0xff]
  %v42 = vld [vmem:[%s0 + $0x8] sm:$0x1]
  %v43 = vld [vmem:[%s0 + $0x10] sm:$0xff]
  %v44 = vld [vmem:[%s0 + $0x18] sm:$0x1]
  %v49 = vcombine.high %v41, %v41
  %v51 = vunpack.c.l.s4 1966171168
  %v52 = vunpack.c.0.s8 %v51
  %v53 = vlaneseq
  %v54 = vshrl.u32 %v53, 7
  %v55 = vsub.s32 %v52, %v54
  %v56 = vrot.slane %v41, %v55
  %v58 = vunpack.c.l.s4 1966171168
  %v59 = vunpack.c.0.s8 %v58
  %v60 = vlaneseq
  %v61 = vshrl.u32 %v60, 7
  %v62 = vsub.s32 %v59, %v61
  %v63 = vrot.slane %v49, %v62
  %v64 = vcombine.high %v56, %v56
  %v65 = vcombine.high %v63, %v63
  %v67 = vunpack.c.l.s4 1966171168
  %v68 = vunpack.c.0.s8 %v67
  %v69 = vlaneseq
  %v70 = vshrl.u32 %v69, 7
  %v71 = vsub.s32 %v68, %v70
  %v72 = vrot.slane %v56, %v71
  %v74 = vunpack.c.l.s4 1966171168
  %v75 = vunpack.c.0.s8 %v74
  %v76 = vlaneseq
  %v77 = vshrl.u32 %v76, 7
  %v78 = vsub.s32 %v75, %v77
  %v79 = vrot.slane %v63, %v78
  %v81 = vunpack.c.l.s4 1966171168
  %v82 = vunpack.c.0.s8 %v81
  %v83 = vlaneseq
  %v84 = vshrl.u32 %v83, 7
  %v85 = vsub.s32 %v82, %v84
  %v86 = vrot.slane %v64, %v85
  %v88 = vunpack.c.l.s4 1966171168
  %v89 = vunpack.c.0.s8 %v88
  %v90 = vlaneseq
  %v91 = vshrl.u32 %v90, 7
  %v92 = vsub.s32 %v89, %v91
  %v93 = vrot.slane %v65, %v92
  %v94 = vcombine.high %v72, %v72
  %v95 = vcombine.high %v79, %v79
  %v96 = vcombine.high %v86, %v86
  %v97 = vcombine.high %v93, %v93
  %v99 = vunpack.c.l.s4 1966171168
  %v100 = vunpack.c.0.s8 %v99
  %v101 = vlaneseq
  %v102 = vshrl.u32 %v101, 7
  %v103 = vsub.s32 %v100, %v102
  %v104 = vrot.slane %v42, %v103
  %v106 = vunpack.c.l.s4 1966171168
  %v107 = vunpack.c.0.s8 %v106
  %v108 = vlaneseq
  %v109 = vshrl.u32 %v108, 7
  %v110 = vsub.s32 %v107, %v109
  %v111 = vrot.slane %v104, %v110
  %v112 = vcombine.high %v43, %v43
  %v114 = vunpack.c.l.s4 1966171168
  %v115 = vunpack.c.0.s8 %v114
  %v116 = vlaneseq
  %v117 = vshrl.u32 %v116, 7
  %v118 = vsub.s32 %v115, %v117
  %v119 = vrot.slane %v43, %v118
  %v121 = vunpack.c.l.s4 1966171168
  %v122 = vunpack.c.0.s8 %v121
  %v123 = vlaneseq
  %v124 = vshrl.u32 %v123, 7
  %v125 = vsub.s32 %v122, %v124
  %v126 = vrot.slane %v112, %v125
  %v127 = vcombine.high %v119, %v119
  %v128 = vcombine.high %v126, %v126
  %v130 = vunpack.c.l.s4 1966171168
  %v131 = vunpack.c.0.s8 %v130
  %v132 = vlaneseq
  %v133 = vshrl.u32 %v132, 7
  %v134 = vsub.s32 %v131, %v133
  %v135 = vrot.slane %v119, %v134
  %v137 = vunpack.c.l.s4 1966171168
  %v138 = vunpack.c.0.s8 %v137
  %v139 = vlaneseq
  %v140 = vshrl.u32 %v139, 7
  %v141 = vsub.s32 %v138, %v140
  %v142 = vrot.slane %v126, %v141
  %v144 = vunpack.c.l.s4 1966171168
  %v145 = vunpack.c.0.s8 %v144
  %v146 = vlaneseq
  %v147 = vshrl.u32 %v146, 7
  %v148 = vsub.s32 %v145, %v147
  %v149 = vrot.slane %v127, %v148
  %v151 = vunpack.c.l.s4 1966171168
  %v152 = vunpack.c.0.s8 %v151
  %v153 = vlaneseq
  %v154 = vshrl.u32 %v153, 7
  %v155 = vsub.s32 %v152, %v154
  %v156 = vrot.slane %v128, %v155
  %v157 = vcombine.high %v135, %v135
  %v158 = vcombine.high %v142, %v142
  %v159 = vcombine.high %v149, %v149
  %v160 = vcombine.high %v156, %v156
  %v162 = vunpack.c.l.s4 1966171168
  %v163 = vunpack.c.0.s8 %v162
  %v164 = vlaneseq
  %v165 = vshrl.u32 %v164, 7
  %v166 = vsub.s32 %v163, %v165
  %v167 = vrot.slane %v44, %v166
  %v169 = vunpack.c.l.s4 1966171168
  %v170 = vunpack.c.0.s8 %v169
  %v171 = vlaneseq
  %v172 = vshrl.u32 %v171, 7
  %v173 = vsub.s32 %v170, %v172
  %v174 = vrot.slane %v167, %v173
  %v193 = vmul.f32 %v72, %v72
  %v194 = vmul.f32 %v86, %v86
  %v195 = vmul.f32 %v94, %v94
  %v196 = vmul.f32 %v96, %v96
  %v197 = vmul.f32 %v79, %v79
  %v198 = vmul.f32 %v93, %v93
  %v199 = vmul.f32 %v95, %v95
  %v200 = vmul.f32 %v97, %v97
  %v201 = vmul.f32 %v111, %v111
  %v202 = vmul.f32 %v135, %v135
  %v203 = vmul.f32 %v149, %v149
  %v204 = vmul.f32 %v157, %v157
  %v205 = vmul.f32 %v159, %v159
  %v206 = vmul.f32 %v142, %v142
  %v207 = vmul.f32 %v156, %v156
  %v208 = vmul.f32 %v158, %v158
  %v209 = vmul.f32 %v160, %v160
  %v210 = vmul.f32 %v174, %v174
  %v229 = vcombine.low %v193, %v194
  %v230 = vcombine.low %v195, %v196
  %v231 = vcombine.low %v197, %v198
  %v232 = vcombine.low %v199, %v200
  %v234 = vunpack.c.l.s4 1966171168
  %v235 = vunpack.c.0.s8 %v234
  %v236 = vlaneseq
  %v237 = vshrl.u32 %v236, 7
  %v238 = vsub.s32 %v235, %v237
  %v239 = vrot.slane %v229, %v238
  %v241 = vunpack.c.l.s4 1966171168
  %v242 = vunpack.c.0.s8 %v241
  %v243 = vlaneseq
  %v244 = vshrl.u32 %v243, 7
  %v245 = vsub.s32 %v242, %v244
  %v246 = vrot.slane %v230, %v245
  %v248 = vunpack.c.l.s4 1966171168
  %v249 = vunpack.c.0.s8 %v248
  %v250 = vlaneseq
  %v251 = vshrl.u32 %v250, 7
  %v252 = vsub.s32 %v249, %v251
  %v253 = vrot.slane %v231, %v252
  %v255 = vunpack.c.l.s4 1966171168
  %v256 = vunpack.c.0.s8 %v255
  %v257 = vlaneseq
  %v258 = vshrl.u32 %v257, 7
  %v259 = vsub.s32 %v256, %v258
  %v260 = vrot.slane %v232, %v259
  %v261 = vcombine.low %v239, %v246
  %v262 = vcombine.low %v253, %v260
  %v264 = vunpack.c.l.s4 1966171168
  %v265 = vunpack.c.0.s8 %v264
  %v266 = vlaneseq
  %v267 = vshrl.u32 %v266, 7
  %v268 = vsub.s32 %v265, %v267
  %v269 = vrot.slane %v261, %v268
  %v271 = vunpack.c.l.s4 1966171168
  %v272 = vunpack.c.0.s8 %v271
  %v273 = vlaneseq
  %v274 = vshrl.u32 %v273, 7
  %v275 = vsub.s32 %v272, %v274
  %v276 = vrot.slane %v262, %v275
  %v277 = vcombine.low %v269, %v276
  %v278 = vcombine.low %v201, %v202
  %v279 = vcombine.low %v203, %v204
  %v280 = vcombine.low %v205, %v206
  %v281 = vcombine.low %v207, %v208
  %v283 = vunpack.c.l.s4 1966171168
  %v284 = vunpack.c.0.s8 %v283
  %v285 = vlaneseq
  %v286 = vshrl.u32 %v285, 7
  %v287 = vsub.s32 %v284, %v286
  %v288 = vrot.slane %v278, %v287
  %v290 = vunpack.c.l.s4 1966171168
  %v291 = vunpack.c.0.s8 %v290
  %v292 = vlaneseq
  %v293 = vshrl.u32 %v292, 7
  %v294 = vsub.s32 %v291, %v293
  %v295 = vrot.slane %v279, %v294
  %v297 = vunpack.c.l.s4 1966171168
  %v298 = vunpack.c.0.s8 %v297
  %v299 = vlaneseq
  %v300 = vshrl.u32 %v299, 7
  %v301 = vsub.s32 %v298, %v300
  %v302 = vrot.slane %v280, %v301
  %v304 = vunpack.c.l.s4 1966171168
  %v305 = vunpack.c.0.s8 %v304
  %v306 = vlaneseq
  %v307 = vshrl.u32 %v306, 7
  %v308 = vsub.s32 %v305, %v307
  %v309 = vrot.slane %v281, %v308
  %v310 = vcombine.low %v288, %v295
  %v311 = vcombine.low %v302, %v309
  %v313 = vunpack.c.l.s4 1966171168
  %v314 = vunpack.c.0.s8 %v313
  %v315 = vlaneseq
  %v316 = vshrl.u32 %v315, 7
  %v317 = vsub.s32 %v314, %v316
  %v318 = vrot.slane %v310, %v317
  %v320 = vunpack.c.l.s4 1966171168
  %v321 = vunpack.c.0.s8 %v320
  %v322 = vlaneseq
  %v323 = vshrl.u32 %v322, 7
  %v324 = vsub.s32 %v321, %v323
  %v325 = vrot.slane %v311, %v324
  %v326 = vcombine.low %v318, %v325
  %v327 = vcombine.low %v209, %v210
  %v329 = vunpack.c.l.s4 1966171168
  %v330 = vunpack.c.0.s8 %v329
  %v331 = vlaneseq
  %v332 = vshrl.u32 %v331, 7
  %v333 = vsub.s32 %v330, %v332
  %v334 = vrot.slane %v327, %v333
  %v336 = vunpack.c.l.s4 1966171168
  %v337 = vunpack.c.0.s8 %v336
  %v338 = vlaneseq
  %v339 = vshrl.u32 %v338, 7
  %v340 = vsub.s32 %v337, %v339
  %v341 = vrot.slane %v334, %v340
  %vm345 = vcmask 261120
  %v346 = vsel %vm345, %v277, 0.0
  %347 = vadd.xlane.f32.xlu0 %v346
  %v348 = vpop.xlane.xlu0 %347
  %v349 = vsel %vm345, %v326, 0.0
  %350 = vadd.xlane.f32.xlu0 %v349
  %v351 = vpop.xlane.xlu0 %350
  %vm352 = vcmask 254976
  %v353 = vsel %vm352, %v341, 0.0
  %354 = vadd.xlane.f32.xlu0 %v353
  %v355 = vpop.xlane.xlu0 %354
  %v356 = vrcp.pop 32.0
  %v357 = vmul.f32 %v348, %v356
  %v358 = vmul.f32 %v351, %v356
  %v359 = vmul.f32 %v355, %v356
  %v360 = vadd.f32 %v357, 1e-05
  %v361 = vadd.f32 %v358, 1e-05
  %v362 = vadd.f32 %v359, 1e-05
  %v363 = vrsqrt.pop %v360
  %v364 = vrsqrt.pop %v361
  %v365 = vrsqrt.pop %v362
  %v369 = vlaneseq
  %v370 = vshrl.u32 %v369, 7
  %v371 = vsub.s32 0, %v370
  %v372 = vrot.slane %v363, %v371
  %v373 = vlaneseq
  %v374 = vshrl.u32 %v373, 7
  %v375 = vsub.s32 1, %v374
  %v376 = vrot.slane %v363, %v375
  %v377 = vlaneseq
  %v378 = vshrl.u32 %v377, 7
  %v379 = vsub.s32 2, %v378
  %v380 = vrot.slane %v363, %v379
  %v381 = vlaneseq
  %v382 = vshrl.u32 %v381, 7
  %v383 = vsub.s32 3, %v382
  %v384 = vrot.slane %v363, %v383
  %v385 = vlaneseq
  %v386 = vshrl.u32 %v385, 7
  %v387 = vsub.s32 4, %v386
  %v388 = vrot.slane %v363, %v387
  %v389 = vlaneseq
  %v390 = vshrl.u32 %v389, 7
  %v391 = vsub.s32 5, %v390
  %v392 = vrot.slane %v363, %v391
  %v393 = vlaneseq
  %v394 = vshrl.u32 %v393, 7
  %v395 = vsub.s32 6, %v394
  %v396 = vrot.slane %v363, %v395
  %v397 = vlaneseq
  %v398 = vshrl.u32 %v397, 7
  %v399 = vsub.s32 7, %v398
  %v400 = vrot.slane %v363, %v399
  %v401 = vlaneseq
  %v402 = vshrl.u32 %v401, 7
  %v403 = vsub.s32 0, %v402
  %v404 = vrot.slane %v364, %v403
  %v405 = vlaneseq
  %v406 = vshrl.u32 %v405, 7
  %v407 = vsub.s32 1, %v406
  %v408 = vrot.slane %v364, %v407
  %v409 = vlaneseq
  %v410 = vshrl.u32 %v409, 7
  %v411 = vsub.s32 2, %v410
  %v412 = vrot.slane %v364, %v411
  %v413 = vlaneseq
  %v414 = vshrl.u32 %v413, 7
  %v415 = vsub.s32 3, %v414
  %v416 = vrot.slane %v364, %v415
  %v417 = vlaneseq
  %v418 = vshrl.u32 %v417, 7
  %v419 = vsub.s32 4, %v418
  %v420 = vrot.slane %v364, %v419
  %v421 = vlaneseq
  %v422 = vshrl.u32 %v421, 7
  %v423 = vsub.s32 5, %v422
  %v424 = vrot.slane %v364, %v423
  %v425 = vlaneseq
  %v426 = vshrl.u32 %v425, 7
  %v427 = vsub.s32 6, %v426
  %v428 = vrot.slane %v364, %v427
  %v429 = vlaneseq
  %v430 = vshrl.u32 %v429, 7
  %v431 = vsub.s32 7, %v430
  %v432 = vrot.slane %v364, %v431
  %v433 = vlaneseq
  %v434 = vshrl.u32 %v433, 7
  %v435 = vsub.s32 0, %v434
  %v436 = vrot.slane %v365, %v435
  %v437 = vlaneseq
  %v438 = vshrl.u32 %v437, 7
  %v439 = vsub.s32 1, %v438
  %v440 = vrot.slane %v365, %v439
  %v459 = vmul.f32 %v72, %v372
  %v460 = vmul.f32 %v86, %v376
  %v461 = vmul.f32 %v94, %v380
  %v462 = vmul.f32 %v96, %v384
  %v463 = vmul.f32 %v79, %v388
  %v464 = vmul.f32 %v93, %v392
  %v465 = vmul.f32 %v95, %v396
  %v466 = vmul.f32 %v97, %v400
  %v467 = vmul.f32 %v111, %v404
  %v468 = vmul.f32 %v135, %v408
  %v469 = vmul.f32 %v149, %v412
  %v470 = vmul.f32 %v157, %v416
  %v471 = vmul.f32 %v159, %v420
  %v472 = vmul.f32 %v142, %v424
  %v473 = vmul.f32 %v156, %v428
  %v474 = vmul.f32 %v158, %v432
  %v475 = vmul.f32 %v160, %v436
  %v476 = vmul.f32 %v174, %v440
  %v477 = vlaneseq
  %v478 = vshrl.u32 %v477, 7
  %v479 = vsub.s32 7, %v478
  %v480 = vrot.slane %v38, %v479
  %v482 = vcombine.high %v480, %v480
  %v484 = vunpack.c.l.s4 1966171168
  %v485 = vunpack.c.0.s8 %v484
  %v486 = vlaneseq
  %v487 = vshrl.u32 %v486, 7
  %v488 = vsub.s32 %v485, %v487
  %v489 = vrot.slane %v480, %v488
  %v491 = vunpack.c.l.s4 1966171168
  %v492 = vunpack.c.0.s8 %v491
  %v493 = vlaneseq
  %v494 = vshrl.u32 %v493, 7
  %v495 = vsub.s32 %v492, %v494
  %v496 = vrot.slane %v482, %v495
  %v497 = vcombine.high %v489, %v489
  %v498 = vcombine.high %v496, %v496
  %v500 = vunpack.c.l.s4 1966171168
  %v501 = vunpack.c.0.s8 %v500
  %v502 = vlaneseq
  %v503 = vshrl.u32 %v502, 7
  %v504 = vsub.s32 %v501, %v503
  %v505 = vrot.slane %v489, %v504
  %v507 = vunpack.c.l.s4 1966171168
  %v508 = vunpack.c.0.s8 %v507
  %v509 = vlaneseq
  %v510 = vshrl.u32 %v509, 7
  %v511 = vsub.s32 %v508, %v510
  %v512 = vrot.slane %v496, %v511
  %v514 = vunpack.c.l.s4 1966171168
  %v515 = vunpack.c.0.s8 %v514
  %v516 = vlaneseq
  %v517 = vshrl.u32 %v516, 7
  %v518 = vsub.s32 %v515, %v517
  %v519 = vrot.slane %v497, %v518
  %v521 = vunpack.c.l.s4 1966171168
  %v522 = vunpack.c.0.s8 %v521
  %v523 = vlaneseq
  %v524 = vshrl.u32 %v523, 7
  %v525 = vsub.s32 %v522, %v524
  %v526 = vrot.slane %v498, %v525
  %v527 = vcombine.high %v505, %v505
  %v528 = vcombine.high %v512, %v512
  %v529 = vcombine.high %v519, %v519
  %v530 = vcombine.high %v526, %v526
  %v539 = vmul.f32 %v459, %v505
  %v540 = vmul.f32 %v460, %v519
  %v541 = vmul.f32 %v461, %v527
  %v542 = vmul.f32 %v462, %v529
  %v543 = vmul.f32 %v463, %v512
  %v544 = vmul.f32 %v464, %v526
  %v545 = vmul.f32 %v465, %v528
  %v546 = vmul.f32 %v466, %v530
  %v547 = vmul.f32 %v467, %v505
  %v548 = vmul.f32 %v468, %v519
  %v549 = vmul.f32 %v469, %v527
  %v550 = vmul.f32 %v470, %v529
  %v551 = vmul.f32 %v471, %v512
  %v552 = vmul.f32 %v472, %v526
  %v553 = vmul.f32 %v473, %v528
  %v554 = vmul.f32 %v474, %v530
  %v555 = vmul.f32 %v475, %v505
  %v556 = vmul.f32 %v476, %v519
  %v557 = vld [vmem:[%s3] sm:$0xff]
  %v558 = vld [vmem:[%s3 + $0x8] sm:$0xff]
  %v559 = vld [vmem:[%s3 + $0x10] sm:$0xff]
  %v560 = vld [vmem:[%s3 + $0x18] sm:$0xff]
  %v579 = vcombine.low %v539, %v540
  %v580 = vcombine.low %v541, %v542
  %v581 = vcombine.low %v543, %v544
  %v582 = vcombine.low %v545, %v546
  %v584 = vunpack.c.l.s4 1966171168
  %v585 = vunpack.c.0.s8 %v584
  %v586 = vlaneseq
  %v587 = vshrl.u32 %v586, 7
  %v588 = vsub.s32 %v585, %v587
  %v589 = vrot.slane %v579, %v588
  %v591 = vunpack.c.l.s4 1966171168
  %v592 = vunpack.c.0.s8 %v591
  %v593 = vlaneseq
  %v594 = vshrl.u32 %v593, 7
  %v595 = vsub.s32 %v592, %v594
  %v596 = vrot.slane %v580, %v595
  %v598 = vunpack.c.l.s4 1966171168
  %v599 = vunpack.c.0.s8 %v598
  %v600 = vlaneseq
  %v601 = vshrl.u32 %v600, 7
  %v602 = vsub.s32 %v599, %v601
  %v603 = vrot.slane %v581, %v602
  %v605 = vunpack.c.l.s4 1966171168
  %v606 = vunpack.c.0.s8 %v605
  %v607 = vlaneseq
  %v608 = vshrl.u32 %v607, 7
  %v609 = vsub.s32 %v606, %v608
  %v610 = vrot.slane %v582, %v609
  %v611 = vcombine.low %v589, %v596
  %v612 = vcombine.low %v603, %v610
  %v614 = vunpack.c.l.s4 1966171168
  %v615 = vunpack.c.0.s8 %v614
  %v616 = vlaneseq
  %v617 = vshrl.u32 %v616, 7
  %v618 = vsub.s32 %v615, %v617
  %v619 = vrot.slane %v611, %v618
  %v621 = vunpack.c.l.s4 1966171168
  %v622 = vunpack.c.0.s8 %v621
  %v623 = vlaneseq
  %v624 = vshrl.u32 %v623, 7
  %v625 = vsub.s32 %v622, %v624
  %v626 = vrot.slane %v612, %v625
  %v627 = vcombine.low %v619, %v626
  %v628 = vcombine.low %v547, %v548
  %v629 = vcombine.low %v549, %v550
  %v630 = vcombine.low %v551, %v552
  %v631 = vcombine.low %v553, %v554
  %v633 = vunpack.c.l.s4 1966171168
  %v634 = vunpack.c.0.s8 %v633
  %v635 = vlaneseq
  %v636 = vshrl.u32 %v635, 7
  %v637 = vsub.s32 %v634, %v636
  %v638 = vrot.slane %v628, %v637
  %v640 = vunpack.c.l.s4 1966171168
  %v641 = vunpack.c.0.s8 %v640
  %v642 = vlaneseq
  %v643 = vshrl.u32 %v642, 7
  %v644 = vsub.s32 %v641, %v643
  %v645 = vrot.slane %v629, %v644
  %v647 = vunpack.c.l.s4 1966171168
  %v648 = vunpack.c.0.s8 %v647
  %v649 = vlaneseq
  %v650 = vshrl.u32 %v649, 7
  %v651 = vsub.s32 %v648, %v650
  %v652 = vrot.slane %v630, %v651
  %v654 = vunpack.c.l.s4 1966171168
  %v655 = vunpack.c.0.s8 %v654
  %v656 = vlaneseq
  %v657 = vshrl.u32 %v656, 7
  %v658 = vsub.s32 %v655, %v657
  %v659 = vrot.slane %v631, %v658
  %v660 = vcombine.low %v638, %v645
  %v661 = vcombine.low %v652, %v659
  %v663 = vunpack.c.l.s4 1966171168
  %v664 = vunpack.c.0.s8 %v663
  %v665 = vlaneseq
  %v666 = vshrl.u32 %v665, 7
  %v667 = vsub.s32 %v664, %v666
  %v668 = vrot.slane %v660, %v667
  %v670 = vunpack.c.l.s4 1966171168
  %v671 = vunpack.c.0.s8 %v670
  %v672 = vlaneseq
  %v673 = vshrl.u32 %v672, 7
  %v674 = vsub.s32 %v671, %v673
  %v675 = vrot.slane %v661, %v674
  %v676 = vcombine.low %v668, %v675
  %v677 = vcombine.low %v555, %v556
  %v679 = vunpack.c.l.s4 1966171168
  %v680 = vunpack.c.0.s8 %v679
  %v681 = vlaneseq
  %v682 = vshrl.u32 %v681, 7
  %v683 = vsub.s32 %v680, %v682
  %v684 = vrot.slane %v677, %v683
  %v686 = vunpack.c.l.s4 1966171168
  %v687 = vunpack.c.0.s8 %v686
  %v688 = vlaneseq
  %v689 = vshrl.u32 %v688, 7
  %v690 = vsub.s32 %v687, %v689
  %v691 = vrot.slane %v684, %v690
  %v692 = vsel %vm345, %v627, 0
  %v694 = vsel %vm345, %v676, 0
  %v696 = vsel %vm345, %v691, 0
  %698 = vmatprep.subr.mxu0 0.0
  %699 = vmatpush1.msra.mxu0 0.0
  %700 = vmatprep.subr.mxu0 0.0
  %701 = vmatpush1.msra.mxu0 0.0
  %702 = vmatprep.subr.mxu0 0.0
  %703 = vmatpush1.msra.mxu0 0.0
  %704 = vmatprep.subr.mxu0 0.0
  %705 = vmatpush1.msra.mxu0 0.0
  %706 = vmatprep.subr.mxu0 0.0
  %707 = vmatpush1.msra.mxu0 0.0
  %708 = vmatprep.subr.mxu0 0.0
  %709 = vmatpush1.msra.mxu0 0.0
  %710 = vmatprep.subr.mxu0 0.0
  %711 = vmatpush1.msra.mxu0 0.0
  %712 = vmatprep.subr.mxu0 0.0
  %713 = vmatpush1.msra.mxu0 0.0
  %714 = vmatprep.subr.mxu0 0.0
  %715 = vmatpush1.msra.mxu0 0.0
  %716 = vmatprep.subr.mxu0 0.0
  %717 = vmatpush1.msra.mxu0 0.0
  %718 = vmatprep.subr.mxu0 0.0
  %719 = vmatpush1.msra.mxu0 0.0
  %720 = vmatprep.subr.mxu0 0.0
  %721 = vmatpush1.msra.mxu0 0.0
  %722 = vmatprep.subr.mxu0 0.0
  %723 = vmatpush1.msra.mxu0 %v560
  %724 = vmatprep.subr.mxu0 0.0
  %725 = vmatpush1.msra.mxu0 %v559
  %726 = vmatprep.subr.mxu0 0.0
  %727 = vmatpush1.msra.mxu0 %v558
  %728 = vmatprep.subr.mxu0 0.0
  %729 = vmatpush1.msra.mxu0 %v557
  %730 = vmatprep.subr.mxu0 0.0
  %731 = vmatpush2.msra.mxu0 0.0
  %732 = vmatprep.subr.mxu0 0.0
  %733 = vmatpush2.msra.mxu0 0.0
  %734 = vmatprep.subr.mxu0 0.0
  %735 = vmatpush2.msra.mxu0 0.0
  %736 = vmatprep.subr.mxu0 0.0
  %737 = vmatpush2.msra.mxu0 0.0
  %738 = vmatprep.subr.mxu0 0.0
  %739 = vmatpush2.msra.mxu0 0.0
  %740 = vmatprep.subr.mxu0 0.0
  %741 = vmatpush2.msra.mxu0 0.0
  %742 = vmatprep.subr.mxu0 0.0
  %743 = vmatpush2.msra.mxu0 0.0
  %744 = vmatprep.subr.mxu0 0.0
  %745 = vmatpush2.msra.mxu0 0.0
  %746 = vmatprep.subr.mxu0 0.0
  %747 = vmatpush2.msra.mxu0 0.0
  %748 = vmatprep.subr.mxu0 0.0
  %749 = vmatpush2.msra.mxu0 0.0
  %750 = vmatprep.subr.mxu0 0.0
  %751 = vmatpush2.msra.mxu0 0.0
  %752 = vmatprep.subr.mxu0 0.0
  %753 = vmatpush2.msra.mxu0 0.0
  %754 = vmatprep.subr.mxu0 0.0
  %755 = vmatpush2.msra.mxu0 0.0
  %756 = vmatprep.subr.mxu0 0.0
  %757 = vmatpush2.msra.mxu0 0.0
  %758 = vmatprep.subr.mxu0 0.0
  %759 = vmatpush2.msra.mxu0 0.0
  %760 = vmatprep.subr.mxu0 0.0
  %761 = vmatpush2.msra.mxu0 0.0
  %762 = vmatprep.mubr.f32.mxu0 0.0
  %763 = vmatmul.mubr.f32.gmra.mxu0 %v692
  %v764 = vpop.f32.mrf.mxu0
  %v765 = vadd.f32 0.0, %v764
  %v766 = vpop.f32.mrf.mxu0
  %767 = vmatprep.mubr.f32.mxu0 0.0
  %768 = vmatmul.mubr.f32.gmra.mxu0 %v694
  %v769 = vpop.f32.mrf.mxu0
  %v770 = vadd.f32 0.0, %v769
  %v771 = vpop.f32.mrf.mxu0
  %772 = vmatprep.mubr.f32.mxu0 0.0
  %773 = vmatmul.mubr.f32.gmra.mxu0 %v696
  %v774 = vpop.f32.mrf.mxu0
  %v775 = vadd.f32 0.0, %v774
  %v776 = vpop.f32.mrf.mxu0
  %777 = vdwg.mxu0
  %v781 = vcombine.high %v765, %v765
  %v783 = vunpack.c.l.s4 1966171168
  %v784 = vunpack.c.0.s8 %v783
  %v785 = vlaneseq
  %v786 = vshrl.u32 %v785, 7
  %v787 = vsub.s32 %v784, %v786
  %v788 = vrot.slane %v765, %v787
  %v790 = vunpack.c.l.s4 1966171168
  %v791 = vunpack.c.0.s8 %v790
  %v792 = vlaneseq
  %v793 = vshrl.u32 %v792, 7
  %v794 = vsub.s32 %v791, %v793
  %v795 = vrot.slane %v781, %v794
  %v796 = vcombine.high %v788, %v788
  %v797 = vcombine.high %v795, %v795
  %v799 = vunpack.c.l.s4 1966171168
  %v800 = vunpack.c.0.s8 %v799
  %v801 = vlaneseq
  %v802 = vshrl.u32 %v801, 7
  %v803 = vsub.s32 %v800, %v802
  %v804 = vrot.slane %v788, %v803
  %v806 = vunpack.c.l.s4 1966171168
  %v807 = vunpack.c.0.s8 %v806
  %v808 = vlaneseq
  %v809 = vshrl.u32 %v808, 7
  %v810 = vsub.s32 %v807, %v809
  %v811 = vrot.slane %v795, %v810
  %v813 = vunpack.c.l.s4 1966171168
  %v814 = vunpack.c.0.s8 %v813
  %v815 = vlaneseq
  %v816 = vshrl.u32 %v815, 7
  %v817 = vsub.s32 %v814, %v816
  %v818 = vrot.slane %v796, %v817
  %v820 = vunpack.c.l.s4 1966171168
  %v821 = vunpack.c.0.s8 %v820
  %v822 = vlaneseq
  %v823 = vshrl.u32 %v822, 7
  %v824 = vsub.s32 %v821, %v823
  %v825 = vrot.slane %v797, %v824
  %v826 = vcombine.high %v804, %v804
  %v827 = vcombine.high %v811, %v811
  %v828 = vcombine.high %v818, %v818
  %v829 = vcombine.high %v825, %v825
  %v830 = vcombine.high %v770, %v770
  %v832 = vunpack.c.l.s4 1966171168
  %v833 = vunpack.c.0.s8 %v832
  %v834 = vlaneseq
  %v835 = vshrl.u32 %v834, 7
  %v836 = vsub.s32 %v833, %v835
  %v837 = vrot.slane %v770, %v836
  %v839 = vunpack.c.l.s4 1966171168
  %v840 = vunpack.c.0.s8 %v839
  %v841 = vlaneseq
  %v842 = vshrl.u32 %v841, 7
  %v843 = vsub.s32 %v840, %v842
  %v844 = vrot.slane %v830, %v843
  %v845 = vcombine.high %v837, %v837
  %v846 = vcombine.high %v844, %v844
  %v848 = vunpack.c.l.s4 1966171168
  %v849 = vunpack.c.0.s8 %v848
  %v850 = vlaneseq
  %v851 = vshrl.u32 %v850, 7
  %v852 = vsub.s32 %v849, %v851
  %v853 = vrot.slane %v837, %v852
  %v855 = vunpack.c.l.s4 1966171168
  %v856 = vunpack.c.0.s8 %v855
  %v857 = vlaneseq
  %v858 = vshrl.u32 %v857, 7
  %v859 = vsub.s32 %v856, %v858
  %v860 = vrot.slane %v844, %v859
  %v862 = vunpack.c.l.s4 1966171168
  %v863 = vunpack.c.0.s8 %v862
  %v864 = vlaneseq
  %v865 = vshrl.u32 %v864, 7
  %v866 = vsub.s32 %v863, %v865
  %v867 = vrot.slane %v845, %v866
  %v869 = vunpack.c.l.s4 1966171168
  %v870 = vunpack.c.0.s8 %v869
  %v871 = vlaneseq
  %v872 = vshrl.u32 %v871, 7
  %v873 = vsub.s32 %v870, %v872
  %v874 = vrot.slane %v846, %v873
  %v875 = vcombine.high %v853, %v853
  %v876 = vcombine.high %v860, %v860
  %v877 = vcombine.high %v867, %v867
  %v878 = vcombine.high %v874, %v874
  %v880 = vunpack.c.l.s4 1966171168
  %v881 = vunpack.c.0.s8 %v880
  %v882 = vlaneseq
  %v883 = vshrl.u32 %v882, 7
  %v884 = vsub.s32 %v881, %v883
  %v885 = vrot.slane %v775, %v884
  %v886 = vcombine.high %v885, %v885
  %v888 = vunpack.c.l.s4 1966171168
  %v889 = vunpack.c.0.s8 %v888
  %v890 = vlaneseq
  %v891 = vshrl.u32 %v890, 7
  %v892 = vsub.s32 %v889, %v891
  %v893 = vrot.slane %v885, %v892
  %v895 = vunpack.c.l.s4 1966171168
  %v896 = vunpack.c.0.s8 %v895
  %v897 = vlaneseq
  %v898 = vshrl.u32 %v897, 7
  %v899 = vsub.s32 %v896, %v898
  %v900 = vrot.slane %v886, %v899
  %v903 = vlaneseq
  %v904 = vshrl.u32 %v903, 7
  %v905 = vsub.s32 0, %v904
  %v906 = vrot.slane %v829, %v905
  %v907 = vlaneseq
  %v908 = vshrl.u32 %v907, 7
  %v909 = vsub.s32 0, %v908
  %v910 = vrot.slane %v893, %v909
  %v913 = vlaneseq
  %v914 = vshrl.u32 %v913, 7
  %v915 = vsub.s32 0, %v914
  %v916 = vrot.slane %v827, %v915
  %v917 = vlaneseq
  %v918 = vshrl.u32 %v917, 7
  %v919 = vsub.s32 0, %v918
  %v920 = vrot.slane %v878, %v919
  %v923 = vlaneseq
  %v924 = vshrl.u32 %v923, 7
  %v925 = vsub.s32 0, %v924
  %v926 = vrot.slane %v825, %v925
  %v927 = vlaneseq
  %v928 = vshrl.u32 %v927, 7
  %v929 = vsub.s32 0, %v928
  %v930 = vrot.slane %v876, %v929
  %v933 = vlaneseq
  %v934 = vshrl.u32 %v933, 7
  %v935 = vsub.s32 0, %v934
  %v936 = vrot.slane %v811, %v935
  %v937 = vlaneseq
  %v938 = vshrl.u32 %v937, 7
  %v939 = vsub.s32 0, %v938
  %v940 = vrot.slane %v874, %v939
  %vm943 = vcmask 1040384
  %v944 = vsel %vm943, %v853, %v906
  %v945 = vsel %vm943, %v900, %v910
  %vm946 = vcmask 1041408
  %v947 = vsel %vm946, %v944, %v916
  %v948 = vsel %vm946, %v945, %v920
  %vm949 = vcmask 1042432
  %v950 = vsel %vm949, %v947, %v926
  %v951 = vsel %vm949, %v948, %v930
  %vm952 = vcmask 1043456
  %v953 = vsel %vm952, %v950, %v936
  %v954 = vsel %vm952, %v951, %v940
  %vm955 = vcmask 518144
  %956 = vst.msk [vmem:[#allocation2] sm:$0x7] %vm955, 0.0
  %957 = vst.msk [vmem:[#allocation2 + $0x10] sm:$0x7] %vm955, 0.0
  %958 = vst.msk [vmem:[#allocation2 + $0x8] sm:$0x7] %vm955, 0.0
  %959 = vst.msk [vmem:[#allocation2 + $0x18] sm:$0x7] %vm955, 0.0
  %v960 = vcombine.low %v804, %v818
  %v961 = vcombine.low %v826, %v828
  %v963 = vunpack.c.l.s4 1966171168
  %v964 = vunpack.c.0.s8 %v963
  %v965 = vlaneseq
  %v966 = vshrl.u32 %v965, 7
  %v967 = vsub.s32 %v964, %v966
  %v968 = vrot.slane %v960, %v967
  %v970 = vunpack.c.l.s4 1966171168
  %v971 = vunpack.c.0.s8 %v970
  %v972 = vlaneseq
  %v973 = vshrl.u32 %v972, 7
  %v974 = vsub.s32 %v971, %v973
  %v975 = vrot.slane %v961, %v974
  %v977 = vunpack.c.l.s4 1966171168
  %v978 = vunpack.c.0.s8 %v977
  %v979 = vlaneseq
  %v980 = vshrl.u32 %v979, 7
  %v981 = vsub.s32 %v978, %v980
  %v982 = vrot.slane %v811, %v981
  %v983 = vcombine.low %v968, %v975
  %v985 = vunpack.c.l.s4 1966171168
  %v986 = vunpack.c.0.s8 %v985
  %v987 = vlaneseq
  %v988 = vshrl.u32 %v987, 7
  %v989 = vsub.s32 %v986, %v988
  %v990 = vrot.slane %v983, %v989
  %v992 = vunpack.c.l.s4 1966171168
  %v993 = vunpack.c.0.s8 %v992
  %v994 = vlaneseq
  %v995 = vshrl.u32 %v994, 7
  %v996 = vsub.s32 %v993, %v995
  %v997 = vrot.slane %v982, %v996
  %v998 = vcombine.low %v990, %v997
  %v999 = vcombine.low %v867, %v875
  %v1000 = vcombine.low %v877, %v860
  %v1002 = vunpack.c.l.s4 1966171168
  %v1003 = vunpack.c.0.s8 %v1002
  %v1004 = vlaneseq
  %v1005 = vshrl.u32 %v1004, 7
  %v1006 = vsub.s32 %v1003, %v1005
  %v1007 = vrot.slane %v999, %v1006
  %v1009 = vunpack.c.l.s4 1966171168
  %v1010 = vunpack.c.0.s8 %v1009
  %v1011 = vlaneseq
  %v1012 = vshrl.u32 %v1011, 7
  %v1013 = vsub.s32 %v1010, %v1012
  %v1014 = vrot.slane %v1000, %v1013
  %v1016 = vunpack.c.l.s4 1966171168
  %v1017 = vunpack.c.0.s8 %v1016
  %v1018 = vlaneseq
  %v1019 = vshrl.u32 %v1018, 7
  %v1020 = vsub.s32 %v1017, %v1019
  %v1021 = vrot.slane %v874, %v1020
  %v1022 = vcombine.low %v1007, %v1014
  %v1024 = vunpack.c.l.s4 1966171168
  %v1025 = vunpack.c.0.s8 %v1024
  %v1026 = vlaneseq
  %v1027 = vshrl.u32 %v1026, 7
  %v1028 = vsub.s32 %v1025, %v1027
  %v1029 = vrot.slane %v1022, %v1028
  %v1031 = vunpack.c.l.s4 1966171168
  %v1032 = vunpack.c.0.s8 %v1031
  %v1033 = vlaneseq
  %v1034 = vshrl.u32 %v1033, 7
  %v1035 = vsub.s32 %v1032, %v1034
  %v1036 = vrot.slane %v1021, %v1035
  %v1037 = vcombine.low %v1029, %v1036
  %vm1040 = vcmask 520192
  %1041 = vst.msk [vmem:[#allocation2 + $0x3] sm:$0x1f] %vm1040, %v998
  %1042 = vst.msk [vmem:[#allocation2 + $0x13] sm:$0x1f] %vm1040, %v1037
  %v1043 = vld [vmem:[%s4] sm:$0xf]
  %v1044 = vld [vmem:[#allocation2] sm:$0xff]
  %v1045 = vld [vmem:[#allocation2 + $0x10] sm:$0xff]
  %v1046 = vlaneseq
  %v1047 = vshrl.u32 %v1046, 7
  %v1048 = vsub.s32 0, %v1047
  %v1049 = vrot.slane %v1043, %v1048
  %v1050 = vmul.f32 %v1044, %v1049
  %v1051 = vmul.f32 %v1045, %v1049
  %v1052 = vld [vmem:[#allocation2 + $0x1] sm:$0xff]
  %v1053 = vld [vmem:[#allocation2 + $0x11] sm:$0xff]
  %v1054 = vlaneseq
  %v1055 = vshrl.u32 %v1054, 7
  %v1056 = vsub.s32 1, %v1055
  %v1057 = vrot.slane %v1043, %v1056
  %v1058 = vmul.f32 %v1052, %v1057
  %v1059 = vmul.f32 %v1053, %v1057
  %v1060 = vadd.f32 %v1050, %v1058
  %v1061 = vadd.f32 %v1051, %v1059
  %v1062 = vld [vmem:[#allocation2 + $0x2] sm:$0xff]
  %v1063 = vld [vmem:[#allocation2 + $0x12] sm:$0xff]
  %v1064 = vlaneseq
  %v1065 = vshrl.u32 %v1064, 7
  %v1066 = vsub.s32 2, %v1065
  %v1067 = vrot.slane %v1043, %v1066
  %v1068 = vmul.f32 %v1062, %v1067
  %v1069 = vmul.f32 %v1063, %v1067
  %v1070 = vadd.f32 %v1060, %v1068
  %v1071 = vadd.f32 %v1061, %v1069
  %v1072 = vld [vmem:[#allocation2 + $0x3] sm:$0xff]
  %v1073 = vld [vmem:[#allocation2 + $0x13] sm:$0xff]
  %v1074 = vlaneseq
  %v1075 = vshrl.u32 %v1074, 7
  %v1076 = vsub.s32 3, %v1075
  %v1077 = vrot.slane %v1043, %v1076
  %v1078 = vmul.f32 %v1072, %v1077
  %v1079 = vmul.f32 %v1073, %v1077
  %v1080 = vadd.f32 %v1070, %v1078
  %v1081 = vadd.f32 %v1071, %v1079
  %v1082 = vlaneseq
  %v1083 = vshrl.u32 %v1082, 7
  %v1084 = vsub.s32 0, %v1083
  %v1085 = vrot.slane %v38, %v1084
  %v1086 = vadd.f32 %v1080, %v1085
  %v1087 = vadd.f32 %v1081, %v1085
  %v1088 = vxor.u32 %v1086, 2147483648
  %v1089 = vxor.u32 %v1087, 2147483648
  %v1090 = vmul.f32 %v1088, 1.442695
  %v1091 = vpow.pop %v1090
  %v1092 = vmul.f32 %v1089, 1.442695
  %v1093 = vpow.pop %v1092
  %v1094 = vadd.f32 %v1091, 1.0
  %v1095 = vadd.f32 %v1093, 1.0
  %v1096 = vrcp.pop %v1094
  %v1097 = vmul.f32 1.0, %v1096
  %v1098 = vrcp.pop %v1095
  %v1099 = vmul.f32 1.0, %v1098
  %v1100 = vmul.f32 %v1086, %v1097
  %v1101 = vmul.f32 %v1087, %v1099
  %1102 = vst.msk [vmem:[#allocation2 + $0x3] sm:$0x1f] %vm1040, %v953
  %1103 = vst.msk [vmem:[#allocation2 + $0x13] sm:$0x1f] %vm1040, %v954
  %s1104 = scalar_lea.vmem %s4, 4
  %v1105 = vld [vmem:[%s1104] sm:$0xf]
  %v1106 = vld [vmem:[#allocation2] sm:$0xff]
  %v1107 = vld [vmem:[#allocation2 + $0x10] sm:$0xff]
  %v1108 = vlaneseq
  %v1109 = vshrl.u32 %v1108, 7
  %v1110 = vsub.s32 0, %v1109
  %v1111 = vrot.slane %v1105, %v1110
  %v1112 = vmul.f32 %v1106, %v1111
  %v1113 = vmul.f32 %v1107, %v1111
  %v1114 = vld [vmem:[#allocation2 + $0x1] sm:$0xff]
  %v1115 = vld [vmem:[#allocation2 + $0x11] sm:$0xff]
  %v1116 = vlaneseq
  %v1117 = vshrl.u32 %v1116, 7
  %v1118 = vsub.s32 1, %v1117
  %v1119 = vrot.slane %v1105, %v1118
  %v1120 = vmul.f32 %v1114, %v1119
  %v1121 = vmul.f32 %v1115, %v1119
  %v1122 = vadd.f32 %v1112, %v1120
  %v1123 = vadd.f32 %v1113, %v1121
  %v1124 = vld [vmem:[#allocation2 + $0x2] sm:$0xff]
  %v1125 = vld [vmem:[#allocation2 + $0x12] sm:$0xff]
  %v1126 = vlaneseq
  %v1127 = vshrl.u32 %v1126, 7
  %v1128 = vsub.s32 2, %v1127
  %v1129 = vrot.slane %v1105, %v1128
  %v1130 = vmul.f32 %v1124, %v1129
  %v1131 = vmul.f32 %v1125, %v1129
  %v1132 = vadd.f32 %v1122, %v1130
  %v1133 = vadd.f32 %v1123, %v1131
  %v1134 = vld [vmem:[#allocation2 + $0x3] sm:$0xff]
  %v1135 = vld [vmem:[#allocation2 + $0x13] sm:$0xff]
  %v1136 = vlaneseq
  %v1137 = vshrl.u32 %v1136, 7
  %v1138 = vsub.s32 3, %v1137
  %v1139 = vrot.slane %v1105, %v1138
  %v1140 = vmul.f32 %v1134, %v1139
  %v1141 = vmul.f32 %v1135, %v1139
  %v1142 = vadd.f32 %v1132, %v1140
  %v1143 = vadd.f32 %v1133, %v1141
  %v1144 = vlaneseq
  %v1145 = vshrl.u32 %v1144, 7
  %v1146 = vsub.s32 1, %v1145
  %v1147 = vrot.slane %v38, %v1146
  %v1148 = vadd.f32 %v1142, %v1147
  %v1149 = vadd.f32 %v1143, %v1147
  %v1150 = vxor.u32 %v1148, 2147483648
  %v1151 = vxor.u32 %v1149, 2147483648
  %v1152 = vmul.f32 %v1150, 1.442695
  %v1153 = vpow.pop %v1152
  %v1154 = vmul.f32 %v1151, 1.442695
  %v1155 = vpow.pop %v1154
  %v1156 = vadd.f32 %v1153, 1.0
  %v1157 = vadd.f32 %v1155, 1.0
  %v1158 = vrcp.pop %v1156
  %v1159 = vmul.f32 1.0, %v1158
  %v1160 = vrcp.pop %v1157
  %v1161 = vmul.f32 1.0, %v1160
  %v1162 = vmul.f32 %v1148, %v1159
  %v1163 = vmul.f32 %v1149, %v1161
  %v1164 = vld [vmem:[%s5] sm:$0xff]
  %v1165 = vld [vmem:[%s5 + $0x8] sm:$0xff]
  %v1166 = vld [vmem:[%s5 + $0x10] sm:$0xff]
  %v1167 = vld [vmem:[%s5 + $0x18] sm:$0xff]
  %v1168 = vld [vmem:[%s5 + $0x20] sm:$0xff]
  %v1169 = vld [vmem:[%s5 + $0x28] sm:$0xff]
  %v1170 = vld [vmem:[%s5 + $0x30] sm:$0xff]
  %v1171 = vld [vmem:[%s5 + $0x38] sm:$0xff]
  %v1172 = vlaneseq
  %v1173 = vshrl.u32 %v1172, 7
  %v1174 = vsub.s32 0, %v1173
  %v1175 = vrot.slane %v39, %v1174
  %vm1176 = vcmask 523264
  %v1178 = vsel %vm1176, %v1100, 0
  %v1181 = vsel %vm1176, %v1101, 0
  %1183 = vmatprep.subr.mxu0 0.0
  %1184 = vmatpush1.msra.mxu0 0.0
  %1185 = vmatprep.subr.mxu0 0.0
  %1186 = vmatpush1.msra.mxu0 0.0
  %1187 = vmatprep.subr.mxu0 0.0
  %1188 = vmatpush1.msra.mxu0 0.0
  %1189 = vmatprep.subr.mxu0 0.0
  %1190 = vmatpush1.msra.mxu0 0.0
  %1191 = vmatprep.subr.mxu0 0.0
  %1192 = vmatpush1.msra.mxu0 0.0
  %1193 = vmatprep.subr.mxu0 0.0
  %1194 = vmatpush1.msra.mxu0 0.0
  %1195 = vmatprep.subr.mxu0 0.0
  %1196 = vmatpush1.msra.mxu0 0.0
  %1197 = vmatprep.subr.mxu0 0.0
  %1198 = vmatpush1.msra.mxu0 0.0
  %1199 = vmatprep.subr.mxu0 0.0
  %1200 = vmatpush1.msra.mxu0 %v1171
  %1201 = vmatprep.subr.mxu0 0.0
  %1202 = vmatpush1.msra.mxu0 %v1170
  %1203 = vmatprep.subr.mxu0 0.0
  %1204 = vmatpush1.msra.mxu0 %v1169
  %1205 = vmatprep.subr.mxu0 0.0
  %1206 = vmatpush1.msra.mxu0 %v1168
  %1207 = vmatprep.subr.mxu0 0.0
  %1208 = vmatpush1.msra.mxu0 %v1167
  %1209 = vmatprep.subr.mxu0 0.0
  %1210 = vmatpush1.msra.mxu0 %v1166
  %1211 = vmatprep.subr.mxu0 0.0
  %1212 = vmatpush1.msra.mxu0 %v1165
  %1213 = vmatprep.subr.mxu0 0.0
  %1214 = vmatpush1.msra.mxu0 %v1164
  %1215 = vmatprep.subr.mxu0 0.0
  %1216 = vmatpush2.msra.mxu0 0.0
  %1217 = vmatprep.subr.mxu0 0.0
  %1218 = vmatpush2.msra.mxu0 0.0
  %1219 = vmatprep.subr.mxu0 0.0
  %1220 = vmatpush2.msra.mxu0 0.0
  %1221 = vmatprep.subr.mxu0 0.0
  %1222 = vmatpush2.msra.mxu0 0.0
  %1223 = vmatprep.subr.mxu0 0.0
  %1224 = vmatpush2.msra.mxu0 0.0
  %1225 = vmatprep.subr.mxu0 0.0
  %1226 = vmatpush2.msra.mxu0 0.0
  %1227 = vmatprep.subr.mxu0 0.0
  %1228 = vmatpush2.msra.mxu0 0.0
  %1229 = vmatprep.subr.mxu0 0.0
  %1230 = vmatpush2.msra.mxu0 0.0
  %1231 = vmatprep.subr.mxu0 0.0
  %1232 = vmatpush2.msra.mxu0 0.0
  %1233 = vmatprep.subr.mxu0 0.0
  %1234 = vmatpush2.msra.mxu0 0.0
  %1235 = vmatprep.subr.mxu0 0.0
  %1236 = vmatpush2.msra.mxu0 0.0
  %1237 = vmatprep.subr.mxu0 0.0
  %1238 = vmatpush2.msra.mxu0 0.0
  %1239 = vmatprep.subr.mxu0 0.0
  %1240 = vmatpush2.msra.mxu0 0.0
  %1241 = vmatprep.subr.mxu0 0.0
  %1242 = vmatpush2.msra.mxu0 0.0
  %1243 = vmatprep.subr.mxu0 0.0
  %1244 = vmatpush2.msra.mxu0 0.0
  %1245 = vmatprep.subr.mxu0 0.0
  %1246 = vmatpush2.msra.mxu0 0.0
  %1247 = vmatprep.mubr.f32.mxu0 0.0
  %1248 = vmatmul.mubr.f32.gmra.mxu0 %v1178
  %v1249 = vpop.f32.mrf.mxu0
  %v1250 = vadd.f32 %v1175, %v1249
  %v1251 = vpop.f32.mrf.mxu0
  %1252 = vmatprep.mubr.f32.mxu0 0.0
  %1253 = vmatmul.mubr.f32.gmra.mxu0 %v1181
  %v1254 = vpop.f32.mrf.mxu0
  %v1255 = vadd.f32 %v1175, %v1254
  %v1256 = vpop.f32.mrf.mxu0
  %1257 = vdwg.mxu0
  %v1258 = vld [vmem:[%s6] sm:$0x3]
  %v1259 = vlaneseq
  %v1260 = vshrl.u32 %v1259, 7
  %v1261 = vsub.s32 2, %v1260
  %v1262 = vrot.slane %v38, %v1261
  %vm1263 = vcmask 15360
  %v1265 = vsel %vm1263, %v1250, 0
  %v1268 = vsel %vm1263, %v1255, 0
  %v1271 = vsel %vm946, %v1258, 0
  %1273 = vmatprep.subr.mxu0 0.0
  %1274 = vmatpush1.msra.mxu0 0.0
  %1275 = vmatprep.subr.mxu0 0.0
  %1276 = vmatpush1.msra.mxu0 0.0
  %1277 = vmatprep.subr.mxu0 0.0
  %1278 = vmatpush1.msra.mxu0 0.0
  %1279 = vmatprep.subr.mxu0 0.0
  %1280 = vmatpush1.msra.mxu0 0.0
  %1281 = vmatprep.subr.mxu0 0.0
  %1282 = vmatpush1.msra.mxu0 0.0
  %1283 = vmatprep.subr.mxu0 0.0
  %1284 = vmatpush1.msra.mxu0 0.0
  %1285 = vmatprep.subr.mxu0 0.0
  %1286 = vmatpush1.msra.mxu0 0.0
  %1287 = vmatprep.subr.mxu0 0.0
  %1288 = vmatpush1.msra.mxu0 0.0
  %1289 = vmatprep.subr.mxu0 0.0
  %1290 = vmatpush1.msra.mxu0 0.0
  %1291 = vmatprep.subr.mxu0 0.0
  %1292 = vmatpush1.msra.mxu0 0.0
  %1293 = vmatprep.subr.mxu0 0.0
  %1294 = vmatpush1.msra.mxu0 0.0
  %1295 = vmatprep.subr.mxu0 0.0
  %1296 = vmatpush1.msra.mxu0 0.0
  %1297 = vmatprep.subr.mxu0 0.0
  %1298 = vmatpush1.msra.mxu0 0.0
  %1299 = vmatprep.subr.mxu0 0.0
  %1300 = vmatpush1.msra.mxu0 0.0
  %1301 = vmatprep.subr.mxu0 0.0
  %1302 = vmatpush1.msra.mxu0 0.0
  %1303 = vmatprep.subr.mxu0 0.0
  %1304 = vmatpush1.msra.mxu0 %v1271
  %1305 = vmatprep.subr.mxu0 0.0
  %1306 = vmatpush2.msra.mxu0 0.0
  %1307 = vmatprep.subr.mxu0 0.0
  %1308 = vmatpush2.msra.mxu0 0.0
  %1309 = vmatprep.subr.mxu0 0.0
  %1310 = vmatpush2.msra.mxu0 0.0
  %1311 = vmatprep.subr.mxu0 0.0
  %1312 = vmatpush2.msra.mxu0 0.0
  %1313 = vmatprep.subr.mxu0 0.0
  %1314 = vmatpush2.msra.mxu0 0.0
  %1315 = vmatprep.subr.mxu0 0.0
  %1316 = vmatpush2.msra.mxu0 0.0
  %1317 = vmatprep.subr.mxu0 0.0
  %1318 = vmatpush2.msra.mxu0 0.0
  %1319 = vmatprep.subr.mxu0 0.0
  %1320 = vmatpush2.msra.mxu0 0.0
  %1321 = vmatprep.subr.mxu0 0.0
  %1322 = vmatpush2.msra.mxu0 0.0
  %1323 = vmatprep.subr.mxu0 0.0
  %1324 = vmatpush2.msra.mxu0 0.0
  %1325 = vmatprep.subr.mxu0 0.0
  %1326 = vmatpush2.msra.mxu0 0.0
  %1327 = vmatprep.subr.mxu0 0.0
  %1328 = vmatpush2.msra.mxu0 0.0
  %1329 = vmatprep.subr.mxu0 0.0
  %1330 = vmatpush2.msra.mxu0 0.0
  %1331 = vmatprep.subr.mxu0 0.0
  %1332 = vmatpush2.msra.mxu0 0.0
  %1333 = vmatprep.subr.mxu0 0.0
  %1334 = vmatpush2.msra.mxu0 0.0
  %1335 = vmatprep.subr.mxu0 0.0
  %1336 = vmatpush2.msra.mxu0 0.0
  %1337 = vmatprep.mubr.f32.mxu0 0.0
  %1338 = vmatmul.mubr.f32.gmra.mxu0 %v1265
  %v1339 = vpop.f32.mrf.mxu0
  %v1340 = vadd.f32 %v1262, %v1339
  %v1341 = vpop.f32.mrf.mxu0
  %1342 = vmatprep.mubr.f32.mxu0 0.0
  %1343 = vmatmul.mubr.f32.gmra.mxu0 %v1268
  %v1344 = vpop.f32.mrf.mxu0
  %v1345 = vadd.f32 %v1262, %v1344
  %v1346 = vpop.f32.mrf.mxu0
  %1347 = vdwg.mxu0
  %v1348 = vmax.f32 %v1340, 0.0
  %v1349 = vmax.f32 %v1345, 0.0
  %vm1350 = vcmp.ne.f32.partialorder %v1340, %v1340
  %vm1351 = vcmp.ne.f32.partialorder %v1345, %v1345
  %v1352 = vadd.f32 %v1340, 0.0
  %v1353 = vadd.f32 %v1345, 0.0
  %v1354 = vand.u32 2147483647, %v1340
  %v1355 = vand.u32 2147483647, %v1345
  %v1356 = vsub.f32 0.0, %v1354
  %v1357 = vsub.f32 0.0, %v1355
  %v1358 = vmul.f32 %v1356, 1.442695
  %v1359 = vpow.pop %v1358
  %v1360 = vmul.f32 %v1357, 1.442695
  %v1361 = vpow.pop %v1360
  %v1362 = vadd.f32 %v1359, 1.0
  %v1363 = vlog2.pop %v1362
  %v1364 = vmul.f32 %v1363, 0.6931472
  %v1365 = vmul.f32 -0.5, %v1359
  %v1366 = vadd.f32 %v1365, 1.0
  %v1367 = vmul.f32 %v1366, %v1359
  %v1368 = vand.u32 2147483647, %v1359
  %vm1369 = vcmp.lt.f32.partialorder %v1368, 0.0004427343
  %v1370 = vsel %vm1369, %v1367, %v1364
  %v1371 = vadd.f32 %v1361, 1.0
  %v1372 = vlog2.pop %v1371
  %v1373 = vmul.f32 %v1372, 0.6931472
  %v1374 = vmul.f32 -0.5, %v1361
  %v1375 = vadd.f32 %v1374, 1.0
  %v1376 = vmul.f32 %v1375, %v1361
  %v1377 = vand.u32 2147483647, %v1361
  %vm1378 = vcmp.lt.f32.partialorder %v1377, 0.0004427343
  %v1379 = vsel %vm1378, %v1376, %v1373
  %v1380 = vadd.f32 %v1348, %v1370
  %v1381 = vadd.f32 %v1349, %v1379
  %v1382 = vsel %vm1350, %v1352, %v1380
  %v1383 = vsel %vm1351, %v1353, %v1381
  %v1384 = vld [vmem:[%s7] sm:$0xff]
  %v1385 = vld [vmem:[%s7 + $0x8] sm:$0xff]
  %v1388 = vcombine.high %v1382, %v1382
  %v1390 = vunpack.c.l.s4 1966171168
  %v1391 = vunpack.c.0.s8 %v1390
  %v1392 = vlaneseq
  %v1393 = vshrl.u32 %v1392, 7
  %v1394 = vsub.s32 %v1391, %v1393
  %v1395 = vrot.slane %v1382, %v1394
  %v1397 = vunpack.c.l.s4 1966171168
  %v1398 = vunpack.c.0.s8 %v1397
  %v1399 = vlaneseq
  %v1400 = vshrl.u32 %v1399, 7
  %v1401 = vsub.s32 %v1398, %v1400
  %v1402 = vrot.slane %v1388, %v1401
  %v1403 = vcombine.high %v1395, %v1395
  %v1404 = vcombine.high %v1402, %v1402
  %v1406 = vunpack.c.l.s4 1966171168
  %v1407 = vunpack.c.0.s8 %v1406
  %v1408 = vlaneseq
  %v1409 = vshrl.u32 %v1408, 7
  %v1410 = vsub.s32 %v1407, %v1409
  %v1411 = vrot.slane %v1395, %v1410
  %v1413 = vunpack.c.l.s4 1966171168
  %v1414 = vunpack.c.0.s8 %v1413
  %v1415 = vlaneseq
  %v1416 = vshrl.u32 %v1415, 7
  %v1417 = vsub.s32 %v1414, %v1416
  %v1418 = vrot.slane %v1402, %v1417
  %v1420 = vunpack.c.l.s4 1966171168
  %v1421 = vunpack.c.0.s8 %v1420
  %v1422 = vlaneseq
  %v1423 = vshrl.u32 %v1422, 7
  %v1424 = vsub.s32 %v1421, %v1423
  %v1425 = vrot.slane %v1403, %v1424
  %v1427 = vunpack.c.l.s4 1966171168
  %v1428 = vunpack.c.0.s8 %v1427
  %v1429 = vlaneseq
  %v1430 = vshrl.u32 %v1429, 7
  %v1431 = vsub.s32 %v1428, %v1430
  %v1432 = vrot.slane %v1404, %v1431
  %v1433 = vcombine.high %v1411, %v1411
  %v1434 = vcombine.high %v1418, %v1418
  %v1435 = vcombine.high %v1425, %v1425
  %v1436 = vcombine.high %v1432, %v1432
  %v1437 = vcombine.high %v1383, %v1383
  %v1439 = vunpack.c.l.s4 1966171168
  %v1440 = vunpack.c.0.s8 %v1439
  %v1441 = vlaneseq
  %v1442 = vshrl.u32 %v1441, 7
  %v1443 = vsub.s32 %v1440, %v1442
  %v1444 = vrot.slane %v1383, %v1443
  %v1446 = vunpack.c.l.s4 1966171168
  %v1447 = vunpack.c.0.s8 %v1446
  %v1448 = vlaneseq
  %v1449 = vshrl.u32 %v1448, 7
  %v1450 = vsub.s32 %v1447, %v1449
  %v1451 = vrot.slane %v1437, %v1450
  %v1452 = vcombine.high %v1444, %v1444
  %v1453 = vcombine.high %v1451, %v1451
  %v1455 = vunpack.c.l.s4 1966171168
  %v1456 = vunpack.c.0.s8 %v1455
  %v1457 = vlaneseq
  %v1458 = vshrl.u32 %v1457, 7
  %v1459 = vsub.s32 %v1456, %v1458
  %v1460 = vrot.slane %v1444, %v1459
  %v1462 = vunpack.c.l.s4 1966171168
  %v1463 = vunpack.c.0.s8 %v1462
  %v1464 = vlaneseq
  %v1465 = vshrl.u32 %v1464, 7
  %v1466 = vsub.s32 %v1463, %v1465
  %v1467 = vrot.slane %v1451, %v1466
  %v1469 = vunpack.c.l.s4 1966171168
  %v1470 = vunpack.c.0.s8 %v1469
  %v1471 = vlaneseq
  %v1472 = vshrl.u32 %v1471, 7
  %v1473 = vsub.s32 %v1470, %v1472
  %v1474 = vrot.slane %v1452, %v1473
  %v1476 = vunpack.c.l.s4 1966171168
  %v1477 = vunpack.c.0.s8 %v1476
  %v1478 = vlaneseq
  %v1479 = vshrl.u32 %v1478, 7
  %v1480 = vsub.s32 %v1477, %v1479
  %v1481 = vrot.slane %v1453, %v1480
  %v1482 = vcombine.high %v1460, %v1460
  %v1483 = vcombine.high %v1467, %v1467
  %v1484 = vcombine.high %v1474, %v1474
  %v1485 = vcombine.high %v1481, %v1481
  %v1486 = vlaneseq
  %v1487 = vshrl.u32 %v1486, 7
  %v1488 = vsub.s32 0, %v1487
  %v1489 = vrot.slane %v1411, %v1488
  %v1490 = vlaneseq
  %v1491 = vshrl.u32 %v1490, 7
  %v1492 = vsub.s32 0, %v1491
  %v1493 = vrot.slane %v1425, %v1492
  %v1494 = vlaneseq
  %v1495 = vshrl.u32 %v1494, 7
  %v1496 = vsub.s32 0, %v1495
  %v1497 = vrot.slane %v1433, %v1496
  %v1498 = vlaneseq
  %v1499 = vshrl.u32 %v1498, 7
  %v1500 = vsub.s32 0, %v1499
  %v1501 = vrot.slane %v1435, %v1500
  %v1502 = vlaneseq
  %v1503 = vshrl.u32 %v1502, 7
  %v1504 = vsub.s32 0, %v1503
  %v1505 = vrot.slane %v1418, %v1504
  %v1506 = vlaneseq
  %v1507 = vshrl.u32 %v1506, 7
  %v1508 = vsub.s32 0, %v1507
  %v1509 = vrot.slane %v1432, %v1508
  %v1510 = vlaneseq
  %v1511 = vshrl.u32 %v1510, 7
  %v1512 = vsub.s32 0, %v1511
  %v1513 = vrot.slane %v1434, %v1512
  %v1514 = vlaneseq
  %v1515 = vshrl.u32 %v1514, 7
  %v1516 = vsub.s32 0, %v1515
  %v1517 = vrot.slane %v1436, %v1516
  %v1518 = vlaneseq
  %v1519 = vshrl.u32 %v1518, 7
  %v1520 = vsub.s32 0, %v1519
  %v1521 = vrot.slane %v1460, %v1520
  %v1522 = vlaneseq
  %v1523 = vshrl.u32 %v1522, 7
  %v1524 = vsub.s32 0, %v1523
  %v1525 = vrot.slane %v1474, %v1524
  %v1526 = vlaneseq
  %v1527 = vshrl.u32 %v1526, 7
  %v1528 = vsub.s32 0, %v1527
  %v1529 = vrot.slane %v1482, %v1528
  %v1530 = vlaneseq
  %v1531 = vshrl.u32 %v1530, 7
  %v1532 = vsub.s32 0, %v1531
  %v1533 = vrot.slane %v1484, %v1532
  %v1534 = vlaneseq
  %v1535 = vshrl.u32 %v1534, 7
  %v1536 = vsub.s32 0, %v1535
  %v1537 = vrot.slane %v1467, %v1536
  %v1538 = vlaneseq
  %v1539 = vshrl.u32 %v1538, 7
  %v1540 = vsub.s32 0, %v1539
  %v1541 = vrot.slane %v1481, %v1540
  %v1542 = vlaneseq
  %v1543 = vshrl.u32 %v1542, 7
  %v1544 = vsub.s32 0, %v1543
  %v1545 = vrot.slane %v1483, %v1544
  %v1546 = vlaneseq
  %v1547 = vshrl.u32 %v1546, 7
  %v1548 = vsub.s32 0, %v1547
  %v1549 = vrot.slane %v1485, %v1548
  %v1566 = vmul.f32 %v1489, %v1384
  %v1567 = vmul.f32 %v1489, %v1385
  %v1568 = vmul.f32 %v1493, %v1384
  %v1569 = vmul.f32 %v1493, %v1385
  %v1570 = vmul.f32 %v1497, %v1384
  %v1571 = vmul.f32 %v1497, %v1385
  %v1572 = vmul.f32 %v1501, %v1384
  %v1573 = vmul.f32 %v1501, %v1385
  %v1574 = vmul.f32 %v1505, %v1384
  %v1575 = vmul.f32 %v1505, %v1385
  %v1576 = vmul.f32 %v1509, %v1384
  %v1577 = vmul.f32 %v1509, %v1385
  %v1578 = vmul.f32 %v1513, %v1384
  %v1579 = vmul.f32 %v1513, %v1385
  %v1580 = vmul.f32 %v1517, %v1384
  %v1581 = vmul.f32 %v1517, %v1385
  %v1582 = vmul.f32 %v1521, %v1384
  %v1583 = vmul.f32 %v1521, %v1385
  %v1584 = vmul.f32 %v1525, %v1384
  %v1585 = vmul.f32 %v1525, %v1385
  %v1586 = vmul.f32 %v1529, %v1384
  %v1587 = vmul.f32 %v1529, %v1385
  %v1588 = vmul.f32 %v1533, %v1384
  %v1589 = vmul.f32 %v1533, %v1385
  %v1590 = vmul.f32 %v1537, %v1384
  %v1591 = vmul.f32 %v1537, %v1385
  %v1592 = vmul.f32 %v1541, %v1384
  %v1593 = vmul.f32 %v1541, %v1385
  %v1594 = vmul.f32 %v1545, %v1384
  %v1595 = vmul.f32 %v1545, %v1385
  %v1596 = vmul.f32 %v1549, %v1384
  %v1597 = vmul.f32 %v1549, %v1385
  %v1598 = vmul.f32 %v1566, 1.442695
  %v1599 = vpow.pop %v1598
  %v1600 = vmul.f32 %v1567, 1.442695
  %v1601 = vpow.pop %v1600
  %v1602 = vmul.f32 %v1568, 1.442695
  %v1603 = vpow.pop %v1602
  %v1604 = vmul.f32 %v1569, 1.442695
  %v1605 = vpow.pop %v1604
  %v1606 = vmul.f32 %v1570, 1.442695
  %v1607 = vpow.pop %v1606
  %v1608 = vmul.f32 %v1571, 1.442695
  %v1609 = vpow.pop %v1608
  %v1610 = vmul.f32 %v1572, 1.442695
  %v1611 = vpow.pop %v1610
  %v1612 = vmul.f32 %v1573, 1.442695
  %v1613 = vpow.pop %v1612
  %v1614 = vmul.f32 %v1574, 1.442695
  %v1615 = vpow.pop %v1614
  %v1616 = vmul.f32 %v1575, 1.442695
  %v1617 = vpow.pop %v1616
  %v1618 = vmul.f32 %v1576, 1.442695
  %v1619 = vpow.pop %v1618
  %v1620 = vmul.f32 %v1577, 1.442695
  %v1621 = vpow.pop %v1620
  %v1622 = vmul.f32 %v1578, 1.442695
  %v1623 = vpow.pop %v1622
  %v1624 = vmul.f32 %v1579, 1.442695
  %v1625 = vpow.pop %v1624
  %v1626 = vmul.f32 %v1580, 1.442695
  %v1627 = vpow.pop %v1626
  %v1628 = vmul.f32 %v1581, 1.442695
  %v1629 = vpow.pop %v1628
  %v1630 = vmul.f32 %v1582, 1.442695
  %v1631 = vpow.pop %v1630
  %v1632 = vmul.f32 %v1583, 1.442695
  %v1633 = vpow.pop %v1632
  %v1634 = vmul.f32 %v1584, 1.442695
  %v1635 = vpow.pop %v1634
  %v1636 = vmul.f32 %v1585, 1.442695
  %v1637 = vpow.pop %v1636
  %v1638 = vmul.f32 %v1586, 1.442695
  %v1639 = vpow.pop %v1638
  %v1640 = vmul.f32 %v1587, 1.442695
  %v1641 = vpow.pop %v1640
  %v1642 = vmul.f32 %v1588, 1.442695
  %v1643 = vpow.pop %v1642
  %v1644 = vmul.f32 %v1589, 1.442695
  %v1645 = vpow.pop %v1644
  %v1646 = vmul.f32 %v1590, 1.442695
  %v1647 = vpow.pop %v1646
  %v1648 = vmul.f32 %v1591, 1.442695
  %v1649 = vpow.pop %v1648
  %v1650 = vmul.f32 %v1592, 1.442695
  %v1651 = vpow.pop %v1650
  %v1652 = vmul.f32 %v1593, 1.442695
  %v1653 = vpow.pop %v1652
  %v1654 = vmul.f32 %v1594, 1.442695
  %v1655 = vpow.pop %v1654
  %v1656 = vmul.f32 %v1595, 1.442695
  %v1657 = vpow.pop %v1656
  %v1658 = vmul.f32 %v1596, 1.442695
  %v1659 = vpow.pop %v1658
  %v1660 = vmul.f32 %v1597, 1.442695
  %v1661 = vpow.pop %v1660
  %v1662 = vlaneseq
  %v1663 = vshrl.u32 %v1662, 7
  %v1664 = vsub.s32 0, %v1663
  %v1665 = vrot.slane %v1250, %v1664
  %s1667 = sor.u32 256, 2
  %1668 = vbcast.lane.b32.xlu0 %v1665, %s1667
  %v1669 = vpop.permute.xlu0 %1668
  %s1671 = sor.u32 256, 10
  %1672 = vbcast.lane.b32.xlu0 %v1665, %s1671
  %v1673 = vpop.permute.xlu0 %1672
  %v1674 = vlaneseq
  %v1675 = vshrl.u32 %v1674, 7
  %v1676 = vsub.s32 1, %v1675
  %v1677 = vrot.slane %v1250, %v1676
  %s1679 = sor.u32 256, 2
  %1680 = vbcast.lane.b32.xlu0 %v1677, %s1679
  %v1681 = vpop.permute.xlu0 %1680
  %s1683 = sor.u32 256, 10
  %1684 = vbcast.lane.b32.xlu0 %v1677, %s1683
  %v1685 = vpop.permute.xlu0 %1684
  %v1686 = vlaneseq
  %v1687 = vshrl.u32 %v1686, 7
  %v1688 = vsub.s32 2, %v1687
  %v1689 = vrot.slane %v1250, %v1688
  %s1691 = sor.u32 256, 2
  %1692 = vbcast.lane.b32.xlu0 %v1689, %s1691
  %v1693 = vpop.permute.xlu0 %1692
  %s1695 = sor.u32 256, 10
  %1696 = vbcast.lane.b32.xlu0 %v1689, %s1695
  %v1697 = vpop.permute.xlu0 %1696
  %v1698 = vlaneseq
  %v1699 = vshrl.u32 %v1698, 7
  %v1700 = vsub.s32 3, %v1699
  %v1701 = vrot.slane %v1250, %v1700
  %s1703 = sor.u32 256, 2
  %1704 = vbcast.lane.b32.xlu0 %v1701, %s1703
  %v1705 = vpop.permute.xlu0 %1704
  %s1707 = sor.u32 256, 10
  %1708 = vbcast.lane.b32.xlu0 %v1701, %s1707
  %v1709 = vpop.permute.xlu0 %1708
  %v1710 = vlaneseq
  %v1711 = vshrl.u32 %v1710, 7
  %v1712 = vsub.s32 4, %v1711
  %v1713 = vrot.slane %v1250, %v1712
  %s1715 = sor.u32 256, 2
  %1716 = vbcast.lane.b32.xlu0 %v1713, %s1715
  %v1717 = vpop.permute.xlu0 %1716
  %s1719 = sor.u32 256, 10
  %1720 = vbcast.lane.b32.xlu0 %v1713, %s1719
  %v1721 = vpop.permute.xlu0 %1720
  %v1722 = vlaneseq
  %v1723 = vshrl.u32 %v1722, 7
  %v1724 = vsub.s32 5, %v1723
  %v1725 = vrot.slane %v1250, %v1724
  %s1727 = sor.u32 256, 2
  %1728 = vbcast.lane.b32.xlu0 %v1725, %s1727
  %v1729 = vpop.permute.xlu0 %1728
  %s1731 = sor.u32 256, 10
  %1732 = vbcast.lane.b32.xlu0 %v1725, %s1731
  %v1733 = vpop.permute.xlu0 %1732
  %v1734 = vlaneseq
  %v1735 = vshrl.u32 %v1734, 7
  %v1736 = vsub.s32 6, %v1735
  %v1737 = vrot.slane %v1250, %v1736
  %s1739 = sor.u32 256, 2
  %1740 = vbcast.lane.b32.xlu0 %v1737, %s1739
  %v1741 = vpop.permute.xlu0 %1740
  %s1743 = sor.u32 256, 10
  %1744 = vbcast.lane.b32.xlu0 %v1737, %s1743
  %v1745 = vpop.permute.xlu0 %1744
  %v1746 = vlaneseq
  %v1747 = vshrl.u32 %v1746, 7
  %v1748 = vsub.s32 7, %v1747
  %v1749 = vrot.slane %v1250, %v1748
  %s1751 = sor.u32 256, 2
  %1752 = vbcast.lane.b32.xlu0 %v1749, %s1751
  %v1753 = vpop.permute.xlu0 %1752
  %s1755 = sor.u32 256, 10
  %1756 = vbcast.lane.b32.xlu0 %v1749, %s1755
  %v1757 = vpop.permute.xlu0 %1756
  %v1758 = vlaneseq
  %v1759 = vshrl.u32 %v1758, 7
  %v1760 = vsub.s32 0, %v1759
  %v1761 = vrot.slane %v1255, %v1760
  %s1763 = sor.u32 256, 2
  %1764 = vbcast.lane.b32.xlu0 %v1761, %s1763
  %v1765 = vpop.permute.xlu0 %1764
  %s1767 = sor.u32 256, 10
  %1768 = vbcast.lane.b32.xlu0 %v1761, %s1767
  %v1769 = vpop.permute.xlu0 %1768
  %v1770 = vlaneseq
  %v1771 = vshrl.u32 %v1770, 7
  %v1772 = vsub.s32 1, %v1771
  %v1773 = vrot.slane %v1255, %v1772
  %s1775 = sor.u32 256, 2
  %1776 = vbcast.lane.b32.xlu0 %v1773, %s1775
  %v1777 = vpop.permute.xlu0 %1776
  %s1779 = sor.u32 256, 10
  %1780 = vbcast.lane.b32.xlu0 %v1773, %s1779
  %v1781 = vpop.permute.xlu0 %1780
  %v1782 = vlaneseq
  %v1783 = vshrl.u32 %v1782, 7
  %v1784 = vsub.s32 2, %v1783
  %v1785 = vrot.slane %v1255, %v1784
  %s1787 = sor.u32 256, 2
  %1788 = vbcast.lane.b32.xlu0 %v1785, %s1787
  %v1789 = vpop.permute.xlu0 %1788
  %s1791 = sor.u32 256, 10
  %1792 = vbcast.lane.b32.xlu0 %v1785, %s1791
  %v1793 = vpop.permute.xlu0 %1792
  %v1794 = vlaneseq
  %v1795 = vshrl.u32 %v1794, 7
  %v1796 = vsub.s32 3, %v1795
  %v1797 = vrot.slane %v1255, %v1796
  %s1799 = sor.u32 256, 2
  %1800 = vbcast.lane.b32.xlu0 %v1797, %s1799
  %v1801 = vpop.permute.xlu0 %1800
  %s1803 = sor.u32 256, 10
  %1804 = vbcast.lane.b32.xlu0 %v1797, %s1803
  %v1805 = vpop.permute.xlu0 %1804
  %v1806 = vlaneseq
  %v1807 = vshrl.u32 %v1806, 7
  %v1808 = vsub.s32 4, %v1807
  %v1809 = vrot.slane %v1255, %v1808
  %s1811 = sor.u32 256, 2
  %1812 = vbcast.lane.b32.xlu0 %v1809, %s1811
  %v1813 = vpop.permute.xlu0 %1812
  %s1815 = sor.u32 256, 10
  %1816 = vbcast.lane.b32.xlu0 %v1809, %s1815
  %v1817 = vpop.permute.xlu0 %1816
  %v1818 = vlaneseq
  %v1819 = vshrl.u32 %v1818, 7
  %v1820 = vsub.s32 5, %v1819
  %v1821 = vrot.slane %v1255, %v1820
  %s1823 = sor.u32 256, 2
  %1824 = vbcast.lane.b32.xlu0 %v1821, %s1823
  %v1825 = vpop.permute.xlu0 %1824
  %s1827 = sor.u32 256, 10
  %1828 = vbcast.lane.b32.xlu0 %v1821, %s1827
  %v1829 = vpop.permute.xlu0 %1828
  %v1830 = vlaneseq
  %v1831 = vshrl.u32 %v1830, 7
  %v1832 = vsub.s32 6, %v1831
  %v1833 = vrot.slane %v1255, %v1832
  %s1835 = sor.u32 256, 2
  %1836 = vbcast.lane.b32.xlu0 %v1833, %s1835
  %v1837 = vpop.permute.xlu0 %1836
  %s1839 = sor.u32 256, 10
  %1840 = vbcast.lane.b32.xlu0 %v1833, %s1839
  %v1841 = vpop.permute.xlu0 %1840
  %v1842 = vlaneseq
  %v1843 = vshrl.u32 %v1842, 7
  %v1844 = vsub.s32 7, %v1843
  %v1845 = vrot.slane %v1255, %v1844
  %s1847 = sor.u32 256, 2
  %1848 = vbcast.lane.b32.xlu0 %v1845, %s1847
  %v1849 = vpop.permute.xlu0 %1848
  %s1851 = sor.u32 256, 10
  %1852 = vbcast.lane.b32.xlu0 %v1845, %s1851
  %v1853 = vpop.permute.xlu0 %1852
  %v1854 = vmul.f32 %v1382, %v1100
  %v1855 = vmul.f32 %v1383, %v1101
  %v1858 = vcombine.high %v1854, %v1854
  %v1860 = vunpack.c.l.s4 1966171168
  %v1861 = vunpack.c.0.s8 %v1860
  %v1862 = vlaneseq
  %v1863 = vshrl.u32 %v1862, 7
  %v1864 = vsub.s32 %v1861, %v1863
  %v1865 = vrot.slane %v1854, %v1864
  %v1867 = vunpack.c.l.s4 1966171168
  %v1868 = vunpack.c.0.s8 %v1867
  %v1869 = vlaneseq
  %v1870 = vshrl.u32 %v1869, 7
  %v1871 = vsub.s32 %v1868, %v1870
  %v1872 = vrot.slane %v1858, %v1871
  %v1873 = vcombine.high %v1865, %v1865
  %v1874 = vcombine.high %v1872, %v1872
  %v1876 = vunpack.c.l.s4 1966171168
  %v1877 = vunpack.c.0.s8 %v1876
  %v1878 = vlaneseq
  %v1879 = vshrl.u32 %v1878, 7
  %v1880 = vsub.s32 %v1877, %v1879
  %v1881 = vrot.slane %v1865, %v1880
  %v1883 = vunpack.c.l.s4 1966171168
  %v1884 = vunpack.c.0.s8 %v1883
  %v1885 = vlaneseq
  %v1886 = vshrl.u32 %v1885, 7
  %v1887 = vsub.s32 %v1884, %v1886
  %v1888 = vrot.slane %v1872, %v1887
  %v1890 = vunpack.c.l.s4 1966171168
  %v1891 = vunpack.c.0.s8 %v1890
  %v1892 = vlaneseq
  %v1893 = vshrl.u32 %v1892, 7
  %v1894 = vsub.s32 %v1891, %v1893
  %v1895 = vrot.slane %v1873, %v1894
  %v1897 = vunpack.c.l.s4 1966171168
  %v1898 = vunpack.c.0.s8 %v1897
  %v1899 = vlaneseq
  %v1900 = vshrl.u32 %v1899, 7
  %v1901 = vsub.s32 %v1898, %v1900
  %v1902 = vrot.slane %v1874, %v1901
  %v1903 = vcombine.high %v1881, %v1881
  %v1904 = vcombine.high %v1888, %v1888
  %v1905 = vcombine.high %v1895, %v1895
  %v1906 = vcombine.high %v1902, %v1902
  %v1907 = vcombine.high %v1855, %v1855
  %v1909 = vunpack.c.l.s4 1966171168
  %v1910 = vunpack.c.0.s8 %v1909
  %v1911 = vlaneseq
  %v1912 = vshrl.u32 %v1911, 7
  %v1913 = vsub.s32 %v1910, %v1912
  %v1914 = vrot.slane %v1855, %v1913
  %v1916 = vunpack.c.l.s4 1966171168
  %v1917 = vunpack.c.0.s8 %v1916
  %v1918 = vlaneseq
  %v1919 = vshrl.u32 %v1918, 7
  %v1920 = vsub.s32 %v1917, %v1919
  %v1921 = vrot.slane %v1907, %v1920
  %v1922 = vcombine.high %v1914, %v1914
  %v1923 = vcombine.high %v1921, %v1921
  %v1925 = vunpack.c.l.s4 1966171168
  %v1926 = vunpack.c.0.s8 %v1925
  %v1927 = vlaneseq
  %v1928 = vshrl.u32 %v1927, 7
  %v1929 = vsub.s32 %v1926, %v1928
  %v1930 = vrot.slane %v1914, %v1929
  %v1932 = vunpack.c.l.s4 1966171168
  %v1933 = vunpack.c.0.s8 %v1932
  %v1934 = vlaneseq
  %v1935 = vshrl.u32 %v1934, 7
  %v1936 = vsub.s32 %v1933, %v1935
  %v1937 = vrot.slane %v1921, %v1936
  %v1939 = vunpack.c.l.s4 1966171168
  %v1940 = vunpack.c.0.s8 %v1939
  %v1941 = vlaneseq
  %v1942 = vshrl.u32 %v1941, 7
  %v1943 = vsub.s32 %v1940, %v1942
  %v1944 = vrot.slane %v1922, %v1943
  %v1946 = vunpack.c.l.s4 1966171168
  %v1947 = vunpack.c.0.s8 %v1946
  %v1948 = vlaneseq
  %v1949 = vshrl.u32 %v1948, 7
  %v1950 = vsub.s32 %v1947, %v1949
  %v1951 = vrot.slane %v1923, %v1950
  %v1952 = vcombine.high %v1930, %v1930
  %v1953 = vcombine.high %v1937, %v1937
  %v1954 = vcombine.high %v1944, %v1944
  %v1955 = vcombine.high %v1951, %v1951
  %v1956 = vlaneseq
  %v1957 = vshrl.u32 %v1956, 7
  %v1958 = vsub.s32 0, %v1957
  %v1959 = vrot.slane %v1881, %v1958
  %v1960 = vlaneseq
  %v1961 = vshrl.u32 %v1960, 7
  %v1962 = vsub.s32 0, %v1961
  %v1963 = vrot.slane %v1895, %v1962
  %v1964 = vlaneseq
  %v1965 = vshrl.u32 %v1964, 7
  %v1966 = vsub.s32 0, %v1965
  %v1967 = vrot.slane %v1903, %v1966
  %v1968 = vlaneseq
  %v1969 = vshrl.u32 %v1968, 7
  %v1970 = vsub.s32 0, %v1969
  %v1971 = vrot.slane %v1905, %v1970
  %v1972 = vlaneseq
  %v1973 = vshrl.u32 %v1972, 7
  %v1974 = vsub.s32 0, %v1973
  %v1975 = vrot.slane %v1888, %v1974
  %v1976 = vlaneseq
  %v1977 = vshrl.u32 %v1976, 7
  %v1978 = vsub.s32 0, %v1977
  %v1979 = vrot.slane %v1902, %v1978
  %v1980 = vlaneseq
  %v1981 = vshrl.u32 %v1980, 7
  %v1982 = vsub.s32 0, %v1981
  %v1983 = vrot.slane %v1904, %v1982
  %v1984 = vlaneseq
  %v1985 = vshrl.u32 %v1984, 7
  %v1986 = vsub.s32 0, %v1985
  %v1987 = vrot.slane %v1906, %v1986
  %v1988 = vlaneseq
  %v1989 = vshrl.u32 %v1988, 7
  %v1990 = vsub.s32 0, %v1989
  %v1991 = vrot.slane %v1930, %v1990
  %v1992 = vlaneseq
  %v1993 = vshrl.u32 %v1992, 7
  %v1994 = vsub.s32 0, %v1993
  %v1995 = vrot.slane %v1944, %v1994
  %v1996 = vlaneseq
  %v1997 = vshrl.u32 %v1996, 7
  %v1998 = vsub.s32 0, %v1997
  %v1999 = vrot.slane %v1952, %v1998
  %v2000 = vlaneseq
  %v2001 = vshrl.u32 %v2000, 7
  %v2002 = vsub.s32 0, %v2001
  %v2003 = vrot.slane %v1954, %v2002
  %v2004 = vlaneseq
  %v2005 = vshrl.u32 %v2004, 7
  %v2006 = vsub.s32 0, %v2005
  %v2007 = vrot.slane %v1937, %v2006
  %v2008 = vlaneseq
  %v2009 = vshrl.u32 %v2008, 7
  %v2010 = vsub.s32 0, %v2009
  %v2011 = vrot.slane %v1951, %v2010
  %v2012 = vlaneseq
  %v2013 = vshrl.u32 %v2012, 7
  %v2014 = vsub.s32 0, %v2013
  %v2015 = vrot.slane %v1953, %v2014
  %v2016 = vlaneseq
  %v2017 = vshrl.u32 %v2016, 7
  %v2018 = vsub.s32 0, %v2017
  %v2019 = vrot.slane %v1955, %v2018
  %v2036 = vmul.f32 %v1669, %v1959
  %v2037 = vmul.f32 %v1673, %v1959
  %v2038 = vmul.f32 %v1681, %v1963
  %v2039 = vmul.f32 %v1685, %v1963
  %v2040 = vmul.f32 %v1693, %v1967
  %v2041 = vmul.f32 %v1697, %v1967
  %v2042 = vmul.f32 %v1705, %v1971
  %v2043 = vmul.f32 %v1709, %v1971
  %v2044 = vmul.f32 %v1717, %v1975
  %v2045 = vmul.f32 %v1721, %v1975
  %v2046 = vmul.f32 %v1729, %v1979
  %v2047 = vmul.f32 %v1733, %v1979
  %v2048 = vmul.f32 %v1741, %v1983
  %v2049 = vmul.f32 %v1745, %v1983
  %v2050 = vmul.f32 %v1753, %v1987
  %v2051 = vmul.f32 %v1757, %v1987
  %v2052 = vmul.f32 %v1765, %v1991
  %v2053 = vmul.f32 %v1769, %v1991
  %v2054 = vmul.f32 %v1777, %v1995
  %v2055 = vmul.f32 %v1781, %v1995
  %v2056 = vmul.f32 %v1789, %v1999
  %v2057 = vmul.f32 %v1793, %v1999
  %v2058 = vmul.f32 %v1801, %v2003
  %v2059 = vmul.f32 %v1805, %v2003
  %v2060 = vmul.f32 %v1813, %v2007
  %v2061 = vmul.f32 %v1817, %v2007
  %v2062 = vmul.f32 %v1825, %v2011
  %v2063 = vmul.f32 %v1829, %v2011
  %v2064 = vmul.f32 %v1837, %v2015
  %v2065 = vmul.f32 %v1841, %v2015
  %v2066 = vmul.f32 %v1849, %v2019
  %v2067 = vmul.f32 %v1853, %v2019
  %v2068 = vmul.f32 %v1599, 0.0
  %v2069 = vmul.f32 %v1601, 0.0
  %v2070 = vmul.f32 %v1631, 0.0
  %v2071 = vmul.f32 %v1633, 0.0
  %v2072 = vadd.f32 %v2068, %v2036
  %v2073 = vadd.f32 %v2069, %v2037
  %v2074 = vadd.f32 %v2070, %v2052
  %v2075 = vadd.f32 %v2071, %v2053
  %2076 = vst.msk [vmem:[#allocation3] sm:$0xff] %vm1176, %v2072
  %2077 = vst.msk [vmem:[#allocation3 + $0x8] sm:$0xff] %vm1176, %v2073
  %2078 = vst.msk [vmem:[#allocation3 + $0x80] sm:$0xff] %vm1176, %v2074
  %2079 = vst.msk [vmem:[#allocation3 + $0x88] sm:$0xff] %vm1176, %v2075
  %v2080 = vmul.f32 %v1603, %v2072
  %v2081 = vmul.f32 %v1605, %v2073
  %v2082 = vmul.f32 %v1635, %v2074
  %v2083 = vmul.f32 %v1637, %v2075
  %v2084 = vadd.f32 %v2080, %v2038
  %v2085 = vadd.f32 %v2081, %v2039
  %v2086 = vadd.f32 %v2082, %v2054
  %v2087 = vadd.f32 %v2083, %v2055
  %s2088 = scalar_lea.vmem [#allocation3], 16
  %2089 = vst.msk [vmem:[%s2088] sm:$0xff] %vm1176, %v2084
  %2090 = vst.msk [vmem:[%s2088 + $0x8] sm:$0xff] %vm1176, %v2085
  %2091 = vst.msk [vmem:[%s2088 + $0x80] sm:$0xff] %vm1176, %v2086
  %2092 = vst.msk [vmem:[%s2088 + $0x88] sm:$0xff] %vm1176, %v2087
  %v2093 = vmul.f32 %v1607, %v2084
  %v2094 = vmul.f32 %v1609, %v2085
  %v2095 = vmul.f32 %v1639, %v2086
  %v2096 = vmul.f32 %v1641, %v2087
  %v2097 = vadd.f32 %v2093, %v2040
  %v2098 = vadd.f32 %v2094, %v2041
  %v2099 = vadd.f32 %v2095, %v2056
  %v2100 = vadd.f32 %v2096, %v2057
  %s2101 = scalar_lea.vmem [#allocation3], 32
  %2102 = vst.msk [vmem:[%s2101] sm:$0xff] %vm1176, %v2097
  %2103 = vst.msk [vmem:[%s2101 + $0x8] sm:$0xff] %vm1176, %v2098
  %2104 = vst.msk [vmem:[%s2101 + $0x80] sm:$0xff] %vm1176, %v2099
  %2105 = vst.msk [vmem:[%s2101 + $0x88] sm:$0xff] %vm1176, %v2100
  %v2106 = vmul.f32 %v1611, %v2097
  %v2107 = vmul.f32 %v1613, %v2098
  %v2108 = vmul.f32 %v1643, %v2099
  %v2109 = vmul.f32 %v1645, %v2100
  %v2110 = vadd.f32 %v2106, %v2042
  %v2111 = vadd.f32 %v2107, %v2043
  %v2112 = vadd.f32 %v2108, %v2058
  %v2113 = vadd.f32 %v2109, %v2059
  %s2114 = scalar_lea.vmem [#allocation3], 48
  %2115 = vst.msk [vmem:[%s2114] sm:$0xff] %vm1176, %v2110
  %2116 = vst.msk [vmem:[%s2114 + $0x8] sm:$0xff] %vm1176, %v2111
  %2117 = vst.msk [vmem:[%s2114 + $0x80] sm:$0xff] %vm1176, %v2112
  %2118 = vst.msk [vmem:[%s2114 + $0x88] sm:$0xff] %vm1176, %v2113
  %v2119 = vmul.f32 %v1615, %v2110
  %v2120 = vmul.f32 %v1617, %v2111
  %v2121 = vmul.f32 %v1647, %v2112
  %v2122 = vmul.f32 %v1649, %v2113
  %v2123 = vadd.f32 %v2119, %v2044
  %v2124 = vadd.f32 %v2120, %v2045
  %v2125 = vadd.f32 %v2121, %v2060
  %v2126 = vadd.f32 %v2122, %v2061
  %s2127 = scalar_lea.vmem [#allocation3], 64
  %2128 = vst.msk [vmem:[%s2127] sm:$0xff] %vm1176, %v2123
  %2129 = vst.msk [vmem:[%s2127 + $0x8] sm:$0xff] %vm1176, %v2124
  %2130 = vst.msk [vmem:[%s2127 + $0x80] sm:$0xff] %vm1176, %v2125
  %2131 = vst.msk [vmem:[%s2127 + $0x88] sm:$0xff] %vm1176, %v2126
  %v2132 = vmul.f32 %v1619, %v2123
  %v2133 = vmul.f32 %v1621, %v2124
  %v2134 = vmul.f32 %v1651, %v2125
  %v2135 = vmul.f32 %v1653, %v2126
  %v2136 = vadd.f32 %v2132, %v2046
  %v2137 = vadd.f32 %v2133, %v2047
  %v2138 = vadd.f32 %v2134, %v2062
  %v2139 = vadd.f32 %v2135, %v2063
  %s2140 = scalar_lea.vmem [#allocation3], 80
  %2141 = vst.msk [vmem:[%s2140] sm:$0xff] %vm1176, %v2136
  %2142 = vst.msk [vmem:[%s2140 + $0x8] sm:$0xff] %vm1176, %v2137
  %2143 = vst.msk [vmem:[%s2140 + $0x80] sm:$0xff] %vm1176, %v2138
  %2144 = vst.msk [vmem:[%s2140 + $0x88] sm:$0xff] %vm1176, %v2139
  %v2145 = vmul.f32 %v1623, %v2136
  %v2146 = vmul.f32 %v1625, %v2137
  %v2147 = vmul.f32 %v1655, %v2138
  %v2148 = vmul.f32 %v1657, %v2139
  %v2149 = vadd.f32 %v2145, %v2048
  %v2150 = vadd.f32 %v2146, %v2049
  %v2151 = vadd.f32 %v2147, %v2064
  %v2152 = vadd.f32 %v2148, %v2065
  %s2153 = scalar_lea.vmem [#allocation3], 96
  %2154 = vst.msk [vmem:[%s2153] sm:$0xff] %vm1176, %v2149
  %2155 = vst.msk [vmem:[%s2153 + $0x8] sm:$0xff] %vm1176, %v2150
  %2156 = vst.msk [vmem:[%s2153 + $0x80] sm:$0xff] %vm1176, %v2151
  %2157 = vst.msk [vmem:[%s2153 + $0x88] sm:$0xff] %vm1176, %v2152
  %v2158 = vmul.f32 %v1627, %v2149
  %v2159 = vmul.f32 %v1629, %v2150
  %v2160 = vmul.f32 %v1659, %v2151
  %v2161 = vmul.f32 %v1661, %v2152
  %v2162 = vadd.f32 %v2158, %v2050
  %v2163 = vadd.f32 %v2159, %v2051
  %v2164 = vadd.f32 %v2160, %v2066
  %v2165 = vadd.f32 %v2161, %v2067
  %s2166 = scalar_lea.vmem [#allocation3], 112
  %2167 = vst.msk [vmem:[%s2166] sm:$0xff] %vm1176, %v2162
  %2168 = vst.msk [vmem:[%s2166 + $0x8] sm:$0xff] %vm1176, %v2163
  %2169 = vst.msk [vmem:[%s2166 + $0x80] sm:$0xff] %vm1176, %v2164
  %2170 = vst.msk [vmem:[%s2166 + $0x88] sm:$0xff] %vm1176, %v2165
  %v2171 = vld [vmem:[#allocation3] sm:$0xff]
  %v2172 = vld [vmem:[#allocation3 + $0x8] sm:$0xff]
  %v2173 = vld [vmem:[#allocation3 + $0x10] sm:$0xff]
  %v2174 = vld [vmem:[#allocation3 + $0x18] sm:$0xff]
  %v2175 = vld [vmem:[#allocation3 + $0x20] sm:$0xff]
  %v2176 = vld [vmem:[#allocation3 + $0x28] sm:$0xff]
  %v2177 = vld [vmem:[#allocation3 + $0x30] sm:$0xff]
  %v2178 = vld [vmem:[#allocation3 + $0x38] sm:$0xff]
  %v2179 = vld [vmem:[#allocation3 + $0x40] sm:$0xff]
  %v2180 = vld [vmem:[#allocation3 + $0x48] sm:$0xff]
  %v2181 = vld [vmem:[#allocation3 + $0x50] sm:$0xff]
  %v2182 = vld [vmem:[#allocation3 + $0x58] sm:$0xff]
  %v2183 = vld [vmem:[#allocation3 + $0x60] sm:$0xff]
  %v2184 = vld [vmem:[#allocation3 + $0x68] sm:$0xff]
  %v2185 = vld [vmem:[#allocation3 + $0x70] sm:$0xff]
  %v2186 = vld [vmem:[#allocation3 + $0x78] sm:$0xff]
  %v2187 = vld [vmem:[#allocation3 + $0x80] sm:$0xff]
  %v2188 = vld [vmem:[#allocation3 + $0x88] sm:$0xff]
  %v2189 = vld [vmem:[#allocation3 + $0x90] sm:$0xff]
  %v2190 = vld [vmem:[#allocation3 + $0x98] sm:$0xff]
  %v2191 = vld [vmem:[#allocation3 + $0xa0] sm:$0xff]
  %v2192 = vld [vmem:[#allocation3 + $0xa8] sm:$0xff]
  %v2193 = vld [vmem:[#allocation3 + $0xb0] sm:$0xff]
  %v2194 = vld [vmem:[#allocation3 + $0xb8] sm:$0xff]
  %v2195 = vld [vmem:[#allocation3 + $0xc0] sm:$0xff]
  %v2196 = vld [vmem:[#allocation3 + $0xc8] sm:$0xff]
  %v2197 = vld [vmem:[#allocation3 + $0xd0] sm:$0xff]
  %v2198 = vld [vmem:[#allocation3 + $0xd8] sm:$0xff]
  %v2199 = vld [vmem:[#allocation3 + $0xe0] sm:$0xff]
  %v2200 = vld [vmem:[#allocation3 + $0xe8] sm:$0xff]
  %v2201 = vld [vmem:[#allocation3 + $0xf0] sm:$0xff]
  %v2202 = vld [vmem:[#allocation3 + $0xf8] sm:$0xff]
  %s2204 = sor.u32 256, 18
  %2205 = vbcast.lane.b32.xlu0 %v1665, %s2204
  %v2206 = vpop.permute.xlu0 %2205
  %s2208 = sor.u32 256, 26
  %2209 = vbcast.lane.b32.xlu0 %v1665, %s2208
  %v2210 = vpop.permute.xlu0 %2209
  %s2212 = sor.u32 256, 18
  %2213 = vbcast.lane.b32.xlu0 %v1677, %s2212
  %v2214 = vpop.permute.xlu0 %2213
  %s2216 = sor.u32 256, 26
  %2217 = vbcast.lane.b32.xlu0 %v1677, %s2216
  %v2218 = vpop.permute.xlu0 %2217
  %s2220 = sor.u32 256, 18
  %2221 = vbcast.lane.b32.xlu0 %v1689, %s2220
  %v2222 = vpop.permute.xlu0 %2221
  %s2224 = sor.u32 256, 26
  %2225 = vbcast.lane.b32.xlu0 %v1689, %s2224
  %v2226 = vpop.permute.xlu0 %2225
  %s2228 = sor.u32 256, 18
  %2229 = vbcast.lane.b32.xlu0 %v1701, %s2228
  %v2230 = vpop.permute.xlu0 %2229
  %s2232 = sor.u32 256, 26
  %2233 = vbcast.lane.b32.xlu0 %v1701, %s2232
  %v2234 = vpop.permute.xlu0 %2233
  %s2236 = sor.u32 256, 18
  %2237 = vbcast.lane.b32.xlu0 %v1713, %s2236
  %v2238 = vpop.permute.xlu0 %2237
  %s2240 = sor.u32 256, 26
  %2241 = vbcast.lane.b32.xlu0 %v1713, %s2240
  %v2242 = vpop.permute.xlu0 %2241
  %s2244 = sor.u32 256, 18
  %2245 = vbcast.lane.b32.xlu0 %v1725, %s2244
  %v2246 = vpop.permute.xlu0 %2245
  %s2248 = sor.u32 256, 26
  %2249 = vbcast.lane.b32.xlu0 %v1725, %s2248
  %v2250 = vpop.permute.xlu0 %2249
  %s2252 = sor.u32 256, 18
  %2253 = vbcast.lane.b32.xlu0 %v1737, %s2252
  %v2254 = vpop.permute.xlu0 %2253
  %s2256 = sor.u32 256, 26
  %2257 = vbcast.lane.b32.xlu0 %v1737, %s2256
  %v2258 = vpop.permute.xlu0 %2257
  %s2260 = sor.u32 256, 18
  %2261 = vbcast.lane.b32.xlu0 %v1749, %s2260
  %v2262 = vpop.permute.xlu0 %2261
  %s2264 = sor.u32 256, 26
  %2265 = vbcast.lane.b32.xlu0 %v1749, %s2264
  %v2266 = vpop.permute.xlu0 %2265
  %s2268 = sor.u32 256, 18
  %2269 = vbcast.lane.b32.xlu0 %v1761, %s2268
  %v2270 = vpop.permute.xlu0 %2269
  %s2272 = sor.u32 256, 26
  %2273 = vbcast.lane.b32.xlu0 %v1761, %s2272
  %v2274 = vpop.permute.xlu0 %2273
  %s2276 = sor.u32 256, 18
  %2277 = vbcast.lane.b32.xlu0 %v1773, %s2276
  %v2278 = vpop.permute.xlu0 %2277
  %s2280 = sor.u32 256, 26
  %2281 = vbcast.lane.b32.xlu0 %v1773, %s2280
  %v2282 = vpop.permute.xlu0 %2281
  %s2284 = sor.u32 256, 18
  %2285 = vbcast.lane.b32.xlu0 %v1785, %s2284
  %v2286 = vpop.permute.xlu0 %2285
  %s2288 = sor.u32 256, 26
  %2289 = vbcast.lane.b32.xlu0 %v1785, %s2288
  %v2290 = vpop.permute.xlu0 %2289
  %s2292 = sor.u32 256, 18
  %2293 = vbcast.lane.b32.xlu0 %v1797, %s2292
  %v2294 = vpop.permute.xlu0 %2293
  %s2296 = sor.u32 256, 26
  %2297 = vbcast.lane.b32.xlu0 %v1797, %s2296
  %v2298 = vpop.permute.xlu0 %2297
  %s2300 = sor.u32 256, 18
  %2301 = vbcast.lane.b32.xlu0 %v1809, %s2300
  %v2302 = vpop.permute.xlu0 %2301
  %s2304 = sor.u32 256, 26
  %2305 = vbcast.lane.b32.xlu0 %v1809, %s2304
  %v2306 = vpop.permute.xlu0 %2305
  %s2308 = sor.u32 256, 18
  %2309 = vbcast.lane.b32.xlu0 %v1821, %s2308
  %v2310 = vpop.permute.xlu0 %2309
  %s2312 = sor.u32 256, 26
  %2313 = vbcast.lane.b32.xlu0 %v1821, %s2312
  %v2314 = vpop.permute.xlu0 %2313
  %s2316 = sor.u32 256, 18
  %2317 = vbcast.lane.b32.xlu0 %v1833, %s2316
  %v2318 = vpop.permute.xlu0 %2317
  %s2320 = sor.u32 256, 26
  %2321 = vbcast.lane.b32.xlu0 %v1833, %s2320
  %v2322 = vpop.permute.xlu0 %2321
  %s2324 = sor.u32 256, 18
  %2325 = vbcast.lane.b32.xlu0 %v1845, %s2324
  %v2326 = vpop.permute.xlu0 %2325
  %s2328 = sor.u32 256, 26
  %2329 = vbcast.lane.b32.xlu0 %v1845, %s2328
  %v2330 = vpop.permute.xlu0 %2329
  %v2331 = vmul.f32 %v2171, %v2206
  %v2332 = vmul.f32 %v2172, %v2210
  %v2333 = vmul.f32 %v2173, %v2214
  %v2334 = vmul.f32 %v2174, %v2218
  %v2335 = vmul.f32 %v2175, %v2222
  %v2336 = vmul.f32 %v2176, %v2226
  %v2337 = vmul.f32 %v2177, %v2230
  %v2338 = vmul.f32 %v2178, %v2234
  %v2339 = vmul.f32 %v2179, %v2238
  %v2340 = vmul.f32 %v2180, %v2242
  %v2341 = vmul.f32 %v2181, %v2246
  %v2342 = vmul.f32 %v2182, %v2250
  %v2343 = vmul.f32 %v2183, %v2254
  %v2344 = vmul.f32 %v2184, %v2258
  %v2345 = vmul.f32 %v2185, %v2262
  %v2346 = vmul.f32 %v2186, %v2266
  %v2347 = vmul.f32 %v2187, %v2270
  %v2348 = vmul.f32 %v2188, %v2274
  %v2349 = vmul.f32 %v2189, %v2278
  %v2350 = vmul.f32 %v2190, %v2282
  %v2351 = vmul.f32 %v2191, %v2286
  %v2352 = vmul.f32 %v2192, %v2290
  %v2353 = vmul.f32 %v2193, %v2294
  %v2354 = vmul.f32 %v2194, %v2298
  %v2355 = vmul.f32 %v2195, %v2302
  %v2356 = vmul.f32 %v2196, %v2306
  %v2357 = vmul.f32 %v2197, %v2310
  %v2358 = vmul.f32 %v2198, %v2314
  %v2359 = vmul.f32 %v2199, %v2318
  %v2360 = vmul.f32 %v2200, %v2322
  %v2361 = vmul.f32 %v2201, %v2326
  %v2362 = vmul.f32 %v2202, %v2330
  %v2363 = vsel %vm1176, %v2331, 0.0
  %v2364 = vsel %vm1176, %v2332, 0.0
  %v2365 = vadd.f32 %v2363, %v2364
  %v2366 = vrot.slane %v2365, 4
  %v2367 = vadd.f32 %v2365, %v2366
  %v2368 = vrot.slane %v2367, 2
  %v2369 = vadd.f32 %v2367, %v2368
  %v2370 = vrot.slane %v2369, 1
  %v2371 = vadd.f32 %v2369, %v2370
  %v2372 = vsel %vm1176, %v2333, 0.0
  %v2373 = vsel %vm1176, %v2334, 0.0
  %v2374 = vadd.f32 %v2372, %v2373
  %v2375 = vrot.slane %v2374, 4
  %v2376 = vadd.f32 %v2374, %v2375
  %v2377 = vrot.slane %v2376, 2
  %v2378 = vadd.f32 %v2376, %v2377
  %v2379 = vrot.slane %v2378, 1
  %v2380 = vadd.f32 %v2378, %v2379
  %v2381 = vsel %vm1176, %v2335, 0.0
  %v2382 = vsel %vm1176, %v2336, 0.0
  %v2383 = vadd.f32 %v2381, %v2382
  %v2384 = vrot.slane %v2383, 4
  %v2385 = vadd.f32 %v2383, %v2384
  %v2386 = vrot.slane %v2385, 2
  %v2387 = vadd.f32 %v2385, %v2386
  %v2388 = vrot.slane %v2387, 1
  %v2389 = vadd.f32 %v2387, %v2388
  %v2390 = vsel %vm1176, %v2337, 0.0
  %v2391 = vsel %vm1176, %v2338, 0.0
  %v2392 = vadd.f32 %v2390, %v2391
  %v2393 = vrot.slane %v2392, 4
  %v2394 = vadd.f32 %v2392, %v2393
  %v2395 = vrot.slane %v2394, 2
  %v2396 = vadd.f32 %v2394, %v2395
  %v2397 = vrot.slane %v2396, 1
  %v2398 = vadd.f32 %v2396, %v2397
  %v2399 = vsel %vm1176, %v2339, 0.0
  %v2400 = vsel %vm1176, %v2340, 0.0
  %v2401 = vadd.f32 %v2399, %v2400
  %v2402 = vrot.slane %v2401, 4
  %v2403 = vadd.f32 %v2401, %v2402
  %v2404 = vrot.slane %v2403, 2
  %v2405 = vadd.f32 %v2403, %v2404
  %v2406 = vrot.slane %v2405, 1
  %v2407 = vadd.f32 %v2405, %v2406
  %v2408 = vsel %vm1176, %v2341, 0.0
  %v2409 = vsel %vm1176, %v2342, 0.0
  %v2410 = vadd.f32 %v2408, %v2409
  %v2411 = vrot.slane %v2410, 4
  %v2412 = vadd.f32 %v2410, %v2411
  %v2413 = vrot.slane %v2412, 2
  %v2414 = vadd.f32 %v2412, %v2413
  %v2415 = vrot.slane %v2414, 1
  %v2416 = vadd.f32 %v2414, %v2415
  %v2417 = vsel %vm1176, %v2343, 0.0
  %v2418 = vsel %vm1176, %v2344, 0.0
  %v2419 = vadd.f32 %v2417, %v2418
  %v2420 = vrot.slane %v2419, 4
  %v2421 = vadd.f32 %v2419, %v2420
  %v2422 = vrot.slane %v2421, 2
  %v2423 = vadd.f32 %v2421, %v2422
  %v2424 = vrot.slane %v2423, 1
  %v2425 = vadd.f32 %v2423, %v2424
  %v2426 = vsel %vm1176, %v2345, 0.0
  %v2427 = vsel %vm1176, %v2346, 0.0
  %v2428 = vadd.f32 %v2426, %v2427
  %v2429 = vrot.slane %v2428, 4
  %v2430 = vadd.f32 %v2428, %v2429
  %v2431 = vrot.slane %v2430, 2
  %v2432 = vadd.f32 %v2430, %v2431
  %v2433 = vrot.slane %v2432, 1
  %v2434 = vadd.f32 %v2432, %v2433
  %v2435 = vsel %vm1176, %v2347, 0.0
  %v2436 = vsel %vm1176, %v2348, 0.0
  %v2437 = vadd.f32 %v2435, %v2436
  %v2438 = vrot.slane %v2437, 4
  %v2439 = vadd.f32 %v2437, %v2438
  %v2440 = vrot.slane %v2439, 2
  %v2441 = vadd.f32 %v2439, %v2440
  %v2442 = vrot.slane %v2441, 1
  %v2443 = vadd.f32 %v2441, %v2442
  %v2444 = vsel %vm1176, %v2349, 0.0
  %v2445 = vsel %vm1176, %v2350, 0.0
  %v2446 = vadd.f32 %v2444, %v2445
  %v2447 = vrot.slane %v2446, 4
  %v2448 = vadd.f32 %v2446, %v2447
  %v2449 = vrot.slane %v2448, 2
  %v2450 = vadd.f32 %v2448, %v2449
  %v2451 = vrot.slane %v2450, 1
  %v2452 = vadd.f32 %v2450, %v2451
  %v2453 = vsel %vm1176, %v2351, 0.0
  %v2454 = vsel %vm1176, %v2352, 0.0
  %v2455 = vadd.f32 %v2453, %v2454
  %v2456 = vrot.slane %v2455, 4
  %v2457 = vadd.f32 %v2455, %v2456
  %v2458 = vrot.slane %v2457, 2
  %v2459 = vadd.f32 %v2457, %v2458
  %v2460 = vrot.slane %v2459, 1
  %v2461 = vadd.f32 %v2459, %v2460
  %v2462 = vsel %vm1176, %v2353, 0.0
  %v2463 = vsel %vm1176, %v2354, 0.0
  %v2464 = vadd.f32 %v2462, %v2463
  %v2465 = vrot.slane %v2464, 4
  %v2466 = vadd.f32 %v2464, %v2465
  %v2467 = vrot.slane %v2466, 2
  %v2468 = vadd.f32 %v2466, %v2467
  %v2469 = vrot.slane %v2468, 1
  %v2470 = vadd.f32 %v2468, %v2469
  %v2471 = vsel %vm1176, %v2355, 0.0
  %v2472 = vsel %vm1176, %v2356, 0.0
  %v2473 = vadd.f32 %v2471, %v2472
  %v2474 = vrot.slane %v2473, 4
  %v2475 = vadd.f32 %v2473, %v2474
  %v2476 = vrot.slane %v2475, 2
  %v2477 = vadd.f32 %v2475, %v2476
  %v2478 = vrot.slane %v2477, 1
  %v2479 = vadd.f32 %v2477, %v2478
  %v2480 = vsel %vm1176, %v2357, 0.0
  %v2481 = vsel %vm1176, %v2358, 0.0
  %v2482 = vadd.f32 %v2480, %v2481
  %v2483 = vrot.slane %v2482, 4
  %v2484 = vadd.f32 %v2482, %v2483
  %v2485 = vrot.slane %v2484, 2
  %v2486 = vadd.f32 %v2484, %v2485
  %v2487 = vrot.slane %v2486, 1
  %v2488 = vadd.f32 %v2486, %v2487
  %v2489 = vsel %vm1176, %v2359, 0.0
  %v2490 = vsel %vm1176, %v2360, 0.0
  %v2491 = vadd.f32 %v2489, %v2490
  %v2492 = vrot.slane %v2491, 4
  %v2493 = vadd.f32 %v2491, %v2492
  %v2494 = vrot.slane %v2493, 2
  %v2495 = vadd.f32 %v2493, %v2494
  %v2496 = vrot.slane %v2495, 1
  %v2497 = vadd.f32 %v2495, %v2496
  %v2498 = vsel %vm1176, %v2361, 0.0
  %v2499 = vsel %vm1176, %v2362, 0.0
  %v2500 = vadd.f32 %v2498, %v2499
  %v2501 = vrot.slane %v2500, 4
  %v2502 = vadd.f32 %v2500, %v2501
  %v2503 = vrot.slane %v2502, 2
  %v2504 = vadd.f32 %v2502, %v2503
  %v2505 = vrot.slane %v2504, 1
  %v2506 = vadd.f32 %v2504, %v2505
  %v2507 = vlaneseq
  %v2508 = vshrl.u32 %v2507, 7
  %v2509 = vsub.s32 4, %v2508
  %v2510 = vrot.slane %v38, %v2509
  %v2511 = vmul.f32 %v2510, %v1100
  %v2512 = vmul.f32 %v2510, %v1101
  %v2515 = vrot.slane %v2511, 1
  %v2516 = vrot.slane %v2511, 2
  %v2517 = vrot.slane %v2511, 3
  %v2518 = vrot.slane %v2511, 4
  %v2519 = vrot.slane %v2511, 5
  %v2520 = vrot.slane %v2511, 6
  %v2521 = vrot.slane %v2511, 7
  %v2522 = vrot.slane %v2512, 1
  %v2523 = vrot.slane %v2512, 2
  %v2524 = vrot.slane %v2512, 3
  %v2525 = vrot.slane %v2512, 4
  %v2526 = vrot.slane %v2512, 5
  %v2527 = vrot.slane %v2512, 6
  %v2528 = vrot.slane %v2512, 7
  %v2545 = vadd.f32 %v2371, %v2511
  %v2546 = vadd.f32 %v2380, %v2515
  %v2547 = vadd.f32 %v2389, %v2516
  %v2548 = vadd.f32 %v2398, %v2517
  %v2549 = vadd.f32 %v2407, %v2518
  %v2550 = vadd.f32 %v2416, %v2519
  %v2551 = vadd.f32 %v2425, %v2520
  %v2552 = vadd.f32 %v2434, %v2521
  %v2553 = vadd.f32 %v2443, %v2512
  %v2554 = vadd.f32 %v2452, %v2522
  %v2555 = vadd.f32 %v2461, %v2523
  %v2556 = vadd.f32 %v2470, %v2524
  %v2557 = vadd.f32 %v2479, %v2525
  %v2558 = vadd.f32 %v2488, %v2526
  %v2559 = vadd.f32 %v2497, %v2527
  %v2560 = vadd.f32 %v2506, %v2528
  %s2561 = scalar_lea.vmem %s5, 64
  %v2562 = vld [vmem:[%s2561] sm:$0xff]
  %v2563 = vld [vmem:[%s2561 + $0x8] sm:$0xff]
  %v2564 = vld [vmem:[%s2561 + $0x10] sm:$0xff]
  %v2565 = vld [vmem:[%s2561 + $0x18] sm:$0xff]
  %v2566 = vld [vmem:[%s2561 + $0x20] sm:$0xff]
  %v2567 = vld [vmem:[%s2561 + $0x28] sm:$0xff]
  %v2568 = vld [vmem:[%s2561 + $0x30] sm:$0xff]
  %v2569 = vld [vmem:[%s2561 + $0x38] sm:$0xff]
  %v2570 = vlaneseq
  %v2571 = vshrl.u32 %v2570, 7
  %v2572 = vsub.s32 1, %v2571
  %v2573 = vrot.slane %v39, %v2572
  %v2575 = vsel %vm1176, %v1162, 0
  %v2578 = vsel %vm1176, %v1163, 0
  %2580 = vmatprep.subr.mxu0 0.0
  %2581 = vmatpush1.msra.mxu0 0.0
  %2582 = vmatprep.subr.mxu0 0.0
  %2583 = vmatpush1.msra.mxu0 0.0
  %2584 = vmatprep.subr.mxu0 0.0
  %2585 = vmatpush1.msra.mxu0 0.0
  %2586 = vmatprep.subr.mxu0 0.0
  %2587 = vmatpush1.msra.mxu0 0.0
  %2588 = vmatprep.subr.mxu0 0.0
  %2589 = vmatpush1.msra.mxu0 0.0
  %2590 = vmatprep.subr.mxu0 0.0
  %2591 = vmatpush1.msra.mxu0 0.0
  %2592 = vmatprep.subr.mxu0 0.0
  %2593 = vmatpush1.msra.mxu0 0.0
  %2594 = vmatprep.subr.mxu0 0.0
  %2595 = vmatpush1.msra.mxu0 0.0
  %2596 = vmatprep.subr.mxu0 0.0
  %2597 = vmatpush1.msra.mxu0 %v2569
  %2598 = vmatprep.subr.mxu0 0.0
  %2599 = vmatpush1.msra.mxu0 %v2568
  %2600 = vmatprep.subr.mxu0 0.0
  %2601 = vmatpush1.msra.mxu0 %v2567
  %2602 = vmatprep.subr.mxu0 0.0
  %2603 = vmatpush1.msra.mxu0 %v2566
  %2604 = vmatprep.subr.mxu0 0.0
  %2605 = vmatpush1.msra.mxu0 %v2565
  %2606 = vmatprep.subr.mxu0 0.0
  %2607 = vmatpush1.msra.mxu0 %v2564
  %2608 = vmatprep.subr.mxu0 0.0
  %2609 = vmatpush1.msra.mxu0 %v2563
  %2610 = vmatprep.subr.mxu0 0.0
  %2611 = vmatpush1.msra.mxu0 %v2562
  %2612 = vmatprep.subr.mxu0 0.0
  %2613 = vmatpush2.msra.mxu0 0.0
  %2614 = vmatprep.subr.mxu0 0.0
  %2615 = vmatpush2.msra.mxu0 0.0
  %2616 = vmatprep.subr.mxu0 0.0
  %2617 = vmatpush2.msra.mxu0 0.0
  %2618 = vmatprep.subr.mxu0 0.0
  %2619 = vmatpush2.msra.mxu0 0.0
  %2620 = vmatprep.subr.mxu0 0.0
  %2621 = vmatpush2.msra.mxu0 0.0
  %2622 = vmatprep.subr.mxu0 0.0
  %2623 = vmatpush2.msra.mxu0 0.0
  %2624 = vmatprep.subr.mxu0 0.0
  %2625 = vmatpush2.msra.mxu0 0.0
  %2626 = vmatprep.subr.mxu0 0.0
  %2627 = vmatpush2.msra.mxu0 0.0
  %2628 = vmatprep.subr.mxu0 0.0
  %2629 = vmatpush2.msra.mxu0 0.0
  %2630 = vmatprep.subr.mxu0 0.0
  %2631 = vmatpush2.msra.mxu0 0.0
  %2632 = vmatprep.subr.mxu0 0.0
  %2633 = vmatpush2.msra.mxu0 0.0
  %2634 = vmatprep.subr.mxu0 0.0
  %2635 = vmatpush2.msra.mxu0 0.0
  %2636 = vmatprep.subr.mxu0 0.0
  %2637 = vmatpush2.msra.mxu0 0.0
  %2638 = vmatprep.subr.mxu0 0.0
  %2639 = vmatpush2.msra.mxu0 0.0
  %2640 = vmatprep.subr.mxu0 0.0
  %2641 = vmatpush2.msra.mxu0 0.0
  %2642 = vmatprep.subr.mxu0 0.0
  %2643 = vmatpush2.msra.mxu0 0.0
  %2644 = vmatprep.mubr.f32.mxu0 0.0
  %2645 = vmatmul.mubr.f32.gmra.mxu0 %v2575
  %v2646 = vpop.f32.mrf.mxu0
  %v2647 = vadd.f32 %v2573, %v2646
  %v2648 = vpop.f32.mrf.mxu0
  %2649 = vmatprep.mubr.f32.mxu0 0.0
  %2650 = vmatmul.mubr.f32.gmra.mxu0 %v2578
  %v2651 = vpop.f32.mrf.mxu0
  %v2652 = vadd.f32 %v2573, %v2651
  %v2653 = vpop.f32.mrf.mxu0
  %2654 = vdwg.mxu0
  %s2655 = scalar_lea.vmem %s6, 2
  %v2656 = vld [vmem:[%s2655] sm:$0x3]
  %v2657 = vlaneseq
  %v2658 = vshrl.u32 %v2657, 7
  %v2659 = vsub.s32 3, %v2658
  %v2660 = vrot.slane %v38, %v2659
  %v2662 = vsel %vm1263, %v2647, 0
  %v2665 = vsel %vm1263, %v2652, 0
  %v2668 = vsel %vm946, %v2656, 0
  %2670 = vmatprep.subr.mxu0 0.0
  %2671 = vmatpush1.msra.mxu0 0.0
  %2672 = vmatprep.subr.mxu0 0.0
  %2673 = vmatpush1.msra.mxu0 0.0
  %2674 = vmatprep.subr.mxu0 0.0
  %2675 = vmatpush1.msra.mxu0 0.0
  %2676 = vmatprep.subr.mxu0 0.0
  %2677 = vmatpush1.msra.mxu0 0.0
  %2678 = vmatprep.subr.mxu0 0.0
  %2679 = vmatpush1.msra.mxu0 0.0
  %2680 = vmatprep.subr.mxu0 0.0
  %2681 = vmatpush1.msra.mxu0 0.0
  %2682 = vmatprep.subr.mxu0 0.0
  %2683 = vmatpush1.msra.mxu0 0.0
  %2684 = vmatprep.subr.mxu0 0.0
  %2685 = vmatpush1.msra.mxu0 0.0
  %2686 = vmatprep.subr.mxu0 0.0
  %2687 = vmatpush1.msra.mxu0 0.0
  %2688 = vmatprep.subr.mxu0 0.0
  %2689 = vmatpush1.msra.mxu0 0.0
  %2690 = vmatprep.subr.mxu0 0.0
  %2691 = vmatpush1.msra.mxu0 0.0
  %2692 = vmatprep.subr.mxu0 0.0
  %2693 = vmatpush1.msra.mxu0 0.0
  %2694 = vmatprep.subr.mxu0 0.0
  %2695 = vmatpush1.msra.mxu0 0.0
  %2696 = vmatprep.subr.mxu0 0.0
  %2697 = vmatpush1.msra.mxu0 0.0
  %2698 = vmatprep.subr.mxu0 0.0
  %2699 = vmatpush1.msra.mxu0 0.0
  %2700 = vmatprep.subr.mxu0 0.0
  %2701 = vmatpush1.msra.mxu0 %v2668
  %2702 = vmatprep.subr.mxu0 0.0
  %2703 = vmatpush2.msra.mxu0 0.0
  %2704 = vmatprep.subr.mxu0 0.0
  %2705 = vmatpush2.msra.mxu0 0.0
  %2706 = vmatprep.subr.mxu0 0.0
  %2707 = vmatpush2.msra.mxu0 0.0
  %2708 = vmatprep.subr.mxu0 0.0
  %2709 = vmatpush2.msra.mxu0 0.0
  %2710 = vmatprep.subr.mxu0 0.0
  %2711 = vmatpush2.msra.mxu0 0.0
  %2712 = vmatprep.subr.mxu0 0.0
  %2713 = vmatpush2.msra.mxu0 0.0
  %2714 = vmatprep.subr.mxu0 0.0
  %2715 = vmatpush2.msra.mxu0 0.0
  %2716 = vmatprep.subr.mxu0 0.0
  %2717 = vmatpush2.msra.mxu0 0.0
  %2718 = vmatprep.subr.mxu0 0.0
  %2719 = vmatpush2.msra.mxu0 0.0
  %2720 = vmatprep.subr.mxu0 0.0
  %2721 = vmatpush2.msra.mxu0 0.0
  %2722 = vmatprep.subr.mxu0 0.0
  %2723 = vmatpush2.msra.mxu0 0.0
  %2724 = vmatprep.subr.mxu0 0.0
  %2725 = vmatpush2.msra.mxu0 0.0
  %2726 = vmatprep.subr.mxu0 0.0
  %2727 = vmatpush2.msra.mxu0 0.0
  %2728 = vmatprep.subr.mxu0 0.0
  %2729 = vmatpush2.msra.mxu0 0.0
  %2730 = vmatprep.subr.mxu0 0.0
  %2731 = vmatpush2.msra.mxu0 0.0
  %2732 = vmatprep.subr.mxu0 0.0
  %2733 = vmatpush2.msra.mxu0 0.0
  %2734 = vmatprep.mubr.f32.mxu0 0.0
  %2735 = vmatmul.mubr.f32.gmra.mxu0 %v2662
  %v2736 = vpop.f32.mrf.mxu0
  %v2737 = vadd.f32 %v2660, %v2736
  %v2738 = vpop.f32.mrf.mxu0
  %2739 = vmatprep.mubr.f32.mxu0 0.0
  %2740 = vmatmul.mubr.f32.gmra.mxu0 %v2665
  %v2741 = vpop.f32.mrf.mxu0
  %v2742 = vadd.f32 %v2660, %v2741
  %v2743 = vpop.f32.mrf.mxu0
  %2744 = vdwg.mxu0
  %v2745 = vmax.f32 %v2737, 0.0
  %v2746 = vmax.f32 %v2742, 0.0
  %vm2747 = vcmp.ne.f32.partialorder %v2737, %v2737
  %vm2748 = vcmp.ne.f32.partialorder %v2742, %v2742
  %v2749 = vadd.f32 %v2737, 0.0
  %v2750 = vadd.f32 %v2742, 0.0
  %v2751 = vand.u32 2147483647, %v2737
  %v2752 = vand.u32 2147483647, %v2742
  %v2753 = vsub.f32 0.0, %v2751
  %v2754 = vsub.f32 0.0, %v2752
  %v2755 = vmul.f32 %v2753, 1.442695
  %v2756 = vpow.pop %v2755
  %v2757 = vmul.f32 %v2754, 1.442695
  %v2758 = vpow.pop %v2757
  %v2759 = vadd.f32 %v2756, 1.0
  %v2760 = vlog2.pop %v2759
  %v2761 = vmul.f32 %v2760, 0.6931472
  %v2762 = vmul.f32 -0.5, %v2756
  %v2763 = vadd.f32 %v2762, 1.0
  %v2764 = vmul.f32 %v2763, %v2756
  %v2765 = vand.u32 2147483647, %v2756
  %vm2766 = vcmp.lt.f32.partialorder %v2765, 0.0004427343
  %v2767 = vsel %vm2766, %v2764, %v2761
  %v2768 = vadd.f32 %v2758, 1.0
  %v2769 = vlog2.pop %v2768
  %v2770 = vmul.f32 %v2769, 0.6931472
  %v2771 = vmul.f32 -0.5, %v2758
  %v2772 = vadd.f32 %v2771, 1.0
  %v2773 = vmul.f32 %v2772, %v2758
  %v2774 = vand.u32 2147483647, %v2758
  %vm2775 = vcmp.lt.f32.partialorder %v2774, 0.0004427343
  %v2776 = vsel %vm2775, %v2773, %v2770
  %v2777 = vadd.f32 %v2745, %v2767
  %v2778 = vadd.f32 %v2746, %v2776
  %v2779 = vsel %vm2747, %v2749, %v2777
  %v2780 = vsel %vm2748, %v2750, %v2778
  %s2781 = scalar_lea.vmem %s7, 16
  %v2782 = vld [vmem:[%s2781] sm:$0xff]
  %v2783 = vld [vmem:[%s2781 + $0x8] sm:$0xff]
  %v2786 = vcombine.high %v2779, %v2779
  %v2788 = vunpack.c.l.s4 1966171168
  %v2789 = vunpack.c.0.s8 %v2788
  %v2790 = vlaneseq
  %v2791 = vshrl.u32 %v2790, 7
  %v2792 = vsub.s32 %v2789, %v2791
  %v2793 = vrot.slane %v2779, %v2792
  %v2795 = vunpack.c.l.s4 1966171168
  %v2796 = vunpack.c.0.s8 %v2795
  %v2797 = vlaneseq
  %v2798 = vshrl.u32 %v2797, 7
  %v2799 = vsub.s32 %v2796, %v2798
  %v2800 = vrot.slane %v2786, %v2799
  %v2801 = vcombine.high %v2793, %v2793
  %v2802 = vcombine.high %v2800, %v2800
  %v2804 = vunpack.c.l.s4 1966171168
  %v2805 = vunpack.c.0.s8 %v2804
  %v2806 = vlaneseq
  %v2807 = vshrl.u32 %v2806, 7
  %v2808 = vsub.s32 %v2805, %v2807
  %v2809 = vrot.slane %v2793, %v2808
  %v2811 = vunpack.c.l.s4 1966171168
  %v2812 = vunpack.c.0.s8 %v2811
  %v2813 = vlaneseq
  %v2814 = vshrl.u32 %v2813, 7
  %v2815 = vsub.s32 %v2812, %v2814
  %v2816 = vrot.slane %v2800, %v2815
  %v2818 = vunpack.c.l.s4 1966171168
  %v2819 = vunpack.c.0.s8 %v2818
  %v2820 = vlaneseq
  %v2821 = vshrl.u32 %v2820, 7
  %v2822 = vsub.s32 %v2819, %v2821
  %v2823 = vrot.slane %v2801, %v2822
  %v2825 = vunpack.c.l.s4 1966171168
  %v2826 = vunpack.c.0.s8 %v2825
  %v2827 = vlaneseq
  %v2828 = vshrl.u32 %v2827, 7
  %v2829 = vsub.s32 %v2826, %v2828
  %v2830 = vrot.slane %v2802, %v2829
  %v2831 = vcombine.high %v2809, %v2809
  %v2832 = vcombine.high %v2816, %v2816
  %v2833 = vcombine.high %v2823, %v2823
  %v2834 = vcombine.high %v2830, %v2830
  %v2835 = vcombine.high %v2780, %v2780
  %v2837 = vunpack.c.l.s4 1966171168
  %v2838 = vunpack.c.0.s8 %v2837
  %v2839 = vlaneseq
  %v2840 = vshrl.u32 %v2839, 7
  %v2841 = vsub.s32 %v2838, %v2840
  %v2842 = vrot.slane %v2780, %v2841
  %v2844 = vunpack.c.l.s4 1966171168
  %v2845 = vunpack.c.0.s8 %v2844
  %v2846 = vlaneseq
  %v2847 = vshrl.u32 %v2846, 7
  %v2848 = vsub.s32 %v2845, %v2847
  %v2849 = vrot.slane %v2835, %v2848
  %v2850 = vcombine.high %v2842, %v2842
  %v2851 = vcombine.high %v2849, %v2849
  %v2853 = vunpack.c.l.s4 1966171168
  %v2854 = vunpack.c.0.s8 %v2853
  %v2855 = vlaneseq
  %v2856 = vshrl.u32 %v2855, 7
  %v2857 = vsub.s32 %v2854, %v2856
  %v2858 = vrot.slane %v2842, %v2857
  %v2860 = vunpack.c.l.s4 1966171168
  %v2861 = vunpack.c.0.s8 %v2860
  %v2862 = vlaneseq
  %v2863 = vshrl.u32 %v2862, 7
  %v2864 = vsub.s32 %v2861, %v2863
  %v2865 = vrot.slane %v2849, %v2864
  %v2867 = vunpack.c.l.s4 1966171168
  %v2868 = vunpack.c.0.s8 %v2867
  %v2869 = vlaneseq
  %v2870 = vshrl.u32 %v2869, 7
  %v2871 = vsub.s32 %v2868, %v2870
  %v2872 = vrot.slane %v2850, %v2871
  %v2874 = vunpack.c.l.s4 1966171168
  %v2875 = vunpack.c.0.s8 %v2874
  %v2876 = vlaneseq
  %v2877 = vshrl.u32 %v2876, 7
  %v2878 = vsub.s32 %v2875, %v2877
  %v2879 = vrot.slane %v2851, %v2878
  %v2880 = vcombine.high %v2858, %v2858
  %v2881 = vcombine.high %v2865, %v2865
  %v2882 = vcombine.high %v2872, %v2872
  %v2883 = vcombine.high %v2879, %v2879
  %v2884 = vlaneseq
  %v2885 = vshrl.u32 %v2884, 7
  %v2886 = vsub.s32 0, %v2885
  %v2887 = vrot.slane %v2809, %v2886
  %v2888 = vlaneseq
  %v2889 = vshrl.u32 %v2888, 7
  %v2890 = vsub.s32 0, %v2889
  %v2891 = vrot.slane %v2823, %v2890
  %v2892 = vlaneseq
  %v2893 = vshrl.u32 %v2892, 7
  %v2894 = vsub.s32 0, %v2893
  %v2895 = vrot.slane %v2831, %v2894
  %v2896 = vlaneseq
  %v2897 = vshrl.u32 %v2896, 7
  %v2898 = vsub.s32 0, %v2897
  %v2899 = vrot.slane %v2833, %v2898
  %v2900 = vlaneseq
  %v2901 = vshrl.u32 %v2900, 7
  %v2902 = vsub.s32 0, %v2901
  %v2903 = vrot.slane %v2816, %v2902
  %v2904 = vlaneseq
  %v2905 = vshrl.u32 %v2904, 7
  %v2906 = vsub.s32 0, %v2905
  %v2907 = vrot.slane %v2830, %v2906
  %v2908 = vlaneseq
  %v2909 = vshrl.u32 %v2908, 7
  %v2910 = vsub.s32 0, %v2909
  %v2911 = vrot.slane %v2832, %v2910
  %v2912 = vlaneseq
  %v2913 = vshrl.u32 %v2912, 7
  %v2914 = vsub.s32 0, %v2913
  %v2915 = vrot.slane %v2834, %v2914
  %v2916 = vlaneseq
  %v2917 = vshrl.u32 %v2916, 7
  %v2918 = vsub.s32 0, %v2917
  %v2919 = vrot.slane %v2858, %v2918
  %v2920 = vlaneseq
  %v2921 = vshrl.u32 %v2920, 7
  %v2922 = vsub.s32 0, %v2921
  %v2923 = vrot.slane %v2872, %v2922
  %v2924 = vlaneseq
  %v2925 = vshrl.u32 %v2924, 7
  %v2926 = vsub.s32 0, %v2925
  %v2927 = vrot.slane %v2880, %v2926
  %v2928 = vlaneseq
  %v2929 = vshrl.u32 %v2928, 7
  %v2930 = vsub.s32 0, %v2929
  %v2931 = vrot.slane %v2882, %v2930
  %v2932 = vlaneseq
  %v2933 = vshrl.u32 %v2932, 7
  %v2934 = vsub.s32 0, %v2933
  %v2935 = vrot.slane %v2865, %v2934
  %v2936 = vlaneseq
  %v2937 = vshrl.u32 %v2936, 7
  %v2938 = vsub.s32 0, %v2937
  %v2939 = vrot.slane %v2879, %v2938
  %v2940 = vlaneseq
  %v2941 = vshrl.u32 %v2940, 7
  %v2942 = vsub.s32 0, %v2941
  %v2943 = vrot.slane %v2881, %v2942
  %v2944 = vlaneseq
  %v2945 = vshrl.u32 %v2944, 7
  %v2946 = vsub.s32 0, %v2945
  %v2947 = vrot.slane %v2883, %v2946
  %v2964 = vmul.f32 %v2887, %v2782
  %v2965 = vmul.f32 %v2887, %v2783
  %v2966 = vmul.f32 %v2891, %v2782
  %v2967 = vmul.f32 %v2891, %v2783
  %v2968 = vmul.f32 %v2895, %v2782
  %v2969 = vmul.f32 %v2895, %v2783
  %v2970 = vmul.f32 %v2899, %v2782
  %v2971 = vmul.f32 %v2899, %v2783
  %v2972 = vmul.f32 %v2903, %v2782
  %v2973 = vmul.f32 %v2903, %v2783
  %v2974 = vmul.f32 %v2907, %v2782
  %v2975 = vmul.f32 %v2907, %v2783
  %v2976 = vmul.f32 %v2911, %v2782
  %v2977 = vmul.f32 %v2911, %v2783
  %v2978 = vmul.f32 %v2915, %v2782
  %v2979 = vmul.f32 %v2915, %v2783
  %v2980 = vmul.f32 %v2919, %v2782
  %v2981 = vmul.f32 %v2919, %v2783
  %v2982 = vmul.f32 %v2923, %v2782
  %v2983 = vmul.f32 %v2923, %v2783
  %v2984 = vmul.f32 %v2927, %v2782
  %v2985 = vmul.f32 %v2927, %v2783
  %v2986 = vmul.f32 %v2931, %v2782
  %v2987 = vmul.f32 %v2931, %v2783
  %v2988 = vmul.f32 %v2935, %v2782
  %v2989 = vmul.f32 %v2935, %v2783
  %v2990 = vmul.f32 %v2939, %v2782
  %v2991 = vmul.f32 %v2939, %v2783
  %v2992 = vmul.f32 %v2943, %v2782
  %v2993 = vmul.f32 %v2943, %v2783
  %v2994 = vmul.f32 %v2947, %v2782
  %v2995 = vmul.f32 %v2947, %v2783
  %v2996 = vmul.f32 %v2964, 1.442695
  %v2997 = vpow.pop %v2996
  %v2998 = vmul.f32 %v2965, 1.442695
  %v2999 = vpow.pop %v2998
  %v3000 = vmul.f32 %v2966, 1.442695
  %v3001 = vpow.pop %v3000
  %v3002 = vmul.f32 %v2967, 1.442695
  %v3003 = vpow.pop %v3002
  %v3004 = vmul.f32 %v2968, 1.442695
  %v3005 = vpow.pop %v3004
  %v3006 = vmul.f32 %v2969, 1.442695
  %v3007 = vpow.pop %v3006
  %v3008 = vmul.f32 %v2970, 1.442695
  %v3009 = vpow.pop %v3008
  %v3010 = vmul.f32 %v2971, 1.442695
  %v3011 = vpow.pop %v3010
  %v3012 = vmul.f32 %v2972, 1.442695
  %v3013 = vpow.pop %v3012
  %v3014 = vmul.f32 %v2973, 1.442695
  %v3015 = vpow.pop %v3014
  %v3016 = vmul.f32 %v2974, 1.442695
  %v3017 = vpow.pop %v3016
  %v3018 = vmul.f32 %v2975, 1.442695
  %v3019 = vpow.pop %v3018
  %v3020 = vmul.f32 %v2976, 1.442695
  %v3021 = vpow.pop %v3020
  %v3022 = vmul.f32 %v2977, 1.442695
  %v3023 = vpow.pop %v3022
  %v3024 = vmul.f32 %v2978, 1.442695
  %v3025 = vpow.pop %v3024
  %v3026 = vmul.f32 %v2979, 1.442695
  %v3027 = vpow.pop %v3026
  %v3028 = vmul.f32 %v2980, 1.442695
  %v3029 = vpow.pop %v3028
  %v3030 = vmul.f32 %v2981, 1.442695
  %v3031 = vpow.pop %v3030
  %v3032 = vmul.f32 %v2982, 1.442695
  %v3033 = vpow.pop %v3032
  %v3034 = vmul.f32 %v2983, 1.442695
  %v3035 = vpow.pop %v3034
  %v3036 = vmul.f32 %v2984, 1.442695
  %v3037 = vpow.pop %v3036
  %v3038 = vmul.f32 %v2985, 1.442695
  %v3039 = vpow.pop %v3038
  %v3040 = vmul.f32 %v2986, 1.442695
  %v3041 = vpow.pop %v3040
  %v3042 = vmul.f32 %v2987, 1.442695
  %v3043 = vpow.pop %v3042
  %v3044 = vmul.f32 %v2988, 1.442695
  %v3045 = vpow.pop %v3044
  %v3046 = vmul.f32 %v2989, 1.442695
  %v3047 = vpow.pop %v3046
  %v3048 = vmul.f32 %v2990, 1.442695
  %v3049 = vpow.pop %v3048
  %v3050 = vmul.f32 %v2991, 1.442695
  %v3051 = vpow.pop %v3050
  %v3052 = vmul.f32 %v2992, 1.442695
  %v3053 = vpow.pop %v3052
  %v3054 = vmul.f32 %v2993, 1.442695
  %v3055 = vpow.pop %v3054
  %v3056 = vmul.f32 %v2994, 1.442695
  %v3057 = vpow.pop %v3056
  %v3058 = vmul.f32 %v2995, 1.442695
  %v3059 = vpow.pop %v3058
  %v3060 = vlaneseq
  %v3061 = vshrl.u32 %v3060, 7
  %v3062 = vsub.s32 0, %v3061
  %v3063 = vrot.slane %v2647, %v3062
  %s3065 = sor.u32 256, 2
  %3066 = vbcast.lane.b32.xlu0 %v3063, %s3065
  %v3067 = vpop.permute.xlu0 %3066
  %s3069 = sor.u32 256, 10
  %3070 = vbcast.lane.b32.xlu0 %v3063, %s3069
  %v3071 = vpop.permute.xlu0 %3070
  %v3072 = vlaneseq
  %v3073 = vshrl.u32 %v3072, 7
  %v3074 = vsub.s32 1, %v3073
  %v3075 = vrot.slane %v2647, %v3074
  %s3077 = sor.u32 256, 2
  %3078 = vbcast.lane.b32.xlu0 %v3075, %s3077
  %v3079 = vpop.permute.xlu0 %3078
  %s3081 = sor.u32 256, 10
  %3082 = vbcast.lane.b32.xlu0 %v3075, %s3081
  %v3083 = vpop.permute.xlu0 %3082
  %v3084 = vlaneseq
  %v3085 = vshrl.u32 %v3084, 7
  %v3086 = vsub.s32 2, %v3085
  %v3087 = vrot.slane %v2647, %v3086
  %s3089 = sor.u32 256, 2
  %3090 = vbcast.lane.b32.xlu0 %v3087, %s3089
  %v3091 = vpop.permute.xlu0 %3090
  %s3093 = sor.u32 256, 10
  %3094 = vbcast.lane.b32.xlu0 %v3087, %s3093
  %v3095 = vpop.permute.xlu0 %3094
  %v3096 = vlaneseq
  %v3097 = vshrl.u32 %v3096, 7
  %v3098 = vsub.s32 3, %v3097
  %v3099 = vrot.slane %v2647, %v3098
  %s3101 = sor.u32 256, 2
  %3102 = vbcast.lane.b32.xlu0 %v3099, %s3101
  %v3103 = vpop.permute.xlu0 %3102
  %s3105 = sor.u32 256, 10
  %3106 = vbcast.lane.b32.xlu0 %v3099, %s3105
  %v3107 = vpop.permute.xlu0 %3106
  %v3108 = vlaneseq
  %v3109 = vshrl.u32 %v3108, 7
  %v3110 = vsub.s32 4, %v3109
  %v3111 = vrot.slane %v2647, %v3110
  %s3113 = sor.u32 256, 2
  %3114 = vbcast.lane.b32.xlu0 %v3111, %s3113
  %v3115 = vpop.permute.xlu0 %3114
  %s3117 = sor.u32 256, 10
  %3118 = vbcast.lane.b32.xlu0 %v3111, %s3117
  %v3119 = vpop.permute.xlu0 %3118
  %v3120 = vlaneseq
  %v3121 = vshrl.u32 %v3120, 7
  %v3122 = vsub.s32 5, %v3121
  %v3123 = vrot.slane %v2647, %v3122
  %s3125 = sor.u32 256, 2
  %3126 = vbcast.lane.b32.xlu0 %v3123, %s3125
  %v3127 = vpop.permute.xlu0 %3126
  %s3129 = sor.u32 256, 10
  %3130 = vbcast.lane.b32.xlu0 %v3123, %s3129
  %v3131 = vpop.permute.xlu0 %3130
  %v3132 = vlaneseq
  %v3133 = vshrl.u32 %v3132, 7
  %v3134 = vsub.s32 6, %v3133
  %v3135 = vrot.slane %v2647, %v3134
  %s3137 = sor.u32 256, 2
  %3138 = vbcast.lane.b32.xlu0 %v3135, %s3137
  %v3139 = vpop.permute.xlu0 %3138
  %s3141 = sor.u32 256, 10
  %3142 = vbcast.lane.b32.xlu0 %v3135, %s3141
  %v3143 = vpop.permute.xlu0 %3142
  %v3144 = vlaneseq
  %v3145 = vshrl.u32 %v3144, 7
  %v3146 = vsub.s32 7, %v3145
  %v3147 = vrot.slane %v2647, %v3146
  %s3149 = sor.u32 256, 2
  %3150 = vbcast.lane.b32.xlu0 %v3147, %s3149
  %v3151 = vpop.permute.xlu0 %3150
  %s3153 = sor.u32 256, 10
  %3154 = vbcast.lane.b32.xlu0 %v3147, %s3153
  %v3155 = vpop.permute.xlu0 %3154
  %v3156 = vlaneseq
  %v3157 = vshrl.u32 %v3156, 7
  %v3158 = vsub.s32 0, %v3157
  %v3159 = vrot.slane %v2652, %v3158
  %s3161 = sor.u32 256, 2
  %3162 = vbcast.lane.b32.xlu0 %v3159, %s3161
  %v3163 = vpop.permute.xlu0 %3162
  %s3165 = sor.u32 256, 10
  %3166 = vbcast.lane.b32.xlu0 %v3159, %s3165
  %v3167 = vpop.permute.xlu0 %3166
  %v3168 = vlaneseq
  %v3169 = vshrl.u32 %v3168, 7
  %v3170 = vsub.s32 1, %v3169
  %v3171 = vrot.slane %v2652, %v3170
  %s3173 = sor.u32 256, 2
  %3174 = vbcast.lane.b32.xlu0 %v3171, %s3173
  %v3175 = vpop.permute.xlu0 %3174
  %s3177 = sor.u32 256, 10
  %3178 = vbcast.lane.b32.xlu0 %v3171, %s3177
  %v3179 = vpop.permute.xlu0 %3178
  %v3180 = vlaneseq
  %v3181 = vshrl.u32 %v3180, 7
  %v3182 = vsub.s32 2, %v3181
  %v3183 = vrot.slane %v2652, %v3182
  %s3185 = sor.u32 256, 2
  %3186 = vbcast.lane.b32.xlu0 %v3183, %s3185
  %v3187 = vpop.permute.xlu0 %3186
  %s3189 = sor.u32 256, 10
  %3190 = vbcast.lane.b32.xlu0 %v3183, %s3189
  %v3191 = vpop.permute.xlu0 %3190
  %v3192 = vlaneseq
  %v3193 = vshrl.u32 %v3192, 7
  %v3194 = vsub.s32 3, %v3193
  %v3195 = vrot.slane %v2652, %v3194
  %s3197 = sor.u32 256, 2
  %3198 = vbcast.lane.b32.xlu0 %v3195, %s3197
  %v3199 = vpop.permute.xlu0 %3198
  %s3201 = sor.u32 256, 10
  %3202 = vbcast.lane.b32.xlu0 %v3195, %s3201
  %v3203 = vpop.permute.xlu0 %3202
  %v3204 = vlaneseq
  %v3205 = vshrl.u32 %v3204, 7
  %v3206 = vsub.s32 4, %v3205
  %v3207 = vrot.slane %v2652, %v3206
  %s3209 = sor.u32 256, 2
  %3210 = vbcast.lane.b32.xlu0 %v3207, %s3209
  %v3211 = vpop.permute.xlu0 %3210
  %s3213 = sor.u32 256, 10
  %3214 = vbcast.lane.b32.xlu0 %v3207, %s3213
  %v3215 = vpop.permute.xlu0 %3214
  %v3216 = vlaneseq
  %v3217 = vshrl.u32 %v3216, 7
  %v3218 = vsub.s32 5, %v3217
  %v3219 = vrot.slane %v2652, %v3218
  %s3221 = sor.u32 256, 2
  %3222 = vbcast.lane.b32.xlu0 %v3219, %s3221
  %v3223 = vpop.permute.xlu0 %3222
  %s3225 = sor.u32 256, 10
  %3226 = vbcast.lane.b32.xlu0 %v3219, %s3225
  %v3227 = vpop.permute.xlu0 %3226
  %v3228 = vlaneseq
  %v3229 = vshrl.u32 %v3228, 7
  %v3230 = vsub.s32 6, %v3229
  %v3231 = vrot.slane %v2652, %v3230
  %s3233 = sor.u32 256, 2
  %3234 = vbcast.lane.b32.xlu0 %v3231, %s3233
  %v3235 = vpop.permute.xlu0 %3234
  %s3237 = sor.u32 256, 10
  %3238 = vbcast.lane.b32.xlu0 %v3231, %s3237
  %v3239 = vpop.permute.xlu0 %3238
  %v3240 = vlaneseq
  %v3241 = vshrl.u32 %v3240, 7
  %v3242 = vsub.s32 7, %v3241
  %v3243 = vrot.slane %v2652, %v3242
  %s3245 = sor.u32 256, 2
  %3246 = vbcast.lane.b32.xlu0 %v3243, %s3245
  %v3247 = vpop.permute.xlu0 %3246
  %s3249 = sor.u32 256, 10
  %3250 = vbcast.lane.b32.xlu0 %v3243, %s3249
  %v3251 = vpop.permute.xlu0 %3250
  %v3252 = vmul.f32 %v2779, %v1162
  %v3253 = vmul.f32 %v2780, %v1163
  %v3256 = vcombine.high %v3252, %v3252
  %v3258 = vunpack.c.l.s4 1966171168
  %v3259 = vunpack.c.0.s8 %v3258
  %v3260 = vlaneseq
  %v3261 = vshrl.u32 %v3260, 7
  %v3262 = vsub.s32 %v3259, %v3261
  %v3263 = vrot.slane %v3252, %v3262
  %v3265 = vunpack.c.l.s4 1966171168
  %v3266 = vunpack.c.0.s8 %v3265
  %v3267 = vlaneseq
  %v3268 = vshrl.u32 %v3267, 7
  %v3269 = vsub.s32 %v3266, %v3268
  %v3270 = vrot.slane %v3256, %v3269
  %v3271 = vcombine.high %v3263, %v3263
  %v3272 = vcombine.high %v3270, %v3270
  %v3274 = vunpack.c.l.s4 1966171168
  %v3275 = vunpack.c.0.s8 %v3274
  %v3276 = vlaneseq
  %v3277 = vshrl.u32 %v3276, 7
  %v3278 = vsub.s32 %v3275, %v3277
  %v3279 = vrot.slane %v3263, %v3278
  %v3281 = vunpack.c.l.s4 1966171168
  %v3282 = vunpack.c.0.s8 %v3281
  %v3283 = vlaneseq
  %v3284 = vshrl.u32 %v3283, 7
  %v3285 = vsub.s32 %v3282, %v3284
  %v3286 = vrot.slane %v3270, %v3285
  %v3288 = vunpack.c.l.s4 1966171168
  %v3289 = vunpack.c.0.s8 %v3288
  %v3290 = vlaneseq
  %v3291 = vshrl.u32 %v3290, 7
  %v3292 = vsub.s32 %v3289, %v3291
  %v3293 = vrot.slane %v3271, %v3292
  %v3295 = vunpack.c.l.s4 1966171168
  %v3296 = vunpack.c.0.s8 %v3295
  %v3297 = vlaneseq
  %v3298 = vshrl.u32 %v3297, 7
  %v3299 = vsub.s32 %v3296, %v3298
  %v3300 = vrot.slane %v3272, %v3299
  %v3301 = vcombine.high %v3279, %v3279
  %v3302 = vcombine.high %v3286, %v3286
  %v3303 = vcombine.high %v3293, %v3293
  %v3304 = vcombine.high %v3300, %v3300
  %v3305 = vcombine.high %v3253, %v3253
  %v3307 = vunpack.c.l.s4 1966171168
  %v3308 = vunpack.c.0.s8 %v3307
  %v3309 = vlaneseq
  %v3310 = vshrl.u32 %v3309, 7
  %v3311 = vsub.s32 %v3308, %v3310
  %v3312 = vrot.slane %v3253, %v3311
  %v3314 = vunpack.c.l.s4 1966171168
  %v3315 = vunpack.c.0.s8 %v3314
  %v3316 = vlaneseq
  %v3317 = vshrl.u32 %v3316, 7
  %v3318 = vsub.s32 %v3315, %v3317
  %v3319 = vrot.slane %v3305, %v3318
  %v3320 = vcombine.high %v3312, %v3312
  %v3321 = vcombine.high %v3319, %v3319
  %v3323 = vunpack.c.l.s4 1966171168
  %v3324 = vunpack.c.0.s8 %v3323
  %v3325 = vlaneseq
  %v3326 = vshrl.u32 %v3325, 7
  %v3327 = vsub.s32 %v3324, %v3326
  %v3328 = vrot.slane %v3312, %v3327
  %v3330 = vunpack.c.l.s4 1966171168
  %v3331 = vunpack.c.0.s8 %v3330
  %v3332 = vlaneseq
  %v3333 = vshrl.u32 %v3332, 7
  %v3334 = vsub.s32 %v3331, %v3333
  %v3335 = vrot.slane %v3319, %v3334
  %v3337 = vunpack.c.l.s4 1966171168
  %v3338 = vunpack.c.0.s8 %v3337
  %v3339 = vlaneseq
  %v3340 = vshrl.u32 %v3339, 7
  %v3341 = vsub.s32 %v3338, %v3340
  %v3342 = vrot.slane %v3320, %v3341
  %v3344 = vunpack.c.l.s4 1966171168
  %v3345 = vunpack.c.0.s8 %v3344
  %v3346 = vlaneseq
  %v3347 = vshrl.u32 %v3346, 7
  %v3348 = vsub.s32 %v3345, %v3347
  %v3349 = vrot.slane %v3321, %v3348
  %v3350 = vcombine.high %v3328, %v3328
  %v3351 = vcombine.high %v3335, %v3335
  %v3352 = vcombine.high %v3342, %v3342
  %v3353 = vcombine.high %v3349, %v3349
  %v3354 = vlaneseq
  %v3355 = vshrl.u32 %v3354, 7
  %v3356 = vsub.s32 0, %v3355
  %v3357 = vrot.slane %v3279, %v3356
  %v3358 = vlaneseq
  %v3359 = vshrl.u32 %v3358, 7
  %v3360 = vsub.s32 0, %v3359
  %v3361 = vrot.slane %v3293, %v3360
  %v3362 = vlaneseq
  %v3363 = vshrl.u32 %v3362, 7
  %v3364 = vsub.s32 0, %v3363
  %v3365 = vrot.slane %v3301, %v3364
  %v3366 = vlaneseq
  %v3367 = vshrl.u32 %v3366, 7
  %v3368 = vsub.s32 0, %v3367
  %v3369 = vrot.slane %v3303, %v3368
  %v3370 = vlaneseq
  %v3371 = vshrl.u32 %v3370, 7
  %v3372 = vsub.s32 0, %v3371
  %v3373 = vrot.slane %v3286, %v3372
  %v3374 = vlaneseq
  %v3375 = vshrl.u32 %v3374, 7
  %v3376 = vsub.s32 0, %v3375
  %v3377 = vrot.slane %v3300, %v3376
  %v3378 = vlaneseq
  %v3379 = vshrl.u32 %v3378, 7
  %v3380 = vsub.s32 0, %v3379
  %v3381 = vrot.slane %v3302, %v3380
  %v3382 = vlaneseq
  %v3383 = vshrl.u32 %v3382, 7
  %v3384 = vsub.s32 0, %v3383
  %v3385 = vrot.slane %v3304, %v3384
  %v3386 = vlaneseq
  %v3387 = vshrl.u32 %v3386, 7
  %v3388 = vsub.s32 0, %v3387
  %v3389 = vrot.slane %v3328, %v3388
  %v3390 = vlaneseq
  %v3391 = vshrl.u32 %v3390, 7
  %v3392 = vsub.s32 0, %v3391
  %v3393 = vrot.slane %v3342, %v3392
  %v3394 = vlaneseq
  %v3395 = vshrl.u32 %v3394, 7
  %v3396 = vsub.s32 0, %v3395
  %v3397 = vrot.slane %v3350, %v3396
  %v3398 = vlaneseq
  %v3399 = vshrl.u32 %v3398, 7
  %v3400 = vsub.s32 0, %v3399
  %v3401 = vrot.slane %v3352, %v3400
  %v3402 = vlaneseq
  %v3403 = vshrl.u32 %v3402, 7
  %v3404 = vsub.s32 0, %v3403
  %v3405 = vrot.slane %v3335, %v3404
  %v3406 = vlaneseq
  %v3407 = vshrl.u32 %v3406, 7
  %v3408 = vsub.s32 0, %v3407
  %v3409 = vrot.slane %v3349, %v3408
  %v3410 = vlaneseq
  %v3411 = vshrl.u32 %v3410, 7
  %v3412 = vsub.s32 0, %v3411
  %v3413 = vrot.slane %v3351, %v3412
  %v3414 = vlaneseq
  %v3415 = vshrl.u32 %v3414, 7
  %v3416 = vsub.s32 0, %v3415
  %v3417 = vrot.slane %v3353, %v3416
  %v3434 = vmul.f32 %v3067, %v3357
  %v3435 = vmul.f32 %v3071, %v3357
  %v3436 = vmul.f32 %v3079, %v3361
  %v3437 = vmul.f32 %v3083, %v3361
  %v3438 = vmul.f32 %v3091, %v3365
  %v3439 = vmul.f32 %v3095, %v3365
  %v3440 = vmul.f32 %v3103, %v3369
  %v3441 = vmul.f32 %v3107, %v3369
  %v3442 = vmul.f32 %v3115, %v3373
  %v3443 = vmul.f32 %v3119, %v3373
  %v3444 = vmul.f32 %v3127, %v3377
  %v3445 = vmul.f32 %v3131, %v3377
  %v3446 = vmul.f32 %v3139, %v3381
  %v3447 = vmul.f32 %v3143, %v3381
  %v3448 = vmul.f32 %v3151, %v3385
  %v3449 = vmul.f32 %v3155, %v3385
  %v3450 = vmul.f32 %v3163, %v3389
  %v3451 = vmul.f32 %v3167, %v3389
  %v3452 = vmul.f32 %v3175, %v3393
  %v3453 = vmul.f32 %v3179, %v3393
  %v3454 = vmul.f32 %v3187, %v3397
  %v3455 = vmul.f32 %v3191, %v3397
  %v3456 = vmul.f32 %v3199, %v3401
  %v3457 = vmul.f32 %v3203, %v3401
  %v3458 = vmul.f32 %v3211, %v3405
  %v3459 = vmul.f32 %v3215, %v3405
  %v3460 = vmul.f32 %v3223, %v3409
  %v3461 = vmul.f32 %v3227, %v3409
  %v3462 = vmul.f32 %v3235, %v3413
  %v3463 = vmul.f32 %v3239, %v3413
  %v3464 = vmul.f32 %v3247, %v3417
  %v3465 = vmul.f32 %v3251, %v3417
  %v3466 = vmul.f32 %v2997, 0.0
  %v3467 = vmul.f32 %v2999, 0.0
  %v3468 = vmul.f32 %v3029, 0.0
  %v3469 = vmul.f32 %v3031, 0.0
  %v3470 = vadd.f32 %v3466, %v3434
  %v3471 = vadd.f32 %v3467, %v3435
  %v3472 = vadd.f32 %v3468, %v3450
  %v3473 = vadd.f32 %v3469, %v3451
  %3474 = vst.msk [vmem:[#allocation3] sm:$0xff] %vm1176, %v3470
  %3475 = vst.msk [vmem:[#allocation3 + $0x8] sm:$0xff] %vm1176, %v3471
  %3476 = vst.msk [vmem:[#allocation3 + $0x80] sm:$0xff] %vm1176, %v3472
  %3477 = vst.msk [vmem:[#allocation3 + $0x88] sm:$0xff] %vm1176, %v3473
  %v3478 = vmul.f32 %v3001, %v3470
  %v3479 = vmul.f32 %v3003, %v3471
  %v3480 = vmul.f32 %v3033, %v3472
  %v3481 = vmul.f32 %v3035, %v3473
  %v3482 = vadd.f32 %v3478, %v3436
  %v3483 = vadd.f32 %v3479, %v3437
  %v3484 = vadd.f32 %v3480, %v3452
  %v3485 = vadd.f32 %v3481, %v3453
  %3486 = vst.msk [vmem:[%s2088] sm:$0xff] %vm1176, %v3482
  %3487 = vst.msk [vmem:[%s2088 + $0x8] sm:$0xff] %vm1176, %v3483
  %3488 = vst.msk [vmem:[%s2088 + $0x80] sm:$0xff] %vm1176, %v3484
  %3489 = vst.msk [vmem:[%s2088 + $0x88] sm:$0xff] %vm1176, %v3485
  %v3490 = vmul.f32 %v3005, %v3482
  %v3491 = vmul.f32 %v3007, %v3483
  %v3492 = vmul.f32 %v3037, %v3484
  %v3493 = vmul.f32 %v3039, %v3485
  %v3494 = vadd.f32 %v3490, %v3438
  %v3495 = vadd.f32 %v3491, %v3439
  %v3496 = vadd.f32 %v3492, %v3454
  %v3497 = vadd.f32 %v3493, %v3455
  %3498 = vst.msk [vmem:[%s2101] sm:$0xff] %vm1176, %v3494
  %3499 = vst.msk [vmem:[%s2101 + $0x8] sm:$0xff] %vm1176, %v3495
  %3500 = vst.msk [vmem:[%s2101 + $0x80] sm:$0xff] %vm1176, %v3496
  %3501 = vst.msk [vmem:[%s2101 + $0x88] sm:$0xff] %vm1176, %v3497
  %v3502 = vmul.f32 %v3009, %v3494
  %v3503 = vmul.f32 %v3011, %v3495
  %v3504 = vmul.f32 %v3041, %v3496
  %v3505 = vmul.f32 %v3043, %v3497
  %v3506 = vadd.f32 %v3502, %v3440
  %v3507 = vadd.f32 %v3503, %v3441
  %v3508 = vadd.f32 %v3504, %v3456
  %v3509 = vadd.f32 %v3505, %v3457
  %3510 = vst.msk [vmem:[%s2114] sm:$0xff] %vm1176, %v3506
  %3511 = vst.msk [vmem:[%s2114 + $0x8] sm:$0xff] %vm1176, %v3507
  %3512 = vst.msk [vmem:[%s2114 + $0x80] sm:$0xff] %vm1176, %v3508
  %3513 = vst.msk [vmem:[%s2114 + $0x88] sm:$0xff] %vm1176, %v3509
  %v3514 = vmul.f32 %v3013, %v3506
  %v3515 = vmul.f32 %v3015, %v3507
  %v3516 = vmul.f32 %v3045, %v3508
  %v3517 = vmul.f32 %v3047, %v3509
  %v3518 = vadd.f32 %v3514, %v3442
  %v3519 = vadd.f32 %v3515, %v3443
  %v3520 = vadd.f32 %v3516, %v3458
  %v3521 = vadd.f32 %v3517, %v3459
  %3522 = vst.msk [vmem:[%s2127] sm:$0xff] %vm1176, %v3518
  %3523 = vst.msk [vmem:[%s2127 + $0x8] sm:$0xff] %vm1176, %v3519
  %3524 = vst.msk [vmem:[%s2127 + $0x80] sm:$0xff] %vm1176, %v3520
  %3525 = vst.msk [vmem:[%s2127 + $0x88] sm:$0xff] %vm1176, %v3521
  %v3526 = vmul.f32 %v3017, %v3518
  %v3527 = vmul.f32 %v3019, %v3519
  %v3528 = vmul.f32 %v3049, %v3520
  %v3529 = vmul.f32 %v3051, %v3521
  %v3530 = vadd.f32 %v3526, %v3444
  %v3531 = vadd.f32 %v3527, %v3445
  %v3532 = vadd.f32 %v3528, %v3460
  %v3533 = vadd.f32 %v3529, %v3461
  %3534 = vst.msk [vmem:[%s2140] sm:$0xff] %vm1176, %v3530
  %3535 = vst.msk [vmem:[%s2140 + $0x8] sm:$0xff] %vm1176, %v3531
  %3536 = vst.msk [vmem:[%s2140 + $0x80] sm:$0xff] %vm1176, %v3532
  %3537 = vst.msk [vmem:[%s2140 + $0x88] sm:$0xff] %vm1176, %v3533
  %v3538 = vmul.f32 %v3021, %v3530
  %v3539 = vmul.f32 %v3023, %v3531
  %v3540 = vmul.f32 %v3053, %v3532
  %v3541 = vmul.f32 %v3055, %v3533
  %v3542 = vadd.f32 %v3538, %v3446
  %v3543 = vadd.f32 %v3539, %v3447
  %v3544 = vadd.f32 %v3540, %v3462
  %v3545 = vadd.f32 %v3541, %v3463
  %3546 = vst.msk [vmem:[%s2153] sm:$0xff] %vm1176, %v3542
  %3547 = vst.msk [vmem:[%s2153 + $0x8] sm:$0xff] %vm1176, %v3543
  %3548 = vst.msk [vmem:[%s2153 + $0x80] sm:$0xff] %vm1176, %v3544
  %3549 = vst.msk [vmem:[%s2153 + $0x88] sm:$0xff] %vm1176, %v3545
  %v3550 = vmul.f32 %v3025, %v3542
  %v3551 = vmul.f32 %v3027, %v3543
  %v3552 = vmul.f32 %v3057, %v3544
  %v3553 = vmul.f32 %v3059, %v3545
  %v3554 = vadd.f32 %v3550, %v3448
  %v3555 = vadd.f32 %v3551, %v3449
  %v3556 = vadd.f32 %v3552, %v3464
  %v3557 = vadd.f32 %v3553, %v3465
  %3558 = vst.msk [vmem:[%s2166] sm:$0xff] %vm1176, %v3554
  %3559 = vst.msk [vmem:[%s2166 + $0x8] sm:$0xff] %vm1176, %v3555
  %3560 = vst.msk [vmem:[%s2166 + $0x80] sm:$0xff] %vm1176, %v3556
  %3561 = vst.msk [vmem:[%s2166 + $0x88] sm:$0xff] %vm1176, %v3557
  %v3562 = vld [vmem:[#allocation3] sm:$0xff]
  %v3563 = vld [vmem:[#allocation3 + $0x8] sm:$0xff]
  %v3564 = vld [vmem:[#allocation3 + $0x10] sm:$0xff]
  %v3565 = vld [vmem:[#allocation3 + $0x18] sm:$0xff]
  %v3566 = vld [vmem:[#allocation3 + $0x20] sm:$0xff]
  %v3567 = vld [vmem:[#allocation3 + $0x28] sm:$0xff]
  %v3568 = vld [vmem:[#allocation3 + $0x30] sm:$0xff]
  %v3569 = vld [vmem:[#allocation3 + $0x38] sm:$0xff]
  %v3570 = vld [vmem:[#allocation3 + $0x40] sm:$0xff]
  %v3571 = vld [vmem:[#allocation3 + $0x48] sm:$0xff]
  %v3572 = vld [vmem:[#allocation3 + $0x50] sm:$0xff]
  %v3573 = vld [vmem:[#allocation3 + $0x58] sm:$0xff]
  %v3574 = vld [vmem:[#allocation3 + $0x60] sm:$0xff]
  %v3575 = vld [vmem:[#allocation3 + $0x68] sm:$0xff]
  %v3576 = vld [vmem:[#allocation3 + $0x70] sm:$0xff]
  %v3577 = vld [vmem:[#allocation3 + $0x78] sm:$0xff]
  %v3578 = vld [vmem:[#allocation3 + $0x80] sm:$0xff]
  %v3579 = vld [vmem:[#allocation3 + $0x88] sm:$0xff]
  %v3580 = vld [vmem:[#allocation3 + $0x90] sm:$0xff]
  %v3581 = vld [vmem:[#allocation3 + $0x98] sm:$0xff]
  %v3582 = vld [vmem:[#allocation3 + $0xa0] sm:$0xff]
  %v3583 = vld [vmem:[#allocation3 + $0xa8] sm:$0xff]
  %v3584 = vld [vmem:[#allocation3 + $0xb0] sm:$0xff]
  %v3585 = vld [vmem:[#allocation3 + $0xb8] sm:$0xff]
  %v3586 = vld [vmem:[#allocation3 + $0xc0] sm:$0xff]
  %v3587 = vld [vmem:[#allocation3 + $0xc8] sm:$0xff]
  %v3588 = vld [vmem:[#allocation3 + $0xd0] sm:$0xff]
  %v3589 = vld [vmem:[#allocation3 + $0xd8] sm:$0xff]
  %v3590 = vld [vmem:[#allocation3 + $0xe0] sm:$0xff]
  %v3591 = vld [vmem:[#allocation3 + $0xe8] sm:$0xff]
  %v3592 = vld [vmem:[#allocation3 + $0xf0] sm:$0xff]
  %v3593 = vld [vmem:[#allocation3 + $0xf8] sm:$0xff]
  %s3595 = sor.u32 256, 18
  %3596 = vbcast.lane.b32.xlu0 %v3063, %s3595
  %v3597 = vpop.permute.xlu0 %3596
  %s3599 = sor.u32 256, 26
  %3600 = vbcast.lane.b32.xlu0 %v3063, %s3599
  %v3601 = vpop.permute.xlu0 %3600
  %s3603 = sor.u32 256, 18
  %3604 = vbcast.lane.b32.xlu0 %v3075, %s3603
  %v3605 = vpop.permute.xlu0 %3604
  %s3607 = sor.u32 256, 26
  %3608 = vbcast.lane.b32.xlu0 %v3075, %s3607
  %v3609 = vpop.permute.xlu0 %3608
  %s3611 = sor.u32 256, 18
  %3612 = vbcast.lane.b32.xlu0 %v3087, %s3611
  %v3613 = vpop.permute.xlu0 %3612
  %s3615 = sor.u32 256, 26
  %3616 = vbcast.lane.b32.xlu0 %v3087, %s3615
  %v3617 = vpop.permute.xlu0 %3616
  %s3619 = sor.u32 256, 18
  %3620 = vbcast.lane.b32.xlu0 %v3099, %s3619
  %v3621 = vpop.permute.xlu0 %3620
  %s3623 = sor.u32 256, 26
  %3624 = vbcast.lane.b32.xlu0 %v3099, %s3623
  %v3625 = vpop.permute.xlu0 %3624
  %s3627 = sor.u32 256, 18
  %3628 = vbcast.lane.b32.xlu0 %v3111, %s3627
  %v3629 = vpop.permute.xlu0 %3628
  %s3631 = sor.u32 256, 26
  %3632 = vbcast.lane.b32.xlu0 %v3111, %s3631
  %v3633 = vpop.permute.xlu0 %3632
  %s3635 = sor.u32 256, 18
  %3636 = vbcast.lane.b32.xlu0 %v3123, %s3635
  %v3637 = vpop.permute.xlu0 %3636
  %s3639 = sor.u32 256, 26
  %3640 = vbcast.lane.b32.xlu0 %v3123, %s3639
  %v3641 = vpop.permute.xlu0 %3640
  %s3643 = sor.u32 256, 18
  %3644 = vbcast.lane.b32.xlu0 %v3135, %s3643
  %v3645 = vpop.permute.xlu0 %3644
  %s3647 = sor.u32 256, 26
  %3648 = vbcast.lane.b32.xlu0 %v3135, %s3647
  %v3649 = vpop.permute.xlu0 %3648
  %s3651 = sor.u32 256, 18
  %3652 = vbcast.lane.b32.xlu0 %v3147, %s3651
  %v3653 = vpop.permute.xlu0 %3652
  %s3655 = sor.u32 256, 26
  %3656 = vbcast.lane.b32.xlu0 %v3147, %s3655
  %v3657 = vpop.permute.xlu0 %3656
  %s3659 = sor.u32 256, 18
  %3660 = vbcast.lane.b32.xlu0 %v3159, %s3659
  %v3661 = vpop.permute.xlu0 %3660
  %s3663 = sor.u32 256, 26
  %3664 = vbcast.lane.b32.xlu0 %v3159, %s3663
  %v3665 = vpop.permute.xlu0 %3664
  %s3667 = sor.u32 256, 18
  %3668 = vbcast.lane.b32.xlu0 %v3171, %s3667
  %v3669 = vpop.permute.xlu0 %3668
  %s3671 = sor.u32 256, 26
  %3672 = vbcast.lane.b32.xlu0 %v3171, %s3671
  %v3673 = vpop.permute.xlu0 %3672
  %s3675 = sor.u32 256, 18
  %3676 = vbcast.lane.b32.xlu0 %v3183, %s3675
  %v3677 = vpop.permute.xlu0 %3676
  %s3679 = sor.u32 256, 26
  %3680 = vbcast.lane.b32.xlu0 %v3183, %s3679
  %v3681 = vpop.permute.xlu0 %3680
  %s3683 = sor.u32 256, 18
  %3684 = vbcast.lane.b32.xlu0 %v3195, %s3683
  %v3685 = vpop.permute.xlu0 %3684
  %s3687 = sor.u32 256, 26
  %3688 = vbcast.lane.b32.xlu0 %v3195, %s3687
  %v3689 = vpop.permute.xlu0 %3688
  %s3691 = sor.u32 256, 18
  %3692 = vbcast.lane.b32.xlu0 %v3207, %s3691
  %v3693 = vpop.permute.xlu0 %3692
  %s3695 = sor.u32 256, 26
  %3696 = vbcast.lane.b32.xlu0 %v3207, %s3695
  %v3697 = vpop.permute.xlu0 %3696
  %s3699 = sor.u32 256, 18
  %3700 = vbcast.lane.b32.xlu0 %v3219, %s3699
  %v3701 = vpop.permute.xlu0 %3700
  %s3703 = sor.u32 256, 26
  %3704 = vbcast.lane.b32.xlu0 %v3219, %s3703
  %v3705 = vpop.permute.xlu0 %3704
  %s3707 = sor.u32 256, 18
  %3708 = vbcast.lane.b32.xlu0 %v3231, %s3707
  %v3709 = vpop.permute.xlu0 %3708
  %s3711 = sor.u32 256, 26
  %3712 = vbcast.lane.b32.xlu0 %v3231, %s3711
  %v3713 = vpop.permute.xlu0 %3712
  %s3715 = sor.u32 256, 18
  %3716 = vbcast.lane.b32.xlu0 %v3243, %s3715
  %v3717 = vpop.permute.xlu0 %3716
  %s3719 = sor.u32 256, 26
  %3720 = vbcast.lane.b32.xlu0 %v3243, %s3719
  %v3721 = vpop.permute.xlu0 %3720
  %v3722 = vmul.f32 %v3562, %v3597
  %v3723 = vmul.f32 %v3563, %v3601
  %v3724 = vmul.f32 %v3564, %v3605
  %v3725 = vmul.f32 %v3565, %v3609
  %v3726 = vmul.f32 %v3566, %v3613
  %v3727 = vmul.f32 %v3567, %v3617
  %v3728 = vmul.f32 %v3568, %v3621
  %v3729 = vmul.f32 %v3569, %v3625
  %v3730 = vmul.f32 %v3570, %v3629
  %v3731 = vmul.f32 %v3571, %v3633
  %v3732 = vmul.f32 %v3572, %v3637
  %v3733 = vmul.f32 %v3573, %v3641
  %v3734 = vmul.f32 %v3574, %v3645
  %v3735 = vmul.f32 %v3575, %v3649
  %v3736 = vmul.f32 %v3576, %v3653
  %v3737 = vmul.f32 %v3577, %v3657
  %v3738 = vmul.f32 %v3578, %v3661
  %v3739 = vmul.f32 %v3579, %v3665
  %v3740 = vmul.f32 %v3580, %v3669
  %v3741 = vmul.f32 %v3581, %v3673
  %v3742 = vmul.f32 %v3582, %v3677
  %v3743 = vmul.f32 %v3583, %v3681
  %v3744 = vmul.f32 %v3584, %v3685
  %v3745 = vmul.f32 %v3585, %v3689
  %v3746 = vmul.f32 %v3586, %v3693
  %v3747 = vmul.f32 %v3587, %v3697
  %v3748 = vmul.f32 %v3588, %v3701
  %v3749 = vmul.f32 %v3589, %v3705
  %v3750 = vmul.f32 %v3590, %v3709
  %v3751 = vmul.f32 %v3591, %v3713
  %v3752 = vmul.f32 %v3592, %v3717
  %v3753 = vmul.f32 %v3593, %v3721
  %v3754 = vsel %vm1176, %v3722, 0.0
  %v3755 = vsel %vm1176, %v3723, 0.0
  %v3756 = vadd.f32 %v3754, %v3755
  %v3757 = vrot.slane %v3756, 4
  %v3758 = vadd.f32 %v3756, %v3757
  %v3759 = vrot.slane %v3758, 2
  %v3760 = vadd.f32 %v3758, %v3759
  %v3761 = vrot.slane %v3760, 1
  %v3762 = vadd.f32 %v3760, %v3761
  %v3763 = vsel %vm1176, %v3724, 0.0
  %v3764 = vsel %vm1176, %v3725, 0.0
  %v3765 = vadd.f32 %v3763, %v3764
  %v3766 = vrot.slane %v3765, 4
  %v3767 = vadd.f32 %v3765, %v3766
  %v3768 = vrot.slane %v3767, 2
  %v3769 = vadd.f32 %v3767, %v3768
  %v3770 = vrot.slane %v3769, 1
  %v3771 = vadd.f32 %v3769, %v3770
  %v3772 = vsel %vm1176, %v3726, 0.0
  %v3773 = vsel %vm1176, %v3727, 0.0
  %v3774 = vadd.f32 %v3772, %v3773
  %v3775 = vrot.slane %v3774, 4
  %v3776 = vadd.f32 %v3774, %v3775
  %v3777 = vrot.slane %v3776, 2
  %v3778 = vadd.f32 %v3776, %v3777
  %v3779 = vrot.slane %v3778, 1
  %v3780 = vadd.f32 %v3778, %v3779
  %v3781 = vsel %vm1176, %v3728, 0.0
  %v3782 = vsel %vm1176, %v3729, 0.0
  %v3783 = vadd.f32 %v3781, %v3782
  %v3784 = vrot.slane %v3783, 4
  %v3785 = vadd.f32 %v3783, %v3784
  %v3786 = vrot.slane %v3785, 2
  %v3787 = vadd.f32 %v3785, %v3786
  %v3788 = vrot.slane %v3787, 1
  %v3789 = vadd.f32 %v3787, %v3788
  %v3790 = vsel %vm1176, %v3730, 0.0
  %v3791 = vsel %vm1176, %v3731, 0.0
  %v3792 = vadd.f32 %v3790, %v3791
  %v3793 = vrot.slane %v3792, 4
  %v3794 = vadd.f32 %v3792, %v3793
  %v3795 = vrot.slane %v3794, 2
  %v3796 = vadd.f32 %v3794, %v3795
  %v3797 = vrot.slane %v3796, 1
  %v3798 = vadd.f32 %v3796, %v3797
  %v3799 = vsel %vm1176, %v3732, 0.0
  %v3800 = vsel %vm1176, %v3733, 0.0
  %v3801 = vadd.f32 %v3799, %v3800
  %v3802 = vrot.slane %v3801, 4
  %v3803 = vadd.f32 %v3801, %v3802
  %v3804 = vrot.slane %v3803, 2
  %v3805 = vadd.f32 %v3803, %v3804
  %v3806 = vrot.slane %v3805, 1
  %v3807 = vadd.f32 %v3805, %v3806
  %v3808 = vsel %vm1176, %v3734, 0.0
  %v3809 = vsel %vm1176, %v3735, 0.0
  %v3810 = vadd.f32 %v3808, %v3809
  %v3811 = vrot.slane %v3810, 4
  %v3812 = vadd.f32 %v3810, %v3811
  %v3813 = vrot.slane %v3812, 2
  %v3814 = vadd.f32 %v3812, %v3813
  %v3815 = vrot.slane %v3814, 1
  %v3816 = vadd.f32 %v3814, %v3815
  %v3817 = vsel %vm1176, %v3736, 0.0
  %v3818 = vsel %vm1176, %v3737, 0.0
  %v3819 = vadd.f32 %v3817, %v3818
  %v3820 = vrot.slane %v3819, 4
  %v3821 = vadd.f32 %v3819, %v3820
  %v3822 = vrot.slane %v3821, 2
  %v3823 = vadd.f32 %v3821, %v3822
  %v3824 = vrot.slane %v3823, 1
  %v3825 = vadd.f32 %v3823, %v3824
  %v3826 = vsel %vm1176, %v3738, 0.0
  %v3827 = vsel %vm1176, %v3739, 0.0
  %v3828 = vadd.f32 %v3826, %v3827
  %v3829 = vrot.slane %v3828, 4
  %v3830 = vadd.f32 %v3828, %v3829
  %v3831 = vrot.slane %v3830, 2
  %v3832 = vadd.f32 %v3830, %v3831
  %v3833 = vrot.slane %v3832, 1
  %v3834 = vadd.f32 %v3832, %v3833
  %v3835 = vsel %vm1176, %v3740, 0.0
  %v3836 = vsel %vm1176, %v3741, 0.0
  %v3837 = vadd.f32 %v3835, %v3836
  %v3838 = vrot.slane %v3837, 4
  %v3839 = vadd.f32 %v3837, %v3838
  %v3840 = vrot.slane %v3839, 2
  %v3841 = vadd.f32 %v3839, %v3840
  %v3842 = vrot.slane %v3841, 1
  %v3843 = vadd.f32 %v3841, %v3842
  %v3844 = vsel %vm1176, %v3742, 0.0
  %v3845 = vsel %vm1176, %v3743, 0.0
  %v3846 = vadd.f32 %v3844, %v3845
  %v3847 = vrot.slane %v3846, 4
  %v3848 = vadd.f32 %v3846, %v3847
  %v3849 = vrot.slane %v3848, 2
  %v3850 = vadd.f32 %v3848, %v3849
  %v3851 = vrot.slane %v3850, 1
  %v3852 = vadd.f32 %v3850, %v3851
  %v3853 = vsel %vm1176, %v3744, 0.0
  %v3854 = vsel %vm1176, %v3745, 0.0
  %v3855 = vadd.f32 %v3853, %v3854
  %v3856 = vrot.slane %v3855, 4
  %v3857 = vadd.f32 %v3855, %v3856
  %v3858 = vrot.slane %v3857, 2
  %v3859 = vadd.f32 %v3857, %v3858
  %v3860 = vrot.slane %v3859, 1
  %v3861 = vadd.f32 %v3859, %v3860
  %v3862 = vsel %vm1176, %v3746, 0.0
  %v3863 = vsel %vm1176, %v3747, 0.0
  %v3864 = vadd.f32 %v3862, %v3863
  %v3865 = vrot.slane %v3864, 4
  %v3866 = vadd.f32 %v3864, %v3865
  %v3867 = vrot.slane %v3866, 2
  %v3868 = vadd.f32 %v3866, %v3867
  %v3869 = vrot.slane %v3868, 1
  %v3870 = vadd.f32 %v3868, %v3869
  %v3871 = vsel %vm1176, %v3748, 0.0
  %v3872 = vsel %vm1176, %v3749, 0.0
  %v3873 = vadd.f32 %v3871, %v3872
  %v3874 = vrot.slane %v3873, 4
  %v3875 = vadd.f32 %v3873, %v3874
  %v3876 = vrot.slane %v3875, 2
  %v3877 = vadd.f32 %v3875, %v3876
  %v3878 = vrot.slane %v3877, 1
  %v3879 = vadd.f32 %v3877, %v3878
  %v3880 = vsel %vm1176, %v3750, 0.0
  %v3881 = vsel %vm1176, %v3751, 0.0
  %v3882 = vadd.f32 %v3880, %v3881
  %v3883 = vrot.slane %v3882, 4
  %v3884 = vadd.f32 %v3882, %v3883
  %v3885 = vrot.slane %v3884, 2
  %v3886 = vadd.f32 %v3884, %v3885
  %v3887 = vrot.slane %v3886, 1
  %v3888 = vadd.f32 %v3886, %v3887
  %v3889 = vsel %vm1176, %v3752, 0.0
  %v3890 = vsel %vm1176, %v3753, 0.0
  %v3891 = vadd.f32 %v3889, %v3890
  %v3892 = vrot.slane %v3891, 4
  %v3893 = vadd.f32 %v3891, %v3892
  %v3894 = vrot.slane %v3893, 2
  %v3895 = vadd.f32 %v3893, %v3894
  %v3896 = vrot.slane %v3895, 1
  %v3897 = vadd.f32 %v3895, %v3896
  %v3898 = vlaneseq
  %v3899 = vshrl.u32 %v3898, 7
  %v3900 = vsub.s32 5, %v3899
  %v3901 = vrot.slane %v38, %v3900
  %v3902 = vmul.f32 %v3901, %v1162
  %v3903 = vmul.f32 %v3901, %v1163
  %v3906 = vrot.slane %v3902, 1
  %v3907 = vrot.slane %v3902, 2
  %v3908 = vrot.slane %v3902, 3
  %v3909 = vrot.slane %v3902, 4
  %v3910 = vrot.slane %v3902, 5
  %v3911 = vrot.slane %v3902, 6
  %v3912 = vrot.slane %v3902, 7
  %v3913 = vrot.slane %v3903, 1
  %v3914 = vrot.slane %v3903, 2
  %v3915 = vrot.slane %v3903, 3
  %v3916 = vrot.slane %v3903, 4
  %v3917 = vrot.slane %v3903, 5
  %v3918 = vrot.slane %v3903, 6
  %v3919 = vrot.slane %v3903, 7
  %v3936 = vadd.f32 %v3762, %v3902
  %v3937 = vadd.f32 %v3771, %v3906
  %v3938 = vadd.f32 %v3780, %v3907
  %v3939 = vadd.f32 %v3789, %v3908
  %v3940 = vadd.f32 %v3798, %v3909
  %v3941 = vadd.f32 %v3807, %v3910
  %v3942 = vadd.f32 %v3816, %v3911
  %v3943 = vadd.f32 %v3825, %v3912
  %v3944 = vadd.f32 %v3834, %v3903
  %v3945 = vadd.f32 %v3843, %v3913
  %v3946 = vadd.f32 %v3852, %v3914
  %v3947 = vadd.f32 %v3861, %v3915
  %v3948 = vadd.f32 %v3870, %v3916
  %v3949 = vadd.f32 %v3879, %v3917
  %v3950 = vadd.f32 %v3888, %v3918
  %v3951 = vadd.f32 %v3897, %v3919
  %v3952 = vlaneseq
  %v3953 = vshrl.u32 %v3952, 7
  %v3954 = vsub.s32 0, %v3953
  %v3955 = vrot.slane %v2552, %v3954
  %v3956 = vlaneseq
  %v3957 = vshrl.u32 %v3956, 7
  %v3958 = vsub.s32 0, %v3957
  %v3959 = vrot.slane %v2560, %v3958
  %v3960 = vsub.f32 %v2545, %v3955
  %v3961 = vsub.f32 %v2546, %v3955
  %v3962 = vsub.f32 %v2547, %v3955
  %v3963 = vsub.f32 %v2548, %v3955
  %v3964 = vsub.f32 %v2549, %v3955
  %v3965 = vsub.f32 %v2550, %v3955
  %v3966 = vsub.f32 %v2551, %v3955
  %v3967 = vsub.f32 %v2552, %v3955
  %v3968 = vsub.f32 %v2553, %v3959
  %v3969 = vsub.f32 %v2554, %v3959
  %v3970 = vsub.f32 %v2555, %v3959
  %v3971 = vsub.f32 %v2556, %v3959
  %v3972 = vsub.f32 %v2557, %v3959
  %v3973 = vsub.f32 %v2558, %v3959
  %v3974 = vsub.f32 %v2559, %v3959
  %v3975 = vsub.f32 %v2560, %v3959
  %v3976 = vmul.f32 %v3960, %v3960
  %v3977 = vmul.f32 %v3961, %v3961
  %v3978 = vmul.f32 %v3962, %v3962
  %v3979 = vmul.f32 %v3963, %v3963
  %v3980 = vmul.f32 %v3964, %v3964
  %v3981 = vmul.f32 %v3965, %v3965
  %v3982 = vmul.f32 %v3966, %v3966
  %v3983 = vmul.f32 %v3967, %v3967
  %v3984 = vmul.f32 %v3968, %v3968
  %v3985 = vmul.f32 %v3969, %v3969
  %v3986 = vmul.f32 %v3970, %v3970
  %v3987 = vmul.f32 %v3971, %v3971
  %v3988 = vmul.f32 %v3972, %v3972
  %v3989 = vmul.f32 %v3973, %v3973
  %v3990 = vmul.f32 %v3974, %v3974
  %v3991 = vmul.f32 %v3975, %v3975
  %v4008 = vrot.slane %v3977, 7
  %vm4009 = vcmask 1041409
  %v4010 = vsel %vm4009, %v4008, %v3976
  %v4011 = vrot.slane %v3978, 6
  %vm4012 = vcmask 1042434
  %v4013 = vsel %vm4012, %v4011, %v4010
  %v4014 = vrot.slane %v3979, 5
  %vm4015 = vcmask 1043459
  %v4016 = vsel %vm4015, %v4014, %v4013
  %v4017 = vrot.slane %v3980, 4
  %vm4018 = vcmask 1044484
  %v4019 = vsel %vm4018, %v4017, %v4016
  %v4020 = vrot.slane %v3981, 3
  %vm4021 = vcmask 1045509
  %v4022 = vsel %vm4021, %v4020, %v4019
  %v4023 = vrot.slane %v3982, 2
  %vm4024 = vcmask 1046534
  %v4025 = vsel %vm4024, %v4023, %v4022
  %v4026 = vrot.slane %v3983, 1
  %vm4027 = vcmask 1047559
  %v4028 = vsel %vm4027, %v4026, %v4025
  %v4029 = vrot.slane %v3985, 7
  %v4030 = vsel %vm4009, %v4029, %v3984
  %v4031 = vrot.slane %v3986, 6
  %v4032 = vsel %vm4012, %v4031, %v4030
  %v4033 = vrot.slane %v3987, 5
  %v4034 = vsel %vm4015, %v4033, %v4032
  %v4035 = vrot.slane %v3988, 4
  %v4036 = vsel %vm4018, %v4035, %v4034
  %v4037 = vrot.slane %v3989, 3
  %v4038 = vsel %vm4021, %v4037, %v4036
  %v4039 = vrot.slane %v3990, 2
  %v4040 = vsel %vm4024, %v4039, %v4038
  %v4041 = vrot.slane %v3991, 1
  %v4042 = vsel %vm4027, %v4041, %v4040
  %v4045 = vsel %vm1176, %v4028, 0.0
  %4046 = vadd.xlane.f32.xlu0 %v4045
  %v4047 = vpop.xlane.xlu0 %4046
  %v4048 = vsel %vm1176, %v4042, 0.0
  %4049 = vadd.xlane.f32.xlu0 %v4048
  %v4050 = vpop.xlane.xlu0 %4049
  %v4051 = vrsqrt.pop %v4047
  %v4052 = vmul.f32 %v4047, %v4051
  %vm4053 = vcmp.eq.f32.partialorder %v4047, inf
  %v4054 = vsel %vm4053, %v4047, %v4052
  %vm4055 = vcmp.eq.f32.partialorder %v4047, 0.0
  %v4056 = vand.u32 %v4047, 2147483648
  %v4057 = vsel %vm4055, %v4056, %v4054
  %v4058 = vrsqrt.pop %v4050
  %v4059 = vmul.f32 %v4050, %v4058
  %vm4060 = vcmp.eq.f32.partialorder %v4050, inf
  %v4061 = vsel %vm4060, %v4050, %v4059
  %vm4062 = vcmp.eq.f32.partialorder %v4050, 0.0
  %v4063 = vand.u32 %v4050, 2147483648
  %v4064 = vsel %vm4062, %v4063, %v4061
  %v4065 = vrot.slane %v4057, 4
  %v4066 = vadd.f32 %v4057, %v4065
  %v4067 = vrot.slane %v4066, 2
  %v4068 = vadd.f32 %v4066, %v4067
  %v4069 = vrot.slane %v4068, 1
  %v4070 = vadd.f32 %v4068, %v4069
  %v4071 = vrot.slane %v4064, 4
  %v4072 = vadd.f32 %v4064, %v4071
  %v4073 = vrot.slane %v4072, 2
  %v4074 = vadd.f32 %v4072, %v4073
  %v4075 = vrot.slane %v4074, 1
  %v4076 = vadd.f32 %v4074, %v4075
  %v4077 = vrcp.pop 8.0
  %v4078 = vmul.f32 %v4070, %v4077
  %v4079 = vmul.f32 %v4076, %v4077
  %v4080 = vrcp.pop %v4078
  %v4081 = vrcp.pop %v4079
  %v4082 = vmul.f32 %v4057, %v4080
  %v4083 = vmul.f32 %v4064, %v4081
  %v4084 = vmul.f32 %v4082, -0.5
  %v4085 = vmul.f32 %v4083, -0.5
  %v4086 = vmul.f32 %v4084, %v4082
  %v4087 = vmul.f32 %v4085, %v4083
  %v4088 = vmul.f32 %v4086, 1.442695
  %v4089 = vpow.pop %v4088
  %v4090 = vmul.f32 %v4087, 1.442695
  %v4091 = vpow.pop %v4090
  %v4092 = vrot.slane %v4089, 4
  %v4093 = vadd.f32 %v4089, %v4092
  %v4094 = vrot.slane %v4093, 2
  %v4095 = vadd.f32 %v4093, %v4094
  %v4096 = vrot.slane %v4095, 1
  %v4097 = vadd.f32 %v4095, %v4096
  %v4098 = vrot.slane %v4091, 4
  %v4099 = vadd.f32 %v4091, %v4098
  %v4100 = vrot.slane %v4099, 2
  %v4101 = vadd.f32 %v4099, %v4100
  %v4102 = vrot.slane %v4101, 1
  %v4103 = vadd.f32 %v4101, %v4102
  %v4104 = vrcp.pop %v4097
  %v4105 = vrcp.pop %v4103
  %v4106 = vmul.f32 %v4089, %v4104
  %v4107 = vmul.f32 %v4091, %v4105
  %v4108 = vmul.f32 %v40, %v4106
  %v4109 = vmul.f32 %v40, %v4107
  %v4110 = vmul.f32 %v4108, %v4108
  %v4111 = vmul.f32 %v4109, %v4109
  %vm4112 = vcmask 7168
  %v4113 = vsel %vm4112, %v4110, 0.0
  %v4114 = vrot.slane %v4113, 4
  %v4115 = vadd.f32 %v4113, %v4114
  %v4116 = vrot.slane %v4115, 2
  %v4117 = vadd.f32 %v4115, %v4116
  %v4118 = vrot.slane %v4117, 1
  %v4119 = vadd.f32 %v4117, %v4118
  %v4120 = vsel %vm4112, %v4111, 0.0
  %v4121 = vrot.slane %v4120, 4
  %v4122 = vadd.f32 %v4120, %v4121
  %v4123 = vrot.slane %v4122, 2
  %v4124 = vadd.f32 %v4122, %v4123
  %v4125 = vrot.slane %v4124, 1
  %v4126 = vadd.f32 %v4124, %v4125
  %v4127 = vrsqrt.pop %v4119
  %v4128 = vmul.f32 %v4119, %v4127
  %vm4129 = vcmp.eq.f32.partialorder %v4119, inf
  %v4130 = vsel %vm4129, %v4119, %v4128
  %vm4131 = vcmp.eq.f32.partialorder %v4119, 0.0
  %v4132 = vand.u32 %v4119, 2147483648
  %v4133 = vsel %vm4131, %v4132, %v4130
  %v4134 = vrsqrt.pop %v4126
  %v4135 = vmul.f32 %v4126, %v4134
  %vm4136 = vcmp.eq.f32.partialorder %v4126, inf
  %v4137 = vsel %vm4136, %v4126, %v4135
  %vm4138 = vcmp.eq.f32.partialorder %v4126, 0.0
  %v4139 = vand.u32 %v4126, 2147483648
  %v4140 = vsel %vm4138, %v4139, %v4137
  %v4141 = vmax.f32 %v4133, 1e-12
  %v4142 = vmax.f32 %v4140, 1e-12
  %v4143 = vrcp.pop %v4141
  %v4144 = vrcp.pop %v4142
  %v4145 = vmul.f32 %v4108, %v4143
  %v4146 = vmul.f32 %v4109, %v4144
  %v4147 = vlaneseq
  %v4148 = vshrl.u32 %v4147, 7
  %v4149 = vsub.s32 0, %v4148
  %v4150 = vrot.slane %v3943, %v4149
  %v4151 = vlaneseq
  %v4152 = vshrl.u32 %v4151, 7
  %v4153 = vsub.s32 0, %v4152
  %v4154 = vrot.slane %v3951, %v4153
  %v4155 = vsub.f32 %v3936, %v4150
  %v4156 = vsub.f32 %v3937, %v4150
  %v4157 = vsub.f32 %v3938, %v4150
  %v4158 = vsub.f32 %v3939, %v4150
  %v4159 = vsub.f32 %v3940, %v4150
  %v4160 = vsub.f32 %v3941, %v4150
  %v4161 = vsub.f32 %v3942, %v4150
  %v4162 = vsub.f32 %v3943, %v4150
  %v4163 = vsub.f32 %v3944, %v4154
  %v4164 = vsub.f32 %v3945, %v4154
  %v4165 = vsub.f32 %v3946, %v4154
  %v4166 = vsub.f32 %v3947, %v4154
  %v4167 = vsub.f32 %v3948, %v4154
  %v4168 = vsub.f32 %v3949, %v4154
  %v4169 = vsub.f32 %v3950, %v4154
  %v4170 = vsub.f32 %v3951, %v4154
  %v4171 = vmul.f32 %v4155, %v4155
  %v4172 = vmul.f32 %v4156, %v4156
  %v4173 = vmul.f32 %v4157, %v4157
  %v4174 = vmul.f32 %v4158, %v4158
  %v4175 = vmul.f32 %v4159, %v4159
  %v4176 = vmul.f32 %v4160, %v4160
  %v4177 = vmul.f32 %v4161, %v4161
  %v4178 = vmul.f32 %v4162, %v4162
  %v4179 = vmul.f32 %v4163, %v4163
  %v4180 = vmul.f32 %v4164, %v4164
  %v4181 = vmul.f32 %v4165, %v4165
  %v4182 = vmul.f32 %v4166, %v4166
  %v4183 = vmul.f32 %v4167, %v4167
  %v4184 = vmul.f32 %v4168, %v4168
  %v4185 = vmul.f32 %v4169, %v4169
  %v4186 = vmul.f32 %v4170, %v4170
  %v4203 = vrot.slane %v4172, 7
  %v4204 = vsel %vm4009, %v4203, %v4171
  %v4205 = vrot.slane %v4173, 6
  %v4206 = vsel %vm4012, %v4205, %v4204
  %v4207 = vrot.slane %v4174, 5
  %v4208 = vsel %vm4015, %v4207, %v4206
  %v4209 = vrot.slane %v4175, 4
  %v4210 = vsel %vm4018, %v4209, %v4208
  %v4211 = vrot.slane %v4176, 3
  %v4212 = vsel %vm4021, %v4211, %v4210
  %v4213 = vrot.slane %v4177, 2
  %v4214 = vsel %vm4024, %v4213, %v4212
  %v4215 = vrot.slane %v4178, 1
  %v4216 = vsel %vm4027, %v4215, %v4214
  %v4217 = vrot.slane %v4180, 7
  %v4218 = vsel %vm4009, %v4217, %v4179
  %v4219 = vrot.slane %v4181, 6
  %v4220 = vsel %vm4012, %v4219, %v4218
  %v4221 = vrot.slane %v4182, 5
  %v4222 = vsel %vm4015, %v4221, %v4220
  %v4223 = vrot.slane %v4183, 4
  %v4224 = vsel %vm4018, %v4223, %v4222
  %v4225 = vrot.slane %v4184, 3
  %v4226 = vsel %vm4021, %v4225, %v4224
  %v4227 = vrot.slane %v4185, 2
  %v4228 = vsel %vm4024, %v4227, %v4226
  %v4229 = vrot.slane %v4186, 1
  %v4230 = vsel %vm4027, %v4229, %v4228
  %v4233 = vsel %vm1176, %v4216, 0.0
  %4234 = vadd.xlane.f32.xlu0 %v4233
  %v4235 = vpop.xlane.xlu0 %4234
  %v4236 = vsel %vm1176, %v4230, 0.0
  %4237 = vadd.xlane.f32.xlu0 %v4236
  %v4238 = vpop.xlane.xlu0 %4237
  %v4239 = vrsqrt.pop %v4235
  %v4240 = vmul.f32 %v4235, %v4239
  %vm4241 = vcmp.eq.f32.partialorder %v4235, inf
  %v4242 = vsel %vm4241, %v4235, %v4240
  %vm4243 = vcmp.eq.f32.partialorder %v4235, 0.0
  %v4244 = vand.u32 %v4235, 2147483648
  %v4245 = vsel %vm4243, %v4244, %v4242
  %v4246 = vrsqrt.pop %v4238
  %v4247 = vmul.f32 %v4238, %v4246
  %vm4248 = vcmp.eq.f32.partialorder %v4238, inf
  %v4249 = vsel %vm4248, %v4238, %v4247
  %vm4250 = vcmp.eq.f32.partialorder %v4238, 0.0
  %v4251 = vand.u32 %v4238, 2147483648
  %v4252 = vsel %vm4250, %v4251, %v4249
  %v4253 = vrot.slane %v4245, 4
  %v4254 = vadd.f32 %v4245, %v4253
  %v4255 = vrot.slane %v4254, 2
  %v4256 = vadd.f32 %v4254, %v4255
  %v4257 = vrot.slane %v4256, 1
  %v4258 = vadd.f32 %v4256, %v4257
  %v4259 = vrot.slane %v4252, 4
  %v4260 = vadd.f32 %v4252, %v4259
  %v4261 = vrot.slane %v4260, 2
  %v4262 = vadd.f32 %v4260, %v4261
  %v4263 = vrot.slane %v4262, 1
  %v4264 = vadd.f32 %v4262, %v4263
  %v4265 = vmul.f32 %v4258, %v4077
  %v4266 = vmul.f32 %v4264, %v4077
  %v4267 = vrcp.pop %v4265
  %v4268 = vrcp.pop %v4266
  %v4269 = vmul.f32 %v4245, %v4267
  %v4270 = vmul.f32 %v4252, %v4268
  %v4271 = vmul.f32 %v4269, -0.5
  %v4272 = vmul.f32 %v4270, -0.5
  %v4273 = vmul.f32 %v4271, %v4269
  %v4274 = vmul.f32 %v4272, %v4270
  %v4275 = vmul.f32 %v4273, 1.442695
  %v4276 = vpow.pop %v4275
  %v4277 = vmul.f32 %v4274, 1.442695
  %v4278 = vpow.pop %v4277
  %v4279 = vrot.slane %v4276, 4
  %v4280 = vadd.f32 %v4276, %v4279
  %v4281 = vrot.slane %v4280, 2
  %v4282 = vadd.f32 %v4280, %v4281
  %v4283 = vrot.slane %v4282, 1
  %v4284 = vadd.f32 %v4282, %v4283
  %v4285 = vrot.slane %v4278, 4
  %v4286 = vadd.f32 %v4278, %v4285
  %v4287 = vrot.slane %v4286, 2
  %v4288 = vadd.f32 %v4286, %v4287
  %v4289 = vrot.slane %v4288, 1
  %v4290 = vadd.f32 %v4288, %v4289
  %v4291 = vrcp.pop %v4284
  %v4292 = vrcp.pop %v4290
  %v4293 = vmul.f32 %v4276, %v4291
  %v4294 = vmul.f32 %v4278, %v4292
  %v4295 = vmul.f32 %v40, %v4293
  %v4296 = vmul.f32 %v40, %v4294
  %v4297 = vmul.f32 %v4295, %v4295
  %v4298 = vmul.f32 %v4296, %v4296
  %v4299 = vsel %vm4112, %v4297, 0.0
  %v4300 = vrot.slane %v4299, 4
  %v4301 = vadd.f32 %v4299, %v4300
  %v4302 = vrot.slane %v4301, 2
  %v4303 = vadd.f32 %v4301, %v4302
  %v4304 = vrot.slane %v4303, 1
  %v4305 = vadd.f32 %v4303, %v4304
  %v4306 = vsel %vm4112, %v4298, 0.0
  %v4307 = vrot.slane %v4306, 4
  %v4308 = vadd.f32 %v4306, %v4307
  %v4309 = vrot.slane %v4308, 2
  %v4310 = vadd.f32 %v4308, %v4309
  %v4311 = vrot.slane %v4310, 1
  %v4312 = vadd.f32 %v4310, %v4311
  %v4313 = vrsqrt.pop %v4305
  %v4314 = vmul.f32 %v4305, %v4313
  %vm4315 = vcmp.eq.f32.partialorder %v4305, inf
  %v4316 = vsel %vm4315, %v4305, %v4314
  %vm4317 = vcmp.eq.f32.partialorder %v4305, 0.0
  %v4318 = vand.u32 %v4305, 2147483648
  %v4319 = vsel %vm4317, %v4318, %v4316
  %v4320 = vrsqrt.pop %v4312
  %v4321 = vmul.f32 %v4312, %v4320
  %vm4322 = vcmp.eq.f32.partialorder %v4312, inf
  %v4323 = vsel %vm4322, %v4312, %v4321
  %vm4324 = vcmp.eq.f32.partialorder %v4312, 0.0
  %v4325 = vand.u32 %v4312, 2147483648
  %v4326 = vsel %vm4324, %v4325, %v4323
  %v4327 = vmax.f32 %v4319, 1e-12
  %v4328 = vmax.f32 %v4326, 1e-12
  %v4329 = vrcp.pop %v4327
  %v4330 = vrcp.pop %v4328
  %v4331 = vmul.f32 %v4295, %v4329
  %v4332 = vmul.f32 %v4296, %v4330
  %v4335 = vrot.slane %v4331, 7
  %v4336 = vrot.slane %v4332, 7
  %v4339 = vrot.slane %v4331, 5
  %v4340 = vrot.slane %v4332, 5
  %v4343 = vrot.slane %v4331, 3
  %v4344 = vrot.slane %v4332, 3
  %v4347 = vrot.slane %v4331, 1
  %v4348 = vrot.slane %v4332, 1
  %v4351 = vsel %vm943, %v4335, %v4339
  %v4352 = vsel %vm943, %v4336, %v4340
  %v4353 = vsel %vm946, %v4351, %v4343
  %v4354 = vsel %vm946, %v4352, %v4344
  %v4355 = vsel %vm949, %v4353, %v4347
  %v4356 = vsel %vm949, %v4354, %v4348
  %v4357 = vsel %vm952, %v4355, %v4335
  %v4358 = vsel %vm952, %v4356, %v4336
  %vm4359 = vcmask 1044480
  %v4360 = vsel %vm4359, %v4357, %v4339
  %v4361 = vsel %vm4359, %v4358, %v4340
  %vm4362 = vcmask 1045504
  %v4363 = vsel %vm4362, %v4360, %v4343
  %v4364 = vsel %vm4362, %v4361, %v4344
  %vm4365 = vcmask 1046528
  %v4366 = vsel %vm4365, %v4363, %v4347
  %v4367 = vsel %vm4365, %v4364, %v4348
  %4369 = vset.pattern.permute.xlu0 0
  %4370 = vperm.xlu0 %4369, %v4145
  %v4371 = vpop.permute.xlu0 %4370
  %4373 = vset.pattern.permute.xlu0 0
  %4374 = vperm.xlu0 %4373, %v4146
  %v4375 = vpop.permute.xlu0 %4374
  %v4376 = vrot.slane %v4371, 1
  %v4377 = vrot.slane %v4371, 2
  %v4378 = vrot.slane %v4371, 3
  %v4379 = vrot.slane %v4371, 4
  %v4380 = vrot.slane %v4371, 5
  %v4381 = vrot.slane %v4371, 6
  %v4382 = vrot.slane %v4371, 7
  %v4383 = vrot.slane %v4375, 1
  %v4384 = vrot.slane %v4375, 2
  %v4385 = vrot.slane %v4375, 3
  %v4386 = vrot.slane %v4375, 4
  %v4387 = vrot.slane %v4375, 5
  %v4388 = vrot.slane %v4375, 6
  %v4389 = vrot.slane %v4375, 7
  %v4406 = vmul.f32 %v2545, %v4371
  %v4407 = vmul.f32 %v2546, %v4376
  %v4408 = vmul.f32 %v2547, %v4377
  %v4409 = vmul.f32 %v2548, %v4378
  %v4410 = vmul.f32 %v2549, %v4379
  %v4411 = vmul.f32 %v2550, %v4380
  %v4412 = vmul.f32 %v2551, %v4381
  %v4413 = vmul.f32 %v2552, %v4382
  %v4414 = vmul.f32 %v2553, %v4375
  %v4415 = vmul.f32 %v2554, %v4383
  %v4416 = vmul.f32 %v2555, %v4384
  %v4417 = vmul.f32 %v2556, %v4385
  %v4418 = vmul.f32 %v2557, %v4386
  %v4419 = vmul.f32 %v2558, %v4387
  %v4420 = vmul.f32 %v2559, %v4388
  %v4421 = vmul.f32 %v2560, %v4389
  %4423 = vset.pattern.permute.xlu0 0
  %4424 = vperm.xlu0 %4423, %v4366
  %v4425 = vpop.permute.xlu0 %4424
  %4427 = vset.pattern.permute.xlu0 0
  %4428 = vperm.xlu0 %4427, %v4367
  %v4429 = vpop.permute.xlu0 %4428
  %v4430 = vrot.slane %v4425, 1
  %v4431 = vrot.slane %v4425, 2
  %v4432 = vrot.slane %v4425, 3
  %v4433 = vrot.slane %v4425, 4
  %v4434 = vrot.slane %v4425, 5
  %v4435 = vrot.slane %v4425, 6
  %v4436 = vrot.slane %v4425, 7
  %v4437 = vrot.slane %v4429, 1
  %v4438 = vrot.slane %v4429, 2
  %v4439 = vrot.slane %v4429, 3
  %v4440 = vrot.slane %v4429, 4
  %v4441 = vrot.slane %v4429, 5
  %v4442 = vrot.slane %v4429, 6
  %v4443 = vrot.slane %v4429, 7
  %v4460 = vmul.f32 %v3936, %v4425
  %v4461 = vmul.f32 %v3937, %v4430
  %v4462 = vmul.f32 %v3938, %v4431
  %v4463 = vmul.f32 %v3939, %v4432
  %v4464 = vmul.f32 %v3940, %v4433
  %v4465 = vmul.f32 %v3941, %v4434
  %v4466 = vmul.f32 %v3942, %v4435
  %v4467 = vmul.f32 %v3943, %v4436
  %v4468 = vmul.f32 %v3944, %v4429
  %v4469 = vmul.f32 %v3945, %v4437
  %v4470 = vmul.f32 %v3946, %v4438
  %v4471 = vmul.f32 %v3947, %v4439
  %v4472 = vmul.f32 %v3948, %v4440
  %v4473 = vmul.f32 %v3949, %v4441
  %v4474 = vmul.f32 %v3950, %v4442
  %v4475 = vmul.f32 %v3951, %v4443
  %v4492 = vrot.slane %v4407, 7
  %v4493 = vsel %vm4009, %v4492, %v4406
  %v4494 = vrot.slane %v4408, 6
  %v4495 = vsel %vm4012, %v4494, %v4493
  %v4496 = vrot.slane %v4409, 5
  %v4497 = vsel %vm4015, %v4496, %v4495
  %v4498 = vrot.slane %v4410, 4
  %v4499 = vsel %vm4018, %v4498, %v4497
  %v4500 = vrot.slane %v4411, 3
  %v4501 = vsel %vm4021, %v4500, %v4499
  %v4502 = vrot.slane %v4412, 2
  %v4503 = vsel %vm4024, %v4502, %v4501
  %v4504 = vrot.slane %v4413, 1
  %v4505 = vsel %vm4027, %v4504, %v4503
  %v4506 = vrot.slane %v4415, 7
  %v4507 = vsel %vm4009, %v4506, %v4414
  %v4508 = vrot.slane %v4416, 6
  %v4509 = vsel %vm4012, %v4508, %v4507
  %v4510 = vrot.slane %v4417, 5
  %v4511 = vsel %vm4015, %v4510, %v4509
  %v4512 = vrot.slane %v4418, 4
  %v4513 = vsel %vm4018, %v4512, %v4511
  %v4514 = vrot.slane %v4419, 3
  %v4515 = vsel %vm4021, %v4514, %v4513
  %v4516 = vrot.slane %v4420, 2
  %v4517 = vsel %vm4024, %v4516, %v4515
  %v4518 = vrot.slane %v4421, 1
  %v4519 = vsel %vm4027, %v4518, %v4517
  %v4538 = vrot.slane %v4461, 7
  %v4539 = vsel %vm4009, %v4538, %v4460
  %v4540 = vrot.slane %v4462, 6
  %v4541 = vsel %vm4012, %v4540, %v4539
  %v4542 = vrot.slane %v4463, 5
  %v4543 = vsel %vm4015, %v4542, %v4541
  %v4544 = vrot.slane %v4464, 4
  %v4545 = vsel %vm4018, %v4544, %v4543
  %v4546 = vrot.slane %v4465, 3
  %v4547 = vsel %vm4021, %v4546, %v4545
  %v4548 = vrot.slane %v4466, 2
  %v4549 = vsel %vm4024, %v4548, %v4547
  %v4550 = vrot.slane %v4467, 1
  %v4551 = vsel %vm4027, %v4550, %v4549
  %v4552 = vrot.slane %v4469, 7
  %v4553 = vsel %vm4009, %v4552, %v4468
  %v4554 = vrot.slane %v4470, 6
  %v4555 = vsel %vm4012, %v4554, %v4553
  %v4556 = vrot.slane %v4471, 5
  %v4557 = vsel %vm4015, %v4556, %v4555
  %v4558 = vrot.slane %v4472, 4
  %v4559 = vsel %vm4018, %v4558, %v4557
  %v4560 = vrot.slane %v4473, 3
  %v4561 = vsel %vm4021, %v4560, %v4559
  %v4562 = vrot.slane %v4474, 2
  %v4563 = vsel %vm4024, %v4562, %v4561
  %v4564 = vrot.slane %v4475, 1
  %v4565 = vsel %vm4027, %v4564, %v4563
  %4566 = vrot.lane.b32.xlu0 %v4551, 64
  %v4567 = vpop.permute.xlu0 %4566
  %4568 = vrot.lane.b32.xlu0 %v4565, 64
  %v4569 = vpop.permute.xlu0 %4568
  %v4572 = vsel %vm1176, %v4505, %v4567
  %v4573 = vsel %vm1176, %v4519, %v4569
  %v4574 = vld [vmem:[%s8] sm:$0xff]
  %v4575 = vld [vmem:[%s8 + $0x8] sm:$0xff]
  %v4576 = vld [vmem:[%s8 + $0x10] sm:$0xff]
  %v4577 = vld [vmem:[%s8 + $0x18] sm:$0xff]
  %v4578 = vld [vmem:[%s8 + $0x20] sm:$0xff]
  %v4579 = vld [vmem:[%s8 + $0x28] sm:$0xff]
  %v4580 = vld [vmem:[%s8 + $0x30] sm:$0xff]
  %v4581 = vld [vmem:[%s8 + $0x38] sm:$0xff]
  %v4582 = vld [vmem:[%s8 + $0x40] sm:$0xff]
  %v4583 = vld [vmem:[%s8 + $0x48] sm:$0xff]
  %v4584 = vld [vmem:[%s8 + $0x50] sm:$0xff]
  %v4585 = vld [vmem:[%s8 + $0x58] sm:$0xff]
  %v4586 = vld [vmem:[%s8 + $0x60] sm:$0xff]
  %v4587 = vld [vmem:[%s8 + $0x68] sm:$0xff]
  %v4588 = vld [vmem:[%s8 + $0x70] sm:$0xff]
  %v4589 = vld [vmem:[%s8 + $0x78] sm:$0xff]
  %v4590 = vlaneseq
  %v4591 = vshrl.u32 %v4590, 7
  %v4592 = vsub.s32 6, %v4591
  %v4593 = vrot.slane %v38, %v4592
  %4594 = vmatprep.subr.mxu0 0.0
  %4595 = vmatpush1.msra.mxu0 %v4589
  %4596 = vmatprep.subr.mxu0 0.0
  %4597 = vmatpush1.msra.mxu0 %v4588
  %4598 = vmatprep.subr.mxu0 0.0
  %4599 = vmatpush1.msra.mxu0 %v4587
  %4600 = vmatprep.subr.mxu0 0.0
  %4601 = vmatpush1.msra.mxu0 %v4586
  %4602 = vmatprep.subr.mxu0 0.0
  %4603 = vmatpush1.msra.mxu0 %v4585
  %4604 = vmatprep.subr.mxu0 0.0
  %4605 = vmatpush1.msra.mxu0 %v4584
  %4606 = vmatprep.subr.mxu0 0.0
  %4607 = vmatpush1.msra.mxu0 %v4583
  %4608 = vmatprep.subr.mxu0 0.0
  %4609 = vmatpush1.msra.mxu0 %v4582
  %4610 = vmatprep.subr.mxu0 0.0
  %4611 = vmatpush1.msra.mxu0 %v4581
  %4612 = vmatprep.subr.mxu0 0.0
  %4613 = vmatpush1.msra.mxu0 %v4580
  %4614 = vmatprep.subr.mxu0 0.0
  %4615 = vmatpush1.msra.mxu0 %v4579
  %4616 = vmatprep.subr.mxu0 0.0
  %4617 = vmatpush1.msra.mxu0 %v4578
  %4618 = vmatprep.subr.mxu0 0.0
  %4619 = vmatpush1.msra.mxu0 %v4577
  %4620 = vmatprep.subr.mxu0 0.0
  %4621 = vmatpush1.msra.mxu0 %v4576
  %4622 = vmatprep.subr.mxu0 0.0
  %4623 = vmatpush1.msra.mxu0 %v4575
  %4624 = vmatprep.subr.mxu0 0.0
  %4625 = vmatpush1.msra.mxu0 %v4574
  %4626 = vmatprep.subr.mxu0 0.0
  %4627 = vmatpush2.msra.mxu0 0.0
  %4628 = vmatprep.subr.mxu0 0.0
  %4629 = vmatpush2.msra.mxu0 0.0
  %4630 = vmatprep.subr.mxu0 0.0
  %4631 = vmatpush2.msra.mxu0 0.0
  %4632 = vmatprep.subr.mxu0 0.0
  %4633 = vmatpush2.msra.mxu0 0.0
  %4634 = vmatprep.subr.mxu0 0.0
  %4635 = vmatpush2.msra.mxu0 0.0
  %4636 = vmatprep.subr.mxu0 0.0
  %4637 = vmatpush2.msra.mxu0 0.0
  %4638 = vmatprep.subr.mxu0 0.0
  %4639 = vmatpush2.msra.mxu0 0.0
  %4640 = vmatprep.subr.mxu0 0.0
  %4641 = vmatpush2.msra.mxu0 0.0
  %4642 = vmatprep.subr.mxu0 0.0
  %4643 = vmatpush2.msra.mxu0 0.0
  %4644 = vmatprep.subr.mxu0 0.0
  %4645 = vmatpush2.msra.mxu0 0.0
  %4646 = vmatprep.subr.mxu0 0.0
  %4647 = vmatpush2.msra.mxu0 0.0
  %4648 = vmatprep.subr.mxu0 0.0
  %4649 = vmatpush2.msra.mxu0 0.0
  %4650 = vmatprep.subr.mxu0 0.0
  %4651 = vmatpush2.msra.mxu0 0.0
  %4652 = vmatprep.subr.mxu0 0.0
  %4653 = vmatpush2.msra.mxu0 0.0
  %4654 = vmatprep.subr.mxu0 0.0
  %4655 = vmatpush2.msra.mxu0 0.0
  %4656 = vmatprep.subr.mxu0 0.0
  %4657 = vmatpush2.msra.mxu0 0.0
  %4658 = vmatprep.mubr.f32.mxu0 0.0
  %4659 = vmatmul.mubr.f32.gmra.mxu0 %v4572
  %v4660 = vpop.f32.mrf.mxu0
  %v4661 = vadd.f32 %v4593, %v4660
  %v4662 = vpop.f32.mrf.mxu0
  %4663 = vmatprep.mubr.f32.mxu0 0.0
  %4664 = vmatmul.mubr.f32.gmra.mxu0 %v4573
  %v4665 = vpop.f32.mrf.mxu0
  %v4666 = vadd.f32 %v4593, %v4665
  %v4667 = vpop.f32.mrf.mxu0
  %4668 = vdwg.mxu0
  %v4669 = vlaneseq
  %v4670 = vshrl.u32 %v4669, 7
  %v4671 = vsub.s32 4, %v4670
  %v4672 = vrot.slane %v4661, %v4671
  %v4673 = vlaneseq
  %v4674 = vshrl.u32 %v4673, 7
  %v4675 = vsub.s32 4, %v4674
  %v4676 = vrot.slane %v4666, %v4675
  %v4677 = vsub.f32 %v4661, %v4672
  %v4678 = vsub.f32 %v4666, %v4676
  %v4679 = vmul.f32 %v4677, %v4677
  %v4680 = vmul.f32 %v4678, %v4678
  %v4681 = vsel %vm1176, %v4679, 0.0
  %4682 = vadd.xlane.f32.xlu0 %v4681
  %v4683 = vpop.xlane.xlu0 %4682
  %v4684 = vsel %vm1176, %v4680, 0.0
  %4685 = vadd.xlane.f32.xlu0 %v4684
  %v4686 = vpop.xlane.xlu0 %4685
  %v4687 = vrsqrt.pop %v4683
  %v4688 = vmul.f32 %v4683, %v4687
  %vm4689 = vcmp.eq.f32.partialorder %v4683, inf
  %v4690 = vsel %vm4689, %v4683, %v4688
  %vm4691 = vcmp.eq.f32.partialorder %v4683, 0.0
  %v4692 = vand.u32 %v4683, 2147483648
  %v4693 = vsel %vm4691, %v4692, %v4690
  %v4694 = vrsqrt.pop %v4686
  %v4695 = vmul.f32 %v4686, %v4694
  %vm4696 = vcmp.eq.f32.partialorder %v4686, inf
  %v4697 = vsel %vm4696, %v4686, %v4695
  %vm4698 = vcmp.eq.f32.partialorder %v4686, 0.0
  %v4699 = vand.u32 %v4686, 2147483648
  %v4700 = vsel %vm4698, %v4699, %v4697
  %v4701 = vrot.slane %v4693, 4
  %v4702 = vadd.f32 %v4693, %v4701
  %v4703 = vrot.slane %v4702, 2
  %v4704 = vadd.f32 %v4702, %v4703
  %v4705 = vrot.slane %v4704, 1
  %v4706 = vadd.f32 %v4704, %v4705
  %v4707 = vrot.slane %v4700, 4
  %v4708 = vadd.f32 %v4700, %v4707
  %v4709 = vrot.slane %v4708, 2
  %v4710 = vadd.f32 %v4708, %v4709
  %v4711 = vrot.slane %v4710, 1
  %v4712 = vadd.f32 %v4710, %v4711
  %v4713 = vmul.f32 %v4706, %v4077
  %v4714 = vmul.f32 %v4712, %v4077
  %v4715 = vrcp.pop %v4713
  %v4716 = vrcp.pop %v4714
  %v4717 = vmul.f32 %v4693, %v4715
  %v4718 = vmul.f32 %v4700, %v4716
  %v4719 = vmul.f32 %v4717, -0.5
  %v4720 = vmul.f32 %v4718, -0.5
  %v4721 = vmul.f32 %v4719, %v4717
  %v4722 = vmul.f32 %v4720, %v4718
  %v4723 = vmul.f32 %v4721, 1.442695
  %v4724 = vpow.pop %v4723
  %v4725 = vmul.f32 %v4722, 1.442695
  %v4726 = vpow.pop %v4725
  %v4727 = vrot.slane %v4724, 4
  %v4728 = vadd.f32 %v4724, %v4727
  %v4729 = vrot.slane %v4728, 2
  %v4730 = vadd.f32 %v4728, %v4729
  %v4731 = vrot.slane %v4730, 1
  %v4732 = vadd.f32 %v4730, %v4731
  %v4733 = vrot.slane %v4726, 4
  %v4734 = vadd.f32 %v4726, %v4733
  %v4735 = vrot.slane %v4734, 2
  %v4736 = vadd.f32 %v4734, %v4735
  %v4737 = vrot.slane %v4736, 1
  %v4738 = vadd.f32 %v4736, %v4737
  %v4739 = vrcp.pop %v4732
  %v4740 = vrcp.pop %v4738
  %v4741 = vmul.f32 %v4724, %v4739
  %v4742 = vmul.f32 %v4726, %v4740
  %v4743 = vmul.f32 %v40, %v4741
  %v4744 = vmul.f32 %v40, %v4742
  %v4745 = vmul.f32 %v4743, %v4743
  %v4746 = vmul.f32 %v4744, %v4744
  %vm4747 = vcmask 15368
  %v4748 = vsel %vm4747, %v4745, 0.0
  %v4749 = vrot.slane %v4748, 4
  %v4750 = vadd.f32 %v4748, %v4749
  %v4751 = vrot.slane %v4750, 2
  %v4752 = vadd.f32 %v4750, %v4751
  %v4753 = vrot.slane %v4752, 1
  %v4754 = vadd.f32 %v4752, %v4753
  %v4755 = vsel %vm4747, %v4746, 0.0
  %v4756 = vrot.slane %v4755, 4
  %v4757 = vadd.f32 %v4755, %v4756
  %v4758 = vrot.slane %v4757, 2
  %v4759 = vadd.f32 %v4757, %v4758
  %v4760 = vrot.slane %v4759, 1
  %v4761 = vadd.f32 %v4759, %v4760
  %v4762 = vrsqrt.pop %v4754
  %v4763 = vmul.f32 %v4754, %v4762
  %vm4764 = vcmp.eq.f32.partialorder %v4754, inf
  %v4765 = vsel %vm4764, %v4754, %v4763
  %vm4766 = vcmp.eq.f32.partialorder %v4754, 0.0
  %v4767 = vand.u32 %v4754, 2147483648
  %v4768 = vsel %vm4766, %v4767, %v4765
  %v4769 = vrsqrt.pop %v4761
  %v4770 = vmul.f32 %v4761, %v4769
  %vm4771 = vcmp.eq.f32.partialorder %v4761, inf
  %v4772 = vsel %vm4771, %v4761, %v4770
  %vm4773 = vcmp.eq.f32.partialorder %v4761, 0.0
  %v4774 = vand.u32 %v4761, 2147483648
  %v4775 = vsel %vm4773, %v4774, %v4772
  %v4776 = vmax.f32 %v4768, 1e-12
  %v4777 = vmax.f32 %v4775, 1e-12
  %v4778 = vrcp.pop %v4776
  %v4779 = vrcp.pop %v4777
  %v4780 = vmul.f32 %v4743, %v4778
  %v4781 = vmul.f32 %v4744, %v4779
  %4783 = vset.pattern.permute.xlu0 1
  %4784 = vperm.xlu0 %4783, %v4780
  %v4785 = vpop.permute.xlu0 %4784
  %4788 = vset.pattern.permute.xlu0 1
  %4789 = vperm.xlu0 %4788, %v4781
  %v4790 = vpop.permute.xlu0 %4789
  %v4792 = vmul.f32 %v4661, %v4785
  %v4793 = vmul.f32 %v4666, %v4790
  %v4794 = vld [vmem:[%s9] sm:$0xff]
  %v4795 = vld [vmem:[%s9 + $0x8] sm:$0xff]
  %v4796 = vld [vmem:[%s9 + $0x10] sm:$0xff]
  %v4797 = vld [vmem:[%s9 + $0x18] sm:$0xff]
  %v4798 = vld [vmem:[%s9 + $0x20] sm:$0xff]
  %v4799 = vld [vmem:[%s9 + $0x28] sm:$0xff]
  %v4800 = vld [vmem:[%s9 + $0x30] sm:$0xff]
  %v4801 = vld [vmem:[%s9 + $0x38] sm:$0xff]
  %v4803 = vsel %vm1176, %v4792, 0
  %v4806 = vsel %vm1176, %v4793, 0
  %4808 = vmatprep.subr.mxu0 0.0
  %4809 = vmatpush1.msra.mxu0 0.0
  %4810 = vmatprep.subr.mxu0 0.0
  %4811 = vmatpush1.msra.mxu0 0.0
  %4812 = vmatprep.subr.mxu0 0.0
  %4813 = vmatpush1.msra.mxu0 0.0
  %4814 = vmatprep.subr.mxu0 0.0
  %4815 = vmatpush1.msra.mxu0 0.0
  %4816 = vmatprep.subr.mxu0 0.0
  %4817 = vmatpush1.msra.mxu0 0.0
  %4818 = vmatprep.subr.mxu0 0.0
  %4819 = vmatpush1.msra.mxu0 0.0
  %4820 = vmatprep.subr.mxu0 0.0
  %4821 = vmatpush1.msra.mxu0 0.0
  %4822 = vmatprep.subr.mxu0 0.0
  %4823 = vmatpush1.msra.mxu0 0.0
  %4824 = vmatprep.subr.mxu0 0.0
  %4825 = vmatpush1.msra.mxu0 %v4801
  %4826 = vmatprep.subr.mxu0 0.0
  %4827 = vmatpush1.msra.mxu0 %v4800
  %4828 = vmatprep.subr.mxu0 0.0
  %4829 = vmatpush1.msra.mxu0 %v4799
  %4830 = vmatprep.subr.mxu0 0.0
  %4831 = vmatpush1.msra.mxu0 %v4798
  %4832 = vmatprep.subr.mxu0 0.0
  %4833 = vmatpush1.msra.mxu0 %v4797
  %4834 = vmatprep.subr.mxu0 0.0
  %4835 = vmatpush1.msra.mxu0 %v4796
  %4836 = vmatprep.subr.mxu0 0.0
  %4837 = vmatpush1.msra.mxu0 %v4795
  %4838 = vmatprep.subr.mxu0 0.0
  %4839 = vmatpush1.msra.mxu0 %v4794
  %4840 = vmatprep.subr.mxu0 0.0
  %4841 = vmatpush2.msra.mxu0 0.0
  %4842 = vmatprep.subr.mxu0 0.0
  %4843 = vmatpush2.msra.mxu0 0.0
  %4844 = vmatprep.subr.mxu0 0.0
  %4845 = vmatpush2.msra.mxu0 0.0
  %4846 = vmatprep.subr.mxu0 0.0
  %4847 = vmatpush2.msra.mxu0 0.0
  %4848 = vmatprep.subr.mxu0 0.0
  %4849 = vmatpush2.msra.mxu0 0.0
  %4850 = vmatprep.subr.mxu0 0.0
  %4851 = vmatpush2.msra.mxu0 0.0
  %4852 = vmatprep.subr.mxu0 0.0
  %4853 = vmatpush2.msra.mxu0 0.0
  %4854 = vmatprep.subr.mxu0 0.0
  %4855 = vmatpush2.msra.mxu0 0.0
  %4856 = vmatprep.subr.mxu0 0.0
  %4857 = vmatpush2.msra.mxu0 0.0
  %4858 = vmatprep.subr.mxu0 0.0
  %4859 = vmatpush2.msra.mxu0 0.0
  %4860 = vmatprep.subr.mxu0 0.0
  %4861 = vmatpush2.msra.mxu0 0.0
  %4862 = vmatprep.subr.mxu0 0.0
  %4863 = vmatpush2.msra.mxu0 0.0
  %4864 = vmatprep.subr.mxu0 0.0
  %4865 = vmatpush2.msra.mxu0 0.0
  %4866 = vmatprep.subr.mxu0 0.0
  %4867 = vmatpush2.msra.mxu0 0.0
  %4868 = vmatprep.subr.mxu0 0.0
  %4869 = vmatpush2.msra.mxu0 0.0
  %4870 = vmatprep.subr.mxu0 0.0
  %4871 = vmatpush2.msra.mxu0 0.0
  %4872 = vmatprep.mubr.f32.mxu0 0.0
  %4873 = vmatmul.mubr.f32.gmra.mxu0 %v4803
  %v4874 = vpop.f32.mrf.mxu0
  %v4875 = vadd.f32 0.0, %v4874
  %v4876 = vpop.f32.mrf.mxu0
  %4877 = vmatprep.mubr.f32.mxu0 0.0
  %4878 = vmatmul.mubr.f32.gmra.mxu0 %v4806
  %v4879 = vpop.f32.mrf.mxu0
  %v4880 = vadd.f32 0.0, %v4879
  %v4881 = vpop.f32.mrf.mxu0
  %4882 = vdwg.mxu0
  %4885 = vrot.lane.b32.xlu0 %v4875, 64
  %v4886 = vpop.permute.xlu0 %4885
  %4887 = vrot.lane.b32.xlu0 %v4880, 64
  %v4888 = vpop.permute.xlu0 %4887
  %4891 = vxpose.xlu0.b32.start [1/16] %v4886, 128
  %4892 = vxpose.xlu0.b32.cont [2/16] 0.0, 128
  %4893 = vxpose.xlu0.b32.cont [3/16] 0.0, 128
  %4894 = vxpose.xlu0.b32.cont [4/16] 0.0, 128
  %4895 = vxpose.xlu0.b32.cont [5/16] 0.0, 128
  %4896 = vxpose.xlu0.b32.cont [6/16] 0.0, 128
  %4897 = vxpose.xlu0.b32.cont [7/16] 0.0, 128
  %4898 = vxpose.xlu0.b32.cont [8/16] 0.0, 128
  %4899 = vxpose.xlu0.b32.cont [9/16] 0.0, 128
  %4900 = vxpose.xlu0.b32.cont [10/16] 0.0, 128
  %4901 = vxpose.xlu0.b32.cont [11/16] 0.0, 128
  %4902 = vxpose.xlu0.b32.cont [12/16] 0.0, 128
  %4903 = vxpose.xlu0.b32.cont [13/16] 0.0, 128
  %4904 = vxpose.xlu0.b32.cont [14/16] 0.0, 128
  %4905 = vxpose.xlu0.b32.cont [15/16] 0.0, 128
  %4906 = vxpose.xlu0.b32.end [16/16] 0.0, 128
  %v4907 = vpop.trf.xlu0
  %v4908 = vpop.trf.xlu0
  %v4909 = vpop.trf.xlu0
  %v4910 = vpop.trf.xlu0
  %v4911 = vpop.trf.xlu0
  %v4912 = vpop.trf.xlu0
  %v4913 = vpop.trf.xlu0
  %v4914 = vpop.trf.xlu0
  %v4915 = vpop.trf.xlu0
  %v4916 = vpop.trf.xlu0
  %v4917 = vpop.trf.xlu0
  %v4918 = vpop.trf.xlu0
  %v4919 = vpop.trf.xlu0
  %v4920 = vpop.trf.xlu0
  %v4921 = vpop.trf.xlu0
  %v4922 = vpop.trf.xlu0
  %4923 = vxpose.xlu0.b32.start [1/16] %v4888, 128
  %4924 = vxpose.xlu0.b32.cont [2/16] 0.0, 128
  %4925 = vxpose.xlu0.b32.cont [3/16] 0.0, 128
  %4926 = vxpose.xlu0.b32.cont [4/16] 0.0, 128
  %4927 = vxpose.xlu0.b32.cont [5/16] 0.0, 128
  %4928 = vxpose.xlu0.b32.cont [6/16] 0.0, 128
  %4929 = vxpose.xlu0.b32.cont [7/16] 0.0, 128
  %4930 = vxpose.xlu0.b32.cont [8/16] 0.0, 128
  %4931 = vxpose.xlu0.b32.cont [9/16] 0.0, 128
  %4932 = vxpose.xlu0.b32.cont [10/16] 0.0, 128
  %4933 = vxpose.xlu0.b32.cont [11/16] 0.0, 128
  %4934 = vxpose.xlu0.b32.cont [12/16] 0.0, 128
  %4935 = vxpose.xlu0.b32.cont [13/16] 0.0, 128
  %4936 = vxpose.xlu0.b32.cont [14/16] 0.0, 128
  %4937 = vxpose.xlu0.b32.cont [15/16] 0.0, 128
  %4938 = vxpose.xlu0.b32.end [16/16] 0.0, 128
  %v4939 = vpop.trf.xlu0
  %v4940 = vpop.trf.xlu0
  %v4941 = vpop.trf.xlu0
  %v4942 = vpop.trf.xlu0
  %v4943 = vpop.trf.xlu0
  %v4944 = vpop.trf.xlu0
  %v4945 = vpop.trf.xlu0
  %v4946 = vpop.trf.xlu0
  %v4947 = vpop.trf.xlu0
  %v4948 = vpop.trf.xlu0
  %v4949 = vpop.trf.xlu0
  %v4950 = vpop.trf.xlu0
  %v4951 = vpop.trf.xlu0
  %v4952 = vpop.trf.xlu0
  %v4953 = vpop.trf.xlu0
  %v4954 = vpop.trf.xlu0
  %vm4955 = vcmask 64512
  %v4956 = vsel %vm4955, %v4907, -inf
  %4957 = vmax.xlane.f32.xlu0 %v4956
  %v4958 = vpop.xlane.xlu0 %4957
  %vm4959 = vcmask 57344
  %v4960 = vsel %vm4959, %v4908, -inf
  %4961 = vmax.xlane.f32.xlu0 %v4960
  %v4962 = vpop.xlane.xlu0 %4961
  %v4963 = vsel %vm4955, %v4939, -inf
  %4964 = vmax.xlane.f32.xlu0 %v4963
  %v4965 = vpop.xlane.xlu0 %4964
  %v4966 = vsel %vm4959, %v4940, -inf
  %4967 = vmax.xlane.f32.xlu0 %v4966
  %v4968 = vpop.xlane.xlu0 %4967
  %v4969 = vsub.f32 %v4907, %v4958
  %v4970 = vsub.f32 %v4908, %v4962
  %v4971 = vsub.f32 %v4939, %v4965
  %v4972 = vsub.f32 %v4940, %v4968
  %v4973 = vmul.f32 %v4969, 1.442695
  %v4974 = vpow.pop %v4973
  %v4975 = vmul.f32 %v4970, 1.442695
  %v4976 = vpow.pop %v4975
  %v4977 = vmul.f32 %v4971, 1.442695
  %v4978 = vpow.pop %v4977
  %v4979 = vmul.f32 %v4972, 1.442695
  %v4980 = vpow.pop %v4979
  %v4981 = vsel %vm4955, %v4974, 0.0
  %4982 = vadd.xlane.f32.xlu0 %v4981
  %v4983 = vpop.xlane.xlu0 %4982
  %v4984 = vsel %vm4959, %v4976, 0.0
  %4985 = vadd.xlane.f32.xlu0 %v4984
  %v4986 = vpop.xlane.xlu0 %4985
  %v4987 = vsel %vm4955, %v4978, 0.0
  %4988 = vadd.xlane.f32.xlu0 %v4987
  %v4989 = vpop.xlane.xlu0 %4988
  %v4990 = vsel %vm4959, %v4980, 0.0
  %4991 = vadd.xlane.f32.xlu0 %v4990
  %v4992 = vpop.xlane.xlu0 %4991
  %v4993 = vrcp.pop %v4983
  %v4994 = vmul.f32 %v4974, %v4993
  %v4995 = vrcp.pop %v4986
  %v4996 = vmul.f32 %v4976, %v4995
  %v4997 = vrcp.pop %v4989
  %v4998 = vmul.f32 %v4978, %v4997
  %v4999 = vrcp.pop %v4992
  %v5000 = vmul.f32 %v4980, %v4999
  %v5002 = vsel %vm4955, %v4994, 0
  %v5005 = vsel %vm4955, %v4996, 0
  %5007 = vmatprep.subr.mxu0 0.0
  %5008 = vmatpush1.msra.mxu0 0.0
  %5009 = vmatprep.subr.mxu0 0.0
  %5010 = vmatpush1.msra.mxu0 0.0
  %5011 = vmatprep.subr.mxu0 0.0
  %5012 = vmatpush1.msra.mxu0 0.0
  %5013 = vmatprep.subr.mxu0 0.0
  %5014 = vmatpush1.msra.mxu0 0.0
  %5015 = vmatprep.subr.mxu0 0.0
  %5016 = vmatpush1.msra.mxu0 0.0
  %5017 = vmatprep.subr.mxu0 0.0
  %5018 = vmatpush1.msra.mxu0 0.0
  %5019 = vmatprep.subr.mxu0 0.0
  %5020 = vmatpush1.msra.mxu0 0.0
  %5021 = vmatprep.subr.mxu0 0.0
  %5022 = vmatpush1.msra.mxu0 0.0
  %5023 = vmatprep.subr.mxu0 0.0
  %5024 = vmatpush1.msra.mxu0 0.0
  %5025 = vmatprep.subr.mxu0 0.0
  %5026 = vmatpush1.msra.mxu0 0.0
  %5027 = vmatprep.subr.mxu0 0.0
  %5028 = vmatpush1.msra.mxu0 0.0
  %5029 = vmatprep.subr.mxu0 0.0
  %5030 = vmatpush1.msra.mxu0 0.0
  %5031 = vmatprep.subr.mxu0 0.0
  %5032 = vmatpush1.msra.mxu0 0.0
  %5033 = vmatprep.subr.mxu0 0.0
  %5034 = vmatpush1.msra.mxu0 0.0
  %5035 = vmatprep.subr.mxu0 0.0
  %5036 = vmatpush1.msra.mxu0 0.0
  %5037 = vmatprep.subr.mxu0 0.0
  %5038 = vmatpush1.msra.mxu0 %v4875
  %5039 = vmatprep.subr.mxu0 0.0
  %5040 = vmatpush2.msra.mxu0 0.0
  %5041 = vmatprep.subr.mxu0 0.0
  %5042 = vmatpush2.msra.mxu0 0.0
  %5043 = vmatprep.subr.mxu0 0.0
  %5044 = vmatpush2.msra.mxu0 0.0
  %5045 = vmatprep.subr.mxu0 0.0
  %5046 = vmatpush2.msra.mxu0 0.0
  %5047 = vmatprep.subr.mxu0 0.0
  %5048 = vmatpush2.msra.mxu0 0.0
  %5049 = vmatprep.subr.mxu0 0.0
  %5050 = vmatpush2.msra.mxu0 0.0
  %5051 = vmatprep.subr.mxu0 0.0
  %5052 = vmatpush2.msra.mxu0 0.0
  %5053 = vmatprep.subr.mxu0 0.0
  %5054 = vmatpush2.msra.mxu0 0.0
  %5055 = vmatprep.subr.mxu0 0.0
  %5056 = vmatpush2.msra.mxu0 0.0
  %5057 = vmatprep.subr.mxu0 0.0
  %5058 = vmatpush2.msra.mxu0 0.0
  %5059 = vmatprep.subr.mxu0 0.0
  %5060 = vmatpush2.msra.mxu0 0.0
  %5061 = vmatprep.subr.mxu0 0.0
  %5062 = vmatpush2.msra.mxu0 0.0
  %5063 = vmatprep.subr.mxu0 0.0
  %5064 = vmatpush2.msra.mxu0 0.0
  %5065 = vmatprep.subr.mxu0 0.0
  %5066 = vmatpush2.msra.mxu0 0.0
  %5067 = vmatprep.subr.mxu0 0.0
  %5068 = vmatpush2.msra.mxu0 0.0
  %5069 = vmatprep.subr.mxu0 0.0
  %5070 = vmatpush2.msra.mxu0 0.0
  %5071 = vmatprep.mubr.f32.mxu0 0.0
  %5072 = vmatmul.mubr.f32.gmra.mxu0 %v5002
  %v5073 = vpop.f32.mrf.mxu0
  %v5074 = vadd.f32 0.0, %v5073
  %v5075 = vpop.f32.mrf.mxu0
  %5076 = vmatprep.mubr.f32.mxu0 0.0
  %5077 = vmatmul.mubr.f32.gmra.mxu0 %v5005
  %v5078 = vpop.f32.mrf.mxu0
  %v5079 = vadd.f32 0.0, %v5078
  %v5080 = vpop.f32.mrf.mxu0
  %5081 = vdwg.mxu0
  %v5083 = vsel %vm4955, %v4998, 0
  %v5086 = vsel %vm4955, %v5000, 0
  %5088 = vmatprep.subr.mxu0 0.0
  %5089 = vmatpush1.msra.mxu0 0.0
  %5090 = vmatprep.subr.mxu0 0.0
  %5091 = vmatpush1.msra.mxu0 0.0
  %5092 = vmatprep.subr.mxu0 0.0
  %5093 = vmatpush1.msra.mxu0 0.0
  %5094 = vmatprep.subr.mxu0 0.0
  %5095 = vmatpush1.msra.mxu0 0.0
  %5096 = vmatprep.subr.mxu0 0.0
  %5097 = vmatpush1.msra.mxu0 0.0
  %5098 = vmatprep.subr.mxu0 0.0
  %5099 = vmatpush1.msra.mxu0 0.0
  %5100 = vmatprep.subr.mxu0 0.0
  %5101 = vmatpush1.msra.mxu0 0.0
  %5102 = vmatprep.subr.mxu0 0.0
  %5103 = vmatpush1.msra.mxu0 0.0
  %5104 = vmatprep.subr.mxu0 0.0
  %5105 = vmatpush1.msra.mxu0 0.0
  %5106 = vmatprep.subr.mxu0 0.0
  %5107 = vmatpush1.msra.mxu0 0.0
  %5108 = vmatprep.subr.mxu0 0.0
  %5109 = vmatpush1.msra.mxu0 0.0
  %5110 = vmatprep.subr.mxu0 0.0
  %5111 = vmatpush1.msra.mxu0 0.0
  %5112 = vmatprep.subr.mxu0 0.0
  %5113 = vmatpush1.msra.mxu0 0.0
  %5114 = vmatprep.subr.mxu0 0.0
  %5115 = vmatpush1.msra.mxu0 0.0
  %5116 = vmatprep.subr.mxu0 0.0
  %5117 = vmatpush1.msra.mxu0 0.0
  %5118 = vmatprep.subr.mxu0 0.0
  %5119 = vmatpush1.msra.mxu0 %v4880
  %5120 = vmatprep.subr.mxu0 0.0
  %5121 = vmatpush2.msra.mxu0 0.0
  %5122 = vmatprep.subr.mxu0 0.0
  %5123 = vmatpush2.msra.mxu0 0.0
  %5124 = vmatprep.subr.mxu0 0.0
  %5125 = vmatpush2.msra.mxu0 0.0
  %5126 = vmatprep.subr.mxu0 0.0
  %5127 = vmatpush2.msra.mxu0 0.0
  %5128 = vmatprep.subr.mxu0 0.0
  %5129 = vmatpush2.msra.mxu0 0.0
  %5130 = vmatprep.subr.mxu0 0.0
  %5131 = vmatpush2.msra.mxu0 0.0
  %5132 = vmatprep.subr.mxu0 0.0
  %5133 = vmatpush2.msra.mxu0 0.0
  %5134 = vmatprep.subr.mxu0 0.0
  %5135 = vmatpush2.msra.mxu0 0.0
  %5136 = vmatprep.subr.mxu0 0.0
  %5137 = vmatpush2.msra.mxu0 0.0
  %5138 = vmatprep.subr.mxu0 0.0
  %5139 = vmatpush2.msra.mxu0 0.0
  %5140 = vmatprep.subr.mxu0 0.0
  %5141 = vmatpush2.msra.mxu0 0.0
  %5142 = vmatprep.subr.mxu0 0.0
  %5143 = vmatpush2.msra.mxu0 0.0
  %5144 = vmatprep.subr.mxu0 0.0
  %5145 = vmatpush2.msra.mxu0 0.0
  %5146 = vmatprep.subr.mxu0 0.0
  %5147 = vmatpush2.msra.mxu0 0.0
  %5148 = vmatprep.subr.mxu0 0.0
  %5149 = vmatpush2.msra.mxu0 0.0
  %5150 = vmatprep.subr.mxu0 0.0
  %5151 = vmatpush2.msra.mxu0 0.0
  %5152 = vmatprep.mubr.f32.mxu0 0.0
  %5153 = vmatmul.mubr.f32.gmra.mxu0 %v5083
  %v5154 = vpop.f32.mrf.mxu0
  %v5155 = vadd.f32 0.0, %v5154
  %v5156 = vpop.f32.mrf.mxu0
  %5157 = vmatprep.mubr.f32.mxu0 0.0
  %5158 = vmatmul.mubr.f32.gmra.mxu0 %v5086
  %v5159 = vpop.f32.mrf.mxu0
  %v5160 = vadd.f32 0.0, %v5159
  %v5161 = vpop.f32.mrf.mxu0
  %5162 = vdwg.mxu0
  %v5163 = vxor.u32 %v765, 2147483648
  %v5164 = vxor.u32 %v770, 2147483648
  %v5165 = vxor.u32 %v775, 2147483648
  %v5166 = vmul.f32 %v5163, 1.442695
  %v5167 = vpow.pop %v5166
  %v5168 = vmul.f32 %v5164, 1.442695
  %v5169 = vpow.pop %v5168
  %v5170 = vmul.f32 %v5165, 1.442695
  %v5171 = vpow.pop %v5170
  %v5172 = vadd.f32 %v5167, 1.0
  %v5173 = vadd.f32 %v5169, 1.0
  %v5174 = vadd.f32 %v5171, 1.0
  %v5175 = vrcp.pop %v5172
  %v5176 = vmul.f32 1.0, %v5175
  %v5177 = vrcp.pop %v5173
  %v5178 = vmul.f32 1.0, %v5177
  %v5179 = vrcp.pop %v5174
  %v5180 = vmul.f32 1.0, %v5179
  %v5181 = vmul.f32 %v765, %v5176
  %v5182 = vmul.f32 %v770, %v5178
  %v5183 = vmul.f32 %v775, %v5180
  %v5187 = vcombine.high %v5181, %v5181
  %v5189 = vunpack.c.l.s4 1966171168
  %v5190 = vunpack.c.0.s8 %v5189
  %v5191 = vlaneseq
  %v5192 = vshrl.u32 %v5191, 7
  %v5193 = vsub.s32 %v5190, %v5192
  %v5194 = vrot.slane %v5181, %v5193
  %v5196 = vunpack.c.l.s4 1966171168
  %v5197 = vunpack.c.0.s8 %v5196
  %v5198 = vlaneseq
  %v5199 = vshrl.u32 %v5198, 7
  %v5200 = vsub.s32 %v5197, %v5199
  %v5201 = vrot.slane %v5187, %v5200
  %v5202 = vcombine.high %v5194, %v5194
  %v5203 = vcombine.high %v5201, %v5201
  %v5205 = vunpack.c.l.s4 1966171168
  %v5206 = vunpack.c.0.s8 %v5205
  %v5207 = vlaneseq
  %v5208 = vshrl.u32 %v5207, 7
  %v5209 = vsub.s32 %v5206, %v5208
  %v5210 = vrot.slane %v5194, %v5209
  %v5212 = vunpack.c.l.s4 1966171168
  %v5213 = vunpack.c.0.s8 %v5212
  %v5214 = vlaneseq
  %v5215 = vshrl.u32 %v5214, 7
  %v5216 = vsub.s32 %v5213, %v5215
  %v5217 = vrot.slane %v5201, %v5216
  %v5219 = vunpack.c.l.s4 1966171168
  %v5220 = vunpack.c.0.s8 %v5219
  %v5221 = vlaneseq
  %v5222 = vshrl.u32 %v5221, 7
  %v5223 = vsub.s32 %v5220, %v5222
  %v5224 = vrot.slane %v5202, %v5223
  %v5226 = vunpack.c.l.s4 1966171168
  %v5227 = vunpack.c.0.s8 %v5226
  %v5228 = vlaneseq
  %v5229 = vshrl.u32 %v5228, 7
  %v5230 = vsub.s32 %v5227, %v5229
  %v5231 = vrot.slane %v5203, %v5230
  %v5232 = vcombine.high %v5210, %v5210
  %v5233 = vcombine.high %v5217, %v5217
  %v5234 = vcombine.high %v5224, %v5224
  %v5235 = vcombine.high %v5231, %v5231
  %v5236 = vcombine.high %v5182, %v5182
  %v5238 = vunpack.c.l.s4 1966171168
  %v5239 = vunpack.c.0.s8 %v5238
  %v5240 = vlaneseq
  %v5241 = vshrl.u32 %v5240, 7
  %v5242 = vsub.s32 %v5239, %v5241
  %v5243 = vrot.slane %v5182, %v5242
  %v5245 = vunpack.c.l.s4 1966171168
  %v5246 = vunpack.c.0.s8 %v5245
  %v5247 = vlaneseq
  %v5248 = vshrl.u32 %v5247, 7
  %v5249 = vsub.s32 %v5246, %v5248
  %v5250 = vrot.slane %v5236, %v5249
  %v5251 = vcombine.high %v5243, %v5243
  %v5252 = vcombine.high %v5250, %v5250
  %v5254 = vunpack.c.l.s4 1966171168
  %v5255 = vunpack.c.0.s8 %v5254
  %v5256 = vlaneseq
  %v5257 = vshrl.u32 %v5256, 7
  %v5258 = vsub.s32 %v5255, %v5257
  %v5259 = vrot.slane %v5243, %v5258
  %v5261 = vunpack.c.l.s4 1966171168
  %v5262 = vunpack.c.0.s8 %v5261
  %v5263 = vlaneseq
  %v5264 = vshrl.u32 %v5263, 7
  %v5265 = vsub.s32 %v5262, %v5264
  %v5266 = vrot.slane %v5250, %v5265
  %v5268 = vunpack.c.l.s4 1966171168
  %v5269 = vunpack.c.0.s8 %v5268
  %v5270 = vlaneseq
  %v5271 = vshrl.u32 %v5270, 7
  %v5272 = vsub.s32 %v5269, %v5271
  %v5273 = vrot.slane %v5251, %v5272
  %v5275 = vunpack.c.l.s4 1966171168
  %v5276 = vunpack.c.0.s8 %v5275
  %v5277 = vlaneseq
  %v5278 = vshrl.u32 %v5277, 7
  %v5279 = vsub.s32 %v5276, %v5278
  %v5280 = vrot.slane %v5252, %v5279
  %v5281 = vcombine.high %v5259, %v5259
  %v5282 = vcombine.high %v5266, %v5266
  %v5283 = vcombine.high %v5273, %v5273
  %v5284 = vcombine.high %v5280, %v5280
  %v5286 = vunpack.c.l.s4 1966171168
  %v5287 = vunpack.c.0.s8 %v5286
  %v5288 = vlaneseq
  %v5289 = vshrl.u32 %v5288, 7
  %v5290 = vsub.s32 %v5287, %v5289
  %v5291 = vrot.slane %v5183, %v5290
  %v5292 = vcombine.high %v5291, %v5291
  %v5294 = vunpack.c.l.s4 1966171168
  %v5295 = vunpack.c.0.s8 %v5294
  %v5296 = vlaneseq
  %v5297 = vshrl.u32 %v5296, 7
  %v5298 = vsub.s32 %v5295, %v5297
  %v5299 = vrot.slane %v5291, %v5298
  %v5301 = vunpack.c.l.s4 1966171168
  %v5302 = vunpack.c.0.s8 %v5301
  %v5303 = vlaneseq
  %v5304 = vshrl.u32 %v5303, 7
  %v5305 = vsub.s32 %v5302, %v5304
  %v5306 = vrot.slane %v5292, %v5305
  %v5307 = vcombine.low %v5210, %v5224
  %v5308 = vcombine.low %v5232, %v5234
  %v5309 = vcombine.low %v5217, %v5231
  %v5310 = vcombine.low %v5233, %v5235
  %v5312 = vunpack.c.l.s4 1966171168
  %v5313 = vunpack.c.0.s8 %v5312
  %v5314 = vlaneseq
  %v5315 = vshrl.u32 %v5314, 7
  %v5316 = vsub.s32 %v5313, %v5315
  %v5317 = vrot.slane %v5307, %v5316
  %v5319 = vunpack.c.l.s4 1966171168
  %v5320 = vunpack.c.0.s8 %v5319
  %v5321 = vlaneseq
  %v5322 = vshrl.u32 %v5321, 7
  %v5323 = vsub.s32 %v5320, %v5322
  %v5324 = vrot.slane %v5308, %v5323
  %v5326 = vunpack.c.l.s4 1966171168
  %v5327 = vunpack.c.0.s8 %v5326
  %v5328 = vlaneseq
  %v5329 = vshrl.u32 %v5328, 7
  %v5330 = vsub.s32 %v5327, %v5329
  %v5331 = vrot.slane %v5309, %v5330
  %v5333 = vunpack.c.l.s4 1966171168
  %v5334 = vunpack.c.0.s8 %v5333
  %v5335 = vlaneseq
  %v5336 = vshrl.u32 %v5335, 7
  %v5337 = vsub.s32 %v5334, %v5336
  %v5338 = vrot.slane %v5310, %v5337
  %v5339 = vcombine.low %v5317, %v5324
  %v5340 = vcombine.low %v5331, %v5338
  %v5342 = vunpack.c.l.s4 1966171168
  %v5343 = vunpack.c.0.s8 %v5342
  %v5344 = vlaneseq
  %v5345 = vshrl.u32 %v5344, 7
  %v5346 = vsub.s32 %v5343, %v5345
  %v5347 = vrot.slane %v5339, %v5346
  %v5349 = vunpack.c.l.s4 1966171168
  %v5350 = vunpack.c.0.s8 %v5349
  %v5351 = vlaneseq
  %v5352 = vshrl.u32 %v5351, 7
  %v5353 = vsub.s32 %v5350, %v5352
  %v5354 = vrot.slane %v5340, %v5353
  %v5355 = vcombine.low %v5347, %v5354
  %v5357 = vunpack.c.l.s4 1966171168
  %v5358 = vunpack.c.0.s8 %v5357
  %v5359 = vlaneseq
  %v5360 = vshrl.u32 %v5359, 7
  %v5361 = vsub.s32 %v5358, %v5360
  %v5362 = vrot.slane %v5259, %v5361
  %v5364 = vunpack.c.l.s4 1966171168
  %v5365 = vunpack.c.0.s8 %v5364
  %v5366 = vlaneseq
  %v5367 = vshrl.u32 %v5366, 7
  %v5368 = vsub.s32 %v5365, %v5367
  %v5369 = vrot.slane %v5362, %v5368
  %v5370 = vcombine.low %v5273, %v5281
  %v5371 = vcombine.low %v5283, %v5266
  %v5372 = vcombine.low %v5280, %v5282
  %v5373 = vcombine.low %v5284, %v5299
  %v5375 = vunpack.c.l.s4 1966171168
  %v5376 = vunpack.c.0.s8 %v5375
  %v5377 = vlaneseq
  %v5378 = vshrl.u32 %v5377, 7
  %v5379 = vsub.s32 %v5376, %v5378
  %v5380 = vrot.slane %v5370, %v5379
  %v5382 = vunpack.c.l.s4 1966171168
  %v5383 = vunpack.c.0.s8 %v5382
  %v5384 = vlaneseq
  %v5385 = vshrl.u32 %v5384, 7
  %v5386 = vsub.s32 %v5383, %v5385
  %v5387 = vrot.slane %v5371, %v5386
  %v5389 = vunpack.c.l.s4 1966171168
  %v5390 = vunpack.c.0.s8 %v5389
  %v5391 = vlaneseq
  %v5392 = vshrl.u32 %v5391, 7
  %v5393 = vsub.s32 %v5390, %v5392
  %v5394 = vrot.slane %v5372, %v5393
  %v5396 = vunpack.c.l.s4 1966171168
  %v5397 = vunpack.c.0.s8 %v5396
  %v5398 = vlaneseq
  %v5399 = vshrl.u32 %v5398, 7
  %v5400 = vsub.s32 %v5397, %v5399
  %v5401 = vrot.slane %v5373, %v5400
  %v5402 = vcombine.low %v5380, %v5387
  %v5403 = vcombine.low %v5394, %v5401
  %v5405 = vunpack.c.l.s4 1966171168
  %v5406 = vunpack.c.0.s8 %v5405
  %v5407 = vlaneseq
  %v5408 = vshrl.u32 %v5407, 7
  %v5409 = vsub.s32 %v5406, %v5408
  %v5410 = vrot.slane %v5402, %v5409
  %v5412 = vunpack.c.l.s4 1966171168
  %v5413 = vunpack.c.0.s8 %v5412
  %v5414 = vlaneseq
  %v5415 = vshrl.u32 %v5414, 7
  %v5416 = vsub.s32 %v5413, %v5415
  %v5417 = vrot.slane %v5403, %v5416
  %v5418 = vcombine.low %v5410, %v5417
  %v5420 = vunpack.c.l.s4 1966171168
  %v5421 = vunpack.c.0.s8 %v5420
  %v5422 = vlaneseq
  %v5423 = vshrl.u32 %v5422, 7
  %v5424 = vsub.s32 %v5421, %v5423
  %v5425 = vrot.slane %v5306, %v5424
  %v5427 = vunpack.c.l.s4 1966171168
  %v5428 = vunpack.c.0.s8 %v5427
  %v5429 = vlaneseq
  %v5430 = vshrl.u32 %v5429, 7
  %v5431 = vsub.s32 %v5428, %v5430
  %v5432 = vrot.slane %v5425, %v5431
  %5433 = vrot.lane.b32.xlu0 %v5355, 64
  %v5434 = vpop.permute.xlu0 %5433
  %5435 = vrot.lane.b32.xlu0 %v5369, 64
  %v5436 = vpop.permute.xlu0 %5435
  %5437 = vrot.lane.b32.xlu0 %v5418, 64
  %v5438 = vpop.permute.xlu0 %5437
  %5439 = vrot.lane.b32.xlu0 %v5432, 64
  %v5440 = vpop.permute.xlu0 %5439
  %v5445 = vmul.f32 %v5074, %v5434
  %v5446 = vmul.f32 %v5079, %v5436
  %v5447 = vmul.f32 %v5155, %v5438
  %v5448 = vmul.f32 %v5160, %v5440
  %v5453 = vcombine.high %v5445, %v5445
  %v5455 = vunpack.c.l.s4 1966171168
  %v5456 = vunpack.c.0.s8 %v5455
  %v5457 = vlaneseq
  %v5458 = vshrl.u32 %v5457, 7
  %v5459 = vsub.s32 %v5456, %v5458
  %v5460 = vrot.slane %v5445, %v5459
  %v5462 = vunpack.c.l.s4 1966171168
  %v5463 = vunpack.c.0.s8 %v5462
  %v5464 = vlaneseq
  %v5465 = vshrl.u32 %v5464, 7
  %v5466 = vsub.s32 %v5463, %v5465
  %v5467 = vrot.slane %v5453, %v5466
  %v5468 = vcombine.high %v5460, %v5460
  %v5469 = vcombine.high %v5467, %v5467
  %v5471 = vunpack.c.l.s4 1966171168
  %v5472 = vunpack.c.0.s8 %v5471
  %v5473 = vlaneseq
  %v5474 = vshrl.u32 %v5473, 7
  %v5475 = vsub.s32 %v5472, %v5474
  %v5476 = vrot.slane %v5460, %v5475
  %v5478 = vunpack.c.l.s4 1966171168
  %v5479 = vunpack.c.0.s8 %v5478
  %v5480 = vlaneseq
  %v5481 = vshrl.u32 %v5480, 7
  %v5482 = vsub.s32 %v5479, %v5481
  %v5483 = vrot.slane %v5467, %v5482
  %v5485 = vunpack.c.l.s4 1966171168
  %v5486 = vunpack.c.0.s8 %v5485
  %v5487 = vlaneseq
  %v5488 = vshrl.u32 %v5487, 7
  %v5489 = vsub.s32 %v5486, %v5488
  %v5490 = vrot.slane %v5468, %v5489
  %v5492 = vunpack.c.l.s4 1966171168
  %v5493 = vunpack.c.0.s8 %v5492
  %v5494 = vlaneseq
  %v5495 = vshrl.u32 %v5494, 7
  %v5496 = vsub.s32 %v5493, %v5495
  %v5497 = vrot.slane %v5469, %v5496
  %v5498 = vcombine.high %v5476, %v5476
  %v5499 = vcombine.high %v5483, %v5483
  %v5500 = vcombine.high %v5490, %v5490
  %v5501 = vcombine.high %v5497, %v5497
  %v5503 = vunpack.c.l.s4 1966171168
  %v5504 = vunpack.c.0.s8 %v5503
  %v5505 = vlaneseq
  %v5506 = vshrl.u32 %v5505, 7
  %v5507 = vsub.s32 %v5504, %v5506
  %v5508 = vrot.slane %v5446, %v5507
  %v5510 = vunpack.c.l.s4 1966171168
  %v5511 = vunpack.c.0.s8 %v5510
  %v5512 = vlaneseq
  %v5513 = vshrl.u32 %v5512, 7
  %v5514 = vsub.s32 %v5511, %v5513
  %v5515 = vrot.slane %v5508, %v5514
  %v5516 = vcombine.high %v5447, %v5447
  %v5518 = vunpack.c.l.s4 1966171168
  %v5519 = vunpack.c.0.s8 %v5518
  %v5520 = vlaneseq
  %v5521 = vshrl.u32 %v5520, 7
  %v5522 = vsub.s32 %v5519, %v5521
  %v5523 = vrot.slane %v5447, %v5522
  %v5525 = vunpack.c.l.s4 1966171168
  %v5526 = vunpack.c.0.s8 %v5525
  %v5527 = vlaneseq
  %v5528 = vshrl.u32 %v5527, 7
  %v5529 = vsub.s32 %v5526, %v5528
  %v5530 = vrot.slane %v5516, %v5529
  %v5531 = vcombine.high %v5523, %v5523
  %v5532 = vcombine.high %v5530, %v5530
  %v5534 = vunpack.c.l.s4 1966171168
  %v5535 = vunpack.c.0.s8 %v5534
  %v5536 = vlaneseq
  %v5537 = vshrl.u32 %v5536, 7
  %v5538 = vsub.s32 %v5535, %v5537
  %v5539 = vrot.slane %v5523, %v5538
  %v5541 = vunpack.c.l.s4 1966171168
  %v5542 = vunpack.c.0.s8 %v5541
  %v5543 = vlaneseq
  %v5544 = vshrl.u32 %v5543, 7
  %v5545 = vsub.s32 %v5542, %v5544
  %v5546 = vrot.slane %v5530, %v5545
  %v5548 = vunpack.c.l.s4 1966171168
  %v5549 = vunpack.c.0.s8 %v5548
  %v5550 = vlaneseq
  %v5551 = vshrl.u32 %v5550, 7
  %v5552 = vsub.s32 %v5549, %v5551
  %v5553 = vrot.slane %v5531, %v5552
  %v5555 = vunpack.c.l.s4 1966171168
  %v5556 = vunpack.c.0.s8 %v5555
  %v5557 = vlaneseq
  %v5558 = vshrl.u32 %v5557, 7
  %v5559 = vsub.s32 %v5556, %v5558
  %v5560 = vrot.slane %v5532, %v5559
  %v5561 = vcombine.high %v5539, %v5539
  %v5562 = vcombine.high %v5546, %v5546
  %v5563 = vcombine.high %v5553, %v5553
  %v5564 = vcombine.high %v5560, %v5560
  %v5566 = vunpack.c.l.s4 1966171168
  %v5567 = vunpack.c.0.s8 %v5566
  %v5568 = vlaneseq
  %v5569 = vshrl.u32 %v5568, 7
  %v5570 = vsub.s32 %v5567, %v5569
  %v5571 = vrot.slane %v5448, %v5570
  %v5573 = vunpack.c.l.s4 1966171168
  %v5574 = vunpack.c.0.s8 %v5573
  %v5575 = vlaneseq
  %v5576 = vshrl.u32 %v5575, 7
  %v5577 = vsub.s32 %v5574, %v5576
  %v5578 = vrot.slane %v5571, %v5577
  %v5579 = vcombine.low %v5476, %v5490
  %v5580 = vcombine.low %v5498, %v5500
  %v5581 = vcombine.low %v5483, %v5497
  %v5582 = vcombine.low %v5499, %v5501
  %v5584 = vunpack.c.l.s4 1966171168
  %v5585 = vunpack.c.0.s8 %v5584
  %v5586 = vlaneseq
  %v5587 = vshrl.u32 %v5586, 7
  %v5588 = vsub.s32 %v5585, %v5587
  %v5589 = vrot.slane %v5579, %v5588
  %v5591 = vunpack.c.l.s4 1966171168
  %v5592 = vunpack.c.0.s8 %v5591
  %v5593 = vlaneseq
  %v5594 = vshrl.u32 %v5593, 7
  %v5595 = vsub.s32 %v5592, %v5594
  %v5596 = vrot.slane %v5580, %v5595
  %v5598 = vunpack.c.l.s4 1966171168
  %v5599 = vunpack.c.0.s8 %v5598
  %v5600 = vlaneseq
  %v5601 = vshrl.u32 %v5600, 7
  %v5602 = vsub.s32 %v5599, %v5601
  %v5603 = vrot.slane %v5581, %v5602
  %v5605 = vunpack.c.l.s4 1966171168
  %v5606 = vunpack.c.0.s8 %v5605
  %v5607 = vlaneseq
  %v5608 = vshrl.u32 %v5607, 7
  %v5609 = vsub.s32 %v5606, %v5608
  %v5610 = vrot.slane %v5582, %v5609
  %v5611 = vcombine.low %v5589, %v5596
  %v5612 = vcombine.low %v5603, %v5610
  %v5614 = vunpack.c.l.s4 1966171168
  %v5615 = vunpack.c.0.s8 %v5614
  %v5616 = vlaneseq
  %v5617 = vshrl.u32 %v5616, 7
  %v5618 = vsub.s32 %v5615, %v5617
  %v5619 = vrot.slane %v5611, %v5618
  %v5621 = vunpack.c.l.s4 1966171168
  %v5622 = vunpack.c.0.s8 %v5621
  %v5623 = vlaneseq
  %v5624 = vshrl.u32 %v5623, 7
  %v5625 = vsub.s32 %v5622, %v5624
  %v5626 = vrot.slane %v5612, %v5625
  %v5627 = vcombine.low %v5619, %v5626
  %v5628 = vcombine.low %v5515, %v5539
  %v5629 = vcombine.low %v5553, %v5561
  %v5630 = vcombine.low %v5563, %v5546
  %v5631 = vcombine.low %v5560, %v5562
  %v5633 = vunpack.c.l.s4 1966171168
  %v5634 = vunpack.c.0.s8 %v5633
  %v5635 = vlaneseq
  %v5636 = vshrl.u32 %v5635, 7
  %v5637 = vsub.s32 %v5634, %v5636
  %v5638 = vrot.slane %v5628, %v5637
  %v5640 = vunpack.c.l.s4 1966171168
  %v5641 = vunpack.c.0.s8 %v5640
  %v5642 = vlaneseq
  %v5643 = vshrl.u32 %v5642, 7
  %v5644 = vsub.s32 %v5641, %v5643
  %v5645 = vrot.slane %v5629, %v5644
  %v5647 = vunpack.c.l.s4 1966171168
  %v5648 = vunpack.c.0.s8 %v5647
  %v5649 = vlaneseq
  %v5650 = vshrl.u32 %v5649, 7
  %v5651 = vsub.s32 %v5648, %v5650
  %v5652 = vrot.slane %v5630, %v5651
  %v5654 = vunpack.c.l.s4 1966171168
  %v5655 = vunpack.c.0.s8 %v5654
  %v5656 = vlaneseq
  %v5657 = vshrl.u32 %v5656, 7
  %v5658 = vsub.s32 %v5655, %v5657
  %v5659 = vrot.slane %v5631, %v5658
  %v5660 = vcombine.low %v5638, %v5645
  %v5661 = vcombine.low %v5652, %v5659
  %v5663 = vunpack.c.l.s4 1966171168
  %v5664 = vunpack.c.0.s8 %v5663
  %v5665 = vlaneseq
  %v5666 = vshrl.u32 %v5665, 7
  %v5667 = vsub.s32 %v5664, %v5666
  %v5668 = vrot.slane %v5660, %v5667
  %v5670 = vunpack.c.l.s4 1966171168
  %v5671 = vunpack.c.0.s8 %v5670
  %v5672 = vlaneseq
  %v5673 = vshrl.u32 %v5672, 7
  %v5674 = vsub.s32 %v5671, %v5673
  %v5675 = vrot.slane %v5661, %v5674
  %v5676 = vcombine.low %v5668, %v5675
  %v5677 = vcombine.low %v5564, %v5578
  %v5679 = vunpack.c.l.s4 1966171168
  %v5680 = vunpack.c.0.s8 %v5679
  %v5681 = vlaneseq
  %v5682 = vshrl.u32 %v5681, 7
  %v5683 = vsub.s32 %v5680, %v5682
  %v5684 = vrot.slane %v5677, %v5683
  %v5686 = vunpack.c.l.s4 1966171168
  %v5687 = vunpack.c.0.s8 %v5686
  %v5688 = vlaneseq
  %v5689 = vshrl.u32 %v5688, 7
  %v5690 = vsub.s32 %v5687, %v5689
  %v5691 = vrot.slane %v5684, %v5690
  %v5695 = vcombine.low %v72, %v86
  %v5696 = vcombine.low %v94, %v96
  %v5697 = vcombine.low %v79, %v93
  %v5698 = vcombine.low %v95, %v97
  %v5700 = vunpack.c.l.s4 1966171168
  %v5701 = vunpack.c.0.s8 %v5700
  %v5702 = vlaneseq
  %v5703 = vshrl.u32 %v5702, 7
  %v5704 = vsub.s32 %v5701, %v5703
  %v5705 = vrot.slane %v5695, %v5704
  %v5707 = vunpack.c.l.s4 1966171168
  %v5708 = vunpack.c.0.s8 %v5707
  %v5709 = vlaneseq
  %v5710 = vshrl.u32 %v5709, 7
  %v5711 = vsub.s32 %v5708, %v5710
  %v5712 = vrot.slane %v5696, %v5711
  %v5714 = vunpack.c.l.s4 1966171168
  %v5715 = vunpack.c.0.s8 %v5714
  %v5716 = vlaneseq
  %v5717 = vshrl.u32 %v5716, 7
  %v5718 = vsub.s32 %v5715, %v5717
  %v5719 = vrot.slane %v5697, %v5718
  %v5721 = vunpack.c.l.s4 1966171168
  %v5722 = vunpack.c.0.s8 %v5721
  %v5723 = vlaneseq
  %v5724 = vshrl.u32 %v5723, 7
  %v5725 = vsub.s32 %v5722, %v5724
  %v5726 = vrot.slane %v5698, %v5725
  %v5727 = vcombine.low %v5705, %v5712
  %v5728 = vcombine.low %v5719, %v5726
  %v5730 = vunpack.c.l.s4 1966171168
  %v5731 = vunpack.c.0.s8 %v5730
  %v5732 = vlaneseq
  %v5733 = vshrl.u32 %v5732, 7
  %v5734 = vsub.s32 %v5731, %v5733
  %v5735 = vrot.slane %v5727, %v5734
  %v5737 = vunpack.c.l.s4 1966171168
  %v5738 = vunpack.c.0.s8 %v5737
  %v5739 = vlaneseq
  %v5740 = vshrl.u32 %v5739, 7
  %v5741 = vsub.s32 %v5738, %v5740
  %v5742 = vrot.slane %v5728, %v5741
  %v5743 = vcombine.low %v5735, %v5742
  %v5744 = vcombine.low %v111, %v135
  %v5745 = vcombine.low %v149, %v157
  %v5746 = vcombine.low %v159, %v142
  %v5747 = vcombine.low %v156, %v158
  %v5749 = vunpack.c.l.s4 1966171168
  %v5750 = vunpack.c.0.s8 %v5749
  %v5751 = vlaneseq
  %v5752 = vshrl.u32 %v5751, 7
  %v5753 = vsub.s32 %v5750, %v5752
  %v5754 = vrot.slane %v5744, %v5753
  %v5756 = vunpack.c.l.s4 1966171168
  %v5757 = vunpack.c.0.s8 %v5756
  %v5758 = vlaneseq
  %v5759 = vshrl.u32 %v5758, 7
  %v5760 = vsub.s32 %v5757, %v5759
  %v5761 = vrot.slane %v5745, %v5760
  %v5763 = vunpack.c.l.s4 1966171168
  %v5764 = vunpack.c.0.s8 %v5763
  %v5765 = vlaneseq
  %v5766 = vshrl.u32 %v5765, 7
  %v5767 = vsub.s32 %v5764, %v5766
  %v5768 = vrot.slane %v5746, %v5767
  %v5770 = vunpack.c.l.s4 1966171168
  %v5771 = vunpack.c.0.s8 %v5770
  %v5772 = vlaneseq
  %v5773 = vshrl.u32 %v5772, 7
  %v5774 = vsub.s32 %v5771, %v5773
  %v5775 = vrot.slane %v5747, %v5774
  %v5776 = vcombine.low %v5754, %v5761
  %v5777 = vcombine.low %v5768, %v5775
  %v5779 = vunpack.c.l.s4 1966171168
  %v5780 = vunpack.c.0.s8 %v5779
  %v5781 = vlaneseq
  %v5782 = vshrl.u32 %v5781, 7
  %v5783 = vsub.s32 %v5780, %v5782
  %v5784 = vrot.slane %v5776, %v5783
  %v5786 = vunpack.c.l.s4 1966171168
  %v5787 = vunpack.c.0.s8 %v5786
  %v5788 = vlaneseq
  %v5789 = vshrl.u32 %v5788, 7
  %v5790 = vsub.s32 %v5787, %v5789
  %v5791 = vrot.slane %v5777, %v5790
  %v5792 = vcombine.low %v5784, %v5791
  %v5793 = vcombine.low %v160, %v174
  %v5795 = vunpack.c.l.s4 1966171168
  %v5796 = vunpack.c.0.s8 %v5795
  %v5797 = vlaneseq
  %v5798 = vshrl.u32 %v5797, 7
  %v5799 = vsub.s32 %v5796, %v5798
  %v5800 = vrot.slane %v5793, %v5799
  %v5802 = vunpack.c.l.s4 1966171168
  %v5803 = vunpack.c.0.s8 %v5802
  %v5804 = vlaneseq
  %v5805 = vshrl.u32 %v5804, 7
  %v5806 = vsub.s32 %v5803, %v5805
  %v5807 = vrot.slane %v5800, %v5806
  %5808 = vrot.lane.b32.xlu0 %v5743, 64
  %v5809 = vpop.permute.xlu0 %5808
  %5810 = vrot.lane.b32.xlu0 %v5792, 64
  %v5811 = vpop.permute.xlu0 %5810
  %5812 = vrot.lane.b32.xlu0 %v5807, 64
  %v5813 = vpop.permute.xlu0 %5812
  %v5817 = vsel %vm1176, %v5627, %v5809
  %v5818 = vsel %vm1176, %v5676, %v5811
  %v5819 = vsel %vm1176, %v5691, %v5813
  %v5820 = vld [vmem:[%s10] sm:$0xff]
  %v5821 = vld [vmem:[%s10 + $0x8] sm:$0xff]
  %v5822 = vld [vmem:[%s10 + $0x10] sm:$0xff]
  %v5823 = vld [vmem:[%s10 + $0x18] sm:$0xff]
  %v5824 = vld [vmem:[%s10 + $0x20] sm:$0xff]
  %v5825 = vld [vmem:[%s10 + $0x28] sm:$0xff]
  %v5826 = vld [vmem:[%s10 + $0x30] sm:$0xff]
  %v5827 = vld [vmem:[%s10 + $0x38] sm:$0xff]
  %v5828 = vld [vmem:[%s10 + $0x40] sm:$0xff]
  %v5829 = vld [vmem:[%s10 + $0x48] sm:$0xff]
  %v5830 = vld [vmem:[%s10 + $0x50] sm:$0xff]
  %v5831 = vld [vmem:[%s10 + $0x58] sm:$0xff]
  %v5832 = vlaneseq
  %v5833 = vshrl.u32 %v5832, 7
  %v5834 = vsub.s32 2, %v5833
  %v5835 = vrot.slane %v39, %v5834
  %vm5836 = vcmask 785408
  %v5838 = vsel %vm5836, %v5817, 0
  %v5841 = vsel %vm5836, %v5818, 0
  %v5844 = vsel %vm5836, %v5819, 0
  %5846 = vmatprep.subr.mxu0 0.0
  %5847 = vmatpush1.msra.mxu0 0.0
  %5848 = vmatprep.subr.mxu0 0.0
  %5849 = vmatpush1.msra.mxu0 0.0
  %5850 = vmatprep.subr.mxu0 0.0
  %5851 = vmatpush1.msra.mxu0 0.0
  %5852 = vmatprep.subr.mxu0 0.0
  %5853 = vmatpush1.msra.mxu0 0.0
  %5854 = vmatprep.subr.mxu0 0.0
  %5855 = vmatpush1.msra.mxu0 %v5831
  %5856 = vmatprep.subr.mxu0 0.0
  %5857 = vmatpush1.msra.mxu0 %v5830
  %5858 = vmatprep.subr.mxu0 0.0
  %5859 = vmatpush1.msra.mxu0 %v5829
  %5860 = vmatprep.subr.mxu0 0.0
  %5861 = vmatpush1.msra.mxu0 %v5828
  %5862 = vmatprep.subr.mxu0 0.0
  %5863 = vmatpush1.msra.mxu0 %v5827
  %5864 = vmatprep.subr.mxu0 0.0
  %5865 = vmatpush1.msra.mxu0 %v5826
  %5866 = vmatprep.subr.mxu0 0.0
  %5867 = vmatpush1.msra.mxu0 %v5825
  %5868 = vmatprep.subr.mxu0 0.0
  %5869 = vmatpush1.msra.mxu0 %v5824
  %5870 = vmatprep.subr.mxu0 0.0
  %5871 = vmatpush1.msra.mxu0 %v5823
  %5872 = vmatprep.subr.mxu0 0.0
  %5873 = vmatpush1.msra.mxu0 %v5822
  %5874 = vmatprep.subr.mxu0 0.0
  %5875 = vmatpush1.msra.mxu0 %v5821
  %5876 = vmatprep.subr.mxu0 0.0
  %5877 = vmatpush1.msra.mxu0 %v5820
  %5878 = vmatprep.subr.mxu0 0.0
  %5879 = vmatpush2.msra.mxu0 0.0
  %5880 = vmatprep.subr.mxu0 0.0
  %5881 = vmatpush2.msra.mxu0 0.0
  %5882 = vmatprep.subr.mxu0 0.0
  %5883 = vmatpush2.msra.mxu0 0.0
  %5884 = vmatprep.subr.mxu0 0.0
  %5885 = vmatpush2.msra.mxu0 0.0
  %5886 = vmatprep.subr.mxu0 0.0
  %5887 = vmatpush2.msra.mxu0 0.0
  %5888 = vmatprep.subr.mxu0 0.0
  %5889 = vmatpush2.msra.mxu0 0.0
  %5890 = vmatprep.subr.mxu0 0.0
  %5891 = vmatpush2.msra.mxu0 0.0
  %5892 = vmatprep.subr.mxu0 0.0
  %5893 = vmatpush2.msra.mxu0 0.0
  %5894 = vmatprep.subr.mxu0 0.0
  %5895 = vmatpush2.msra.mxu0 0.0
  %5896 = vmatprep.subr.mxu0 0.0
  %5897 = vmatpush2.msra.mxu0 0.0
  %5898 = vmatprep.subr.mxu0 0.0
  %5899 = vmatpush2.msra.mxu0 0.0
  %5900 = vmatprep.subr.mxu0 0.0
  %5901 = vmatpush2.msra.mxu0 0.0
  %5902 = vmatprep.subr.mxu0 0.0
  %5903 = vmatpush2.msra.mxu0 0.0
  %5904 = vmatprep.subr.mxu0 0.0
  %5905 = vmatpush2.msra.mxu0 0.0
  %5906 = vmatprep.subr.mxu0 0.0
  %5907 = vmatpush2.msra.mxu0 0.0
  %5908 = vmatprep.subr.mxu0 0.0
  %5909 = vmatpush2.msra.mxu0 0.0
  %5910 = vmatprep.mubr.f32.mxu0 0.0
  %5911 = vmatmul.mubr.f32.gmra.mxu0 %v5838
  %v5912 = vpop.f32.mrf.mxu0
  %v5913 = vadd.f32 %v5835, %v5912
  %v5914 = vpop.f32.mrf.mxu0
  %5915 = vmatprep.mubr.f32.mxu0 0.0
  %5916 = vmatmul.mubr.f32.gmra.mxu0 %v5841
  %v5917 = vpop.f32.mrf.mxu0
  %v5918 = vadd.f32 %v5835, %v5917
  %v5919 = vpop.f32.mrf.mxu0
  %5920 = vmatprep.mubr.f32.mxu0 0.0
  %5921 = vmatmul.mubr.f32.gmra.mxu0 %v5844
  %v5922 = vpop.f32.mrf.mxu0
  %v5923 = vadd.f32 %v5835, %v5922
  %v5924 = vpop.f32.mrf.mxu0
  %5925 = vdwg.mxu0
  %v5929 = vcombine.high %v5913, %v5913
  %v5931 = vunpack.c.l.s4 1966171168
  %v5932 = vunpack.c.0.s8 %v5931
  %v5933 = vlaneseq
  %v5934 = vshrl.u32 %v5933, 7
  %v5935 = vsub.s32 %v5932, %v5934
  %v5936 = vrot.slane %v5913, %v5935
  %v5938 = vunpack.c.l.s4 1966171168
  %v5939 = vunpack.c.0.s8 %v5938
  %v5940 = vlaneseq
  %v5941 = vshrl.u32 %v5940, 7
  %v5942 = vsub.s32 %v5939, %v5941
  %v5943 = vrot.slane %v5929, %v5942
  %v5944 = vcombine.high %v5936, %v5936
  %v5945 = vcombine.high %v5943, %v5943
  %v5947 = vunpack.c.l.s4 1966171168
  %v5948 = vunpack.c.0.s8 %v5947
  %v5949 = vlaneseq
  %v5950 = vshrl.u32 %v5949, 7
  %v5951 = vsub.s32 %v5948, %v5950
  %v5952 = vrot.slane %v5936, %v5951
  %v5954 = vunpack.c.l.s4 1966171168
  %v5955 = vunpack.c.0.s8 %v5954
  %v5956 = vlaneseq
  %v5957 = vshrl.u32 %v5956, 7
  %v5958 = vsub.s32 %v5955, %v5957
  %v5959 = vrot.slane %v5943, %v5958
  %v5961 = vunpack.c.l.s4 1966171168
  %v5962 = vunpack.c.0.s8 %v5961
  %v5963 = vlaneseq
  %v5964 = vshrl.u32 %v5963, 7
  %v5965 = vsub.s32 %v5962, %v5964
  %v5966 = vrot.slane %v5944, %v5965
  %v5968 = vunpack.c.l.s4 1966171168
  %v5969 = vunpack.c.0.s8 %v5968
  %v5970 = vlaneseq
  %v5971 = vshrl.u32 %v5970, 7
  %v5972 = vsub.s32 %v5969, %v5971
  %v5973 = vrot.slane %v5945, %v5972
  %v5974 = vcombine.high %v5952, %v5952
  %v5975 = vcombine.high %v5959, %v5959
  %v5976 = vcombine.high %v5966, %v5966
  %v5977 = vcombine.high %v5973, %v5973
  %v5978 = vcombine.high %v5918, %v5918
  %v5980 = vunpack.c.l.s4 1966171168
  %v5981 = vunpack.c.0.s8 %v5980
  %v5982 = vlaneseq
  %v5983 = vshrl.u32 %v5982, 7
  %v5984 = vsub.s32 %v5981, %v5983
  %v5985 = vrot.slane %v5918, %v5984
  %v5987 = vunpack.c.l.s4 1966171168
  %v5988 = vunpack.c.0.s8 %v5987
  %v5989 = vlaneseq
  %v5990 = vshrl.u32 %v5989, 7
  %v5991 = vsub.s32 %v5988, %v5990
  %v5992 = vrot.slane %v5978, %v5991
  %v5993 = vcombine.high %v5985, %v5985
  %v5994 = vcombine.high %v5992, %v5992
  %v5996 = vunpack.c.l.s4 1966171168
  %v5997 = vunpack.c.0.s8 %v5996
  %v5998 = vlaneseq
  %v5999 = vshrl.u32 %v5998, 7
  %v6000 = vsub.s32 %v5997, %v5999
  %v6001 = vrot.slane %v5985, %v6000
  %v6003 = vunpack.c.l.s4 1966171168
  %v6004 = vunpack.c.0.s8 %v6003
  %v6005 = vlaneseq
  %v6006 = vshrl.u32 %v6005, 7
  %v6007 = vsub.s32 %v6004, %v6006
  %v6008 = vrot.slane %v5992, %v6007
  %v6010 = vunpack.c.l.s4 1966171168
  %v6011 = vunpack.c.0.s8 %v6010
  %v6012 = vlaneseq
  %v6013 = vshrl.u32 %v6012, 7
  %v6014 = vsub.s32 %v6011, %v6013
  %v6015 = vrot.slane %v5993, %v6014
  %v6017 = vunpack.c.l.s4 1966171168
  %v6018 = vunpack.c.0.s8 %v6017
  %v6019 = vlaneseq
  %v6020 = vshrl.u32 %v6019, 7
  %v6021 = vsub.s32 %v6018, %v6020
  %v6022 = vrot.slane %v5994, %v6021
  %v6023 = vcombine.high %v6001, %v6001
  %v6024 = vcombine.high %v6008, %v6008
  %v6025 = vcombine.high %v6015, %v6015
  %v6026 = vcombine.high %v6022, %v6022
  %v6028 = vunpack.c.l.s4 1966171168
  %v6029 = vunpack.c.0.s8 %v6028
  %v6030 = vlaneseq
  %v6031 = vshrl.u32 %v6030, 7
  %v6032 = vsub.s32 %v6029, %v6031
  %v6033 = vrot.slane %v5923, %v6032
  %v6034 = vcombine.high %v6033, %v6033
  %v6036 = vunpack.c.l.s4 1966171168
  %v6037 = vunpack.c.0.s8 %v6036
  %v6038 = vlaneseq
  %v6039 = vshrl.u32 %v6038, 7
  %v6040 = vsub.s32 %v6037, %v6039
  %v6041 = vrot.slane %v6033, %v6040
  %v6043 = vunpack.c.l.s4 1966171168
  %v6044 = vunpack.c.0.s8 %v6043
  %v6045 = vlaneseq
  %v6046 = vshrl.u32 %v6045, 7
  %v6047 = vsub.s32 %v6044, %v6046
  %v6048 = vrot.slane %v6034, %v6047
  %v6049 = vcombine.low %v5952, %v5966
  %v6050 = vcombine.low %v5974, %v5976
  %v6051 = vcombine.low %v5959, %v5973
  %v6052 = vcombine.low %v5975, %v5977
  %v6054 = vunpack.c.l.s4 1966171168
  %v6055 = vunpack.c.0.s8 %v6054
  %v6056 = vlaneseq
  %v6057 = vshrl.u32 %v6056, 7
  %v6058 = vsub.s32 %v6055, %v6057
  %v6059 = vrot.slane %v6049, %v6058
  %v6061 = vunpack.c.l.s4 1966171168
  %v6062 = vunpack.c.0.s8 %v6061
  %v6063 = vlaneseq
  %v6064 = vshrl.u32 %v6063, 7
  %v6065 = vsub.s32 %v6062, %v6064
  %v6066 = vrot.slane %v6050, %v6065
  %v6068 = vunpack.c.l.s4 1966171168
  %v6069 = vunpack.c.0.s8 %v6068
  %v6070 = vlaneseq
  %v6071 = vshrl.u32 %v6070, 7
  %v6072 = vsub.s32 %v6069, %v6071
  %v6073 = vrot.slane %v6051, %v6072
  %v6075 = vunpack.c.l.s4 1966171168
  %v6076 = vunpack.c.0.s8 %v6075
  %v6077 = vlaneseq
  %v6078 = vshrl.u32 %v6077, 7
  %v6079 = vsub.s32 %v6076, %v6078
  %v6080 = vrot.slane %v6052, %v6079
  %v6081 = vcombine.low %v6059, %v6066
  %v6082 = vcombine.low %v6073, %v6080
  %v6084 = vunpack.c.l.s4 1966171168
  %v6085 = vunpack.c.0.s8 %v6084
  %v6086 = vlaneseq
  %v6087 = vshrl.u32 %v6086, 7
  %v6088 = vsub.s32 %v6085, %v6087
  %v6089 = vrot.slane %v6081, %v6088
  %v6091 = vunpack.c.l.s4 1966171168
  %v6092 = vunpack.c.0.s8 %v6091
  %v6093 = vlaneseq
  %v6094 = vshrl.u32 %v6093, 7
  %v6095 = vsub.s32 %v6092, %v6094
  %v6096 = vrot.slane %v6082, %v6095
  %v6097 = vcombine.low %v6089, %v6096
  %v6099 = vunpack.c.l.s4 1966171168
  %v6100 = vunpack.c.0.s8 %v6099
  %v6101 = vlaneseq
  %v6102 = vshrl.u32 %v6101, 7
  %v6103 = vsub.s32 %v6100, %v6102
  %v6104 = vrot.slane %v6001, %v6103
  %v6106 = vunpack.c.l.s4 1966171168
  %v6107 = vunpack.c.0.s8 %v6106
  %v6108 = vlaneseq
  %v6109 = vshrl.u32 %v6108, 7
  %v6110 = vsub.s32 %v6107, %v6109
  %v6111 = vrot.slane %v6104, %v6110
  %v6112 = vcombine.low %v6015, %v6023
  %v6113 = vcombine.low %v6025, %v6008
  %v6114 = vcombine.low %v6022, %v6024
  %v6115 = vcombine.low %v6026, %v6041
  %v6117 = vunpack.c.l.s4 1966171168
  %v6118 = vunpack.c.0.s8 %v6117
  %v6119 = vlaneseq
  %v6120 = vshrl.u32 %v6119, 7
  %v6121 = vsub.s32 %v6118, %v6120
  %v6122 = vrot.slane %v6112, %v6121
  %v6124 = vunpack.c.l.s4 1966171168
  %v6125 = vunpack.c.0.s8 %v6124
  %v6126 = vlaneseq
  %v6127 = vshrl.u32 %v6126, 7
  %v6128 = vsub.s32 %v6125, %v6127
  %v6129 = vrot.slane %v6113, %v6128
  %v6131 = vunpack.c.l.s4 1966171168
  %v6132 = vunpack.c.0.s8 %v6131
  %v6133 = vlaneseq
  %v6134 = vshrl.u32 %v6133, 7
  %v6135 = vsub.s32 %v6132, %v6134
  %v6136 = vrot.slane %v6114, %v6135
  %v6138 = vunpack.c.l.s4 1966171168
  %v6139 = vunpack.c.0.s8 %v6138
  %v6140 = vlaneseq
  %v6141 = vshrl.u32 %v6140, 7
  %v6142 = vsub.s32 %v6139, %v6141
  %v6143 = vrot.slane %v6115, %v6142
  %v6144 = vcombine.low %v6122, %v6129
  %v6145 = vcombine.low %v6136, %v6143
  %v6147 = vunpack.c.l.s4 1966171168
  %v6148 = vunpack.c.0.s8 %v6147
  %v6149 = vlaneseq
  %v6150 = vshrl.u32 %v6149, 7
  %v6151 = vsub.s32 %v6148, %v6150
  %v6152 = vrot.slane %v6144, %v6151
  %v6154 = vunpack.c.l.s4 1966171168
  %v6155 = vunpack.c.0.s8 %v6154
  %v6156 = vlaneseq
  %v6157 = vshrl.u32 %v6156, 7
  %v6158 = vsub.s32 %v6155, %v6157
  %v6159 = vrot.slane %v6145, %v6158
  %v6160 = vcombine.low %v6152, %v6159
  %v6162 = vunpack.c.l.s4 1966171168
  %v6163 = vunpack.c.0.s8 %v6162
  %v6164 = vlaneseq
  %v6165 = vshrl.u32 %v6164, 7
  %v6166 = vsub.s32 %v6163, %v6165
  %v6167 = vrot.slane %v6048, %v6166
  %v6169 = vunpack.c.l.s4 1966171168
  %v6170 = vunpack.c.0.s8 %v6169
  %v6171 = vlaneseq
  %v6172 = vshrl.u32 %v6171, 7
  %v6173 = vsub.s32 %v6170, %v6172
  %v6174 = vrot.slane %v6167, %v6173
  %6179 = vst.msk [vmem:[%s11] sm:$0xff] %vm345, %v6097
  %vm6180 = vcmask 253952
  %6181 = vst.msk [vmem:[%s11 + $0x8] sm:$0x1] %vm6180, %v6111
  %6182 = vst.msk [vmem:[%s11 + $0x10] sm:$0xff] %vm345, %v6160
  %6183 = vst.msk [vmem:[%s11 + $0x18] sm:$0x1] %vm6180, %v6174
  // Predicated region
  $region46: #{tpu_custom_call.1} parent=0 // pred_check
    _
  $region47: #{tpu_custom_call.1} parent=0 // pred_check_branch
    %6185 = sbr.rel (0) target = $region49
  $region48: #{tpu_custom_call.1} parent=0 // pred_region
    _
  $region49: #{tpu_custom_call.1} parent=0 // pred_fallthru
    _
  // Predicated region
  $region50: #{tpu_custom_call.1} parent=0 // pred_check
    _
  $region51: #{tpu_custom_call.1} parent=0 // pred_check_branch
    %6187 = sbr.rel (0) target = $region53
  $region52: #{tpu_custom_call.1} parent=0 // pred_region
    _
  $region53: #{tpu_custom_call.1} parent=0 // pred_fallthru
    _

</llo_original>
